<compile_context>
chip_gen: v7x
topology: tpu7x:2x2x1
jax: 0.10.0
libtpu: 0.0.40
codegen_flags: <defaults>
</compile_context>

<pallas_src>
import functools

import jax
import jax.numpy as jnp
from jax import lax
from jax.experimental import pallas as pl
from jax.experimental.pallas import tpu as pltpu

EPS = 1e-5
SLOPE = 0.1          # LeakyReLU negative slope
LANE = 128           # TPU lane width


# ----------------------------- in-kernel helpers -----------------------------
def _leaky(y):
    return jnp.maximum(y, SLOPE * y)


def _write_stats(st_ref, y2d):
    # Per-channel partial (sum, sum_sq) for this tile -> (2, C) block.
    s = jnp.sum(y2d, axis=0, keepdims=True)
    ss = jnp.sum(y2d * y2d, axis=0, keepdims=True)
    st_ref[...] = jnp.concatenate([s, ss], axis=0)


def _activated_tile(x_ref, sc_ref, sh_ref, *, h, w, tile_h):
    # x_ref: (tile_h+2, w+2, C) halo tile of the spatially zero-padded input.
    a = _leaky(x_ref[...].astype(jnp.float32) * sc_ref[...] + sh_ref[...])
    # The reference module zero-pads *after* BN+LeakyReLU (padding belongs to
    # the conv), so re-zero the spatial padding positions of the halo tile.
    row = lax.broadcasted_iota(jnp.int32, a.shape, 0) + pl.program_id(1) * tile_h
    col = lax.broadcasted_iota(jnp.int32, a.shape, 1)
    valid = (row >= 1) & (row <= h) & (col >= 1) & (col <= w)
    return jnp.where(valid, a, 0.0)


def _conv3x3(a, w_ref, *, w, tile_h):
    # a: (tile_h+2, w+2, C) activated tile; w_ref: (9, C, Cout) bf16.
    cout = w_ref.shape[-1]
    acc = jnp.zeros((tile_h * w, cout), jnp.float32)
    for kh in range(3):
        for kw in range(3):
            tap = a[kh:kh + tile_h, kw:kw + w, :]
            tap = tap.reshape(tile_h * w, -1).astype(jnp.bfloat16)
            acc = acc + jnp.dot(tap, w_ref[kh * 3 + kw],
                                preferred_element_type=jnp.float32)
    return acc


# --------------------------------- kernels -----------------------------------
def _stats_kernel(x_ref, st_ref):
    # Per-channel partial stats of an (tile_h, w, C) tile.
    x = x_ref[...].astype(jnp.float32)
    _write_stats(st_ref, x.reshape(-1, x.shape[-1]))


def _bn_leaky_stats_kernel(x_ref, sc_ref, sh_ref, o_ref, st_ref):
    # y = leaky(scale*x + shift); also emit partial stats of y.
    y = _leaky(x_ref[...].astype(jnp.float32) * sc_ref[...] + sh_ref[...])
    o_ref[...] = y.astype(o_ref.dtype)
    _write_stats(st_ref, y.reshape(-1, y.shape[-1]))


def _preact_conv_kernel(x_ref, sc_ref, sh_ref, w_ref, o_ref, st_ref,
                        *, h, w, tile_h):
    # leaky(BN(x)) -> implicit 3x3 conv (no bias: it cancels in the next BN).
    a = _activated_tile(x_ref, sc_ref, sh_ref, h=h, w=w, tile_h=tile_h)
    acc = _conv3x3(a, w_ref, w=w, tile_h=tile_h)
    o_ref[...] = acc.reshape(tile_h, w, -1).astype(o_ref.dtype)
    _write_stats(st_ref, acc)


def _preact_conv_res_kernel(x_ref, sc_ref, sh_ref, w_ref, b_ref, r_ref,
                            o_ref, st_ref, *, h, w, tile_h):
    # leaky(BN(h)) -> 3x3 conv + bias + residual add; stats feed the next BN1.
    a = _activated_tile(x_ref, sc_ref, sh_ref, h=h, w=w, tile_h=tile_h)
    acc = _conv3x3(a, w_ref, w=w, tile_h=tile_h)
    out = acc + b_ref[...] + r_ref[...].astype(jnp.float32).reshape(acc.shape)
    o_ref[...] = out.reshape(tile_h, w, -1).astype(o_ref.dtype)
    _write_stats(st_ref, out)


def _down_conv_kernel(xp_ref, w_ref, o_ref, st_ref, *, tile_ho, wo):
    # Stride-2 3x3 conv from a 4-phase (space-to-depth) layout.
    # xp_ref: (4, tile_ho+1, wo+1, Cin); tap (kh,kw) reads phase (kh%2, kw%2).
    cout = w_ref.shape[-1]
    acc = jnp.zeros((tile_ho * wo, cout), jnp.float32)
    for kh in range(3):
        for kw in range(3):
            p = (kh % 2) * 2 + (kw % 2)
            tap = xp_ref[p, kh // 2:kh // 2 + tile_ho, kw // 2:kw // 2 + wo, :]
            tap = tap.reshape(tile_ho * wo, -1).astype(jnp.bfloat16)
            acc = acc + jnp.dot(tap, w_ref[kh * 3 + kw],
                                preferred_element_type=jnp.float32)
    o_ref[...] = acc.reshape(tile_ho, wo, -1).astype(o_ref.dtype)
    _write_stats(st_ref, acc)


# ------------------------------ pallas wrappers -------------------------------
def _cparams():
    return pltpu.CompilerParams(
        dimension_semantics=("parallel", "parallel"),
        vmem_limit_bytes=32 * 1024 * 1024)


def _stats_pass(x, tile_h):
    n, h, w, c = x.shape
    nt = h // tile_h
    return pl.pallas_call(
        _stats_kernel,
        out_shape=jax.ShapeDtypeStruct((n, nt, 2, c), jnp.float32),
        grid=(n, nt),
        in_specs=[pl.BlockSpec((None, tile_h, w, c), lambda i, t: (i, t, 0, 0))],
        out_specs=pl.BlockSpec((None, None, 2, c), lambda i, t: (i, t, 0, 0)),
        compiler_params=_cparams(),
    )(x)


def _bn_leaky_pass(x, scale, shift, tile_h):
    n, h, w, c = x.shape
    nt = h // tile_h
    return pl.pallas_call(
        _bn_leaky_stats_kernel,
        out_shape=(jax.ShapeDtypeStruct((n, h, w, c), jnp.float32),
                   jax.ShapeDtypeStruct((n, nt, 2, c), jnp.float32)),
        grid=(n, nt),
        in_specs=[pl.BlockSpec((None, tile_h, w, c), lambda i, t: (i, t, 0, 0)),
                  pl.BlockSpec((1, c), lambda i, t: (0, 0)),
                  pl.BlockSpec((1, c), lambda i, t: (0, 0))],
        out_specs=[pl.BlockSpec((None, tile_h, w, c), lambda i, t: (i, t, 0, 0)),
                   pl.BlockSpec((None, None, 2, c), lambda i, t: (i, t, 0, 0))],
        compiler_params=_cparams(),
    )(x, scale, shift)


def _preact_conv_pass(xh, scale, shift, wk, *, h, w, tile_h):
    n, nt, thp2, wp2, c = xh.shape
    cout = wk.shape[-1]
    kern = functools.partial(_preact_conv_kernel, h=h, w=w, tile_h=tile_h)
    return pl.pallas_call(
        kern,
        out_shape=(jax.ShapeDtypeStruct((n, h, w, cout), jnp.float32),
                   jax.ShapeDtypeStruct((n, nt, 2, cout), jnp.float32)),
        grid=(n, nt),
        in_specs=[pl.BlockSpec((None, None, thp2, wp2, c),
                               lambda i, t: (i, t, 0, 0, 0)),
                  pl.BlockSpec((1, c), lambda i, t: (0, 0)),
                  pl.BlockSpec((1, c), lambda i, t: (0, 0)),
                  pl.BlockSpec((9, c, cout), lambda i, t: (0, 0, 0))],
        out_specs=[pl.BlockSpec((None, tile_h, w, cout), lambda i, t: (i, t, 0, 0)),
                   pl.BlockSpec((None, None, 2, cout), lambda i, t: (i, t, 0, 0))],
        compiler_params=_cparams(),
    )(xh, scale, shift, wk)


def _preact_conv_res_pass(xh, scale, shift, wk, bias, res, *, h, w, tile_h):
    n, nt, thp2, wp2, c = xh.shape
    cout = wk.shape[-1]
    kern = functools.partial(_preact_conv_res_kernel, h=h, w=w, tile_h=tile_h)
    return pl.pallas_call(
        kern,
        out_shape=(jax.ShapeDtypeStruct((n, h, w, cout), jnp.float32),
                   jax.ShapeDtypeStruct((n, nt, 2, cout), jnp.float32)),
        grid=(n, nt),
        in_specs=[pl.BlockSpec((None, None, thp2, wp2, c),
                               lambda i, t: (i, t, 0, 0, 0)),
                  pl.BlockSpec((1, c), lambda i, t: (0, 0)),
                  pl.BlockSpec((1, c), lambda i, t: (0, 0)),
                  pl.BlockSpec((9, c, cout), lambda i, t: (0, 0, 0)),
                  pl.BlockSpec((1, cout), lambda i, t: (0, 0)),
                  pl.BlockSpec((None, tile_h, w, cout), lambda i, t: (i, t, 0, 0))],
        out_specs=[pl.BlockSpec((None, tile_h, w, cout), lambda i, t: (i, t, 0, 0)),
                   pl.BlockSpec((None, None, 2, cout), lambda i, t: (i, t, 0, 0))],
        compiler_params=_cparams(),
    )(xh, scale, shift, wk, bias, res)


def _down_conv_pass(xph, wk, *, ho, wo, tile_ho):
    n, nt, _, thp1, wop1, cin = xph.shape
    cout = wk.shape[-1]
    kern = functools.partial(_down_conv_kernel, tile_ho=tile_ho, wo=wo)
    return pl.pallas_call(
        kern,
        out_shape=(jax.ShapeDtypeStruct((n, ho, wo, cout), jnp.float32),
                   jax.ShapeDtypeStruct((n, nt, 2, cout), jnp.float32)),
        grid=(n, nt),
        in_specs=[pl.BlockSpec((None, None, 4, thp1, wop1, cin),
                               lambda i, t: (i, t, 0, 0, 0, 0)),
                  pl.BlockSpec((9, cin, cout), lambda i, t: (0, 0, 0))],
        out_specs=[pl.BlockSpec((None, tile_ho, wo, cout), lambda i, t: (i, t, 0, 0)),
                   pl.BlockSpec((None, None, 2, cout), lambda i, t: (i, t, 0, 0))],
        compiler_params=_cparams(),
    )(xph, wk)


# ------------------------------- plain-JAX glue -------------------------------
def _round_up(n, m):
    return (n + m - 1) // m * m


def _pad_vec(v, size):
    return jnp.pad(v.astype(jnp.float32), (0, size - v.shape[0]))


def _pad_channels(x, cp):
    return jnp.pad(x, ((0, 0), (0, 0), (0, 0), (0, cp - x.shape[-1])))


def _prep_w(w, cpi, cpo):
    # (3, 3, ci, co) -> zero-padded (9, cpi, cpo) bf16, tap-major (kh*3 + kw).
    _, _, ci, co = w.shape
    wk = w.reshape(9, ci, co)
    wk = jnp.pad(wk, ((0, 0), (0, cpi - ci), (0, cpo - co)))
    return wk.astype(jnp.bfloat16)


def _fold_bn(stats, gamma_p, beta_p, count):
    # Fold per-channel (sum, sum_sq) partials into BN scale/shift (training mode).
    tot = jnp.sum(stats, axis=(0, 1))                     # (2, Cp)
    mean = tot[0] / count
    var = jnp.maximum(tot[1] / count - mean * mean, 0.0)
    scale = gamma_p * lax.rsqrt(var + EPS)
    shift = beta_p - mean * scale
    return scale.reshape(1, -1), shift.reshape(1, -1)


def _pick_tile(h, w, target_rows=512):
    # Largest divisor of h with roughly <= target_rows rows per tile.
    t = max(1, min(h, target_rows // max(w, 1)))
    while h % t:
        t -= 1
    return t


def _halo_tiles(x, tile_h):
    # (n, h, w, c) -> (n, nt, tile_h+2, w+2, c): zero-padded overlapped H-tiles.
    n, h, w, c = x.shape
    xp = jnp.pad(x, ((0, 0), (1, 1), (1, 1), (0, 0)))
    nt = h // tile_h
    idx = jnp.arange(nt)[:, None] * tile_h + jnp.arange(tile_h + 2)[None, :]
    return xp[:, idx]


def _down_phase_tiles(x, tile_ho):
    # Space-to-depth phase split for the stride-2 conv:
    # (n, h, w, c) -> (n, nt, 4, tile_ho+1, w/2+1, c), phase = (row%2)*2 + col%2.
    n, h, w, c = x.shape
    ho, wo = h // 2, w // 2
    xp = jnp.pad(x, ((0, 0), (1, 1), (1, 1), (0, 0)))
    xp = xp.reshape(n, ho + 1, 2, wo + 1, 2, c)
    xp = jnp.transpose(xp, (0, 2, 4, 1, 3, 5)).reshape(n, 4, ho + 1, wo + 1, c)
    nt = ho // tile_ho
    idx = jnp.arange(nt)[:, None] * tile_ho + jnp.arange(tile_ho + 1)[None, :]
    xt = xp[:, :, idx]                                    # (n, 4, nt, th+1, wo+1, c)
    return jnp.transpose(xt, (0, 2, 1, 3, 4, 5))


def _residual_block(x, st_x, rp, tile_h, cp):
    # BN1 -> Leaky -> Conv1 -> BN2 -> Leaky -> Conv2 (+bias) -> add x.
    # Conv1's bias is a no-op under the following training-mode BN -> dropped.
    n, h, w, _ = x.shape
    count = n * h * w
    w1 = _prep_w(rp["w1"], cp, cp)
    w2 = _prep_w(rp["w2"], cp, cp)
    bias2 = _pad_vec(rp["b2"], cp).reshape(1, cp)

    sc1, sh1 = _fold_bn(st_x, _pad_vec(rp["bn1_g"], cp),
                        _pad_vec(rp["bn1_b"], cp), count)
    xh = _halo_tiles(x, tile_h)
    hmid, st_h = _preact_conv_pass(xh, sc1, sh1, w1, h=h, w=w, tile_h=tile_h)

    sc2, sh2 = _fold_bn(st_h, _pad_vec(rp["bn2_g"], cp),
                        _pad_vec(rp["bn2_b"], cp), count)
    hh = _halo_tiles(hmid, tile_h)
    out, st_out = _preact_conv_res_pass(hh, sc2, sh2, w2, bias2, x,
                                        h=h, w=w, tile_h=tile_h)
    return out, st_out


def encoder_block_forward(x_nchw, params):
    x = jnp.transpose(x_nchw, (0, 2, 3, 1)).astype(jnp.float32)   # NCHW -> NHWC
    n, h, w, cin = x.shape
    c = params["res1"]["bn1_g"].shape[0]            # working channel count
    cp = _round_up(c, LANE)

    if params["downsample"]:
        assert h % 2 == 0 and w % 2 == 0
        dp = params["down"]
        cpi = _round_up(cin, LANE)
        xpad = _pad_channels(x, cpi)
        ho, wo = h // 2, w // 2
        tho = _pick_tile(ho, wo)
        xph = _down_phase_tiles(xpad, tho)
        wd = _prep_w(dp["w"], cpi, cp)              # down-conv bias cancels in BN
        y, st_y = _down_conv_pass(xph, wd, ho=ho, wo=wo, tile_ho=tho)
        sc, sh = _fold_bn(st_y, _pad_vec(dp["bn_g"], cp),
                          _pad_vec(dp["bn_b"], cp), n * ho * wo)
        x, st_x = _bn_leaky_pass(y, sc, sh, tho)
        h, w = ho, wo
    else:
        x = _pad_channels(x, cp)
        st_x = _stats_pass(x, _pick_tile(h, w))

    tile_h = _pick_tile(h, w)
    for name in ("res1", "res2"):
        x, st_x = _residual_block(x, st_x, params[name], tile_h, cp)

    return jnp.transpose(x[..., :c], (0, 3, 1, 2))  # NHWC -> NCHW


# ------------------------------ parameter init --------------------------------
def init_params(key, in_channels, out_channels):
    downsample = in_channels != out_channels
    c = out_channels if downsample else in_channels
    keys = iter(jax.random.split(key, 32))

    def convw(ci, co):
        w = 0.1 * jax.random.normal(next(keys), (3, 3, ci, co), jnp.float32)
        b = 0.1 * jax.random.normal(next(keys), (co,), jnp.float32)
        return w, b

    def bn(co):
        g = 1.0 + 0.1 * jax.random.normal(next(keys), (co,), jnp.float32)
        b = 0.1 * jax.random.normal(next(keys), (co,), jnp.float32)
        return g, b

    params = {"downsample": downsample}
    if downsample:
        w, b = convw(in_channels, out_channels)
        g, bt = bn(out_channels)
        params["down"] = {"w": w, "b": b, "bn_g": g, "bn_b": bt}

    def res():
        g1, b1 = bn(c)
        w1, bb1 = convw(c, c)
        g2, b2 = bn(c)
        w2, bb2 = convw(c, c)
        return {"bn1_g": g1, "bn1_b": b1, "w1": w1, "b1": bb1,
                "bn2_g": g2, "bn2_b": b2, "w2": w2, "b2": bb2}

    params["res1"] = res()
    params["res2"] = res()
    return params


# --------------------------- pure-JAX reference check --------------------------
def _conv_ref(x, w, b, stride):
    y = lax.conv_general_dilated(
        x, w, (stride, stride), ((1, 1), (1, 1)),
        dimension_numbers=("NHWC", "HWIO", "NHWC"),
        precision=lax.Precision.HIGHEST)
    return y + b.reshape(1, 1, 1, -1)


def _bn_leaky_ref(x, g, b):
    mean = jnp.mean(x, axis=(0, 1, 2), keepdims=True)
    var = jnp.mean((x - mean) ** 2, axis=(0, 1, 2), keepdims=True)
    y = (x - mean) * lax.rsqrt(var + EPS) * g.reshape(1, 1, 1, -1) + b.reshape(1, 1, 1, -1)
    return jnp.where(y > 0, y, SLOPE * y)


def encoder_block_ref(x_nchw, params):
    x = jnp.transpose(x_nchw, (0, 2, 3, 1))
    if params["downsample"]:
        dp = params["down"]
        x = _bn_leaky_ref(_conv_ref(x, dp["w"], dp["b"], 2), dp["bn_g"], dp["bn_b"])
    for rp in (params["res1"], params["res2"]):
        a = _bn_leaky_ref(x, rp["bn1_g"], rp["bn1_b"])
        hmid = _bn_leaky_ref(_conv_ref(a, rp["w1"], rp["b1"], 1),
                             rp["bn2_g"], rp["bn2_b"])
        x = x + _conv_ref(hmid, rp["w2"], rp["b2"], 1)
    return jnp.transpose(x, (0, 3, 1, 2))


# ------------------------------------ main -------------------------------------
if __name__ == "__main__":
    key = jax.random.PRNGKey(0)
    k_x, k_p = jax.random.split(key)

    N, Cin, Cout, H, W = 2, 4, 8, 16, 16
    x = jax.random.normal(k_x, (N, Cin, H, W), jnp.float32)
    params = init_params(k_p, Cin, Cout)

    fwd = jax.jit(functools.partial(encoder_block_forward, params=params))
    out = jax.block_until_ready(fwd(x))
    assert out.shape == (N, Cout, H // 2, W // 2), out.shape

    ref = jax.block_until_ready(encoder_block_ref(x, params))
    assert bool(jnp.all(jnp.isfinite(out)))
    # Kernel uses bf16 MXU operands (f32 accumulation); reference is full f32.
    max_err = float(jnp.max(jnp.abs(out - ref)))
    assert max_err < 5e-2, f"mismatch vs reference: {max_err}"

    print("KERNEL_OK")
</pallas_src>

<mosaic_0001>
module attributes {stable_mosaic.version = 11 : i64} {
  func.func @_bn_leaky_stats_kernel(%arg0: i32, %arg1: i32, %arg2: memref<1x8x8x128xf32, #tpu.memory_space<vmem>>, %arg3: memref<1x128xf32, #tpu.memory_space<vmem>>, %arg4: memref<1x128xf32, #tpu.memory_space<vmem>>, %arg5: memref<1x8x8x128xf32, #tpu.memory_space<vmem>>, %arg6: memref<1x1x2x128xf32, #tpu.memory_space<vmem>>) attributes {dimension_semantics = [#tpu.dimension_semantics<parallel>, #tpu.dimension_semantics<parallel>], iteration_bounds = array<i64: 2, 1>, scalar_prefetch = 0 : i64, scratch_operands = 0 : i64, tpu.core_type = #tpu.core_type<tc>, window_params = [{transform_indices = @transform_0, window_bounds = array<i64: 1, 8, 8, 128>}, {pipeline_mode = #tpu.pipeline_mode<synchronous>, transform_indices = @transform_1, window_bounds = array<i64: 1, 128>}, {pipeline_mode = #tpu.pipeline_mode<synchronous>, transform_indices = @transform_2, window_bounds = array<i64: 1, 128>}, {transform_indices = @transform_3, window_bounds = array<i64: 1, 8, 8, 128>}, {transform_indices = @transform_4, window_bounds = array<i64: 1, 1, 2, 128>}]} {
    %c0 = arith.constant 0 : index
    %c0_0 = arith.constant 0 : index
    %c0_1 = arith.constant 0 : index
    %c0_2 = arith.constant 0 : index
    %0 = vector.load %arg2[%c0, %c0_0, %c0_1, %c0_2] : memref<1x8x8x128xf32, #tpu.memory_space<vmem>>, vector<1x8x8x128xf32>
    %1 = vector.shape_cast %0 : vector<1x8x8x128xf32> to vector<8x8x128xf32>
    %c0_3 = arith.constant 0 : index
    %c0_4 = arith.constant 0 : index
    %2 = vector.load %arg3[%c0_3, %c0_4] : memref<1x128xf32, #tpu.memory_space<vmem>>, vector<1x128xf32>
    %3 = vector.shape_cast %2 : vector<1x128xf32> to vector<1x1x128xf32>
    %4 = vector.broadcast %3 : vector<1x1x128xf32> to vector<8x8x128xf32>
    %5 = arith.mulf %1, %4 : vector<8x8x128xf32>
    %c0_5 = arith.constant 0 : index
    %c0_6 = arith.constant 0 : index
    %6 = vector.load %arg4[%c0_5, %c0_6] : memref<1x128xf32, #tpu.memory_space<vmem>>, vector<1x128xf32>
    %7 = vector.shape_cast %6 : vector<1x128xf32> to vector<1x1x128xf32>
    %8 = vector.broadcast %7 : vector<1x1x128xf32> to vector<8x8x128xf32>
    %9 = arith.addf %5, %8 : vector<8x8x128xf32>
    %cst = arith.constant 1.000000e-01 : f32
    %10 = vector.broadcast %cst : f32 to vector<8x8x128xf32>
    %11 = arith.mulf %10, %9 : vector<8x8x128xf32>
    %12 = arith.maximumf %9, %11 : vector<8x8x128xf32>
    %c0_7 = arith.constant 0 : index
    %c0_8 = arith.constant 0 : index
    %c0_9 = arith.constant 0 : index
    %c0_10 = arith.constant 0 : index
    %13 = vector.load %arg5[%c0_7, %c0_8, %c0_9, %c0_10] : memref<1x8x8x128xf32, #tpu.memory_space<vmem>>, vector<1x8x8x128xf32>
    %14 = vector.shape_cast %13 : vector<1x8x8x128xf32> to vector<8x8x128xf32>
    %15 = vector.shape_cast %12 : vector<8x8x128xf32> to vector<1x8x8x128xf32>
    tpu.vector_store %arg5[%c0_7, %c0_8, %c0_9, %c0_10], %15 {strides = array<i32>} : memref<1x8x8x128xf32, #tpu.memory_space<vmem>>, vector<1x8x8x128xf32>,
    %16 = vector.shape_cast %12 : vector<8x8x128xf32> to vector<64x128xf32>
    %cst_11 = arith.constant dense<0.000000e+00> : vector<128xf32>
    %17 = vector.multi_reduction <add>, %16, %cst_11 [0] : vector<64x128xf32> to vector<128xf32>
    %18 = vector.shape_cast %17 : vector<128xf32> to vector<1x128xf32>
    %19 = arith.mulf %16, %16 : vector<64x128xf32>
    %cst_12 = arith.constant dense<0.000000e+00> : vector<128xf32>
    %20 = vector.multi_reduction <add>, %19, %cst_12 [0] : vector<64x128xf32> to vector<128xf32>
    %21 = vector.shape_cast %20 : vector<128xf32> to vector<1x128xf32>
    %22 = tpu.concatenate %18, %21 in 0 : vector<1x128xf32>, vector<1x128xf32> -> vector<2x128xf32>
    %c0_13 = arith.constant 0 : index
    %c0_14 = arith.constant 0 : index
    %c0_15 = arith.constant 0 : index
    %c0_16 = arith.constant 0 : index
    %23 = vector.load %arg6[%c0_13, %c0_14, %c0_15, %c0_16] : memref<1x1x2x128xf32, #tpu.memory_space<vmem>>, vector<1x1x2x128xf32>
    %24 = vector.shape_cast %23 : vector<1x1x2x128xf32> to vector<2x128xf32>
    %25 = vector.shape_cast %22 : vector<2x128xf32> to vector<1x1x2x128xf32>
    tpu.vector_store %arg6[%c0_13, %c0_14, %c0_15, %c0_16], %25 {strides = array<i32>} : memref<1x1x2x128xf32, #tpu.memory_space<vmem>>, vector<1x1x2x128xf32>,
    return
  }
  func.func @transform_0(%arg0: i32, %arg1: i32) -> (i32, i32, i32, i32) {
    %c0_i32 = arith.constant 0 : i32
    %c0_i32_0 = arith.constant 0 : i32
    %c0_i32_1 = arith.constant 0 : i32
    return %arg0, %arg1, %c0_i32, %c0_i32_0 : i32, i32, i32, i32
  }
  func.func @transform_1(%arg0: i32, %arg1: i32) -> (i32, i32) {
    %c0_i32 = arith.constant 0 : i32
    %c0_i32_0 = arith.constant 0 : i32
    %c0_i32_1 = arith.constant 0 : i32
    return %c0_i32, %c0_i32_0 : i32, i32
  }
  func.func @transform_2(%arg0: i32, %arg1: i32) -> (i32, i32) {
    %c0_i32 = arith.constant 0 : i32
    %c0_i32_0 = arith.constant 0 : i32
    %c0_i32_1 = arith.constant 0 : i32
    return %c0_i32, %c0_i32_0 : i32, i32
  }
  func.func @transform_3(%arg0: i32, %arg1: i32) -> (i32, i32, i32, i32) {
    %c0_i32 = arith.constant 0 : i32
    %c0_i32_0 = arith.constant 0 : i32
    %c0_i32_1 = arith.constant 0 : i32
    return %arg0, %arg1, %c0_i32, %c0_i32_0 : i32, i32, i32, i32
  }
  func.func @transform_4(%arg0: i32, %arg1: i32) -> (i32, i32, i32, i32) {
    %c0_i32 = arith.constant 0 : i32
    %c0_i32_0 = arith.constant 0 : i32
    %c0_i32_1 = arith.constant 0 : i32
    return %arg0, %arg1, %c0_i32, %c0_i32_0 : i32, i32, i32, i32
  }
}

module attributes {stable_mosaic.version = 11 : i64} {
  func.func @_down_conv_kernel(%arg0: i32, %arg1: i32, %arg2: memref<1x1x4x9x9x128xf32, #tpu.memory_space<vmem>>, %arg3: memref<9x128x128xbf16, #tpu.memory_space<vmem>>, %arg4: memref<1x8x8x128xf32, #tpu.memory_space<vmem>>, %arg5: memref<1x1x2x128xf32, #tpu.memory_space<vmem>>) attributes {dimension_semantics = [#tpu.dimension_semantics<parallel>, #tpu.dimension_semantics<parallel>], iteration_bounds = array<i64: 2, 1>, scalar_prefetch = 0 : i64, scratch_operands = 0 : i64, tpu.core_type = #tpu.core_type<tc>, window_params = [{transform_indices = @transform_0, window_bounds = array<i64: 1, 1, 4, 9, 9, 128>}, {pipeline_mode = #tpu.pipeline_mode<synchronous>, transform_indices = @transform_1, window_bounds = array<i64: 9, 128, 128>}, {transform_indices = @transform_2, window_bounds = array<i64: 1, 8, 8, 128>}, {transform_indices = @transform_3, window_bounds = array<i64: 1, 1, 2, 128>}]} {
    %cst = arith.constant 0.000000e+00 : f32
    %0 = vector.broadcast %cst : f32 to vector<64x128xf32>
    %c0 = arith.constant 0 : index
    %c0_0 = arith.constant 0 : index
    %c0_1 = arith.constant 0 : index
    %c0_2 = arith.constant 0 : index
    %c0_3 = arith.constant 0 : index
    %c0_4 = arith.constant 0 : index
    %1 = vector.load %arg2[%c0, %c0_0, %c0_1, %c0_2, %c0_3, %c0_4] : memref<1x1x4x9x9x128xf32, #tpu.memory_space<vmem>>, vector<1x1x1x8x8x128xf32>
    %2 = vector.shape_cast %1 : vector<1x1x1x8x8x128xf32> to vector<8x8x128xf32>
    %3 = vector.shape_cast %2 : vector<8x8x128xf32> to vector<64x128xf32>
    %4 = arith.truncf %3 : vector<64x128xf32> to vector<64x128xbf16>
    %c0_5 = arith.constant 0 : index
    %c0_6 = arith.constant 0 : index
    %c0_7 = arith.constant 0 : index
    %5 = vector.load %arg3[%c0_5, %c0_6, %c0_7] : memref<9x128x128xbf16, #tpu.memory_space<vmem>>, vector<1x128x128xbf16>
    %6 = vector.shape_cast %5 : vector<1x128x128xbf16> to vector<128x128xbf16>
    %cst_8 = arith.constant dense<0.000000e+00> : vector<64x128xf32>
    %7 = tpu.matmul %4, %6, %cst_8 {dimension_numbers = #tpu.dot_dimension_numbers<[1], [0], [0], [1], [0, 0, 1, 1], [], []>} : vector<64x128xbf16>, vector<128x128xbf16>, vector<64x128xf32> -> vector<64x128xf32>
    %8 = arith.addf %0, %7 : vector<64x128xf32>
    %c0_9 = arith.constant 0 : index
    %c0_10 = arith.constant 0 : index
    %c1 = arith.constant 1 : index
    %c0_11 = arith.constant 0 : index
    %c0_12 = arith.constant 0 : index
    %c0_13 = arith.constant 0 : index
    %9 = vector.load %arg2[%c0_9, %c0_10, %c1, %c0_11, %c0_12, %c0_13] : memref<1x1x4x9x9x128xf32, #tpu.memory_space<vmem>>, vector<1x1x1x8x8x128xf32>
    %10 = vector.shape_cast %9 : vector<1x1x1x8x8x128xf32> to vector<8x8x128xf32>
    %11 = vector.shape_cast %10 : vector<8x8x128xf32> to vector<64x128xf32>
    %12 = arith.truncf %11 : vector<64x128xf32> to vector<64x128xbf16>
    %c1_14 = arith.constant 1 : index
    %c0_15 = arith.constant 0 : index
    %c0_16 = arith.constant 0 : index
    %13 = vector.load %arg3[%c1_14, %c0_15, %c0_16] : memref<9x128x128xbf16, #tpu.memory_space<vmem>>, vector<1x128x128xbf16>
    %14 = vector.shape_cast %13 : vector<1x128x128xbf16> to vector<128x128xbf16>
    %cst_17 = arith.constant dense<0.000000e+00> : vector<64x128xf32>
    %15 = tpu.matmul %12, %14, %cst_17 {dimension_numbers = #tpu.dot_dimension_numbers<[1], [0], [0], [1], [0, 0, 1, 1], [], []>} : vector<64x128xbf16>, vector<128x128xbf16>, vector<64x128xf32> -> vector<64x128xf32>
    %16 = arith.addf %8, %15 : vector<64x128xf32>
    %c0_18 = arith.constant 0 : index
    %c0_19 = arith.constant 0 : index
    %c0_20 = arith.constant 0 : index
    %c0_21 = arith.constant 0 : index
    %c1_22 = arith.constant 1 : index
    %c0_23 = arith.constant 0 : index
    %17 = vector.load %arg2[%c0_18, %c0_19, %c0_20, %c0_21, %c1_22, %c0_23] : memref<1x1x4x9x9x128xf32, #tpu.memory_space<vmem>>, vector<1x1x1x8x8x128xf32>
    %18 = vector.shape_cast %17 : vector<1x1x1x8x8x128xf32> to vector<8x8x128xf32>
    %19 = vector.shape_cast %18 : vector<8x8x128xf32> to vector<64x128xf32>
    %20 = arith.truncf %19 : vector<64x128xf32> to vector<64x128xbf16>
    %c2 = arith.constant 2 : index
    %c0_24 = arith.constant 0 : index
    %c0_25 = arith.constant 0 : index
    %21 = vector.load %arg3[%c2, %c0_24, %c0_25] : memref<9x128x128xbf16, #tpu.memory_space<vmem>>, vector<1x128x128xbf16>
    %22 = vector.shape_cast %21 : vector<1x128x128xbf16> to vector<128x128xbf16>
    %cst_26 = arith.constant dense<0.000000e+00> : vector<64x128xf32>
    %23 = tpu.matmul %20, %22, %cst_26 {dimension_numbers = #tpu.dot_dimension_numbers<[1], [0], [0], [1], [0, 0, 1, 1], [], []>} : vector<64x128xbf16>, vector<128x128xbf16>, vector<64x128xf32> -> vector<64x128xf32>
    %24 = arith.addf %16, %23 : vector<64x128xf32>
    %c0_27 = arith.constant 0 : index
    %c0_28 = arith.constant 0 : index
    %c2_29 = arith.constant 2 : index
    %c0_30 = arith.constant 0 : index
    %c0_31 = arith.constant 0 : index
    %c0_32 = arith.constant 0 : index
    %25 = vector.load %arg2[%c0_27, %c0_28, %c2_29, %c0_30, %c0_31, %c0_32] : memref<1x1x4x9x9x128xf32, #tpu.memory_space<vmem>>, vector<1x1x1x8x8x128xf32>
    %26 = vector.shape_cast %25 : vector<1x1x1x8x8x128xf32> to vector<8x8x128xf32>
    %27 = vector.shape_cast %26 : vector<8x8x128xf32> to vector<64x128xf32>
    %28 = arith.truncf %27 : vector<64x128xf32> to vector<64x128xbf16>
    %c3 = arith.constant 3 : index
    %c0_33 = arith.constant 0 : index
    %c0_34 = arith.constant 0 : index
    %29 = vector.load %arg3[%c3, %c0_33, %c0_34] : memref<9x128x128xbf16, #tpu.memory_space<vmem>>, vector<1x128x128xbf16>
    %30 = vector.shape_cast %29 : vector<1x128x128xbf16> to vector<128x128xbf16>
    %cst_35 = arith.constant dense<0.000000e+00> : vector<64x128xf32>
    %31 = tpu.matmul %28, %30, %cst_35 {dimension_numbers = #tpu.dot_dimension_numbers<[1], [0], [0], [1], [0, 0, 1, 1], [], []>} : vector<64x128xbf16>, vector<128x128xbf16>, vector<64x128xf32> -> vector<64x128xf32>
    %32 = arith.addf %24, %31 : vector<64x128xf32>
    %c0_36 = arith.constant 0 : index
    %c0_37 = arith.constant 0 : index
    %c3_38 = arith.constant 3 : index
    %c0_39 = arith.constant 0 : index
    %c0_40 = arith.constant 0 : index
    %c0_41 = arith.constant 0 : index
    %33 = vector.load %arg2[%c0_36, %c0_37, %c3_38, %c0_39, %c0_40, %c0_41] : memref<1x1x4x9x9x128xf32, #tpu.memory_space<vmem>>, vector<1x1x1x8x8x128xf32>
    %34 = vector.shape_cast %33 : vector<1x1x1x8x8x128xf32> to vector<8x8x128xf32>
    %35 = vector.shape_cast %34 : vector<8x8x128xf32> to vector<64x128xf32>
    %36 = arith.truncf %35 : vector<64x128xf32> to vector<64x128xbf16>
    %c4 = arith.constant 4 : index
    %c0_42 = arith.constant 0 : index
    %c0_43 = arith.constant 0 : index
    %37 = vector.load %arg3[%c4, %c0_42, %c0_43] : memref<9x128x128xbf16, #tpu.memory_space<vmem>>, vector<1x128x128xbf16>
    %38 = vector.shape_cast %37 : vector<1x128x128xbf16> to vector<128x128xbf16>
    %cst_44 = arith.constant dense<0.000000e+00> : vector<64x128xf32>
    %39 = tpu.matmul %36, %38, %cst_44 {dimension_numbers = #tpu.dot_dimension_numbers<[1], [0], [0], [1], [0, 0, 1, 1], [], []>} : vector<64x128xbf16>, vector<128x128xbf16>, vector<64x128xf32> -> vector<64x128xf32>
    %40 = arith.addf %32, %39 : vector<64x128xf32>
    %c0_45 = arith.constant 0 : index
    %c0_46 = arith.constant 0 : index
    %c2_47 = arith.constant 2 : index
    %c0_48 = arith.constant 0 : index
    %c1_49 = arith.constant 1 : index
    %c0_50 = arith.constant 0 : index
    %41 = vector.load %arg2[%c0_45, %c0_46, %c2_47, %c0_48, %c1_49, %c0_50] : memref<1x1x4x9x9x128xf32, #tpu.memory_space<vmem>>, vector<1x1x1x8x8x128xf32>
    %42 = vector.shape_cast %41 : vector<1x1x1x8x8x128xf32> to vector<8x8x128xf32>
    %43 = vector.shape_cast %42 : vector<8x8x128xf32> to vector<64x128xf32>
    %44 = arith.truncf %43 : vector<64x128xf32> to vector<64x128xbf16>
    %c5 = arith.constant 5 : index
    %c0_51 = arith.constant 0 : index
    %c0_52 = arith.constant 0 : index
    %45 = vector.load %arg3[%c5, %c0_51, %c0_52] : memref<9x128x128xbf16, #tpu.memory_space<vmem>>, vector<1x128x128xbf16>
    %46 = vector.shape_cast %45 : vector<1x128x128xbf16> to vector<128x128xbf16>
    %cst_53 = arith.constant dense<0.000000e+00> : vector<64x128xf32>
    %47 = tpu.matmul %44, %46, %cst_53 {dimension_numbers = #tpu.dot_dimension_numbers<[1], [0], [0], [1], [0, 0, 1, 1], [], []>} : vector<64x128xbf16>, vector<128x128xbf16>, vector<64x128xf32> -> vector<64x128xf32>
    %48 = arith.addf %40, %47 : vector<64x128xf32>
    %c0_54 = arith.constant 0 : index
    %c0_55 = arith.constant 0 : index
    %c0_56 = arith.constant 0 : index
    %c1_57 = arith.constant 1 : index
    %c0_58 = arith.constant 0 : index
    %c0_59 = arith.constant 0 : index
    %49 = vector.load %arg2[%c0_54, %c0_55, %c0_56, %c1_57, %c0_58, %c0_59] : memref<1x1x4x9x9x128xf32, #tpu.memory_space<vmem>>, vector<1x1x1x8x8x128xf32>
    %50 = vector.shape_cast %49 : vector<1x1x1x8x8x128xf32> to vector<8x8x128xf32>
    %51 = vector.shape_cast %50 : vector<8x8x128xf32> to vector<64x128xf32>
    %52 = arith.truncf %51 : vector<64x128xf32> to vector<64x128xbf16>
    %c6 = arith.constant 6 : index
    %c0_60 = arith.constant 0 : index
    %c0_61 = arith.constant 0 : index
    %53 = vector.load %arg3[%c6, %c0_60, %c0_61] : memref<9x128x128xbf16, #tpu.memory_space<vmem>>, vector<1x128x128xbf16>
    %54 = vector.shape_cast %53 : vector<1x128x128xbf16> to vector<128x128xbf16>
    %cst_62 = arith.constant dense<0.000000e+00> : vector<64x128xf32>
    %55 = tpu.matmul %52, %54, %cst_62 {dimension_numbers = #tpu.dot_dimension_numbers<[1], [0], [0], [1], [0, 0, 1, 1], [], []>} : vector<64x128xbf16>, vector<128x128xbf16>, vector<64x128xf32> -> vector<64x128xf32>
    %56 = arith.addf %48, %55 : vector<64x128xf32>
    %c0_63 = arith.constant 0 : index
    %c0_64 = arith.constant 0 : index
    %c1_65 = arith.constant 1 : index
    %c1_66 = arith.constant 1 : index
    %c0_67 = arith.constant 0 : index
    %c0_68 = arith.constant 0 : index
    %57 = vector.load %arg2[%c0_63, %c0_64, %c1_65, %c1_66, %c0_67, %c0_68] : memref<1x1x4x9x9x128xf32, #tpu.memory_space<vmem>>, vector<1x1x1x8x8x128xf32>
    %58 = vector.shape_cast %57 : vector<1x1x1x8x8x128xf32> to vector<8x8x128xf32>
    %59 = vector.shape_cast %58 : vector<8x8x128xf32> to vector<64x128xf32>
    %60 = arith.truncf %59 : vector<64x128xf32> to vector<64x128xbf16>
    %c7 = arith.constant 7 : index
    %c0_69 = arith.constant 0 : index
    %c0_70 = arith.constant 0 : index
    %61 = vector.load %arg3[%c7, %c0_69, %c0_70] : memref<9x128x128xbf16, #tpu.memory_space<vmem>>, vector<1x128x128xbf16>
    %62 = vector.shape_cast %61 : vector<1x128x128xbf16> to vector<128x128xbf16>
    %cst_71 = arith.constant dense<0.000000e+00> : vector<64x128xf32>
    %63 = tpu.matmul %60, %62, %cst_71 {dimension_numbers = #tpu.dot_dimension_numbers<[1], [0], [0], [1], [0, 0, 1, 1], [], []>} : vector<64x128xbf16>, vector<128x128xbf16>, vector<64x128xf32> -> vector<64x128xf32>
    %64 = arith.addf %56, %63 : vector<64x128xf32>
    %c0_72 = arith.constant 0 : index
    %c0_73 = arith.constant 0 : index
    %c0_74 = arith.constant 0 : index
    %c1_75 = arith.constant 1 : index
    %c1_76 = arith.constant 1 : index
    %c0_77 = arith.constant 0 : index
    %65 = vector.load %arg2[%c0_72, %c0_73, %c0_74, %c1_75, %c1_76, %c0_77] : memref<1x1x4x9x9x128xf32, #tpu.memory_space<vmem>>, vector<1x1x1x8x8x128xf32>
    %66 = vector.shape_cast %65 : vector<1x1x1x8x8x128xf32> to vector<8x8x128xf32>
    %67 = vector.shape_cast %66 : vector<8x8x128xf32> to vector<64x128xf32>
    %68 = arith.truncf %67 : vector<64x128xf32> to vector<64x128xbf16>
    %c8 = arith.constant 8 : index
    %c0_78 = arith.constant 0 : index
    %c0_79 = arith.constant 0 : index
    %69 = vector.load %arg3[%c8, %c0_78, %c0_79] : memref<9x128x128xbf16, #tpu.memory_space<vmem>>, vector<1x128x128xbf16>
    %70 = vector.shape_cast %69 : vector<1x128x128xbf16> to vector<128x128xbf16>
    %cst_80 = arith.constant dense<0.000000e+00> : vector<64x128xf32>
    %71 = tpu.matmul %68, %70, %cst_80 {dimension_numbers = #tpu.dot_dimension_numbers<[1], [0], [0], [1], [0, 0, 1, 1], [], []>} : vector<64x128xbf16>, vector<128x128xbf16>, vector<64x128xf32> -> vector<64x128xf32>
    %72 = arith.addf %64, %71 : vector<64x128xf32>
    %73 = vector.shape_cast %72 : vector<64x128xf32> to vector<8x8x128xf32>
    %c0_81 = arith.constant 0 : index
    %c0_82 = arith.constant 0 : index
    %c0_83 = arith.constant 0 : index
    %c0_84 = arith.constant 0 : index
    %74 = vector.load %arg4[%c0_81, %c0_82, %c0_83, %c0_84] : memref<1x8x8x128xf32, #tpu.memory_space<vmem>>, vector<1x8x8x128xf32>
    %75 = vector.shape_cast %74 : vector<1x8x8x128xf32> to vector<8x8x128xf32>
    %76 = vector.shape_cast %73 : vector<8x8x128xf32> to vector<1x8x8x128xf32>
    tpu.vector_store %arg4[%c0_81, %c0_82, %c0_83, %c0_84], %76 {strides = array<i32>} : memref<1x8x8x128xf32, #tpu.memory_space<vmem>>, vector<1x8x8x128xf32>,
    %cst_85 = arith.constant dense<0.000000e+00> : vector<128xf32>
    %77 = vector.multi_reduction <add>, %72, %cst_85 [0] : vector<64x128xf32> to vector<128xf32>
    %78 = vector.shape_cast %77 : vector<128xf32> to vector<1x128xf32>
    %79 = arith.mulf %72, %72 : vector<64x128xf32>
    %cst_86 = arith.constant dense<0.000000e+00> : vector<128xf32>
    %80 = vector.multi_reduction <add>, %79, %cst_86 [0] : vector<64x128xf32> to vector<128xf32>
    %81 = vector.shape_cast %80 : vector<128xf32> to vector<1x128xf32>
    %82 = tpu.concatenate %78, %81 in 0 : vector<1x128xf32>, vector<1x128xf32> -> vector<2x128xf32>
    %c0_87 = arith.constant 0 : index
    %c0_88 = arith.constant 0 : index
    %c0_89 = arith.constant 0 : index
    %c0_90 = arith.constant 0 : index
    %83 = vector.load %arg5[%c0_87, %c0_88, %c0_89, %c0_90] : memref<1x1x2x128xf32, #tpu.memory_space<vmem>>, vector<1x1x2x128xf32>
    %84 = vector.shape_cast %83 : vector<1x1x2x128xf32> to vector<2x128xf32>
    %85 = vector.shape_cast %82 : vector<2x128xf32> to vector<1x1x2x128xf32>
    tpu.vector_store %arg5[%c0_87, %c0_88, %c0_89, %c0_90], %85 {strides = array<i32>} : memref<1x1x2x128xf32, #tpu.memory_space<vmem>>, vector<1x1x2x128xf32>,
    return
  }
  func.func @transform_0(%arg0: i32, %arg1: i32) -> (i32, i32, i32, i32, i32, i32) {
    %c0_i32 = arith.constant 0 : i32
    %c0_i32_0 = arith.constant 0 : i32
    %c0_i32_1 = arith.constant 0 : i32
    %c0_i32_2 = arith.constant 0 : i32
    %c0_i32_3 = arith.constant 0 : i32
    return %arg0, %arg1, %c0_i32, %c0_i32_0, %c0_i32_1, %c0_i32_2 : i32, i32, i32, i32, i32, i32
  }
  func.func @transform_1(%arg0: i32, %arg1: i32) -> (i32, i32, i32) {
    %c0_i32 = arith.constant 0 : i32
    %c0_i32_0 = arith.constant 0 : i32
    %c0_i32_1 = arith.constant 0 : i32
    %c0_i32_2 = arith.constant 0 : i32
    return %c0_i32, %c0_i32_0, %c0_i32_1 : i32, i32, i32
  }
  func.func @transform_2(%arg0: i32, %arg1: i32) -> (i32, i32, i32, i32) {
    %c0_i32 = arith.constant 0 : i32
    %c0_i32_0 = arith.constant 0 : i32
    %c0_i32_1 = arith.constant 0 : i32
    return %arg0, %arg1, %c0_i32, %c0_i32_0 : i32, i32, i32, i32
  }
  func.func @transform_3(%arg0: i32, %arg1: i32) -> (i32, i32, i32, i32) {
    %c0_i32 = arith.constant 0 : i32
    %c0_i32_0 = arith.constant 0 : i32
    %c0_i32_1 = arith.constant 0 : i32
    return %arg0, %arg1, %c0_i32, %c0_i32_0 : i32, i32, i32, i32
  }
}

module attributes {stable_mosaic.version = 11 : i64} {
  func.func @_preact_conv_kernel(%arg0: i32, %arg1: i32, %arg2: memref<1x1x10x10x128xf32, #tpu.memory_space<vmem>>, %arg3: memref<1x128xf32, #tpu.memory_space<vmem>>, %arg4: memref<1x128xf32, #tpu.memory_space<vmem>>, %arg5: memref<9x128x128xbf16, #tpu.memory_space<vmem>>, %arg6: memref<1x8x8x128xf32, #tpu.memory_space<vmem>>, %arg7: memref<1x1x2x128xf32, #tpu.memory_space<vmem>>) attributes {dimension_semantics = [#tpu.dimension_semantics<parallel>, #tpu.dimension_semantics<parallel>], iteration_bounds = array<i64: 2, 1>, scalar_prefetch = 0 : i64, scratch_operands = 0 : i64, tpu.core_type = #tpu.core_type<tc>, window_params = [{transform_indices = @transform_0, window_bounds = array<i64: 1, 1, 10, 10, 128>}, {pipeline_mode = #tpu.pipeline_mode<synchronous>, transform_indices = @transform_1, window_bounds = array<i64: 1, 128>}, {pipeline_mode = #tpu.pipeline_mode<synchronous>, transform_indices = @transform_2, window_bounds = array<i64: 1, 128>}, {pipeline_mode = #tpu.pipeline_mode<synchronous>, transform_indices = @transform_3, window_bounds = array<i64: 9, 128, 128>}, {transform_indices = @transform_4, window_bounds = array<i64: 1, 8, 8, 128>}, {transform_indices = @transform_5, window_bounds = array<i64: 1, 1, 2, 128>}]} {
    %c0 = arith.constant 0 : index
    %c0_0 = arith.constant 0 : index
    %c0_1 = arith.constant 0 : index
    %c0_2 = arith.constant 0 : index
    %c0_3 = arith.constant 0 : index
    %0 = vector.load %arg2[%c0, %c0_0, %c0_1, %c0_2, %c0_3] : memref<1x1x10x10x128xf32, #tpu.memory_space<vmem>>, vector<1x1x10x10x128xf32>
    %1 = vector.shape_cast %0 : vector<1x1x10x10x128xf32> to vector<10x10x128xf32>
    %c0_4 = arith.constant 0 : index
    %c0_5 = arith.constant 0 : index
    %2 = vector.load %arg3[%c0_4, %c0_5] : memref<1x128xf32, #tpu.memory_space<vmem>>, vector<1x128xf32>
    %3 = vector.shape_cast %2 : vector<1x128xf32> to vector<1x1x128xf32>
    %4 = vector.broadcast %3 : vector<1x1x128xf32> to vector<10x10x128xf32>
    %5 = arith.mulf %1, %4 : vector<10x10x128xf32>
    %c0_6 = arith.constant 0 : index
    %c0_7 = arith.constant 0 : index
    %6 = vector.load %arg4[%c0_6, %c0_7] : memref<1x128xf32, #tpu.memory_space<vmem>>, vector<1x128xf32>
    %7 = vector.shape_cast %6 : vector<1x128xf32> to vector<1x1x128xf32>
    %8 = vector.broadcast %7 : vector<1x1x128xf32> to vector<10x10x128xf32>
    %9 = arith.addf %5, %8 : vector<10x10x128xf32>
    %cst = arith.constant 1.000000e-01 : f32
    %10 = vector.broadcast %cst : f32 to vector<10x10x128xf32>
    %11 = arith.mulf %10, %9 : vector<10x10x128xf32>
    %12 = arith.maximumf %9, %11 : vector<10x10x128xf32>
    %13 = tpu.iota {dimensions = array<i32: 0>} : vector<10x10x128xi32>
    %c8_i32 = arith.constant 8 : i32
    %14 = arith.muli %arg1, %c8_i32 : i32
    %15 = vector.broadcast %14 : i32 to vector<10x10x128xi32>
    %16 = arith.addi %13, %15 : vector<10x10x128xi32>
    %17 = tpu.iota {dimensions = array<i32: 1>} : vector<10x10x128xi32>
    %c1_i32 = arith.constant 1 : i32
    %18 = vector.broadcast %c1_i32 : i32 to vector<10x10x128xi32>
    %19 = arith.cmpi sge, %16, %18 : vector<10x10x128xi32>
    %c8_i32_8 = arith.constant 8 : i32
    %20 = vector.broadcast %c8_i32_8 : i32 to vector<10x10x128xi32>
    %21 = arith.cmpi sle, %16, %20 : vector<10x10x128xi32>
    %22 = arith.andi %19, %21 : vector<10x10x128xi1>
    %c1_i32_9 = arith.constant 1 : i32
    %23 = vector.broadcast %c1_i32_9 : i32 to vector<10x10x128xi32>
    %24 = arith.cmpi sge, %17, %23 : vector<10x10x128xi32>
    %25 = arith.andi %22, %24 : vector<10x10x128xi1>
    %c8_i32_10 = arith.constant 8 : i32
    %26 = vector.broadcast %c8_i32_10 : i32 to vector<10x10x128xi32>
    %27 = arith.cmpi sle, %17, %26 : vector<10x10x128xi32>
    %28 = arith.andi %25, %27 : vector<10x10x128xi1>
    %cst_11 = arith.constant 0.000000e+00 : f32
    %29 = vector.broadcast %cst_11 : f32 to vector<10x10x128xf32>
    %30 = arith.select %28, %12, %29 : vector<10x10x128xi1>, vector<10x10x128xf32>
    %cst_12 = arith.constant 0.000000e+00 : f32
    %31 = vector.broadcast %cst_12 : f32 to vector<64x128xf32>
    %32 = vector.extract_strided_slice %30 {offsets = [0, 0, 0], sizes = [8, 8, 128], strides = [1, 1, 1]} : vector<10x10x128xf32> to vector<8x8x128xf32>
    %33 = vector.shape_cast %32 : vector<8x8x128xf32> to vector<64x128xf32>
    %34 = arith.truncf %33 : vector<64x128xf32> to vector<64x128xbf16>
    %c0_13 = arith.constant 0 : index
    %c0_14 = arith.constant 0 : index
    %c0_15 = arith.constant 0 : index
    %35 = vector.load %arg5[%c0_13, %c0_14, %c0_15] : memref<9x128x128xbf16, #tpu.memory_space<vmem>>, vector<1x128x128xbf16>
    %36 = vector.shape_cast %35 : vector<1x128x128xbf16> to vector<128x128xbf16>
    %cst_16 = arith.constant dense<0.000000e+00> : vector<64x128xf32>
    %37 = tpu.matmul %34, %36, %cst_16 {dimension_numbers = #tpu.dot_dimension_numbers<[1], [0], [0], [1], [0, 0, 1, 1], [], []>} : vector<64x128xbf16>, vector<128x128xbf16>, vector<64x128xf32> -> vector<64x128xf32>
    %38 = arith.addf %31, %37 : vector<64x128xf32>
    %39 = vector.extract_strided_slice %30 {offsets = [0, 1, 0], sizes = [8, 8, 128], strides = [1, 1, 1]} : vector<10x10x128xf32> to vector<8x8x128xf32>
    %40 = vector.shape_cast %39 : vector<8x8x128xf32> to vector<64x128xf32>
    %41 = arith.truncf %40 : vector<64x128xf32> to vector<64x128xbf16>
    %c1 = arith.constant 1 : index
    %c0_17 = arith.constant 0 : index
    %c0_18 = arith.constant 0 : index
    %42 = vector.load %arg5[%c1, %c0_17, %c0_18] : memref<9x128x128xbf16, #tpu.memory_space<vmem>>, vector<1x128x128xbf16>
    %43 = vector.shape_cast %42 : vector<1x128x128xbf16> to vector<128x128xbf16>
    %cst_19 = arith.constant dense<0.000000e+00> : vector<64x128xf32>
    %44 = tpu.matmul %41, %43, %cst_19 {dimension_numbers = #tpu.dot_dimension_numbers<[1], [0], [0], [1], [0, 0, 1, 1], [], []>} : vector<64x128xbf16>, vector<128x128xbf16>, vector<64x128xf32> -> vector<64x128xf32>
    %45 = arith.addf %38, %44 : vector<64x128xf32>
    %46 = vector.extract_strided_slice %30 {offsets = [0, 2, 0], sizes = [8, 8, 128], strides = [1, 1, 1]} : vector<10x10x128xf32> to vector<8x8x128xf32>
    %47 = vector.shape_cast %46 : vector<8x8x128xf32> to vector<64x128xf32>
    %48 = arith.truncf %47 : vector<64x128xf32> to vector<64x128xbf16>
    %c2 = arith.constant 2 : index
    %c0_20 = arith.constant 0 : index
    %c0_21 = arith.constant 0 : index
    %49 = vector.load %arg5[%c2, %c0_20, %c0_21] : memref<9x128x128xbf16, #tpu.memory_space<vmem>>, vector<1x128x128xbf16>
    %50 = vector.shape_cast %49 : vector<1x128x128xbf16> to vector<128x128xbf16>
    %cst_22 = arith.constant dense<0.000000e+00> : vector<64x128xf32>
    %51 = tpu.matmul %48, %50, %cst_22 {dimension_numbers = #tpu.dot_dimension_numbers<[1], [0], [0], [1], [0, 0, 1, 1], [], []>} : vector<64x128xbf16>, vector<128x128xbf16>, vector<64x128xf32> -> vector<64x128xf32>
    %52 = arith.addf %45, %51 : vector<64x128xf32>
    %53 = vector.extract_strided_slice %30 {offsets = [1, 0, 0], sizes = [8, 8, 128], strides = [1, 1, 1]} : vector<10x10x128xf32> to vector<8x8x128xf32>
    %54 = vector.shape_cast %53 : vector<8x8x128xf32> to vector<64x128xf32>
    %55 = arith.truncf %54 : vector<64x128xf32> to vector<64x128xbf16>
    %c3 = arith.constant 3 : index
    %c0_23 = arith.constant 0 : index
    %c0_24 = arith.constant 0 : index
    %56 = vector.load %arg5[%c3, %c0_23, %c0_24] : memref<9x128x128xbf16, #tpu.memory_space<vmem>>, vector<1x128x128xbf16>
    %57 = vector.shape_cast %56 : vector<1x128x128xbf16> to vector<128x128xbf16>
    %cst_25 = arith.constant dense<0.000000e+00> : vector<64x128xf32>
    %58 = tpu.matmul %55, %57, %cst_25 {dimension_numbers = #tpu.dot_dimension_numbers<[1], [0], [0], [1], [0, 0, 1, 1], [], []>} : vector<64x128xbf16>, vector<128x128xbf16>, vector<64x128xf32> -> vector<64x128xf32>
    %59 = arith.addf %52, %58 : vector<64x128xf32>
    %60 = vector.extract_strided_slice %30 {offsets = [1, 1, 0], sizes = [8, 8, 128], strides = [1, 1, 1]} : vector<10x10x128xf32> to vector<8x8x128xf32>
    %61 = vector.shape_cast %60 : vector<8x8x128xf32> to vector<64x128xf32>
    %62 = arith.truncf %61 : vector<64x128xf32> to vector<64x128xbf16>
    %c4 = arith.constant 4 : index
    %c0_26 = arith.constant 0 : index
    %c0_27 = arith.constant 0 : index
    %63 = vector.load %arg5[%c4, %c0_26, %c0_27] : memref<9x128x128xbf16, #tpu.memory_space<vmem>>, vector<1x128x128xbf16>
    %64 = vector.shape_cast %63 : vector<1x128x128xbf16> to vector<128x128xbf16>
    %cst_28 = arith.constant dense<0.000000e+00> : vector<64x128xf32>
    %65 = tpu.matmul %62, %64, %cst_28 {dimension_numbers = #tpu.dot_dimension_numbers<[1], [0], [0], [1], [0, 0, 1, 1], [], []>} : vector<64x128xbf16>, vector<128x128xbf16>, vector<64x128xf32> -> vector<64x128xf32>
    %66 = arith.addf %59, %65 : vector<64x128xf32>
    %67 = vector.extract_strided_slice %30 {offsets = [1, 2, 0], sizes = [8, 8, 128], strides = [1, 1, 1]} : vector<10x10x128xf32> to vector<8x8x128xf32>
    %68 = vector.shape_cast %67 : vector<8x8x128xf32> to vector<64x128xf32>
    %69 = arith.truncf %68 : vector<64x128xf32> to vector<64x128xbf16>
    %c5 = arith.constant 5 : index
    %c0_29 = arith.constant 0 : index
    %c0_30 = arith.constant 0 : index
    %70 = vector.load %arg5[%c5, %c0_29, %c0_30] : memref<9x128x128xbf16, #tpu.memory_space<vmem>>, vector<1x128x128xbf16>
    %71 = vector.shape_cast %70 : vector<1x128x128xbf16> to vector<128x128xbf16>
    %cst_31 = arith.constant dense<0.000000e+00> : vector<64x128xf32>
    %72 = tpu.matmul %69, %71, %cst_31 {dimension_numbers = #tpu.dot_dimension_numbers<[1], [0], [0], [1], [0, 0, 1, 1], [], []>} : vector<64x128xbf16>, vector<128x128xbf16>, vector<64x128xf32> -> vector<64x128xf32>
    %73 = arith.addf %66, %72 : vector<64x128xf32>
    %74 = vector.extract_strided_slice %30 {offsets = [2, 0, 0], sizes = [8, 8, 128], strides = [1, 1, 1]} : vector<10x10x128xf32> to vector<8x8x128xf32>
    %75 = vector.shape_cast %74 : vector<8x8x128xf32> to vector<64x128xf32>
    %76 = arith.truncf %75 : vector<64x128xf32> to vector<64x128xbf16>
    %c6 = arith.constant 6 : index
    %c0_32 = arith.constant 0 : index
    %c0_33 = arith.constant 0 : index
    %77 = vector.load %arg5[%c6, %c0_32, %c0_33] : memref<9x128x128xbf16, #tpu.memory_space<vmem>>, vector<1x128x128xbf16>
    %78 = vector.shape_cast %77 : vector<1x128x128xbf16> to vector<128x128xbf16>
    %cst_34 = arith.constant dense<0.000000e+00> : vector<64x128xf32>
    %79 = tpu.matmul %76, %78, %cst_34 {dimension_numbers = #tpu.dot_dimension_numbers<[1], [0], [0], [1], [0, 0, 1, 1], [], []>} : vector<64x128xbf16>, vector<128x128xbf16>, vector<64x128xf32> -> vector<64x128xf32>
    %80 = arith.addf %73, %79 : vector<64x128xf32>
    %81 = vector.extract_strided_slice %30 {offsets = [2, 1, 0], sizes = [8, 8, 128], strides = [1, 1, 1]} : vector<10x10x128xf32> to vector<8x8x128xf32>
    %82 = vector.shape_cast %81 : vector<8x8x128xf32> to vector<64x128xf32>
    %83 = arith.truncf %82 : vector<64x128xf32> to vector<64x128xbf16>
    %c7 = arith.constant 7 : index
    %c0_35 = arith.constant 0 : index
    %c0_36 = arith.constant 0 : index
    %84 = vector.load %arg5[%c7, %c0_35, %c0_36] : memref<9x128x128xbf16, #tpu.memory_space<vmem>>, vector<1x128x128xbf16>
    %85 = vector.shape_cast %84 : vector<1x128x128xbf16> to vector<128x128xbf16>
    %cst_37 = arith.constant dense<0.000000e+00> : vector<64x128xf32>
    %86 = tpu.matmul %83, %85, %cst_37 {dimension_numbers = #tpu.dot_dimension_numbers<[1], [0], [0], [1], [0, 0, 1, 1], [], []>} : vector<64x128xbf16>, vector<128x128xbf16>, vector<64x128xf32> -> vector<64x128xf32>
    %87 = arith.addf %80, %86 : vector<64x128xf32>
    %88 = vector.extract_strided_slice %30 {offsets = [2, 2, 0], sizes = [8, 8, 128], strides = [1, 1, 1]} : vector<10x10x128xf32> to vector<8x8x128xf32>
    %89 = vector.shape_cast %88 : vector<8x8x128xf32> to vector<64x128xf32>
    %90 = arith.truncf %89 : vector<64x128xf32> to vector<64x128xbf16>
    %c8 = arith.constant 8 : index
    %c0_38 = arith.constant 0 : index
    %c0_39 = arith.constant 0 : index
    %91 = vector.load %arg5[%c8, %c0_38, %c0_39] : memref<9x128x128xbf16, #tpu.memory_space<vmem>>, vector<1x128x128xbf16>
    %92 = vector.shape_cast %91 : vector<1x128x128xbf16> to vector<128x128xbf16>
    %cst_40 = arith.constant dense<0.000000e+00> : vector<64x128xf32>
    %93 = tpu.matmul %90, %92, %cst_40 {dimension_numbers = #tpu.dot_dimension_numbers<[1], [0], [0], [1], [0, 0, 1, 1], [], []>} : vector<64x128xbf16>, vector<128x128xbf16>, vector<64x128xf32> -> vector<64x128xf32>
    %94 = arith.addf %87, %93 : vector<64x128xf32>
    %95 = vector.shape_cast %94 : vector<64x128xf32> to vector<8x8x128xf32>
    %c0_41 = arith.constant 0 : index
    %c0_42 = arith.constant 0 : index
    %c0_43 = arith.constant 0 : index
    %c0_44 = arith.constant 0 : index
    %96 = vector.load %arg6[%c0_41, %c0_42, %c0_43, %c0_44] : memref<1x8x8x128xf32, #tpu.memory_space<vmem>>, vector<1x8x8x128xf32>
    %97 = vector.shape_cast %96 : vector<1x8x8x128xf32> to vector<8x8x128xf32>
    %98 = vector.shape_cast %95 : vector<8x8x128xf32> to vector<1x8x8x128xf32>
    tpu.vector_store %arg6[%c0_41, %c0_42, %c0_43, %c0_44], %98 {strides = array<i32>} : memref<1x8x8x128xf32, #tpu.memory_space<vmem>>, vector<1x8x8x128xf32>,
    %cst_45 = arith.constant dense<0.000000e+00> : vector<128xf32>
    %99 = vector.multi_reduction <add>, %94, %cst_45 [0] : vector<64x128xf32> to vector<128xf32>
    %100 = vector.shape_cast %99 : vector<128xf32> to vector<1x128xf32>
    %101 = arith.mulf %94, %94 : vector<64x128xf32>
    %cst_46 = arith.constant dense<0.000000e+00> : vector<128xf32>
    %102 = vector.multi_reduction <add>, %101, %cst_46 [0] : vector<64x128xf32> to vector<128xf32>
    %103 = vector.shape_cast %102 : vector<128xf32> to vector<1x128xf32>
    %104 = tpu.concatenate %100, %103 in 0 : vector<1x128xf32>, vector<1x128xf32> -> vector<2x128xf32>
    %c0_47 = arith.constant 0 : index
    %c0_48 = arith.constant 0 : index
    %c0_49 = arith.constant 0 : index
    %c0_50 = arith.constant 0 : index
    %105 = vector.load %arg7[%c0_47, %c0_48, %c0_49, %c0_50] : memref<1x1x2x128xf32, #tpu.memory_space<vmem>>, vector<1x1x2x128xf32>
    %106 = vector.shape_cast %105 : vector<1x1x2x128xf32> to vector<2x128xf32>
    %107 = vector.shape_cast %104 : vector<2x128xf32> to vector<1x1x2x128xf32>
    tpu.vector_store %arg7[%c0_47, %c0_48, %c0_49, %c0_50], %107 {strides = array<i32>} : memref<1x1x2x128xf32, #tpu.memory_space<vmem>>, vector<1x1x2x128xf32>,
    return
  }
  func.func @transform_0(%arg0: i32, %arg1: i32) -> (i32, i32, i32, i32, i32) {
    %c0_i32 = arith.constant 0 : i32
    %c0_i32_0 = arith.constant 0 : i32
    %c0_i32_1 = arith.constant 0 : i32
    %c0_i32_2 = arith.constant 0 : i32
    return %arg0, %arg1, %c0_i32, %c0_i32_0, %c0_i32_1 : i32, i32, i32, i32, i32
  }
  func.func @transform_1(%arg0: i32, %arg1: i32) -> (i32, i32) {
    %c0_i32 = arith.constant 0 : i32
    %c0_i32_0 = arith.constant 0 : i32
    %c0_i32_1 = arith.constant 0 : i32
    return %c0_i32, %c0_i32_0 : i32, i32
  }
  func.func @transform_2(%arg0: i32, %arg1: i32) -> (i32, i32) {
    %c0_i32 = arith.constant 0 : i32
    %c0_i32_0 = arith.constant 0 : i32
    %c0_i32_1 = arith.constant 0 : i32
    return %c0_i32, %c0_i32_0 : i32, i32
  }
  func.func @transform_3(%arg0: i32, %arg1: i32) -> (i32, i32, i32) {
    %c0_i32 = arith.constant 0 : i32
    %c0_i32_0 = arith.constant 0 : i32
    %c0_i32_1 = arith.constant 0 : i32
    %c0_i32_2 = arith.constant 0 : i32
    return %c0_i32, %c0_i32_0, %c0_i32_1 : i32, i32, i32
  }
  func.func @transform_4(%arg0: i32, %arg1: i32) -> (i32, i32, i32, i32) {
    %c0_i32 = arith.constant 0 : i32
    %c0_i32_0 = arith.constant 0 : i32
    %c0_i32_1 = arith.constant 0 : i32
    return %arg0, %arg1, %c0_i32, %c0_i32_0 : i32, i32, i32, i32
  }
  func.func @transform_5(%arg0: i32, %arg1: i32) -> (i32, i32, i32, i32) {
    %c0_i32 = arith.constant 0 : i32
    %c0_i32_0 = arith.constant 0 : i32
    %c0_i32_1 = arith.constant 0 : i32
    return %arg0, %arg1, %c0_i32, %c0_i32_0 : i32, i32, i32, i32
  }
}

module attributes {stable_mosaic.version = 11 : i64} {
  func.func @_preact_conv_res_kernel(%arg0: i32, %arg1: i32, %arg2: memref<1x1x10x10x128xf32, #tpu.memory_space<vmem>>, %arg3: memref<1x128xf32, #tpu.memory_space<vmem>>, %arg4: memref<1x128xf32, #tpu.memory_space<vmem>>, %arg5: memref<9x128x128xbf16, #tpu.memory_space<vmem>>, %arg6: memref<1x128xf32, #tpu.memory_space<vmem>>, %arg7: memref<1x8x8x128xf32, #tpu.memory_space<vmem>>, %arg8: memref<1x8x8x128xf32, #tpu.memory_space<vmem>>, %arg9: memref<1x1x2x128xf32, #tpu.memory_space<vmem>>) attributes {dimension_semantics = [#tpu.dimension_semantics<parallel>, #tpu.dimension_semantics<parallel>], iteration_bounds = array<i64: 2, 1>, scalar_prefetch = 0 : i64, scratch_operands = 0 : i64, tpu.core_type = #tpu.core_type<tc>, window_params = [{transform_indices = @transform_0, window_bounds = array<i64: 1, 1, 10, 10, 128>}, {pipeline_mode = #tpu.pipeline_mode<synchronous>, transform_indices = @transform_1, window_bounds = array<i64: 1, 128>}, {pipeline_mode = #tpu.pipeline_mode<synchronous>, transform_indices = @transform_2, window_bounds = array<i64: 1, 128>}, {pipeline_mode = #tpu.pipeline_mode<synchronous>, transform_indices = @transform_3, window_bounds = array<i64: 9, 128, 128>}, {pipeline_mode = #tpu.pipeline_mode<synchronous>, transform_indices = @transform_4, window_bounds = array<i64: 1, 128>}, {transform_indices = @transform_5, window_bounds = array<i64: 1, 8, 8, 128>}, {transform_indices = @transform_6, window_bounds = array<i64: 1, 8, 8, 128>}, {transform_indices = @transform_7, window_bounds = array<i64: 1, 1, 2, 128>}]} {
    %c0 = arith.constant 0 : index
    %c0_0 = arith.constant 0 : index
    %c0_1 = arith.constant 0 : index
    %c0_2 = arith.constant 0 : index
    %c0_3 = arith.constant 0 : index
    %0 = vector.load %arg2[%c0, %c0_0, %c0_1, %c0_2, %c0_3] : memref<1x1x10x10x128xf32, #tpu.memory_space<vmem>>, vector<1x1x10x10x128xf32>
    %1 = vector.shape_cast %0 : vector<1x1x10x10x128xf32> to vector<10x10x128xf32>
    %c0_4 = arith.constant 0 : index
    %c0_5 = arith.constant 0 : index
    %2 = vector.load %arg3[%c0_4, %c0_5] : memref<1x128xf32, #tpu.memory_space<vmem>>, vector<1x128xf32>
    %3 = vector.shape_cast %2 : vector<1x128xf32> to vector<1x1x128xf32>
    %4 = vector.broadcast %3 : vector<1x1x128xf32> to vector<10x10x128xf32>
    %5 = arith.mulf %1, %4 : vector<10x10x128xf32>
    %c0_6 = arith.constant 0 : index
    %c0_7 = arith.constant 0 : index
    %6 = vector.load %arg4[%c0_6, %c0_7] : memref<1x128xf32, #tpu.memory_space<vmem>>, vector<1x128xf32>
    %7 = vector.shape_cast %6 : vector<1x128xf32> to vector<1x1x128xf32>
    %8 = vector.broadcast %7 : vector<1x1x128xf32> to vector<10x10x128xf32>
    %9 = arith.addf %5, %8 : vector<10x10x128xf32>
    %cst = arith.constant 1.000000e-01 : f32
    %10 = vector.broadcast %cst : f32 to vector<10x10x128xf32>
    %11 = arith.mulf %10, %9 : vector<10x10x128xf32>
    %12 = arith.maximumf %9, %11 : vector<10x10x128xf32>
    %13 = tpu.iota {dimensions = array<i32: 0>} : vector<10x10x128xi32>
    %c8_i32 = arith.constant 8 : i32
    %14 = arith.muli %arg1, %c8_i32 : i32
    %15 = vector.broadcast %14 : i32 to vector<10x10x128xi32>
    %16 = arith.addi %13, %15 : vector<10x10x128xi32>
    %17 = tpu.iota {dimensions = array<i32: 1>} : vector<10x10x128xi32>
    %c1_i32 = arith.constant 1 : i32
    %18 = vector.broadcast %c1_i32 : i32 to vector<10x10x128xi32>
    %19 = arith.cmpi sge, %16, %18 : vector<10x10x128xi32>
    %c8_i32_8 = arith.constant 8 : i32
    %20 = vector.broadcast %c8_i32_8 : i32 to vector<10x10x128xi32>
    %21 = arith.cmpi sle, %16, %20 : vector<10x10x128xi32>
    %22 = arith.andi %19, %21 : vector<10x10x128xi1>
    %c1_i32_9 = arith.constant 1 : i32
    %23 = vector.broadcast %c1_i32_9 : i32 to vector<10x10x128xi32>
    %24 = arith.cmpi sge, %17, %23 : vector<10x10x128xi32>
    %25 = arith.andi %22, %24 : vector<10x10x128xi1>
    %c8_i32_10 = arith.constant 8 : i32
    %26 = vector.broadcast %c8_i32_10 : i32 to vector<10x10x128xi32>
    %27 = arith.cmpi sle, %17, %26 : vector<10x10x128xi32>
    %28 = arith.andi %25, %27 : vector<10x10x128xi1>
    %cst_11 = arith.constant 0.000000e+00 : f32
    %29 = vector.broadcast %cst_11 : f32 to vector<10x10x128xf32>
    %30 = arith.select %28, %12, %29 : vector<10x10x128xi1>, vector<10x10x128xf32>
    %cst_12 = arith.constant 0.000000e+00 : f32
    %31 = vector.broadcast %cst_12 : f32 to vector<64x128xf32>
    %32 = vector.extract_strided_slice %30 {offsets = [0, 0, 0], sizes = [8, 8, 128], strides = [1, 1, 1]} : vector<10x10x128xf32> to vector<8x8x128xf32>
    %33 = vector.shape_cast %32 : vector<8x8x128xf32> to vector<64x128xf32>
    %34 = arith.truncf %33 : vector<64x128xf32> to vector<64x128xbf16>
    %c0_13 = arith.constant 0 : index
    %c0_14 = arith.constant 0 : index
    %c0_15 = arith.constant 0 : index
    %35 = vector.load %arg5[%c0_13, %c0_14, %c0_15] : memref<9x128x128xbf16, #tpu.memory_space<vmem>>, vector<1x128x128xbf16>
    %36 = vector.shape_cast %35 : vector<1x128x128xbf16> to vector<128x128xbf16>
    %cst_16 = arith.constant dense<0.000000e+00> : vector<64x128xf32>
    %37 = tpu.matmul %34, %36, %cst_16 {dimension_numbers = #tpu.dot_dimension_numbers<[1], [0], [0], [1], [0, 0, 1, 1], [], []>} : vector<64x128xbf16>, vector<128x128xbf16>, vector<64x128xf32> -> vector<64x128xf32>
    %38 = arith.addf %31, %37 : vector<64x128xf32>
    %39 = vector.extract_strided_slice %30 {offsets = [0, 1, 0], sizes = [8, 8, 128], strides = [1, 1, 1]} : vector<10x10x128xf32> to vector<8x8x128xf32>
    %40 = vector.shape_cast %39 : vector<8x8x128xf32> to vector<64x128xf32>
    %41 = arith.truncf %40 : vector<64x128xf32> to vector<64x128xbf16>
    %c1 = arith.constant 1 : index
    %c0_17 = arith.constant 0 : index
    %c0_18 = arith.constant 0 : index
    %42 = vector.load %arg5[%c1, %c0_17, %c0_18] : memref<9x128x128xbf16, #tpu.memory_space<vmem>>, vector<1x128x128xbf16>
    %43 = vector.shape_cast %42 : vector<1x128x128xbf16> to vector<128x128xbf16>
    %cst_19 = arith.constant dense<0.000000e+00> : vector<64x128xf32>
    %44 = tpu.matmul %41, %43, %cst_19 {dimension_numbers = #tpu.dot_dimension_numbers<[1], [0], [0], [1], [0, 0, 1, 1], [], []>} : vector<64x128xbf16>, vector<128x128xbf16>, vector<64x128xf32> -> vector<64x128xf32>
    %45 = arith.addf %38, %44 : vector<64x128xf32>
    %46 = vector.extract_strided_slice %30 {offsets = [0, 2, 0], sizes = [8, 8, 128], strides = [1, 1, 1]} : vector<10x10x128xf32> to vector<8x8x128xf32>
    %47 = vector.shape_cast %46 : vector<8x8x128xf32> to vector<64x128xf32>
    %48 = arith.truncf %47 : vector<64x128xf32> to vector<64x128xbf16>
    %c2 = arith.constant 2 : index
    %c0_20 = arith.constant 0 : index
    %c0_21 = arith.constant 0 : index
    %49 = vector.load %arg5[%c2, %c0_20, %c0_21] : memref<9x128x128xbf16, #tpu.memory_space<vmem>>, vector<1x128x128xbf16>
    %50 = vector.shape_cast %49 : vector<1x128x128xbf16> to vector<128x128xbf16>
    %cst_22 = arith.constant dense<0.000000e+00> : vector<64x128xf32>
    %51 = tpu.matmul %48, %50, %cst_22 {dimension_numbers = #tpu.dot_dimension_numbers<[1], [0], [0], [1], [0, 0, 1, 1], [], []>} : vector<64x128xbf16>, vector<128x128xbf16>, vector<64x128xf32> -> vector<64x128xf32>
    %52 = arith.addf %45, %51 : vector<64x128xf32>
    %53 = vector.extract_strided_slice %30 {offsets = [1, 0, 0], sizes = [8, 8, 128], strides = [1, 1, 1]} : vector<10x10x128xf32> to vector<8x8x128xf32>
    %54 = vector.shape_cast %53 : vector<8x8x128xf32> to vector<64x128xf32>
    %55 = arith.truncf %54 : vector<64x128xf32> to vector<64x128xbf16>
    %c3 = arith.constant 3 : index
    %c0_23 = arith.constant 0 : index
    %c0_24 = arith.constant 0 : index
    %56 = vector.load %arg5[%c3, %c0_23, %c0_24] : memref<9x128x128xbf16, #tpu.memory_space<vmem>>, vector<1x128x128xbf16>
    %57 = vector.shape_cast %56 : vector<1x128x128xbf16> to vector<128x128xbf16>
    %cst_25 = arith.constant dense<0.000000e+00> : vector<64x128xf32>
    %58 = tpu.matmul %55, %57, %cst_25 {dimension_numbers = #tpu.dot_dimension_numbers<[1], [0], [0], [1], [0, 0, 1, 1], [], []>} : vector<64x128xbf16>, vector<128x128xbf16>, vector<64x128xf32> -> vector<64x128xf32>
    %59 = arith.addf %52, %58 : vector<64x128xf32>
    %60 = vector.extract_strided_slice %30 {offsets = [1, 1, 0], sizes = [8, 8, 128], strides = [1, 1, 1]} : vector<10x10x128xf32> to vector<8x8x128xf32>
    %61 = vector.shape_cast %60 : vector<8x8x128xf32> to vector<64x128xf32>
    %62 = arith.truncf %61 : vector<64x128xf32> to vector<64x128xbf16>
    %c4 = arith.constant 4 : index
    %c0_26 = arith.constant 0 : index
    %c0_27 = arith.constant 0 : index
    %63 = vector.load %arg5[%c4, %c0_26, %c0_27] : memref<9x128x128xbf16, #tpu.memory_space<vmem>>, vector<1x128x128xbf16>
    %64 = vector.shape_cast %63 : vector<1x128x128xbf16> to vector<128x128xbf16>
    %cst_28 = arith.constant dense<0.000000e+00> : vector<64x128xf32>
    %65 = tpu.matmul %62, %64, %cst_28 {dimension_numbers = #tpu.dot_dimension_numbers<[1], [0], [0], [1], [0, 0, 1, 1], [], []>} : vector<64x128xbf16>, vector<128x128xbf16>, vector<64x128xf32> -> vector<64x128xf32>
    %66 = arith.addf %59, %65 : vector<64x128xf32>
    %67 = vector.extract_strided_slice %30 {offsets = [1, 2, 0], sizes = [8, 8, 128], strides = [1, 1, 1]} : vector<10x10x128xf32> to vector<8x8x128xf32>
    %68 = vector.shape_cast %67 : vector<8x8x128xf32> to vector<64x128xf32>
    %69 = arith.truncf %68 : vector<64x128xf32> to vector<64x128xbf16>
    %c5 = arith.constant 5 : index
    %c0_29 = arith.constant 0 : index
    %c0_30 = arith.constant 0 : index
    %70 = vector.load %arg5[%c5, %c0_29, %c0_30] : memref<9x128x128xbf16, #tpu.memory_space<vmem>>, vector<1x128x128xbf16>
    %71 = vector.shape_cast %70 : vector<1x128x128xbf16> to vector<128x128xbf16>
    %cst_31 = arith.constant dense<0.000000e+00> : vector<64x128xf32>
    %72 = tpu.matmul %69, %71, %cst_31 {dimension_numbers = #tpu.dot_dimension_numbers<[1], [0], [0], [1], [0, 0, 1, 1], [], []>} : vector<64x128xbf16>, vector<128x128xbf16>, vector<64x128xf32> -> vector<64x128xf32>
    %73 = arith.addf %66, %72 : vector<64x128xf32>
    %74 = vector.extract_strided_slice %30 {offsets = [2, 0, 0], sizes = [8, 8, 128], strides = [1, 1, 1]} : vector<10x10x128xf32> to vector<8x8x128xf32>
    %75 = vector.shape_cast %74 : vector<8x8x128xf32> to vector<64x128xf32>
    %76 = arith.truncf %75 : vector<64x128xf32> to vector<64x128xbf16>
    %c6 = arith.constant 6 : index
    %c0_32 = arith.constant 0 : index
    %c0_33 = arith.constant 0 : index
    %77 = vector.load %arg5[%c6, %c0_32, %c0_33] : memref<9x128x128xbf16, #tpu.memory_space<vmem>>, vector<1x128x128xbf16>
    %78 = vector.shape_cast %77 : vector<1x128x128xbf16> to vector<128x128xbf16>
    %cst_34 = arith.constant dense<0.000000e+00> : vector<64x128xf32>
    %79 = tpu.matmul %76, %78, %cst_34 {dimension_numbers = #tpu.dot_dimension_numbers<[1], [0], [0], [1], [0, 0, 1, 1], [], []>} : vector<64x128xbf16>, vector<128x128xbf16>, vector<64x128xf32> -> vector<64x128xf32>
    %80 = arith.addf %73, %79 : vector<64x128xf32>
    %81 = vector.extract_strided_slice %30 {offsets = [2, 1, 0], sizes = [8, 8, 128], strides = [1, 1, 1]} : vector<10x10x128xf32> to vector<8x8x128xf32>
    %82 = vector.shape_cast %81 : vector<8x8x128xf32> to vector<64x128xf32>
    %83 = arith.truncf %82 : vector<64x128xf32> to vector<64x128xbf16>
    %c7 = arith.constant 7 : index
    %c0_35 = arith.constant 0 : index
    %c0_36 = arith.constant 0 : index
    %84 = vector.load %arg5[%c7, %c0_35, %c0_36] : memref<9x128x128xbf16, #tpu.memory_space<vmem>>, vector<1x128x128xbf16>
    %85 = vector.shape_cast %84 : vector<1x128x128xbf16> to vector<128x128xbf16>
    %cst_37 = arith.constant dense<0.000000e+00> : vector<64x128xf32>
    %86 = tpu.matmul %83, %85, %cst_37 {dimension_numbers = #tpu.dot_dimension_numbers<[1], [0], [0], [1], [0, 0, 1, 1], [], []>} : vector<64x128xbf16>, vector<128x128xbf16>, vector<64x128xf32> -> vector<64x128xf32>
    %87 = arith.addf %80, %86 : vector<64x128xf32>
    %88 = vector.extract_strided_slice %30 {offsets = [2, 2, 0], sizes = [8, 8, 128], strides = [1, 1, 1]} : vector<10x10x128xf32> to vector<8x8x128xf32>
    %89 = vector.shape_cast %88 : vector<8x8x128xf32> to vector<64x128xf32>
    %90 = arith.truncf %89 : vector<64x128xf32> to vector<64x128xbf16>
    %c8 = arith.constant 8 : index
    %c0_38 = arith.constant 0 : index
    %c0_39 = arith.constant 0 : index
    %91 = vector.load %arg5[%c8, %c0_38, %c0_39] : memref<9x128x128xbf16, #tpu.memory_space<vmem>>, vector<1x128x128xbf16>
    %92 = vector.shape_cast %91 : vector<1x128x128xbf16> to vector<128x128xbf16>
    %cst_40 = arith.constant dense<0.000000e+00> : vector<64x128xf32>
    %93 = tpu.matmul %90, %92, %cst_40 {dimension_numbers = #tpu.dot_dimension_numbers<[1], [0], [0], [1], [0, 0, 1, 1], [], []>} : vector<64x128xbf16>, vector<128x128xbf16>, vector<64x128xf32> -> vector<64x128xf32>
    %94 = arith.addf %87, %93 : vector<64x128xf32>
    %c0_41 = arith.constant 0 : index
    %c0_42 = arith.constant 0 : index
    %95 = vector.load %arg6[%c0_41, %c0_42] : memref<1x128xf32, #tpu.memory_space<vmem>>, vector<1x128xf32>
    %96 = vector.broadcast %95 : vector<1x128xf32> to vector<64x128xf32>
    %97 = arith.addf %94, %96 : vector<64x128xf32>
    %c0_43 = arith.constant 0 : index
    %c0_44 = arith.constant 0 : index
    %c0_45 = arith.constant 0 : index
    %c0_46 = arith.constant 0 : index
    %98 = vector.load %arg7[%c0_43, %c0_44, %c0_45, %c0_46] : memref<1x8x8x128xf32, #tpu.memory_space<vmem>>, vector<1x8x8x128xf32>
    %99 = vector.shape_cast %98 : vector<1x8x8x128xf32> to vector<8x8x128xf32>
    %100 = vector.shape_cast %99 : vector<8x8x128xf32> to vector<64x128xf32>
    %101 = arith.addf %97, %100 : vector<64x128xf32>
    %102 = vector.shape_cast %101 : vector<64x128xf32> to vector<8x8x128xf32>
    %c0_47 = arith.constant 0 : index
    %c0_48 = arith.constant 0 : index
    %c0_49 = arith.constant 0 : index
    %c0_50 = arith.constant 0 : index
    %103 = vector.load %arg8[%c0_47, %c0_48, %c0_49, %c0_50] : memref<1x8x8x128xf32, #tpu.memory_space<vmem>>, vector<1x8x8x128xf32>
    %104 = vector.shape_cast %103 : vector<1x8x8x128xf32> to vector<8x8x128xf32>
    %105 = vector.shape_cast %102 : vector<8x8x128xf32> to vector<1x8x8x128xf32>
    tpu.vector_store %arg8[%c0_47, %c0_48, %c0_49, %c0_50], %105 {strides = array<i32>} : memref<1x8x8x128xf32, #tpu.memory_space<vmem>>, vector<1x8x8x128xf32>,
    %cst_51 = arith.constant dense<0.000000e+00> : vector<128xf32>
    %106 = vector.multi_reduction <add>, %101, %cst_51 [0] : vector<64x128xf32> to vector<128xf32>
    %107 = vector.shape_cast %106 : vector<128xf32> to vector<1x128xf32>
    %108 = arith.mulf %101, %101 : vector<64x128xf32>
    %cst_52 = arith.constant dense<0.000000e+00> : vector<128xf32>
    %109 = vector.multi_reduction <add>, %108, %cst_52 [0] : vector<64x128xf32> to vector<128xf32>
    %110 = vector.shape_cast %109 : vector<128xf32> to vector<1x128xf32>
    %111 = tpu.concatenate %107, %110 in 0 : vector<1x128xf32>, vector<1x128xf32> -> vector<2x128xf32>
    %c0_53 = arith.constant 0 : index
    %c0_54 = arith.constant 0 : index
    %c0_55 = arith.constant 0 : index
    %c0_56 = arith.constant 0 : index
    %112 = vector.load %arg9[%c0_53, %c0_54, %c0_55, %c0_56] : memref<1x1x2x128xf32, #tpu.memory_space<vmem>>, vector<1x1x2x128xf32>
    %113 = vector.shape_cast %112 : vector<1x1x2x128xf32> to vector<2x128xf32>
    %114 = vector.shape_cast %111 : vector<2x128xf32> to vector<1x1x2x128xf32>
    tpu.vector_store %arg9[%c0_53, %c0_54, %c0_55, %c0_56], %114 {strides = array<i32>} : memref<1x1x2x128xf32, #tpu.memory_space<vmem>>, vector<1x1x2x128xf32>,
    return
  }
  func.func @transform_0(%arg0: i32, %arg1: i32) -> (i32, i32, i32, i32, i32) {
    %c0_i32 = arith.constant 0 : i32
    %c0_i32_0 = arith.constant 0 : i32
    %c0_i32_1 = arith.constant 0 : i32
    %c0_i32_2 = arith.constant 0 : i32
    return %arg0, %arg1, %c0_i32, %c0_i32_0, %c0_i32_1 : i32, i32, i32, i32, i32
  }
  func.func @transform_1(%arg0: i32, %arg1: i32) -> (i32, i32) {
    %c0_i32 = arith.constant 0 : i32
    %c0_i32_0 = arith.constant 0 : i32
    %c0_i32_1 = arith.constant 0 : i32
    return %c0_i32, %c0_i32_0 : i32, i32
  }
  func.func @transform_2(%arg0: i32, %arg1: i32) -> (i32, i32) {
    %c0_i32 = arith.constant 0 : i32
    %c0_i32_0 = arith.constant 0 : i32
    %c0_i32_1 = arith.constant 0 : i32
    return %c0_i32, %c0_i32_0 : i32, i32
  }
  func.func @transform_3(%arg0: i32, %arg1: i32) -> (i32, i32, i32) {
    %c0_i32 = arith.constant 0 : i32
    %c0_i32_0 = arith.constant 0 : i32
    %c0_i32_1 = arith.constant 0 : i32
    %c0_i32_2 = arith.constant 0 : i32
    return %c0_i32, %c0_i32_0, %c0_i32_1 : i32, i32, i32
  }
  func.func @transform_4(%arg0: i32, %arg1: i32) -> (i32, i32) {
    %c0_i32 = arith.constant 0 : i32
    %c0_i32_0 = arith.constant 0 : i32
    %c0_i32_1 = arith.constant 0 : i32
    return %c0_i32, %c0_i32_0 : i32, i32
  }
  func.func @transform_5(%arg0: i32, %arg1: i32) -> (i32, i32, i32, i32) {
    %c0_i32 = arith.constant 0 : i32
    %c0_i32_0 = arith.constant 0 : i32
    %c0_i32_1 = arith.constant 0 : i32
    return %arg0, %arg1, %c0_i32, %c0_i32_0 : i32, i32, i32, i32
  }
  func.func @transform_6(%arg0: i32, %arg1: i32) -> (i32, i32, i32, i32) {
    %c0_i32 = arith.constant 0 : i32
    %c0_i32_0 = arith.constant 0 : i32
    %c0_i32_1 = arith.constant 0 : i32
    return %arg0, %arg1, %c0_i32, %c0_i32_0 : i32, i32, i32, i32
  }
  func.func @transform_7(%arg0: i32, %arg1: i32) -> (i32, i32, i32, i32) {
    %c0_i32 = arith.constant 0 : i32
    %c0_i32_0 = arith.constant 0 : i32
    %c0_i32_1 = arith.constant 0 : i32
    return %arg0, %arg1, %c0_i32, %c0_i32_0 : i32, i32, i32, i32
  }
}

module attributes {stable_mosaic.version = 11 : i64} {
  func.func @_preact_conv_res_kernel(%arg0: i32, %arg1: i32, %arg2: memref<1x1x10x10x128xf32, #tpu.memory_space<vmem>>, %arg3: memref<1x128xf32, #tpu.memory_space<vmem>>, %arg4: memref<1x128xf32, #tpu.memory_space<vmem>>, %arg5: memref<9x128x128xbf16, #tpu.memory_space<vmem>>, %arg6: memref<1x128xf32, #tpu.memory_space<vmem>>, %arg7: memref<1x8x8x128xf32, #tpu.memory_space<vmem>>, %arg8: memref<1x8x8x128xf32, #tpu.memory_space<vmem>>, %arg9: memref<1x1x2x128xf32, #tpu.memory_space<vmem>>) attributes {dimension_semantics = [#tpu.dimension_semantics<parallel>, #tpu.dimension_semantics<parallel>], iteration_bounds = array<i64: 2, 1>, scalar_prefetch = 0 : i64, scratch_operands = 0 : i64, tpu.core_type = #tpu.core_type<tc>, window_params = [{transform_indices = @transform_0, window_bounds = array<i64: 1, 1, 10, 10, 128>}, {pipeline_mode = #tpu.pipeline_mode<synchronous>, transform_indices = @transform_1, window_bounds = array<i64: 1, 128>}, {pipeline_mode = #tpu.pipeline_mode<synchronous>, transform_indices = @transform_2, window_bounds = array<i64: 1, 128>}, {pipeline_mode = #tpu.pipeline_mode<synchronous>, transform_indices = @transform_3, window_bounds = array<i64: 9, 128, 128>}, {pipeline_mode = #tpu.pipeline_mode<synchronous>, transform_indices = @transform_4, window_bounds = array<i64: 1, 128>}, {transform_indices = @transform_5, window_bounds = array<i64: 1, 8, 8, 128>}, {transform_indices = @transform_6, window_bounds = array<i64: 1, 8, 8, 128>}, {transform_indices = @transform_7, window_bounds = array<i64: 1, 1, 2, 128>}]} {
    %c0 = arith.constant 0 : index
    %c0_0 = arith.constant 0 : index
    %c0_1 = arith.constant 0 : index
    %c0_2 = arith.constant 0 : index
    %c0_3 = arith.constant 0 : index
    %0 = vector.load %arg2[%c0, %c0_0, %c0_1, %c0_2, %c0_3] : memref<1x1x10x10x128xf32, #tpu.memory_space<vmem>>, vector<1x1x10x10x128xf32>
    %1 = vector.shape_cast %0 : vector<1x1x10x10x128xf32> to vector<10x10x128xf32>
    %c0_4 = arith.constant 0 : index
    %c0_5 = arith.constant 0 : index
    %2 = vector.load %arg3[%c0_4, %c0_5] : memref<1x128xf32, #tpu.memory_space<vmem>>, vector<1x128xf32>
    %3 = vector.shape_cast %2 : vector<1x128xf32> to vector<1x1x128xf32>
    %4 = vector.broadcast %3 : vector<1x1x128xf32> to vector<10x10x128xf32>
    %5 = arith.mulf %1, %4 : vector<10x10x128xf32>
    %c0_6 = arith.constant 0 : index
    %c0_7 = arith.constant 0 : index
    %6 = vector.load %arg4[%c0_6, %c0_7] : memref<1x128xf32, #tpu.memory_space<vmem>>, vector<1x128xf32>
    %7 = vector.shape_cast %6 : vector<1x128xf32> to vector<1x1x128xf32>
    %8 = vector.broadcast %7 : vector<1x1x128xf32> to vector<10x10x128xf32>
    %9 = arith.addf %5, %8 : vector<10x10x128xf32>
    %cst = arith.constant 1.000000e-01 : f32
    %10 = vector.broadcast %cst : f32 to vector<10x10x128xf32>
    %11 = arith.mulf %10, %9 : vector<10x10x128xf32>
    %12 = arith.maximumf %9, %11 : vector<10x10x128xf32>
    %13 = tpu.iota {dimensions = array<i32: 0>} : vector<10x10x128xi32>
    %c8_i32 = arith.constant 8 : i32
    %14 = arith.muli %arg1, %c8_i32 : i32
    %15 = vector.broadcast %14 : i32 to vector<10x10x128xi32>
    %16 = arith.addi %13, %15 : vector<10x10x128xi32>
    %17 = tpu.iota {dimensions = array<i32: 1>} : vector<10x10x128xi32>
    %c1_i32 = arith.constant 1 : i32
    %18 = vector.broadcast %c1_i32 : i32 to vector<10x10x128xi32>
    %19 = arith.cmpi sge, %16, %18 : vector<10x10x128xi32>
    %c8_i32_8 = arith.constant 8 : i32
    %20 = vector.broadcast %c8_i32_8 : i32 to vector<10x10x128xi32>
    %21 = arith.cmpi sle, %16, %20 : vector<10x10x128xi32>
    %22 = arith.andi %19, %21 : vector<10x10x128xi1>
    %c1_i32_9 = arith.constant 1 : i32
    %23 = vector.broadcast %c1_i32_9 : i32 to vector<10x10x128xi32>
    %24 = arith.cmpi sge, %17, %23 : vector<10x10x128xi32>
    %25 = arith.andi %22, %24 : vector<10x10x128xi1>
    %c8_i32_10 = arith.constant 8 : i32
    %26 = vector.broadcast %c8_i32_10 : i32 to vector<10x10x128xi32>
    %27 = arith.cmpi sle, %17, %26 : vector<10x10x128xi32>
    %28 = arith.andi %25, %27 : vector<10x10x128xi1>
    %cst_11 = arith.constant 0.000000e+00 : f32
    %29 = vector.broadcast %cst_11 : f32 to vector<10x10x128xf32>
    %30 = arith.select %28, %12, %29 : vector<10x10x128xi1>, vector<10x10x128xf32>
    %cst_12 = arith.constant 0.000000e+00 : f32
    %31 = vector.broadcast %cst_12 : f32 to vector<64x128xf32>
    %32 = vector.extract_strided_slice %30 {offsets = [0, 0, 0], sizes = [8, 8, 128], strides = [1, 1, 1]} : vector<10x10x128xf32> to vector<8x8x128xf32>
    %33 = vector.shape_cast %32 : vector<8x8x128xf32> to vector<64x128xf32>
    %34 = arith.truncf %33 : vector<64x128xf32> to vector<64x128xbf16>
    %c0_13 = arith.constant 0 : index
    %c0_14 = arith.constant 0 : index
    %c0_15 = arith.constant 0 : index
    %35 = vector.load %arg5[%c0_13, %c0_14, %c0_15] : memref<9x128x128xbf16, #tpu.memory_space<vmem>>, vector<1x128x128xbf16>
    %36 = vector.shape_cast %35 : vector<1x128x128xbf16> to vector<128x128xbf16>
    %cst_16 = arith.constant dense<0.000000e+00> : vector<64x128xf32>
    %37 = tpu.matmul %34, %36, %cst_16 {dimension_numbers = #tpu.dot_dimension_numbers<[1], [0], [0], [1], [0, 0, 1, 1], [], []>} : vector<64x128xbf16>, vector<128x128xbf16>, vector<64x128xf32> -> vector<64x128xf32>
    %38 = arith.addf %31, %37 : vector<64x128xf32>
    %39 = vector.extract_strided_slice %30 {offsets = [0, 1, 0], sizes = [8, 8, 128], strides = [1, 1, 1]} : vector<10x10x128xf32> to vector<8x8x128xf32>
    %40 = vector.shape_cast %39 : vector<8x8x128xf32> to vector<64x128xf32>
    %41 = arith.truncf %40 : vector<64x128xf32> to vector<64x128xbf16>
    %c1 = arith.constant 1 : index
    %c0_17 = arith.constant 0 : index
    %c0_18 = arith.constant 0 : index
    %42 = vector.load %arg5[%c1, %c0_17, %c0_18] : memref<9x128x128xbf16, #tpu.memory_space<vmem>>, vector<1x128x128xbf16>
    %43 = vector.shape_cast %42 : vector<1x128x128xbf16> to vector<128x128xbf16>
    %cst_19 = arith.constant dense<0.000000e+00> : vector<64x128xf32>
    %44 = tpu.matmul %41, %43, %cst_19 {dimension_numbers = #tpu.dot_dimension_numbers<[1], [0], [0], [1], [0, 0, 1, 1], [], []>} : vector<64x128xbf16>, vector<128x128xbf16>, vector<64x128xf32> -> vector<64x128xf32>
    %45 = arith.addf %38, %44 : vector<64x128xf32>
    %46 = vector.extract_strided_slice %30 {offsets = [0, 2, 0], sizes = [8, 8, 128], strides = [1, 1, 1]} : vector<10x10x128xf32> to vector<8x8x128xf32>
    %47 = vector.shape_cast %46 : vector<8x8x128xf32> to vector<64x128xf32>
    %48 = arith.truncf %47 : vector<64x128xf32> to vector<64x128xbf16>
    %c2 = arith.constant 2 : index
    %c0_20 = arith.constant 0 : index
    %c0_21 = arith.constant 0 : index
    %49 = vector.load %arg5[%c2, %c0_20, %c0_21] : memref<9x128x128xbf16, #tpu.memory_space<vmem>>, vector<1x128x128xbf16>
    %50 = vector.shape_cast %49 : vector<1x128x128xbf16> to vector<128x128xbf16>
    %cst_22 = arith.constant dense<0.000000e+00> : vector<64x128xf32>
    %51 = tpu.matmul %48, %50, %cst_22 {dimension_numbers = #tpu.dot_dimension_numbers<[1], [0], [0], [1], [0, 0, 1, 1], [], []>} : vector<64x128xbf16>, vector<128x128xbf16>, vector<64x128xf32> -> vector<64x128xf32>
    %52 = arith.addf %45, %51 : vector<64x128xf32>
    %53 = vector.extract_strided_slice %30 {offsets = [1, 0, 0], sizes = [8, 8, 128], strides = [1, 1, 1]} : vector<10x10x128xf32> to vector<8x8x128xf32>
    %54 = vector.shape_cast %53 : vector<8x8x128xf32> to vector<64x128xf32>
    %55 = arith.truncf %54 : vector<64x128xf32> to vector<64x128xbf16>
    %c3 = arith.constant 3 : index
    %c0_23 = arith.constant 0 : index
    %c0_24 = arith.constant 0 : index
    %56 = vector.load %arg5[%c3, %c0_23, %c0_24] : memref<9x128x128xbf16, #tpu.memory_space<vmem>>, vector<1x128x128xbf16>
    %57 = vector.shape_cast %56 : vector<1x128x128xbf16> to vector<128x128xbf16>
    %cst_25 = arith.constant dense<0.000000e+00> : vector<64x128xf32>
    %58 = tpu.matmul %55, %57, %cst_25 {dimension_numbers = #tpu.dot_dimension_numbers<[1], [0], [0], [1], [0, 0, 1, 1], [], []>} : vector<64x128xbf16>, vector<128x128xbf16>, vector<64x128xf32> -> vector<64x128xf32>
    %59 = arith.addf %52, %58 : vector<64x128xf32>
    %60 = vector.extract_strided_slice %30 {offsets = [1, 1, 0], sizes = [8, 8, 128], strides = [1, 1, 1]} : vector<10x10x128xf32> to vector<8x8x128xf32>
    %61 = vector.shape_cast %60 : vector<8x8x128xf32> to vector<64x128xf32>
    %62 = arith.truncf %61 : vector<64x128xf32> to vector<64x128xbf16>
    %c4 = arith.constant 4 : index
    %c0_26 = arith.constant 0 : index
    %c0_27 = arith.constant 0 : index
    %63 = vector.load %arg5[%c4, %c0_26, %c0_27] : memref<9x128x128xbf16, #tpu.memory_space<vmem>>, vector<1x128x128xbf16>
    %64 = vector.shape_cast %63 : vector<1x128x128xbf16> to vector<128x128xbf16>
    %cst_28 = arith.constant dense<0.000000e+00> : vector<64x128xf32>
    %65 = tpu.matmul %62, %64, %cst_28 {dimension_numbers = #tpu.dot_dimension_numbers<[1], [0], [0], [1], [0, 0, 1, 1], [], []>} : vector<64x128xbf16>, vector<128x128xbf16>, vector<64x128xf32> -> vector<64x128xf32>
    %66 = arith.addf %59, %65 : vector<64x128xf32>
    %67 = vector.extract_strided_slice %30 {offsets = [1, 2, 0], sizes = [8, 8, 128], strides = [1, 1, 1]} : vector<10x10x128xf32> to vector<8x8x128xf32>
    %68 = vector.shape_cast %67 : vector<8x8x128xf32> to vector<64x128xf32>
    %69 = arith.truncf %68 : vector<64x128xf32> to vector<64x128xbf16>
    %c5 = arith.constant 5 : index
    %c0_29 = arith.constant 0 : index
    %c0_30 = arith.constant 0 : index
    %70 = vector.load %arg5[%c5, %c0_29, %c0_30] : memref<9x128x128xbf16, #tpu.memory_space<vmem>>, vector<1x128x128xbf16>
    %71 = vector.shape_cast %70 : vector<1x128x128xbf16> to vector<128x128xbf16>
    %cst_31 = arith.constant dense<0.000000e+00> : vector<64x128xf32>
    %72 = tpu.matmul %69, %71, %cst_31 {dimension_numbers = #tpu.dot_dimension_numbers<[1], [0], [0], [1], [0, 0, 1, 1], [], []>} : vector<64x128xbf16>, vector<128x128xbf16>, vector<64x128xf32> -> vector<64x128xf32>
    %73 = arith.addf %66, %72 : vector<64x128xf32>
    %74 = vector.extract_strided_slice %30 {offsets = [2, 0, 0], sizes = [8, 8, 128], strides = [1, 1, 1]} : vector<10x10x128xf32> to vector<8x8x128xf32>
    %75 = vector.shape_cast %74 : vector<8x8x128xf32> to vector<64x128xf32>
    %76 = arith.truncf %75 : vector<64x128xf32> to vector<64x128xbf16>
    %c6 = arith.constant 6 : index
    %c0_32 = arith.constant 0 : index
    %c0_33 = arith.constant 0 : index
    %77 = vector.load %arg5[%c6, %c0_32, %c0_33] : memref<9x128x128xbf16, #tpu.memory_space<vmem>>, vector<1x128x128xbf16>
    %78 = vector.shape_cast %77 : vector<1x128x128xbf16> to vector<128x128xbf16>
    %cst_34 = arith.constant dense<0.000000e+00> : vector<64x128xf32>
    %79 = tpu.matmul %76, %78, %cst_34 {dimension_numbers = #tpu.dot_dimension_numbers<[1], [0], [0], [1], [0, 0, 1, 1], [], []>} : vector<64x128xbf16>, vector<128x128xbf16>, vector<64x128xf32> -> vector<64x128xf32>
    %80 = arith.addf %73, %79 : vector<64x128xf32>
    %81 = vector.extract_strided_slice %30 {offsets = [2, 1, 0], sizes = [8, 8, 128], strides = [1, 1, 1]} : vector<10x10x128xf32> to vector<8x8x128xf32>
    %82 = vector.shape_cast %81 : vector<8x8x128xf32> to vector<64x128xf32>
    %83 = arith.truncf %82 : vector<64x128xf32> to vector<64x128xbf16>
    %c7 = arith.constant 7 : index
    %c0_35 = arith.constant 0 : index
    %c0_36 = arith.constant 0 : index
    %84 = vector.load %arg5[%c7, %c0_35, %c0_36] : memref<9x128x128xbf16, #tpu.memory_space<vmem>>, vector<1x128x128xbf16>
    %85 = vector.shape_cast %84 : vector<1x128x128xbf16> to vector<128x128xbf16>
    %cst_37 = arith.constant dense<0.000000e+00> : vector<64x128xf32>
    %86 = tpu.matmul %83, %85, %cst_37 {dimension_numbers = #tpu.dot_dimension_numbers<[1], [0], [0], [1], [0, 0, 1, 1], [], []>} : vector<64x128xbf16>, vector<128x128xbf16>, vector<64x128xf32> -> vector<64x128xf32>
    %87 = arith.addf %80, %86 : vector<64x128xf32>
    %88 = vector.extract_strided_slice %30 {offsets = [2, 2, 0], sizes = [8, 8, 128], strides = [1, 1, 1]} : vector<10x10x128xf32> to vector<8x8x128xf32>
    %89 = vector.shape_cast %88 : vector<8x8x128xf32> to vector<64x128xf32>
    %90 = arith.truncf %89 : vector<64x128xf32> to vector<64x128xbf16>
    %c8 = arith.constant 8 : index
    %c0_38 = arith.constant 0 : index
    %c0_39 = arith.constant 0 : index
    %91 = vector.load %arg5[%c8, %c0_38, %c0_39] : memref<9x128x128xbf16, #tpu.memory_space<vmem>>, vector<1x128x128xbf16>
    %92 = vector.shape_cast %91 : vector<1x128x128xbf16> to vector<128x128xbf16>
    %cst_40 = arith.constant dense<0.000000e+00> : vector<64x128xf32>
    %93 = tpu.matmul %90, %92, %cst_40 {dimension_numbers = #tpu.dot_dimension_numbers<[1], [0], [0], [1], [0, 0, 1, 1], [], []>} : vector<64x128xbf16>, vector<128x128xbf16>, vector<64x128xf32> -> vector<64x128xf32>
    %94 = arith.addf %87, %93 : vector<64x128xf32>
    %c0_41 = arith.constant 0 : index
    %c0_42 = arith.constant 0 : index
    %95 = vector.load %arg6[%c0_41, %c0_42] : memref<1x128xf32, #tpu.memory_space<vmem>>, vector<1x128xf32>
    %96 = vector.broadcast %95 : vector<1x128xf32> to vector<64x128xf32>
    %97 = arith.addf %94, %96 : vector<64x128xf32>
    %c0_43 = arith.constant 0 : index
    %c0_44 = arith.constant 0 : index
    %c0_45 = arith.constant 0 : index
    %c0_46 = arith.constant 0 : index
    %98 = vector.load %arg7[%c0_43, %c0_44, %c0_45, %c0_46] : memref<1x8x8x128xf32, #tpu.memory_space<vmem>>, vector<1x8x8x128xf32>
    %99 = vector.shape_cast %98 : vector<1x8x8x128xf32> to vector<8x8x128xf32>
    %100 = vector.shape_cast %99 : vector<8x8x128xf32> to vector<64x128xf32>
    %101 = arith.addf %97, %100 : vector<64x128xf32>
    %102 = vector.shape_cast %101 : vector<64x128xf32> to vector<8x8x128xf32>
    %c0_47 = arith.constant 0 : index
    %c0_48 = arith.constant 0 : index
    %c0_49 = arith.constant 0 : index
    %c0_50 = arith.constant 0 : index
    %103 = vector.load %arg8[%c0_47, %c0_48, %c0_49, %c0_50] : memref<1x8x8x128xf32, #tpu.memory_space<vmem>>, vector<1x8x8x128xf32>
    %104 = vector.shape_cast %103 : vector<1x8x8x128xf32> to vector<8x8x128xf32>
    %105 = vector.shape_cast %102 : vector<8x8x128xf32> to vector<1x8x8x128xf32>
    tpu.vector_store %arg8[%c0_47, %c0_48, %c0_49, %c0_50], %105 {strides = array<i32>} : memref<1x8x8x128xf32, #tpu.memory_space<vmem>>, vector<1x8x8x128xf32>,
    %cst_51 = arith.constant dense<0.000000e+00> : vector<128xf32>
    %106 = vector.multi_reduction <add>, %101, %cst_51 [0] : vector<64x128xf32> to vector<128xf32>
    %107 = vector.shape_cast %106 : vector<128xf32> to vector<1x128xf32>
    %108 = arith.mulf %101, %101 : vector<64x128xf32>
    %cst_52 = arith.constant dense<0.000000e+00> : vector<128xf32>
    %109 = vector.multi_reduction <add>, %108, %cst_52 [0] : vector<64x128xf32> to vector<128xf32>
    %110 = vector.shape_cast %109 : vector<128xf32> to vector<1x128xf32>
    %111 = tpu.concatenate %107, %110 in 0 : vector<1x128xf32>, vector<1x128xf32> -> vector<2x128xf32>
    %c0_53 = arith.constant 0 : index
    %c0_54 = arith.constant 0 : index
    %c0_55 = arith.constant 0 : index
    %c0_56 = arith.constant 0 : index
    %112 = vector.load %arg9[%c0_53, %c0_54, %c0_55, %c0_56] : memref<1x1x2x128xf32, #tpu.memory_space<vmem>>, vector<1x1x2x128xf32>
    %113 = vector.shape_cast %112 : vector<1x1x2x128xf32> to vector<2x128xf32>
    %114 = vector.shape_cast %111 : vector<2x128xf32> to vector<1x1x2x128xf32>
    tpu.vector_store %arg9[%c0_53, %c0_54, %c0_55, %c0_56], %114 {strides = array<i32>} : memref<1x1x2x128xf32, #tpu.memory_space<vmem>>, vector<1x1x2x128xf32>,
    return
  }
  func.func @transform_0(%arg0: i32, %arg1: i32) -> (i32, i32, i32, i32, i32) {
    %c0_i32 = arith.constant 0 : i32
    %c0_i32_0 = arith.constant 0 : i32
    %c0_i32_1 = arith.constant 0 : i32
    %c0_i32_2 = arith.constant 0 : i32
    return %arg0, %arg1, %c0_i32, %c0_i32_0, %c0_i32_1 : i32, i32, i32, i32, i32
  }
  func.func @transform_1(%arg0: i32, %arg1: i32) -> (i32, i32) {
    %c0_i32 = arith.constant 0 : i32
    %c0_i32_0 = arith.constant 0 : i32
    %c0_i32_1 = arith.constant 0 : i32
    return %c0_i32, %c0_i32_0 : i32, i32
  }
  func.func @transform_2(%arg0: i32, %arg1: i32) -> (i32, i32) {
    %c0_i32 = arith.constant 0 : i32
    %c0_i32_0 = arith.constant 0 : i32
    %c0_i32_1 = arith.constant 0 : i32
    return %c0_i32, %c0_i32_0 : i32, i32
  }
  func.func @transform_3(%arg0: i32, %arg1: i32) -> (i32, i32, i32) {
    %c0_i32 = arith.constant 0 : i32
    %c0_i32_0 = arith.constant 0 : i32
    %c0_i32_1 = arith.constant 0 : i32
    %c0_i32_2 = arith.constant 0 : i32
    return %c0_i32, %c0_i32_0, %c0_i32_1 : i32, i32, i32
  }
  func.func @transform_4(%arg0: i32, %arg1: i32) -> (i32, i32) {
    %c0_i32 = arith.constant 0 : i32
    %c0_i32_0 = arith.constant 0 : i32
    %c0_i32_1 = arith.constant 0 : i32
    return %c0_i32, %c0_i32_0 : i32, i32
  }
  func.func @transform_5(%arg0: i32, %arg1: i32) -> (i32, i32, i32, i32) {
    %c0_i32 = arith.constant 0 : i32
    %c0_i32_0 = arith.constant 0 : i32
    %c0_i32_1 = arith.constant 0 : i32
    return %arg0, %arg1, %c0_i32, %c0_i32_0 : i32, i32, i32, i32
  }
  func.func @transform_6(%arg0: i32, %arg1: i32) -> (i32, i32, i32, i32) {
    %c0_i32 = arith.constant 0 : i32
    %c0_i32_0 = arith.constant 0 : i32
    %c0_i32_1 = arith.constant 0 : i32
    return %arg0, %arg1, %c0_i32, %c0_i32_0 : i32, i32, i32, i32
  }
  func.func @transform_7(%arg0: i32, %arg1: i32) -> (i32, i32, i32, i32) {
    %c0_i32 = arith.constant 0 : i32
    %c0_i32_0 = arith.constant 0 : i32
    %c0_i32_1 = arith.constant 0 : i32
    return %arg0, %arg1, %c0_i32, %c0_i32_0 : i32, i32, i32, i32
  }
}

</mosaic_0001>

<llo_original>
// kernel: encoder_block_forward.7
$region0: #{encoder_block_forward.7}
  #allocation0 [shape = 'u32[]', space=smem, size = 0x4, offset = 0x4, fixed_abs, tag = 'smem constant byte address 0x4 - core index']
  #allocation1 [shape = 'u32[144,128]{1,0:T(1,128)}', space=vmem, size = 0x12000, scoped, tag = 'internal scratch']
  %s0 = inlined_call_operand.vmem [shape: f32[2,8,8,128], index: 0, kind: input, shape index: {}]
  %s1 = inlined_call_operand.vmem [shape: f32[1,128], index: 1, kind: input, shape index: {}]
  %s2 = inlined_call_operand.vmem [shape: f32[1,128], index: 2, kind: input, shape index: {}]
  %s3 = inlined_call_operand.vmem [shape: f32[2,8,8,128], index: 3, kind: output, shape index: {0}]
  %s4 = inlined_call_operand.vmem [shape: f32[2,1,2,128], index: 4, kind: output, shape index: {1}]
  %5 = xla_tuple %s3, %s4
  %s6 = sld [smem:[#allocation0]]
  $region53: #{encoder_block_forward.7} parent=0
    _
  %s8 = ssub.s32 1, %s6
  %s9 = scalar_select 0, %s8, %s6
  loop: start=0, step=1, limit=4
  $region2: #{encoder_block_forward.7} parent=0 // loop_pre_header
    _
  $region3: #{encoder_block_forward.7} parent=0 // loop_header
    %s11 = sphi 0, %s15
    %p12 = scmp.ge.s32.totalorder %s11, 4
    %s18 = sphi 0, %s30
    %s19 = sphi 0, %s26
    %s20 = sphi 0, %s18
    %s21 = sphi 0, %s19
    %s22 = sphi 0, %s20
    %s23 = sphi 0, %s21
    %s35 = sphi 0, %s37
    %s38 = sphi 0, %s35
    %s39 = sphi 0, %s38
    %s55 = sphi 0, %s39
    %s59 = sphi 0, %s59
    %s61 = sphi 0, %s59
    %s62 = sphi 0, %s61
    %s76 = sphi 0, %s62
    %s80 = sphi 0, %s80
    %s82 = sphi 0, %s80
    %s83 = sphi 0, %s82
    %s97 = sphi 0, %s83
    %s105 = sphi 0, %s107
    %s108 = sphi 0, %s105
    %s109 = sphi 0, %s108
    %s125 = sphi 0, %s109
    %s133 = sphi 0, %s135
    %s136 = sphi 0, %s133
    %s137 = sphi 0, %s136
    %s153 = sphi 0, %s137
  $region4: #{encoder_block_forward.7} parent=0 // loop_header_branch
    %14 = sbr.rel (%p12) target = $region8
  $region5: #{encoder_block_forward.7} parent=0 // loop_body
    %s16 = ssub.s32 %s11, 1
    %s17 = ssub.s32 %s11, 2
    %s24 = sadd.s32 1, %s19
    %p25 = scmp.ge.s32.totalorder %s24, 1
    %s26 = scalar_select %p25, 0, %s24
    %s27 = sadd.s32 1, %s18
    %s28 = scalar_select %p25, %s27, %s18
    %p29 = scmp.ge.s32.totalorder %s28, 2
    %s30 = scalar_select %p29, 0, %s28
    %s31 = ssub.s32 %s18, %s30
    %s32 = ssub.s32 %s19, %s26
    %s33 = sor.u32 %s31, %s32
    %p34 = scmp.eq.s32.totalorder %s33, 0
    %s36 = sadd.s32 %s35, 1
    %s37 = scalar_select %p34, %s35, %s36
    %p40 = pneg %p34
    %p41 = scmp.eq.s32.totalorder %s11, 1
    %p42 = por %p40, %p41
    %p43 = scmp.ne.s32.totalorder %s35, %s38
    %p44 = scmp.eq.s32.totalorder %s11, 0
    %p45 = por %p43, %p44
    %p46 = scmp.ne.s32.totalorder %s35, %s38
    %p47 = scmp.eq.s32.totalorder %s16, 1
    %p48 = por %p46, %p47
    %p49 = scmp.ne.s32.totalorder %s38, %s39
    %p50 = scmp.eq.s32.totalorder %s16, 0
    %p51 = por %p49, %p50
    %p52 = scmp.ne.s32.totalorder %s38, %s39
    %p53 = scmp.eq.s32.totalorder %s17, 1
    %p54 = por %p52, %p53
    %p56 = scmp.ne.s32.totalorder %s39, %s55
    %p57 = scmp.eq.s32.totalorder %s17, 0
    %p58 = por %p56, %p57
    %s60 = sadd.s32 %s59, 1
    %p63 = scmp.eq.s32.totalorder %s11, 1
    %p64 = scmp.ne.s32.totalorder %s59, %s61
    %p65 = scmp.eq.s32.totalorder %s11, 0
    %p66 = por %p64, %p65
    %p67 = scmp.ne.s32.totalorder %s59, %s61
    %p68 = scmp.eq.s32.totalorder %s16, 1
    %p69 = por %p67, %p68
    %p70 = scmp.ne.s32.totalorder %s61, %s62
    %p71 = scmp.eq.s32.totalorder %s16, 0
    %p72 = por %p70, %p71
    %p73 = scmp.ne.s32.totalorder %s61, %s62
    %p74 = scmp.eq.s32.totalorder %s17, 1
    %p75 = por %p73, %p74
    %p77 = scmp.ne.s32.totalorder %s62, %s76
    %p78 = scmp.eq.s32.totalorder %s17, 0
    %p79 = por %p77, %p78
    %s81 = sadd.s32 %s80, 1
    %p84 = scmp.eq.s32.totalorder %s11, 1
    %p85 = scmp.ne.s32.totalorder %s80, %s82
    %p86 = scmp.eq.s32.totalorder %s11, 0
    %p87 = por %p85, %p86
    %p88 = scmp.ne.s32.totalorder %s80, %s82
    %p89 = scmp.eq.s32.totalorder %s16, 1
    %p90 = por %p88, %p89
    %p91 = scmp.ne.s32.totalorder %s82, %s83
    %p92 = scmp.eq.s32.totalorder %s16, 0
    %p93 = por %p91, %p92
    %p94 = scmp.ne.s32.totalorder %s82, %s83
    %p95 = scmp.eq.s32.totalorder %s17, 1
    %p96 = por %p94, %p95
    %p98 = scmp.ne.s32.totalorder %s83, %s97
    %p99 = scmp.eq.s32.totalorder %s17, 0
    %p100 = por %p98, %p99
    %s101 = ssub.s32 %s18, %s30
    %s102 = ssub.s32 %s19, %s26
    %s103 = sor.u32 %s101, %s102
    %p104 = scmp.eq.s32.totalorder %s103, 0
    %s106 = sadd.s32 %s105, 1
    %s107 = scalar_select %p104, %s105, %s106
    %p110 = pneg %p104
    %p111 = scmp.eq.s32.totalorder %s11, 1
    %p112 = por %p110, %p111
    %p113 = scmp.ne.s32.totalorder %s105, %s108
    %p114 = scmp.eq.s32.totalorder %s11, 0
    %p115 = por %p113, %p114
    %p116 = scmp.ne.s32.totalorder %s105, %s108
    %p117 = scmp.eq.s32.totalorder %s16, 1
    %p118 = por %p116, %p117
    %p119 = scmp.ne.s32.totalorder %s108, %s109
    %p120 = scmp.eq.s32.totalorder %s16, 0
    %p121 = por %p119, %p120
    %p122 = scmp.ne.s32.totalorder %s108, %s109
    %p123 = scmp.eq.s32.totalorder %s17, 1
    %p124 = por %p122, %p123
    %p126 = scmp.ne.s32.totalorder %s109, %s125
    %p127 = scmp.eq.s32.totalorder %s17, 0
    %p128 = por %p126, %p127
    %s129 = ssub.s32 %s18, %s30
    %s130 = ssub.s32 %s19, %s26
    %s131 = sor.u32 %s129, %s130
    %p132 = scmp.eq.s32.totalorder %s131, 0
    %s134 = sadd.s32 %s133, 1
    %s135 = scalar_select %p132, %s133, %s134
    %p138 = pneg %p132
    %p139 = scmp.eq.s32.totalorder %s11, 1
    %p140 = por %p138, %p139
    %p141 = scmp.ne.s32.totalorder %s133, %s136
    %p142 = scmp.eq.s32.totalorder %s11, 0
    %p143 = por %p141, %p142
    %p144 = scmp.ne.s32.totalorder %s133, %s136
    %p145 = scmp.eq.s32.totalorder %s16, 1
    %p146 = por %p144, %p145
    %p147 = scmp.ne.s32.totalorder %s136, %s137
    %p148 = scmp.eq.s32.totalorder %s16, 0
    %p149 = por %p147, %p148
    %p150 = scmp.ne.s32.totalorder %s136, %s137
    %p151 = scmp.eq.s32.totalorder %s17, 1
    %p152 = por %p150, %p151
    %p154 = scmp.ne.s32.totalorder %s137, %s153
    %p155 = scmp.eq.s32.totalorder %s17, 0
    %p156 = por %p154, %p155
    %p157 = scmp.le.s32.totalorder 1, %s11
    %p158 = scmp.lt.s32.totalorder %s11, 3
    %p159 = pnand %p157, %p158
    %p160 = pneg %p159
    // Predicated region
    $region9: #{encoder_block_forward.7} parent=5 // pred_check
      _
    $region10: #{encoder_block_forward.7} parent=5 // pred_check_branch
      %162 = sbr.rel (%p159) target = $region12
    $region11: #{encoder_block_forward.7} parent=5 // pred_region
      %s163 = ssub.s32 %s11, 1
      // Predicated region
      $region13: #{encoder_block_forward.7} parent=11 // pred_check
        %p164 = pneg %p72
      $region14: #{encoder_block_forward.7} parent=11 // pred_check_branch
        %166 = sbr.rel (%p164) target = $region16
      $region15: #{encoder_block_forward.7} parent=11 // pred_region
        _
      $region16: #{encoder_block_forward.7} parent=11 // pred_fallthru
        _
      // Predicated region
      $region17: #{encoder_block_forward.7} parent=11 // pred_check
        %p167 = pneg %p93
      $region18: #{encoder_block_forward.7} parent=11 // pred_check_branch
        %169 = sbr.rel (%p167) target = $region20
      $region19: #{encoder_block_forward.7} parent=11 // pred_region
        _
      $region20: #{encoder_block_forward.7} parent=11 // pred_fallthru
        _
    $region12: #{encoder_block_forward.7} parent=5 // pred_fallthru
      _
    %p170 = scmp.lt.s32.totalorder %s11, 2
    // Predicated region
    $region21: #{encoder_block_forward.7} parent=5 // pred_check
      %p171 = pneg %p170
    $region22: #{encoder_block_forward.7} parent=5 // pred_check_branch
      %173 = sbr.rel (%p171) target = $region24
    $region23: #{encoder_block_forward.7} parent=5 // pred_region
      // Predicated region
      $region25: #{encoder_block_forward.7} parent=23 // pred_check
        %p174 = pneg %p45
      $region26: #{encoder_block_forward.7} parent=23 // pred_check_branch
        %176 = sbr.rel (%p174) target = $region28
      $region27: #{encoder_block_forward.7} parent=23 // pred_region
        %s177 = smul.u32 8, %s19
        %p178 = scmp.lt.s32.totalorder %s18, 1
        %s179 = scalar_select %p178, %s18, 1
        %p180 = scmp.lt.s32.totalorder %s177, 7
        %s181 = scalar_select %p180, %s177, 7
        %s182 = smul.addr %s179, 8
        %s183 = sadd.s32 %s181, %s182
        %s184 = smul.addr %s183, 8
        %s185 = scalar_lea.vmem %s0, %s184
        %s186 = smul.u32 8, %s19
      $region28: #{encoder_block_forward.7} parent=23 // pred_fallthru
        _
    $region24: #{encoder_block_forward.7} parent=5 // pred_fallthru
      _
    %p187 = scmp.le.s32.totalorder 1, %s11
    %p188 = scmp.lt.s32.totalorder %s11, 3
    %p189 = pnand %p187, %p188
    %p190 = pneg %p189
    // Predicated region
    $region29: #{encoder_block_forward.7} parent=5 // pred_check
      _
    $region30: #{encoder_block_forward.7} parent=5 // pred_check_branch
      %192 = sbr.rel (%p189) target = $region32
    $region31: #{encoder_block_forward.7} parent=5 // pred_region
      %s193 = ssub.s32 %s11, 1
      %s194 = smul.u32 8, %s21
      %p195 = scmp.lt.s32.totalorder %s20, 1
      %s196 = scalar_select %p195, %s20, 1
      %p197 = scmp.lt.s32.totalorder %s194, 7
      %s198 = scalar_select %p197, %s194, 7
      %s199 = smul.addr %s196, 8
      %s200 = sadd.s32 %s198, %s199
      %s201 = smul.addr %s200, 8
      %s202 = scalar_lea.vmem %s0, %s201
      %p203 = pneg %p51
      %p204 = pneg %p48
      %p205 = pneg %p72
      %p206 = pneg %p69
      %p207 = pneg %p93
      %p208 = pneg %p90
      %p209 = pneg %p121
      %p210 = pneg %p118
      %s211 = smul.u32 8, %s21
      %p212 = scmp.lt.s32.totalorder %s20, 1
      %s213 = scalar_select %p212, %s20, 1
      %p214 = scmp.lt.s32.totalorder %s211, 7
      %s215 = scalar_select %p214, %s211, 7
      %s216 = smul.addr %s213, 8
      %s217 = sadd.s32 %s215, %s216
      %s218 = smul.addr %s217, 8
      %s219 = scalar_lea.vmem %s3, %s218
      %p220 = pneg %p149
      %p221 = pneg %p146
      %p222 = scmp.lt.s32.totalorder %s20, 1
      %s223 = scalar_select %p222, %s20, 1
      %p224 = scmp.lt.s32.totalorder %s21, 0
      %s225 = scalar_select %p224, %s21, 0
      %s226 = sadd.s32 %s225, %s223
      %s227 = smul.addr %s226, 2
      %s228 = scalar_lea.vmem %s4, %s227
      %s229 = smul.u32 8, %s21
      %p230 = scmp.lt.s32.totalorder %s20, 1
      %s231 = scalar_select %p230, %s20, 1
      %p232 = scmp.lt.s32.totalorder %s229, 7
      %s233 = scalar_select %p232, %s229, 7
      %s234 = smul.addr %s231, 8
      %s235 = sadd.s32 %s233, %s234
      %s236 = smul.addr %s235, 8
      %s237 = scalar_lea.vmem %s0, %s236
      %s238 = smul.u32 8, %s21
      %s239 = smul.u32 8, %s21
      %p240 = scmp.lt.s32.totalorder %s20, 1
      %s241 = scalar_select %p240, %s20, 1
      %p242 = scmp.lt.s32.totalorder %s239, 7
      %s243 = scalar_select %p242, %s239, 7
      %s244 = smul.addr %s241, 8
      %s245 = sadd.s32 %s243, %s244
      %s246 = smul.addr %s245, 8
      %s247 = scalar_lea.vmem %s3, %s246
      %s248 = smul.u32 8, %s21
      %p249 = scmp.lt.s32.totalorder %s20, 1
      %s250 = scalar_select %p249, %s20, 1
      %p251 = scmp.lt.s32.totalorder %s21, 0
      %s252 = scalar_select %p251, %s21, 0
      %s253 = sadd.s32 %s252, %s250
      %s254 = smul.addr %s253, 2
      %s255 = scalar_lea.vmem %s4, %s254
      %v256 = vld [vmem:[%s237] sm:$0xff]
      %v257 = vld [vmem:[%s237 + $0x8] sm:$0xff]
      %v258 = vld [vmem:[%s237 + $0x10] sm:$0xff]
      %v259 = vld [vmem:[%s237 + $0x18] sm:$0xff]
      %v260 = vld [vmem:[%s237 + $0x20] sm:$0xff]
      %v261 = vld [vmem:[%s237 + $0x28] sm:$0xff]
      %v262 = vld [vmem:[%s237 + $0x30] sm:$0xff]
      %v263 = vld [vmem:[%s237 + $0x38] sm:$0xff]
      %v264 = vld [vmem:[%s1] sm:$0x1]
      %v266 = vlaneseq
      %v267 = vshrl.u32 %v266, 7
      %v268 = vsub.s32 0, %v267
      %v269 = vrot.slane %v264, %v268
      %v271 = vmul.f32 %v256, %v269
      %v272 = vmul.f32 %v257, %v269
      %v273 = vmul.f32 %v258, %v269
      %v274 = vmul.f32 %v259, %v269
      %v275 = vmul.f32 %v260, %v269
      %v276 = vmul.f32 %v261, %v269
      %v277 = vmul.f32 %v262, %v269
      %v278 = vmul.f32 %v263, %v269
      %v279 = vld [vmem:[%s2] sm:$0x1]
      %v281 = vlaneseq
      %v282 = vshrl.u32 %v281, 7
      %v283 = vsub.s32 0, %v282
      %v284 = vrot.slane %v279, %v283
      %v286 = vadd.f32 %v271, %v284
      %v287 = vadd.f32 %v272, %v284
      %v288 = vadd.f32 %v273, %v284
      %v289 = vadd.f32 %v274, %v284
      %v290 = vadd.f32 %v275, %v284
      %v291 = vadd.f32 %v276, %v284
      %v292 = vadd.f32 %v277, %v284
      %v293 = vadd.f32 %v278, %v284
      %v294 = vmul.f32 %v286, 0.1
      %v295 = vmul.f32 %v287, 0.1
      %v296 = vmul.f32 %v288, 0.1
      %v297 = vmul.f32 %v289, 0.1
      %v298 = vmul.f32 %v290, 0.1
      %v299 = vmul.f32 %v291, 0.1
      %v300 = vmul.f32 %v292, 0.1
      %v301 = vmul.f32 %v293, 0.1
      %v302 = vmax.f32 %v286, %v294
      %v303 = vmax.f32 %v287, %v295
      %v304 = vmax.f32 %v288, %v296
      %v305 = vmax.f32 %v289, %v297
      %v306 = vmax.f32 %v290, %v298
      %v307 = vmax.f32 %v291, %v299
      %v308 = vmax.f32 %v292, %v300
      %v309 = vmax.f32 %v293, %v301
      %310 = vst [vmem:[%s247] sm:$0xff] %v302
      %311 = vst [vmem:[%s247 + $0x8] sm:$0xff] %v303
      %312 = vst [vmem:[%s247 + $0x10] sm:$0xff] %v304
      %313 = vst [vmem:[%s247 + $0x18] sm:$0xff] %v305
      %314 = vst [vmem:[%s247 + $0x20] sm:$0xff] %v306
      %315 = vst [vmem:[%s247 + $0x28] sm:$0xff] %v307
      %316 = vst [vmem:[%s247 + $0x30] sm:$0xff] %v308
      %317 = vst [vmem:[%s247 + $0x38] sm:$0xff] %v309
      %v318 = vadd.f32 %v302, %v303
      %v319 = vadd.f32 %v318, %v304
      %v320 = vadd.f32 %v319, %v305
      %v321 = vadd.f32 %v320, %v306
      %v322 = vadd.f32 %v321, %v307
      %v323 = vadd.f32 %v322, %v308
      %v324 = vadd.f32 %v323, %v309
      %v325 = vrot.slane %v324, 4
      %v326 = vadd.f32 %v324, %v325
      %v327 = vrot.slane %v326, 2
      %v328 = vadd.f32 %v326, %v327
      %v329 = vrot.slane %v328, 1
      %v330 = vadd.f32 %v328, %v329
      %v331 = vmul.f32 %v302, %v302
      %v332 = vmul.f32 %v303, %v303
      %v333 = vmul.f32 %v304, %v304
      %v334 = vmul.f32 %v305, %v305
      %v335 = vmul.f32 %v306, %v306
      %v336 = vmul.f32 %v307, %v307
      %v337 = vmul.f32 %v308, %v308
      %v338 = vmul.f32 %v309, %v309
      %v339 = vadd.f32 %v331, %v332
      %v340 = vadd.f32 %v339, %v333
      %v341 = vadd.f32 %v340, %v334
      %v342 = vadd.f32 %v341, %v335
      %v343 = vadd.f32 %v342, %v336
      %v344 = vadd.f32 %v343, %v337
      %v345 = vadd.f32 %v344, %v338
      %v346 = vrot.slane %v345, 4
      %v347 = vadd.f32 %v345, %v346
      %v348 = vrot.slane %v347, 2
      %v349 = vadd.f32 %v347, %v348
      %v350 = vrot.slane %v349, 1
      %v351 = vadd.f32 %v349, %v350
      %vm352 = vcmask 1040384
      %v353 = vsel %vm352, %v330, %v351
      %354 = vst [vmem:[%s255] sm:$0x3] %v353
      %s355 = smul.u32 8, %s21
      %p356 = scmp.lt.s32.totalorder %s20, 1
      %s357 = scalar_select %p356, %s20, 1
      %p358 = scmp.lt.s32.totalorder %s355, 7
      %s359 = scalar_select %p358, %s355, 7
      %s360 = smul.addr %s357, 8
      %s361 = sadd.s32 %s359, %s360
      %s362 = smul.addr %s361, 8
      %s363 = scalar_lea.vmem %s3, %s362
      %p364 = scmp.lt.s32.totalorder %s20, 1
      %s365 = scalar_select %p364, %s20, 1
      %p366 = scmp.lt.s32.totalorder %s21, 0
      %s367 = scalar_select %p366, %s21, 0
      %s368 = sadd.s32 %s367, %s365
      %s369 = smul.addr %s368, 2
      %s370 = scalar_lea.vmem %s4, %s369
      // Predicated region
      $region33: #{encoder_block_forward.7} parent=31 // pred_check
        %p371 = pneg %p118
      $region34: #{encoder_block_forward.7} parent=31 // pred_check_branch
        %373 = sbr.rel (%p371) target = $region36
      $region35: #{encoder_block_forward.7} parent=31 // pred_region
        %s374 = smul.u32 8, %s21
      $region36: #{encoder_block_forward.7} parent=31 // pred_fallthru
        _
      // Predicated region
      $region37: #{encoder_block_forward.7} parent=31 // pred_check
        %p375 = pneg %p146
      $region38: #{encoder_block_forward.7} parent=31 // pred_check_branch
        %377 = sbr.rel (%p375) target = $region40
      $region39: #{encoder_block_forward.7} parent=31 // pred_region
        _
      $region40: #{encoder_block_forward.7} parent=31 // pred_fallthru
        _
    $region32: #{encoder_block_forward.7} parent=5 // pred_fallthru
      _
    %p378 = scmp.le.s32.totalorder 2, %s11
    // Predicated region
    $region41: #{encoder_block_forward.7} parent=5 // pred_check
      %p379 = pneg %p378
    $region42: #{encoder_block_forward.7} parent=5 // pred_check_branch
      %381 = sbr.rel (%p379) target = $region44
    $region43: #{encoder_block_forward.7} parent=5 // pred_region
      %s382 = ssub.s32 %s11, 2
      // Predicated region
      $region45: #{encoder_block_forward.7} parent=43 // pred_check
        %p383 = pneg %p124
      $region46: #{encoder_block_forward.7} parent=43 // pred_check_branch
        %385 = sbr.rel (%p383) target = $region48
      $region47: #{encoder_block_forward.7} parent=43 // pred_region
        %s386 = smul.u32 8, %s23
        %p387 = scmp.lt.s32.totalorder %s22, 1
        %s388 = scalar_select %p387, %s22, 1
        %p389 = scmp.lt.s32.totalorder %s386, 7
        %s390 = scalar_select %p389, %s386, 7
        %s391 = smul.addr %s388, 8
        %s392 = sadd.s32 %s390, %s391
        %s393 = smul.addr %s392, 8
        %s394 = scalar_lea.vmem %s3, %s393
      $region48: #{encoder_block_forward.7} parent=43 // pred_fallthru
        _
      // Predicated region
      $region49: #{encoder_block_forward.7} parent=43 // pred_check
        %p395 = pneg %p152
      $region50: #{encoder_block_forward.7} parent=43 // pred_check_branch
        %397 = sbr.rel (%p395) target = $region52
      $region51: #{encoder_block_forward.7} parent=43 // pred_region
        %p398 = scmp.lt.s32.totalorder %s22, 1
        %s399 = scalar_select %p398, %s22, 1
        %p400 = scmp.lt.s32.totalorder %s23, 0
        %s401 = scalar_select %p400, %s23, 0
        %s402 = sadd.s32 %s401, %s399
        %s403 = smul.addr %s402, 2
        %s404 = scalar_lea.vmem %s4, %s403
      $region52: #{encoder_block_forward.7} parent=43 // pred_fallthru
        _
    $region44: #{encoder_block_forward.7} parent=5 // pred_fallthru
      _
  $region6: #{encoder_block_forward.7} parent=0 // loop_footer
    %s15 = sadd.s32 1, %s11
  $region7: #{encoder_block_forward.7} parent=0 // loop_footer_branch
    %10 = sbr.rel target = $region3
  $region8: #{encoder_block_forward.7} parent=0 // loop_exit
    _

// kernel: encoder_block_forward.6
$region0: #{encoder_block_forward.6}
  #allocation0 [shape = 'u32[]', space=smem, size = 0x4, offset = 0x4, fixed_abs, tag = 'smem constant byte address 0x4 - core index']
  #allocation1 [shape = 'u32[144,128]{1,0:T(1,128)}', space=vmem, size = 0x12000, scoped, tag = 'internal scratch']
  %s0 = inlined_call_operand.vmem [shape: f32[2,1,4,9,9,128], index: 0, kind: input, shape index: {}]
  %s1 = inlined_call_operand.vmem [shape: bf16[9,128,128], index: 1, kind: input, shape index: {}]
  %s2 = inlined_call_operand.vmem [shape: f32[2,8,8,128], index: 2, kind: output, shape index: {0}]
  %s3 = inlined_call_operand.vmem [shape: f32[2,1,2,128], index: 3, kind: output, shape index: {1}]
  %4 = xla_tuple %s2, %s3
  %s5 = sld [smem:[#allocation0]]
  $region49: #{encoder_block_forward.6} parent=0
    _
  %s7 = ssub.s32 1, %s5
  %s8 = scalar_select 0, %s7, %s5
  loop: start=0, step=1, limit=4
  $region2: #{encoder_block_forward.6} parent=0 // loop_pre_header
    _
  $region3: #{encoder_block_forward.6} parent=0 // loop_header
    %s10 = sphi 0, %s14
    %p11 = scmp.ge.s32.totalorder %s10, 4
    %s17 = sphi 0, %s29
    %s18 = sphi 0, %s25
    %s19 = sphi 0, %s17
    %s20 = sphi 0, %s18
    %s21 = sphi 0, %s19
    %s22 = sphi 0, %s20
    %s34 = sphi 0, %s36
    %s37 = sphi 0, %s34
    %s38 = sphi 0, %s37
    %s54 = sphi 0, %s38
    %s58 = sphi 0, %s58
    %s60 = sphi 0, %s58
    %s61 = sphi 0, %s60
    %s75 = sphi 0, %s61
    %s83 = sphi 0, %s85
    %s86 = sphi 0, %s83
    %s87 = sphi 0, %s86
    %s103 = sphi 0, %s87
    %s111 = sphi 0, %s113
    %s114 = sphi 0, %s111
    %s115 = sphi 0, %s114
    %s131 = sphi 0, %s115
  $region4: #{encoder_block_forward.6} parent=0 // loop_header_branch
    %13 = sbr.rel (%p11) target = $region8
  $region5: #{encoder_block_forward.6} parent=0 // loop_body
    %s15 = ssub.s32 %s10, 1
    %s16 = ssub.s32 %s10, 2
    %s23 = sadd.s32 1, %s18
    %p24 = scmp.ge.s32.totalorder %s23, 1
    %s25 = scalar_select %p24, 0, %s23
    %s26 = sadd.s32 1, %s17
    %s27 = scalar_select %p24, %s26, %s17
    %p28 = scmp.ge.s32.totalorder %s27, 2
    %s29 = scalar_select %p28, 0, %s27
    %s30 = ssub.s32 %s17, %s29
    %s31 = ssub.s32 %s18, %s25
    %s32 = sor.u32 %s30, %s31
    %p33 = scmp.eq.s32.totalorder %s32, 0
    %s35 = sadd.s32 %s34, 1
    %s36 = scalar_select %p33, %s34, %s35
    %p39 = pneg %p33
    %p40 = scmp.eq.s32.totalorder %s10, 1
    %p41 = por %p39, %p40
    %p42 = scmp.ne.s32.totalorder %s34, %s37
    %p43 = scmp.eq.s32.totalorder %s10, 0
    %p44 = por %p42, %p43
    %p45 = scmp.ne.s32.totalorder %s34, %s37
    %p46 = scmp.eq.s32.totalorder %s15, 1
    %p47 = por %p45, %p46
    %p48 = scmp.ne.s32.totalorder %s37, %s38
    %p49 = scmp.eq.s32.totalorder %s15, 0
    %p50 = por %p48, %p49
    %p51 = scmp.ne.s32.totalorder %s37, %s38
    %p52 = scmp.eq.s32.totalorder %s16, 1
    %p53 = por %p51, %p52
    %p55 = scmp.ne.s32.totalorder %s38, %s54
    %p56 = scmp.eq.s32.totalorder %s16, 0
    %p57 = por %p55, %p56
    %s59 = sadd.s32 %s58, 1
    %p62 = scmp.eq.s32.totalorder %s10, 1
    %p63 = scmp.ne.s32.totalorder %s58, %s60
    %p64 = scmp.eq.s32.totalorder %s10, 0
    %p65 = por %p63, %p64
    %p66 = scmp.ne.s32.totalorder %s58, %s60
    %p67 = scmp.eq.s32.totalorder %s15, 1
    %p68 = por %p66, %p67
    %p69 = scmp.ne.s32.totalorder %s60, %s61
    %p70 = scmp.eq.s32.totalorder %s15, 0
    %p71 = por %p69, %p70
    %p72 = scmp.ne.s32.totalorder %s60, %s61
    %p73 = scmp.eq.s32.totalorder %s16, 1
    %p74 = por %p72, %p73
    %p76 = scmp.ne.s32.totalorder %s61, %s75
    %p77 = scmp.eq.s32.totalorder %s16, 0
    %p78 = por %p76, %p77
    %s79 = ssub.s32 %s17, %s29
    %s80 = ssub.s32 %s18, %s25
    %s81 = sor.u32 %s79, %s80
    %p82 = scmp.eq.s32.totalorder %s81, 0
    %s84 = sadd.s32 %s83, 1
    %s85 = scalar_select %p82, %s83, %s84
    %p88 = pneg %p82
    %p89 = scmp.eq.s32.totalorder %s10, 1
    %p90 = por %p88, %p89
    %p91 = scmp.ne.s32.totalorder %s83, %s86
    %p92 = scmp.eq.s32.totalorder %s10, 0
    %p93 = por %p91, %p92
    %p94 = scmp.ne.s32.totalorder %s83, %s86
    %p95 = scmp.eq.s32.totalorder %s15, 1
    %p96 = por %p94, %p95
    %p97 = scmp.ne.s32.totalorder %s86, %s87
    %p98 = scmp.eq.s32.totalorder %s15, 0
    %p99 = por %p97, %p98
    %p100 = scmp.ne.s32.totalorder %s86, %s87
    %p101 = scmp.eq.s32.totalorder %s16, 1
    %p102 = por %p100, %p101
    %p104 = scmp.ne.s32.totalorder %s87, %s103
    %p105 = scmp.eq.s32.totalorder %s16, 0
    %p106 = por %p104, %p105
    %s107 = ssub.s32 %s17, %s29
    %s108 = ssub.s32 %s18, %s25
    %s109 = sor.u32 %s107, %s108
    %p110 = scmp.eq.s32.totalorder %s109, 0
    %s112 = sadd.s32 %s111, 1
    %s113 = scalar_select %p110, %s111, %s112
    %p116 = pneg %p110
    %p117 = scmp.eq.s32.totalorder %s10, 1
    %p118 = por %p116, %p117
    %p119 = scmp.ne.s32.totalorder %s111, %s114
    %p120 = scmp.eq.s32.totalorder %s10, 0
    %p121 = por %p119, %p120
    %p122 = scmp.ne.s32.totalorder %s111, %s114
    %p123 = scmp.eq.s32.totalorder %s15, 1
    %p124 = por %p122, %p123
    %p125 = scmp.ne.s32.totalorder %s114, %s115
    %p126 = scmp.eq.s32.totalorder %s15, 0
    %p127 = por %p125, %p126
    %p128 = scmp.ne.s32.totalorder %s114, %s115
    %p129 = scmp.eq.s32.totalorder %s16, 1
    %p130 = por %p128, %p129
    %p132 = scmp.ne.s32.totalorder %s115, %s131
    %p133 = scmp.eq.s32.totalorder %s16, 0
    %p134 = por %p132, %p133
    %p135 = scmp.le.s32.totalorder 1, %s10
    %p136 = scmp.lt.s32.totalorder %s10, 3
    %p137 = pnand %p135, %p136
    %p138 = pneg %p137
    // Predicated region
    $region9: #{encoder_block_forward.6} parent=5 // pred_check
      _
    $region10: #{encoder_block_forward.6} parent=5 // pred_check_branch
      %140 = sbr.rel (%p137) target = $region12
    $region11: #{encoder_block_forward.6} parent=5 // pred_region
      %s141 = ssub.s32 %s10, 1
      // Predicated region
      $region13: #{encoder_block_forward.6} parent=11 // pred_check
        %p142 = pneg %p71
      $region14: #{encoder_block_forward.6} parent=11 // pred_check_branch
        %144 = sbr.rel (%p142) target = $region16
      $region15: #{encoder_block_forward.6} parent=11 // pred_region
        _
      $region16: #{encoder_block_forward.6} parent=11 // pred_fallthru
        _
    $region12: #{encoder_block_forward.6} parent=5 // pred_fallthru
      _
    %p145 = scmp.lt.s32.totalorder %s10, 2
    // Predicated region
    $region17: #{encoder_block_forward.6} parent=5 // pred_check
      %p146 = pneg %p145
    $region18: #{encoder_block_forward.6} parent=5 // pred_check_branch
      %148 = sbr.rel (%p146) target = $region20
    $region19: #{encoder_block_forward.6} parent=5 // pred_region
      // Predicated region
      $region21: #{encoder_block_forward.6} parent=19 // pred_check
        %p149 = pneg %p44
      $region22: #{encoder_block_forward.6} parent=19 // pred_check_branch
        %151 = sbr.rel (%p149) target = $region24
      $region23: #{encoder_block_forward.6} parent=19 // pred_region
        %p152 = scmp.lt.s32.totalorder %s17, 1
        %s153 = scalar_select %p152, %s17, 1
        %p154 = scmp.lt.s32.totalorder %s18, 0
        %s155 = scalar_select %p154, %s18, 0
        %s156 = smul.addr %s155, 72
        %s157 = smul.addr %s153, 72
        %s158 = sadd.s32 %s156, %s157
        %s159 = smul.addr %s158, 8
        %s160 = scalar_lea.vmem %s0, %s159
      $region24: #{encoder_block_forward.6} parent=19 // pred_fallthru
        _
    $region20: #{encoder_block_forward.6} parent=5 // pred_fallthru
      _
    %p161 = scmp.le.s32.totalorder 1, %s10
    %p162 = scmp.lt.s32.totalorder %s10, 3
    %p163 = pnand %p161, %p162
    %p164 = pneg %p163
    // Predicated region
    $region25: #{encoder_block_forward.6} parent=5 // pred_check
      _
    $region26: #{encoder_block_forward.6} parent=5 // pred_check_branch
      %166 = sbr.rel (%p163) target = $region28
    $region27: #{encoder_block_forward.6} parent=5 // pred_region
      %s167 = ssub.s32 %s10, 1
      %p168 = scmp.lt.s32.totalorder %s19, 1
      %s169 = scalar_select %p168, %s19, 1
      %p170 = scmp.lt.s32.totalorder %s20, 0
      %s171 = scalar_select %p170, %s20, 0
      %s172 = smul.addr %s171, 72
      %s173 = smul.addr %s169, 72
      %s174 = sadd.s32 %s172, %s173
      %s175 = smul.addr %s174, 8
      %s176 = scalar_lea.vmem %s0, %s175
      %p177 = pneg %p50
      %p178 = pneg %p47
      %p179 = pneg %p71
      %p180 = pneg %p68
      %p181 = pneg %p99
      %p182 = pneg %p96
      %s183 = smul.u32 8, %s20
      %p184 = scmp.lt.s32.totalorder %s19, 1
      %s185 = scalar_select %p184, %s19, 1
      %p186 = scmp.lt.s32.totalorder %s183, 7
      %s187 = scalar_select %p186, %s183, 7
      %s188 = smul.addr %s185, 8
      %s189 = sadd.s32 %s187, %s188
      %s190 = smul.addr %s189, 8
      %s191 = scalar_lea.vmem %s2, %s190
      %p192 = pneg %p127
      %p193 = pneg %p124
      %p194 = scmp.lt.s32.totalorder %s19, 1
      %s195 = scalar_select %p194, %s19, 1
      %p196 = scmp.lt.s32.totalorder %s20, 0
      %s197 = scalar_select %p196, %s20, 0
      %s198 = sadd.s32 %s197, %s195
      %s199 = smul.addr %s198, 2
      %s200 = scalar_lea.vmem %s3, %s199
      %p201 = scmp.lt.s32.totalorder %s19, 1
      %s202 = scalar_select %p201, %s19, 1
      %p203 = scmp.lt.s32.totalorder %s20, 0
      %s204 = scalar_select %p203, %s20, 0
      %s205 = smul.addr %s204, 72
      %s206 = smul.addr %s202, 72
      %s207 = sadd.s32 %s205, %s206
      %s208 = smul.addr %s207, 8
      %s209 = scalar_lea.vmem %s0, %s208
      %s210 = smul.u32 8, %s20
      %p211 = scmp.lt.s32.totalorder %s19, 1
      %s212 = scalar_select %p211, %s19, 1
      %p213 = scmp.lt.s32.totalorder %s210, 7
      %s214 = scalar_select %p213, %s210, 7
      %s215 = smul.addr %s212, 8
      %s216 = sadd.s32 %s214, %s215
      %s217 = smul.addr %s216, 8
      %s218 = scalar_lea.vmem %s2, %s217
      %s219 = smul.u32 8, %s20
      %p220 = scmp.lt.s32.totalorder %s19, 1
      %s221 = scalar_select %p220, %s19, 1
      %p222 = scmp.lt.s32.totalorder %s20, 0
      %s223 = scalar_select %p222, %s20, 0
      %s224 = sadd.s32 %s223, %s221
      %s225 = smul.addr %s224, 2
      %s226 = scalar_lea.vmem %s3, %s225
      %v228 = vld [vmem:[%s209] sm:$0xff]
      %v229 = vld [vmem:[%s209 + $0x10] sm:$0xff]
      %v230 = vld [vmem:[%s209 + $0x20] sm:$0xff]
      %v231 = vld [vmem:[%s209 + $0x30] sm:$0xff]
      %v232 = vld [vmem:[%s209 + $0x40] sm:$0xff]
      %v233 = vld [vmem:[%s209 + $0x50] sm:$0xff]
      %v234 = vld [vmem:[%s209 + $0x60] sm:$0xff]
      %v235 = vld [vmem:[%s209 + $0x70] sm:$0xff]
      %v236 = vpack.c.bf16 %v229, %v228
      %v237 = vpack.c.bf16 %v231, %v230
      %v238 = vpack.c.bf16 %v233, %v232
      %v239 = vpack.c.bf16 %v235, %v234
      %v240 = vld [vmem:[%s1] sm:$0xf]
      %v241 = vld [vmem:[%s1 + $0x4] sm:$0xf]
      %v242 = vld [vmem:[%s1 + $0x8] sm:$0xf]
      %v243 = vld [vmem:[%s1 + $0xc] sm:$0xf]
      %v244 = vld [vmem:[%s1 + $0x10] sm:$0xf]
      %v245 = vld [vmem:[%s1 + $0x14] sm:$0xf]
      %v246 = vld [vmem:[%s1 + $0x18] sm:$0xf]
      %v247 = vld [vmem:[%s1 + $0x1c] sm:$0xf]
      %v248 = vld [vmem:[%s1 + $0x20] sm:$0xf]
      %v249 = vld [vmem:[%s1 + $0x24] sm:$0xf]
      %v250 = vld [vmem:[%s1 + $0x28] sm:$0xf]
      %v251 = vld [vmem:[%s1 + $0x2c] sm:$0xf]
      %v252 = vld [vmem:[%s1 + $0x30] sm:$0xf]
      %v253 = vld [vmem:[%s1 + $0x34] sm:$0xf]
      %v254 = vld [vmem:[%s1 + $0x38] sm:$0xf]
      %v255 = vld [vmem:[%s1 + $0x3c] sm:$0xf]
      %s256 = scalar_lea.vmem %s209, 144
      %v257 = vld [vmem:[%s256] sm:$0xff]
      %v258 = vld [vmem:[%s256 + $0x10] sm:$0xff]
      %v259 = vld [vmem:[%s256 + $0x20] sm:$0xff]
      %v260 = vld [vmem:[%s256 + $0x30] sm:$0xff]
      %v261 = vld [vmem:[%s256 + $0x40] sm:$0xff]
      %v262 = vld [vmem:[%s256 + $0x50] sm:$0xff]
      %v263 = vld [vmem:[%s256 + $0x60] sm:$0xff]
      %v264 = vld [vmem:[%s256 + $0x70] sm:$0xff]
      %v265 = vpack.c.bf16 %v258, %v257
      %v266 = vpack.c.bf16 %v260, %v259
      %v267 = vpack.c.bf16 %v262, %v261
      %v268 = vpack.c.bf16 %v264, %v263
      %s269 = scalar_lea.vmem %s1, 64
      %v270 = vld [vmem:[%s269] sm:$0xf]
      %v271 = vld [vmem:[%s269 + $0x4] sm:$0xf]
      %v272 = vld [vmem:[%s269 + $0x8] sm:$0xf]
      %v273 = vld [vmem:[%s269 + $0xc] sm:$0xf]
      %v274 = vld [vmem:[%s269 + $0x10] sm:$0xf]
      %v275 = vld [vmem:[%s269 + $0x14] sm:$0xf]
      %v276 = vld [vmem:[%s269 + $0x18] sm:$0xf]
      %v277 = vld [vmem:[%s269 + $0x1c] sm:$0xf]
      %v278 = vld [vmem:[%s269 + $0x20] sm:$0xf]
      %v279 = vld [vmem:[%s269 + $0x24] sm:$0xf]
      %v280 = vld [vmem:[%s269 + $0x28] sm:$0xf]
      %v281 = vld [vmem:[%s269 + $0x2c] sm:$0xf]
      %v282 = vld [vmem:[%s269 + $0x30] sm:$0xf]
      %v283 = vld [vmem:[%s269 + $0x34] sm:$0xf]
      %v284 = vld [vmem:[%s269 + $0x38] sm:$0xf]
      %v285 = vld [vmem:[%s269 + $0x3c] sm:$0xf]
      %v302 = vunpack.c.l.b16 %v270
      %v303 = vunpack.c.l.b16 %v271
      %v304 = vunpack.c.l.b16 %v272
      %v305 = vunpack.c.l.b16 %v273
      %v306 = vunpack.c.l.b16 %v274
      %v307 = vunpack.c.l.b16 %v275
      %v308 = vunpack.c.l.b16 %v276
      %v309 = vunpack.c.l.b16 %v277
      %v310 = vunpack.c.l.b16 %v278
      %v311 = vunpack.c.l.b16 %v279
      %v312 = vunpack.c.l.b16 %v280
      %v313 = vunpack.c.l.b16 %v281
      %v314 = vunpack.c.l.b16 %v282
      %v315 = vunpack.c.l.b16 %v283
      %v316 = vunpack.c.l.b16 %v284
      %v317 = vunpack.c.l.b16 %v285
      %v318 = vpack.c.b16 %v303, %v302
      %v319 = vpack.c.b16 %v305, %v304
      %v320 = vpack.c.b16 %v307, %v306
      %v321 = vpack.c.b16 %v309, %v308
      %v322 = vpack.c.b16 %v311, %v310
      %v323 = vpack.c.b16 %v313, %v312
      %v324 = vpack.c.b16 %v315, %v314
      %v325 = vpack.c.b16 %v317, %v316
      %334 = vmatprep.subr.bf16.mxu0 0
      %335 = vmatpush1.bf16.msra.mxu0 %v318
      %336 = vmatprep.subr.bf16.mxu0 0
      %337 = vmatpush1.bf16.msra.mxu0 %v319
      %338 = vmatprep.subr.bf16.mxu0 0
      %339 = vmatpush1.bf16.msra.mxu0 %v320
      %340 = vmatprep.subr.bf16.mxu0 0
      %341 = vmatpush1.bf16.msra.mxu0 %v321
      %342 = vmatprep.subr.bf16.mxu0 0
      %343 = vmatpush1.bf16.msra.mxu0 %v322
      %344 = vmatprep.subr.bf16.mxu0 0
      %345 = vmatpush1.bf16.msra.mxu0 %v323
      %346 = vmatprep.subr.bf16.mxu0 0
      %347 = vmatpush1.bf16.msra.mxu0 %v324
      %348 = vmatprep.subr.bf16.mxu0 0
      %349 = vmatpush1.bf16.msra.mxu0 %v325
      %350 = vmatprep.subr.bf16.mxu0 0
      %351 = vmatpush1.bf16.msra.mxu0 0
      %352 = vmatprep.subr.bf16.mxu0 0
      %353 = vmatpush1.bf16.msra.mxu0 0
      %354 = vmatprep.subr.bf16.mxu0 0
      %355 = vmatpush1.bf16.msra.mxu0 0
      %356 = vmatprep.subr.bf16.mxu0 0
      %357 = vmatpush1.bf16.msra.mxu0 0
      %358 = vmatprep.subr.bf16.mxu0 0
      %359 = vmatpush1.bf16.msra.mxu0 0
      %360 = vmatprep.subr.bf16.mxu0 0
      %361 = vmatpush1.bf16.msra.mxu0 0
      %362 = vmatprep.subr.bf16.mxu0 0
      %363 = vmatpush1.bf16.msra.mxu0 0
      %364 = vmatprep.subr.bf16.mxu0 0
      %365 = vmatpush1.bf16.msra.mxu0 0
      %366 = vmatprep.mubr.bf16.mxu0 0
      %367 = vmatmul.mubr.bf16.gmra.mrb[0].mxu0 %v265
      %v368 = vpop.f32.mrb[0].mxu0
      %v369 = vadd.f32 0.0, %v368
      %v370 = vpop.f32.mrb[0].mxu0
      %v371 = vpop.f32.mrb[0].mxu0
      %v372 = vadd.f32 0.0, %v371
      %v373 = vpop.f32.mrb[0].mxu0
      %374 = vmatprep.mubr.bf16.mxu0 0
      %375 = vmatmul.mubr.bf16.gmra.mrb[0].mxu0 %v266
      %v376 = vpop.f32.mrb[0].mxu0
      %v377 = vadd.f32 0.0, %v376
      %v378 = vpop.f32.mrb[0].mxu0
      %v379 = vpop.f32.mrb[0].mxu0
      %v380 = vadd.f32 0.0, %v379
      %v381 = vpop.f32.mrb[0].mxu0
      %382 = vmatprep.mubr.bf16.mxu0 0
      %383 = vmatmul.mubr.bf16.gmra.mrb[0].mxu0 %v267
      %v384 = vpop.f32.mrb[0].mxu0
      %v385 = vadd.f32 0.0, %v384
      %v386 = vpop.f32.mrb[0].mxu0
      %v387 = vpop.f32.mrb[0].mxu0
      %v388 = vadd.f32 0.0, %v387
      %v389 = vpop.f32.mrb[0].mxu0
      %390 = vmatprep.mubr.bf16.mxu0 0
      %391 = vmatmul.mubr.bf16.gmra.mrb[0].mxu0 %v268
      %v392 = vpop.f32.mrb[0].mxu0
      %v393 = vadd.f32 0.0, %v392
      %v394 = vpop.f32.mrb[0].mxu0
      %v395 = vpop.f32.mrb[0].mxu0
      %v396 = vadd.f32 0.0, %v395
      %v397 = vpop.f32.mrb[0].mxu0
      %398 = vdwg.mxu0
      %v415 = vunpack.c.l.b16 %v240
      %v416 = vunpack.c.l.b16 %v241
      %v417 = vunpack.c.l.b16 %v242
      %v418 = vunpack.c.l.b16 %v243
      %v419 = vunpack.c.l.b16 %v244
      %v420 = vunpack.c.l.b16 %v245
      %v421 = vunpack.c.l.b16 %v246
      %v422 = vunpack.c.l.b16 %v247
      %v423 = vunpack.c.l.b16 %v248
      %v424 = vunpack.c.l.b16 %v249
      %v425 = vunpack.c.l.b16 %v250
      %v426 = vunpack.c.l.b16 %v251
      %v427 = vunpack.c.l.b16 %v252
      %v428 = vunpack.c.l.b16 %v253
      %v429 = vunpack.c.l.b16 %v254
      %v430 = vunpack.c.l.b16 %v255
      %v431 = vpack.c.b16 %v416, %v415
      %v432 = vpack.c.b16 %v418, %v417
      %v433 = vpack.c.b16 %v420, %v419
      %v434 = vpack.c.b16 %v422, %v421
      %v435 = vpack.c.b16 %v424, %v423
      %v436 = vpack.c.b16 %v426, %v425
      %v437 = vpack.c.b16 %v428, %v427
      %v438 = vpack.c.b16 %v430, %v429
      %447 = vmatprep.subr.bf16.mxu0 0
      %448 = vmatpush1.bf16.msra.mxu0 %v431
      %449 = vmatprep.subr.bf16.mxu0 0
      %450 = vmatpush1.bf16.msra.mxu0 %v432
      %451 = vmatprep.subr.bf16.mxu0 0
      %452 = vmatpush1.bf16.msra.mxu0 %v433
      %453 = vmatprep.subr.bf16.mxu0 0
      %454 = vmatpush1.bf16.msra.mxu0 %v434
      %455 = vmatprep.subr.bf16.mxu0 0
      %456 = vmatpush1.bf16.msra.mxu0 %v435
      %457 = vmatprep.subr.bf16.mxu0 0
      %458 = vmatpush1.bf16.msra.mxu0 %v436
      %459 = vmatprep.subr.bf16.mxu0 0
      %460 = vmatpush1.bf16.msra.mxu0 %v437
      %461 = vmatprep.subr.bf16.mxu0 0
      %462 = vmatpush1.bf16.msra.mxu0 %v438
      %463 = vmatprep.subr.bf16.mxu0 0
      %464 = vmatpush1.bf16.msra.mxu0 0
      %465 = vmatprep.subr.bf16.mxu0 0
      %466 = vmatpush1.bf16.msra.mxu0 0
      %467 = vmatprep.subr.bf16.mxu0 0
      %468 = vmatpush1.bf16.msra.mxu0 0
      %469 = vmatprep.subr.bf16.mxu0 0
      %470 = vmatpush1.bf16.msra.mxu0 0
      %471 = vmatprep.subr.bf16.mxu0 0
      %472 = vmatpush1.bf16.msra.mxu0 0
      %473 = vmatprep.subr.bf16.mxu0 0
      %474 = vmatpush1.bf16.msra.mxu0 0
      %475 = vmatprep.subr.bf16.mxu0 0
      %476 = vmatpush1.bf16.msra.mxu0 0
      %477 = vmatprep.subr.bf16.mxu0 0
      %478 = vmatpush1.bf16.msra.mxu0 0
      %479 = vmatprep.mubr.bf16.mxu0 0
      %480 = vmatmul.mubr.bf16.gmra.mrb[0].mxu0 %v236
      %v481 = vpop.f32.mrb[0].mxu0
      %v482 = vadd.f32 %v369, %v481
      %v483 = vpop.f32.mrb[0].mxu0
      %v484 = vpop.f32.mrb[0].mxu0
      %v485 = vadd.f32 %v372, %v484
      %v486 = vpop.f32.mrb[0].mxu0
      %487 = vmatprep.mubr.bf16.mxu0 0
      %488 = vmatmul.mubr.bf16.gmra.mrb[0].mxu0 %v237
      %v489 = vpop.f32.mrb[0].mxu0
      %v490 = vadd.f32 %v377, %v489
      %v491 = vpop.f32.mrb[0].mxu0
      %v492 = vpop.f32.mrb[0].mxu0
      %v493 = vadd.f32 %v380, %v492
      %v494 = vpop.f32.mrb[0].mxu0
      %495 = vmatprep.mubr.bf16.mxu0 0
      %496 = vmatmul.mubr.bf16.gmra.mrb[0].mxu0 %v238
      %v497 = vpop.f32.mrb[0].mxu0
      %v498 = vadd.f32 %v385, %v497
      %v499 = vpop.f32.mrb[0].mxu0
      %v500 = vpop.f32.mrb[0].mxu0
      %v501 = vadd.f32 %v388, %v500
      %v502 = vpop.f32.mrb[0].mxu0
      %503 = vmatprep.mubr.bf16.mxu0 0
      %504 = vmatmul.mubr.bf16.gmra.mrb[0].mxu0 %v239
      %v505 = vpop.f32.mrb[0].mxu0
      %v506 = vadd.f32 %v393, %v505
      %v507 = vpop.f32.mrb[0].mxu0
      %v508 = vpop.f32.mrb[0].mxu0
      %v509 = vadd.f32 %v396, %v508
      %v510 = vpop.f32.mrb[0].mxu0
      %511 = vdwg.mxu0
      %v512 = vld [vmem:[%s209 + $0x1] sm:$0xff]
      %v513 = vld [vmem:[%s209 + $0x11] sm:$0xff]
      %v514 = vld [vmem:[%s209 + $0x21] sm:$0xff]
      %v515 = vld [vmem:[%s209 + $0x31] sm:$0xff]
      %v516 = vld [vmem:[%s209 + $0x41] sm:$0xff]
      %v517 = vld [vmem:[%s209 + $0x51] sm:$0xff]
      %v518 = vld [vmem:[%s209 + $0x61] sm:$0xff]
      %v519 = vld [vmem:[%s209 + $0x71] sm:$0xff]
      %v520 = vpack.c.bf16 %v513, %v512
      %v521 = vpack.c.bf16 %v515, %v514
      %v522 = vpack.c.bf16 %v517, %v516
      %v523 = vpack.c.bf16 %v519, %v518
      %s524 = scalar_lea.vmem %s1, 128
      %v525 = vld [vmem:[%s524] sm:$0xf]
      %v526 = vld [vmem:[%s524 + $0x4] sm:$0xf]
      %v527 = vld [vmem:[%s524 + $0x8] sm:$0xf]
      %v528 = vld [vmem:[%s524 + $0xc] sm:$0xf]
      %v529 = vld [vmem:[%s524 + $0x10] sm:$0xf]
      %v530 = vld [vmem:[%s524 + $0x14] sm:$0xf]
      %v531 = vld [vmem:[%s524 + $0x18] sm:$0xf]
      %v532 = vld [vmem:[%s524 + $0x1c] sm:$0xf]
      %v533 = vld [vmem:[%s524 + $0x20] sm:$0xf]
      %v534 = vld [vmem:[%s524 + $0x24] sm:$0xf]
      %v535 = vld [vmem:[%s524 + $0x28] sm:$0xf]
      %v536 = vld [vmem:[%s524 + $0x2c] sm:$0xf]
      %v537 = vld [vmem:[%s524 + $0x30] sm:$0xf]
      %v538 = vld [vmem:[%s524 + $0x34] sm:$0xf]
      %v539 = vld [vmem:[%s524 + $0x38] sm:$0xf]
      %v540 = vld [vmem:[%s524 + $0x3c] sm:$0xf]
      %v557 = vunpack.c.l.b16 %v525
      %v558 = vunpack.c.l.b16 %v526
      %v559 = vunpack.c.l.b16 %v527
      %v560 = vunpack.c.l.b16 %v528
      %v561 = vunpack.c.l.b16 %v529
      %v562 = vunpack.c.l.b16 %v530
      %v563 = vunpack.c.l.b16 %v531
      %v564 = vunpack.c.l.b16 %v532
      %v565 = vunpack.c.l.b16 %v533
      %v566 = vunpack.c.l.b16 %v534
      %v567 = vunpack.c.l.b16 %v535
      %v568 = vunpack.c.l.b16 %v536
      %v569 = vunpack.c.l.b16 %v537
      %v570 = vunpack.c.l.b16 %v538
      %v571 = vunpack.c.l.b16 %v539
      %v572 = vunpack.c.l.b16 %v540
      %v573 = vpack.c.b16 %v558, %v557
      %v574 = vpack.c.b16 %v560, %v559
      %v575 = vpack.c.b16 %v562, %v561
      %v576 = vpack.c.b16 %v564, %v563
      %v577 = vpack.c.b16 %v566, %v565
      %v578 = vpack.c.b16 %v568, %v567
      %v579 = vpack.c.b16 %v570, %v569
      %v580 = vpack.c.b16 %v572, %v571
      %589 = vmatprep.subr.bf16.mxu0 0
      %590 = vmatpush1.bf16.msra.mxu0 %v573
      %591 = vmatprep.subr.bf16.mxu0 0
      %592 = vmatpush1.bf16.msra.mxu0 %v574
      %593 = vmatprep.subr.bf16.mxu0 0
      %594 = vmatpush1.bf16.msra.mxu0 %v575
      %595 = vmatprep.subr.bf16.mxu0 0
      %596 = vmatpush1.bf16.msra.mxu0 %v576
      %597 = vmatprep.subr.bf16.mxu0 0
      %598 = vmatpush1.bf16.msra.mxu0 %v577
      %599 = vmatprep.subr.bf16.mxu0 0
      %600 = vmatpush1.bf16.msra.mxu0 %v578
      %601 = vmatprep.subr.bf16.mxu0 0
      %602 = vmatpush1.bf16.msra.mxu0 %v579
      %603 = vmatprep.subr.bf16.mxu0 0
      %604 = vmatpush1.bf16.msra.mxu0 %v580
      %605 = vmatprep.subr.bf16.mxu0 0
      %606 = vmatpush1.bf16.msra.mxu0 0
      %607 = vmatprep.subr.bf16.mxu0 0
      %608 = vmatpush1.bf16.msra.mxu0 0
      %609 = vmatprep.subr.bf16.mxu0 0
      %610 = vmatpush1.bf16.msra.mxu0 0
      %611 = vmatprep.subr.bf16.mxu0 0
      %612 = vmatpush1.bf16.msra.mxu0 0
      %613 = vmatprep.subr.bf16.mxu0 0
      %614 = vmatpush1.bf16.msra.mxu0 0
      %615 = vmatprep.subr.bf16.mxu0 0
      %616 = vmatpush1.bf16.msra.mxu0 0
      %617 = vmatprep.subr.bf16.mxu0 0
      %618 = vmatpush1.bf16.msra.mxu0 0
      %619 = vmatprep.subr.bf16.mxu0 0
      %620 = vmatpush1.bf16.msra.mxu0 0
      %621 = vmatprep.mubr.bf16.mxu0 0
      %622 = vmatmul.mubr.bf16.gmra.mrb[0].mxu0 %v520
      %v623 = vpop.f32.mrb[0].mxu0
      %v624 = vadd.f32 0.0, %v623
      %v625 = vpop.f32.mrb[0].mxu0
      %v626 = vpop.f32.mrb[0].mxu0
      %v627 = vadd.f32 0.0, %v626
      %v628 = vpop.f32.mrb[0].mxu0
      %629 = vmatprep.mubr.bf16.mxu0 0
      %630 = vmatmul.mubr.bf16.gmra.mrb[0].mxu0 %v521
      %v631 = vpop.f32.mrb[0].mxu0
      %v632 = vadd.f32 0.0, %v631
      %v633 = vpop.f32.mrb[0].mxu0
      %v634 = vpop.f32.mrb[0].mxu0
      %v635 = vadd.f32 0.0, %v634
      %v636 = vpop.f32.mrb[0].mxu0
      %637 = vmatprep.mubr.bf16.mxu0 0
      %638 = vmatmul.mubr.bf16.gmra.mrb[0].mxu0 %v522
      %v639 = vpop.f32.mrb[0].mxu0
      %v640 = vadd.f32 0.0, %v639
      %v641 = vpop.f32.mrb[0].mxu0
      %v642 = vpop.f32.mrb[0].mxu0
      %v643 = vadd.f32 0.0, %v642
      %v644 = vpop.f32.mrb[0].mxu0
      %645 = vmatprep.mubr.bf16.mxu0 0
      %646 = vmatmul.mubr.bf16.gmra.mrb[0].mxu0 %v523
      %v647 = vpop.f32.mrb[0].mxu0
      %v648 = vadd.f32 0.0, %v647
      %v649 = vpop.f32.mrb[0].mxu0
      %v650 = vpop.f32.mrb[0].mxu0
      %v651 = vadd.f32 0.0, %v650
      %v652 = vpop.f32.mrb[0].mxu0
      %653 = vdwg.mxu0
      %v654 = vadd.f32 %v482, %v624
      %v655 = vadd.f32 %v485, %v627
      %v656 = vadd.f32 %v490, %v632
      %v657 = vadd.f32 %v493, %v635
      %v658 = vadd.f32 %v498, %v640
      %v659 = vadd.f32 %v501, %v643
      %v660 = vadd.f32 %v506, %v648
      %v661 = vadd.f32 %v509, %v651
      %s662 = scalar_lea.vmem %s209, 288
      %v663 = vld [vmem:[%s662] sm:$0xff]
      %v664 = vld [vmem:[%s662 + $0x10] sm:$0xff]
      %v665 = vld [vmem:[%s662 + $0x20] sm:$0xff]
      %v666 = vld [vmem:[%s662 + $0x30] sm:$0xff]
      %v667 = vld [vmem:[%s662 + $0x40] sm:$0xff]
      %v668 = vld [vmem:[%s662 + $0x50] sm:$0xff]
      %v669 = vld [vmem:[%s662 + $0x60] sm:$0xff]
      %v670 = vld [vmem:[%s662 + $0x70] sm:$0xff]
      %v671 = vpack.c.bf16 %v664, %v663
      %v672 = vpack.c.bf16 %v666, %v665
      %v673 = vpack.c.bf16 %v668, %v667
      %v674 = vpack.c.bf16 %v670, %v669
      %s675 = scalar_lea.vmem %s1, 192
      %v676 = vld [vmem:[%s675] sm:$0xf]
      %v677 = vld [vmem:[%s675 + $0x4] sm:$0xf]
      %v678 = vld [vmem:[%s675 + $0x8] sm:$0xf]
      %v679 = vld [vmem:[%s675 + $0xc] sm:$0xf]
      %v680 = vld [vmem:[%s675 + $0x10] sm:$0xf]
      %v681 = vld [vmem:[%s675 + $0x14] sm:$0xf]
      %v682 = vld [vmem:[%s675 + $0x18] sm:$0xf]
      %v683 = vld [vmem:[%s675 + $0x1c] sm:$0xf]
      %v684 = vld [vmem:[%s675 + $0x20] sm:$0xf]
      %v685 = vld [vmem:[%s675 + $0x24] sm:$0xf]
      %v686 = vld [vmem:[%s675 + $0x28] sm:$0xf]
      %v687 = vld [vmem:[%s675 + $0x2c] sm:$0xf]
      %v688 = vld [vmem:[%s675 + $0x30] sm:$0xf]
      %v689 = vld [vmem:[%s675 + $0x34] sm:$0xf]
      %v690 = vld [vmem:[%s675 + $0x38] sm:$0xf]
      %v691 = vld [vmem:[%s675 + $0x3c] sm:$0xf]
      %v708 = vunpack.c.l.b16 %v676
      %v709 = vunpack.c.l.b16 %v677
      %v710 = vunpack.c.l.b16 %v678
      %v711 = vunpack.c.l.b16 %v679
      %v712 = vunpack.c.l.b16 %v680
      %v713 = vunpack.c.l.b16 %v681
      %v714 = vunpack.c.l.b16 %v682
      %v715 = vunpack.c.l.b16 %v683
      %v716 = vunpack.c.l.b16 %v684
      %v717 = vunpack.c.l.b16 %v685
      %v718 = vunpack.c.l.b16 %v686
      %v719 = vunpack.c.l.b16 %v687
      %v720 = vunpack.c.l.b16 %v688
      %v721 = vunpack.c.l.b16 %v689
      %v722 = vunpack.c.l.b16 %v690
      %v723 = vunpack.c.l.b16 %v691
      %v724 = vpack.c.b16 %v709, %v708
      %v725 = vpack.c.b16 %v711, %v710
      %v726 = vpack.c.b16 %v713, %v712
      %v727 = vpack.c.b16 %v715, %v714
      %v728 = vpack.c.b16 %v717, %v716
      %v729 = vpack.c.b16 %v719, %v718
      %v730 = vpack.c.b16 %v721, %v720
      %v731 = vpack.c.b16 %v723, %v722
      %740 = vmatprep.subr.bf16.mxu0 0
      %741 = vmatpush1.bf16.msra.mxu0 %v724
      %742 = vmatprep.subr.bf16.mxu0 0
      %743 = vmatpush1.bf16.msra.mxu0 %v725
      %744 = vmatprep.subr.bf16.mxu0 0
      %745 = vmatpush1.bf16.msra.mxu0 %v726
      %746 = vmatprep.subr.bf16.mxu0 0
      %747 = vmatpush1.bf16.msra.mxu0 %v727
      %748 = vmatprep.subr.bf16.mxu0 0
      %749 = vmatpush1.bf16.msra.mxu0 %v728
      %750 = vmatprep.subr.bf16.mxu0 0
      %751 = vmatpush1.bf16.msra.mxu0 %v729
      %752 = vmatprep.subr.bf16.mxu0 0
      %753 = vmatpush1.bf16.msra.mxu0 %v730
      %754 = vmatprep.subr.bf16.mxu0 0
      %755 = vmatpush1.bf16.msra.mxu0 %v731
      %756 = vmatprep.subr.bf16.mxu0 0
      %757 = vmatpush1.bf16.msra.mxu0 0
      %758 = vmatprep.subr.bf16.mxu0 0
      %759 = vmatpush1.bf16.msra.mxu0 0
      %760 = vmatprep.subr.bf16.mxu0 0
      %761 = vmatpush1.bf16.msra.mxu0 0
      %762 = vmatprep.subr.bf16.mxu0 0
      %763 = vmatpush1.bf16.msra.mxu0 0
      %764 = vmatprep.subr.bf16.mxu0 0
      %765 = vmatpush1.bf16.msra.mxu0 0
      %766 = vmatprep.subr.bf16.mxu0 0
      %767 = vmatpush1.bf16.msra.mxu0 0
      %768 = vmatprep.subr.bf16.mxu0 0
      %769 = vmatpush1.bf16.msra.mxu0 0
      %770 = vmatprep.subr.bf16.mxu0 0
      %771 = vmatpush1.bf16.msra.mxu0 0
      %772 = vmatprep.mubr.bf16.mxu0 0
      %773 = vmatmul.mubr.bf16.gmra.mrb[0].mxu0 %v671
      %v774 = vpop.f32.mrb[0].mxu0
      %v775 = vadd.f32 0.0, %v774
      %v776 = vpop.f32.mrb[0].mxu0
      %v777 = vpop.f32.mrb[0].mxu0
      %v778 = vadd.f32 0.0, %v777
      %v779 = vpop.f32.mrb[0].mxu0
      %780 = vmatprep.mubr.bf16.mxu0 0
      %781 = vmatmul.mubr.bf16.gmra.mrb[0].mxu0 %v672
      %v782 = vpop.f32.mrb[0].mxu0
      %v783 = vadd.f32 0.0, %v782
      %v784 = vpop.f32.mrb[0].mxu0
      %v785 = vpop.f32.mrb[0].mxu0
      %v786 = vadd.f32 0.0, %v785
      %v787 = vpop.f32.mrb[0].mxu0
      %788 = vmatprep.mubr.bf16.mxu0 0
      %789 = vmatmul.mubr.bf16.gmra.mrb[0].mxu0 %v673
      %v790 = vpop.f32.mrb[0].mxu0
      %v791 = vadd.f32 0.0, %v790
      %v792 = vpop.f32.mrb[0].mxu0
      %v793 = vpop.f32.mrb[0].mxu0
      %v794 = vadd.f32 0.0, %v793
      %v795 = vpop.f32.mrb[0].mxu0
      %796 = vmatprep.mubr.bf16.mxu0 0
      %797 = vmatmul.mubr.bf16.gmra.mrb[0].mxu0 %v674
      %v798 = vpop.f32.mrb[0].mxu0
      %v799 = vadd.f32 0.0, %v798
      %v800 = vpop.f32.mrb[0].mxu0
      %v801 = vpop.f32.mrb[0].mxu0
      %v802 = vadd.f32 0.0, %v801
      %v803 = vpop.f32.mrb[0].mxu0
      %804 = vdwg.mxu0
      %v805 = vadd.f32 %v654, %v775
      %v806 = vadd.f32 %v655, %v778
      %v807 = vadd.f32 %v656, %v783
      %v808 = vadd.f32 %v657, %v786
      %v809 = vadd.f32 %v658, %v791
      %v810 = vadd.f32 %v659, %v794
      %v811 = vadd.f32 %v660, %v799
      %v812 = vadd.f32 %v661, %v802
      %s813 = scalar_lea.vmem %s209, 432
      %v814 = vld [vmem:[%s813] sm:$0xff]
      %v815 = vld [vmem:[%s813 + $0x10] sm:$0xff]
      %v816 = vld [vmem:[%s813 + $0x20] sm:$0xff]
      %v817 = vld [vmem:[%s813 + $0x30] sm:$0xff]
      %v818 = vld [vmem:[%s813 + $0x40] sm:$0xff]
      %v819 = vld [vmem:[%s813 + $0x50] sm:$0xff]
      %v820 = vld [vmem:[%s813 + $0x60] sm:$0xff]
      %v821 = vld [vmem:[%s813 + $0x70] sm:$0xff]
      %v822 = vpack.c.bf16 %v815, %v814
      %v823 = vpack.c.bf16 %v817, %v816
      %v824 = vpack.c.bf16 %v819, %v818
      %v825 = vpack.c.bf16 %v821, %v820
      %s826 = scalar_lea.vmem %s1, 256
      %v827 = vld [vmem:[%s826] sm:$0xf]
      %v828 = vld [vmem:[%s826 + $0x4] sm:$0xf]
      %v829 = vld [vmem:[%s826 + $0x8] sm:$0xf]
      %v830 = vld [vmem:[%s826 + $0xc] sm:$0xf]
      %v831 = vld [vmem:[%s826 + $0x10] sm:$0xf]
      %v832 = vld [vmem:[%s826 + $0x14] sm:$0xf]
      %v833 = vld [vmem:[%s826 + $0x18] sm:$0xf]
      %v834 = vld [vmem:[%s826 + $0x1c] sm:$0xf]
      %v835 = vld [vmem:[%s826 + $0x20] sm:$0xf]
      %v836 = vld [vmem:[%s826 + $0x24] sm:$0xf]
      %v837 = vld [vmem:[%s826 + $0x28] sm:$0xf]
      %v838 = vld [vmem:[%s826 + $0x2c] sm:$0xf]
      %v839 = vld [vmem:[%s826 + $0x30] sm:$0xf]
      %v840 = vld [vmem:[%s826 + $0x34] sm:$0xf]
      %v841 = vld [vmem:[%s826 + $0x38] sm:$0xf]
      %v842 = vld [vmem:[%s826 + $0x3c] sm:$0xf]
      %v859 = vunpack.c.l.b16 %v827
      %v860 = vunpack.c.l.b16 %v828
      %v861 = vunpack.c.l.b16 %v829
      %v862 = vunpack.c.l.b16 %v830
      %v863 = vunpack.c.l.b16 %v831
      %v864 = vunpack.c.l.b16 %v832
      %v865 = vunpack.c.l.b16 %v833
      %v866 = vunpack.c.l.b16 %v834
      %v867 = vunpack.c.l.b16 %v835
      %v868 = vunpack.c.l.b16 %v836
      %v869 = vunpack.c.l.b16 %v837
      %v870 = vunpack.c.l.b16 %v838
      %v871 = vunpack.c.l.b16 %v839
      %v872 = vunpack.c.l.b16 %v840
      %v873 = vunpack.c.l.b16 %v841
      %v874 = vunpack.c.l.b16 %v842
      %v875 = vpack.c.b16 %v860, %v859
      %v876 = vpack.c.b16 %v862, %v861
      %v877 = vpack.c.b16 %v864, %v863
      %v878 = vpack.c.b16 %v866, %v865
      %v879 = vpack.c.b16 %v868, %v867
      %v880 = vpack.c.b16 %v870, %v869
      %v881 = vpack.c.b16 %v872, %v871
      %v882 = vpack.c.b16 %v874, %v873
      %891 = vmatprep.subr.bf16.mxu0 0
      %892 = vmatpush1.bf16.msra.mxu0 %v875
      %893 = vmatprep.subr.bf16.mxu0 0
      %894 = vmatpush1.bf16.msra.mxu0 %v876
      %895 = vmatprep.subr.bf16.mxu0 0
      %896 = vmatpush1.bf16.msra.mxu0 %v877
      %897 = vmatprep.subr.bf16.mxu0 0
      %898 = vmatpush1.bf16.msra.mxu0 %v878
      %899 = vmatprep.subr.bf16.mxu0 0
      %900 = vmatpush1.bf16.msra.mxu0 %v879
      %901 = vmatprep.subr.bf16.mxu0 0
      %902 = vmatpush1.bf16.msra.mxu0 %v880
      %903 = vmatprep.subr.bf16.mxu0 0
      %904 = vmatpush1.bf16.msra.mxu0 %v881
      %905 = vmatprep.subr.bf16.mxu0 0
      %906 = vmatpush1.bf16.msra.mxu0 %v882
      %907 = vmatprep.subr.bf16.mxu0 0
      %908 = vmatpush1.bf16.msra.mxu0 0
      %909 = vmatprep.subr.bf16.mxu0 0
      %910 = vmatpush1.bf16.msra.mxu0 0
      %911 = vmatprep.subr.bf16.mxu0 0
      %912 = vmatpush1.bf16.msra.mxu0 0
      %913 = vmatprep.subr.bf16.mxu0 0
      %914 = vmatpush1.bf16.msra.mxu0 0
      %915 = vmatprep.subr.bf16.mxu0 0
      %916 = vmatpush1.bf16.msra.mxu0 0
      %917 = vmatprep.subr.bf16.mxu0 0
      %918 = vmatpush1.bf16.msra.mxu0 0
      %919 = vmatprep.subr.bf16.mxu0 0
      %920 = vmatpush1.bf16.msra.mxu0 0
      %921 = vmatprep.subr.bf16.mxu0 0
      %922 = vmatpush1.bf16.msra.mxu0 0
      %923 = vmatprep.mubr.bf16.mxu0 0
      %924 = vmatmul.mubr.bf16.gmra.mrb[0].mxu0 %v822
      %v925 = vpop.f32.mrb[0].mxu0
      %v926 = vadd.f32 0.0, %v925
      %v927 = vpop.f32.mrb[0].mxu0
      %v928 = vpop.f32.mrb[0].mxu0
      %v929 = vadd.f32 0.0, %v928
      %v930 = vpop.f32.mrb[0].mxu0
      %931 = vmatprep.mubr.bf16.mxu0 0
      %932 = vmatmul.mubr.bf16.gmra.mrb[0].mxu0 %v823
      %v933 = vpop.f32.mrb[0].mxu0
      %v934 = vadd.f32 0.0, %v933
      %v935 = vpop.f32.mrb[0].mxu0
      %v936 = vpop.f32.mrb[0].mxu0
      %v937 = vadd.f32 0.0, %v936
      %v938 = vpop.f32.mrb[0].mxu0
      %939 = vmatprep.mubr.bf16.mxu0 0
      %940 = vmatmul.mubr.bf16.gmra.mrb[0].mxu0 %v824
      %v941 = vpop.f32.mrb[0].mxu0
      %v942 = vadd.f32 0.0, %v941
      %v943 = vpop.f32.mrb[0].mxu0
      %v944 = vpop.f32.mrb[0].mxu0
      %v945 = vadd.f32 0.0, %v944
      %v946 = vpop.f32.mrb[0].mxu0
      %947 = vmatprep.mubr.bf16.mxu0 0
      %948 = vmatmul.mubr.bf16.gmra.mrb[0].mxu0 %v825
      %v949 = vpop.f32.mrb[0].mxu0
      %v950 = vadd.f32 0.0, %v949
      %v951 = vpop.f32.mrb[0].mxu0
      %v952 = vpop.f32.mrb[0].mxu0
      %v953 = vadd.f32 0.0, %v952
      %v954 = vpop.f32.mrb[0].mxu0
      %955 = vdwg.mxu0
      %v956 = vadd.f32 %v805, %v926
      %v957 = vadd.f32 %v806, %v929
      %v958 = vadd.f32 %v807, %v934
      %v959 = vadd.f32 %v808, %v937
      %v960 = vadd.f32 %v809, %v942
      %v961 = vadd.f32 %v810, %v945
      %v962 = vadd.f32 %v811, %v950
      %v963 = vadd.f32 %v812, %v953
      %v964 = vld [vmem:[%s662 + $0x1] sm:$0xff]
      %v965 = vld [vmem:[%s662 + $0x11] sm:$0xff]
      %v966 = vld [vmem:[%s662 + $0x21] sm:$0xff]
      %v967 = vld [vmem:[%s662 + $0x31] sm:$0xff]
      %v968 = vld [vmem:[%s662 + $0x41] sm:$0xff]
      %v969 = vld [vmem:[%s662 + $0x51] sm:$0xff]
      %v970 = vld [vmem:[%s662 + $0x61] sm:$0xff]
      %v971 = vld [vmem:[%s662 + $0x71] sm:$0xff]
      %v972 = vpack.c.bf16 %v965, %v964
      %v973 = vpack.c.bf16 %v967, %v966
      %v974 = vpack.c.bf16 %v969, %v968
      %v975 = vpack.c.bf16 %v971, %v970
      %s976 = scalar_lea.vmem %s1, 320
      %v977 = vld [vmem:[%s976] sm:$0xf]
      %v978 = vld [vmem:[%s976 + $0x4] sm:$0xf]
      %v979 = vld [vmem:[%s976 + $0x8] sm:$0xf]
      %v980 = vld [vmem:[%s976 + $0xc] sm:$0xf]
      %v981 = vld [vmem:[%s976 + $0x10] sm:$0xf]
      %v982 = vld [vmem:[%s976 + $0x14] sm:$0xf]
      %v983 = vld [vmem:[%s976 + $0x18] sm:$0xf]
      %v984 = vld [vmem:[%s976 + $0x1c] sm:$0xf]
      %v985 = vld [vmem:[%s976 + $0x20] sm:$0xf]
      %v986 = vld [vmem:[%s976 + $0x24] sm:$0xf]
      %v987 = vld [vmem:[%s976 + $0x28] sm:$0xf]
      %v988 = vld [vmem:[%s976 + $0x2c] sm:$0xf]
      %v989 = vld [vmem:[%s976 + $0x30] sm:$0xf]
      %v990 = vld [vmem:[%s976 + $0x34] sm:$0xf]
      %v991 = vld [vmem:[%s976 + $0x38] sm:$0xf]
      %v992 = vld [vmem:[%s976 + $0x3c] sm:$0xf]
      %v1009 = vunpack.c.l.b16 %v977
      %v1010 = vunpack.c.l.b16 %v978
      %v1011 = vunpack.c.l.b16 %v979
      %v1012 = vunpack.c.l.b16 %v980
      %v1013 = vunpack.c.l.b16 %v981
      %v1014 = vunpack.c.l.b16 %v982
      %v1015 = vunpack.c.l.b16 %v983
      %v1016 = vunpack.c.l.b16 %v984
      %v1017 = vunpack.c.l.b16 %v985
      %v1018 = vunpack.c.l.b16 %v986
      %v1019 = vunpack.c.l.b16 %v987
      %v1020 = vunpack.c.l.b16 %v988
      %v1021 = vunpack.c.l.b16 %v989
      %v1022 = vunpack.c.l.b16 %v990
      %v1023 = vunpack.c.l.b16 %v991
      %v1024 = vunpack.c.l.b16 %v992
      %v1025 = vpack.c.b16 %v1010, %v1009
      %v1026 = vpack.c.b16 %v1012, %v1011
      %v1027 = vpack.c.b16 %v1014, %v1013
      %v1028 = vpack.c.b16 %v1016, %v1015
      %v1029 = vpack.c.b16 %v1018, %v1017
      %v1030 = vpack.c.b16 %v1020, %v1019
      %v1031 = vpack.c.b16 %v1022, %v1021
      %v1032 = vpack.c.b16 %v1024, %v1023
      %1041 = vmatprep.subr.bf16.mxu0 0
      %1042 = vmatpush1.bf16.msra.mxu0 %v1025
      %1043 = vmatprep.subr.bf16.mxu0 0
      %1044 = vmatpush1.bf16.msra.mxu0 %v1026
      %1045 = vmatprep.subr.bf16.mxu0 0
      %1046 = vmatpush1.bf16.msra.mxu0 %v1027
      %1047 = vmatprep.subr.bf16.mxu0 0
      %1048 = vmatpush1.bf16.msra.mxu0 %v1028
      %1049 = vmatprep.subr.bf16.mxu0 0
      %1050 = vmatpush1.bf16.msra.mxu0 %v1029
      %1051 = vmatprep.subr.bf16.mxu0 0
      %1052 = vmatpush1.bf16.msra.mxu0 %v1030
      %1053 = vmatprep.subr.bf16.mxu0 0
      %1054 = vmatpush1.bf16.msra.mxu0 %v1031
      %1055 = vmatprep.subr.bf16.mxu0 0
      %1056 = vmatpush1.bf16.msra.mxu0 %v1032
      %1057 = vmatprep.subr.bf16.mxu0 0
      %1058 = vmatpush1.bf16.msra.mxu0 0
      %1059 = vmatprep.subr.bf16.mxu0 0
      %1060 = vmatpush1.bf16.msra.mxu0 0
      %1061 = vmatprep.subr.bf16.mxu0 0
      %1062 = vmatpush1.bf16.msra.mxu0 0
      %1063 = vmatprep.subr.bf16.mxu0 0
      %1064 = vmatpush1.bf16.msra.mxu0 0
      %1065 = vmatprep.subr.bf16.mxu0 0
      %1066 = vmatpush1.bf16.msra.mxu0 0
      %1067 = vmatprep.subr.bf16.mxu0 0
      %1068 = vmatpush1.bf16.msra.mxu0 0
      %1069 = vmatprep.subr.bf16.mxu0 0
      %1070 = vmatpush1.bf16.msra.mxu0 0
      %1071 = vmatprep.subr.bf16.mxu0 0
      %1072 = vmatpush1.bf16.msra.mxu0 0
      %1073 = vmatprep.mubr.bf16.mxu0 0
      %1074 = vmatmul.mubr.bf16.gmra.mrb[0].mxu0 %v972
      %v1075 = vpop.f32.mrb[0].mxu0
      %v1076 = vadd.f32 0.0, %v1075
      %v1077 = vpop.f32.mrb[0].mxu0
      %v1078 = vpop.f32.mrb[0].mxu0
      %v1079 = vadd.f32 0.0, %v1078
      %v1080 = vpop.f32.mrb[0].mxu0
      %1081 = vmatprep.mubr.bf16.mxu0 0
      %1082 = vmatmul.mubr.bf16.gmra.mrb[0].mxu0 %v973
      %v1083 = vpop.f32.mrb[0].mxu0
      %v1084 = vadd.f32 0.0, %v1083
      %v1085 = vpop.f32.mrb[0].mxu0
      %v1086 = vpop.f32.mrb[0].mxu0
      %v1087 = vadd.f32 0.0, %v1086
      %v1088 = vpop.f32.mrb[0].mxu0
      %1089 = vmatprep.mubr.bf16.mxu0 0
      %1090 = vmatmul.mubr.bf16.gmra.mrb[0].mxu0 %v974
      %v1091 = vpop.f32.mrb[0].mxu0
      %v1092 = vadd.f32 0.0, %v1091
      %v1093 = vpop.f32.mrb[0].mxu0
      %v1094 = vpop.f32.mrb[0].mxu0
      %v1095 = vadd.f32 0.0, %v1094
      %v1096 = vpop.f32.mrb[0].mxu0
      %1097 = vmatprep.mubr.bf16.mxu0 0
      %1098 = vmatmul.mubr.bf16.gmra.mrb[0].mxu0 %v975
      %v1099 = vpop.f32.mrb[0].mxu0
      %v1100 = vadd.f32 0.0, %v1099
      %v1101 = vpop.f32.mrb[0].mxu0
      %v1102 = vpop.f32.mrb[0].mxu0
      %v1103 = vadd.f32 0.0, %v1102
      %v1104 = vpop.f32.mrb[0].mxu0
      %1105 = vdwg.mxu0
      %v1106 = vadd.f32 %v956, %v1076
      %v1107 = vadd.f32 %v957, %v1079
      %v1108 = vadd.f32 %v958, %v1084
      %v1109 = vadd.f32 %v959, %v1087
      %v1110 = vadd.f32 %v960, %v1092
      %v1111 = vadd.f32 %v961, %v1095
      %v1112 = vadd.f32 %v962, %v1100
      %v1113 = vadd.f32 %v963, %v1103
      %s1114 = scalar_lea.vmem %s209, 16
      %v1115 = vld [vmem:[%s1114] sm:$0xff]
      %v1116 = vld [vmem:[%s1114 + $0x10] sm:$0xff]
      %v1117 = vld [vmem:[%s1114 + $0x20] sm:$0xff]
      %v1118 = vld [vmem:[%s1114 + $0x30] sm:$0xff]
      %v1119 = vld [vmem:[%s1114 + $0x40] sm:$0xff]
      %v1120 = vld [vmem:[%s1114 + $0x50] sm:$0xff]
      %v1121 = vld [vmem:[%s1114 + $0x60] sm:$0xff]
      %v1122 = vld [vmem:[%s1114 + $0x70] sm:$0xff]
      %v1123 = vpack.c.bf16 %v1116, %v1115
      %v1124 = vpack.c.bf16 %v1118, %v1117
      %v1125 = vpack.c.bf16 %v1120, %v1119
      %v1126 = vpack.c.bf16 %v1122, %v1121
      %s1127 = scalar_lea.vmem %s1, 384
      %v1128 = vld [vmem:[%s1127] sm:$0xf]
      %v1129 = vld [vmem:[%s1127 + $0x4] sm:$0xf]
      %v1130 = vld [vmem:[%s1127 + $0x8] sm:$0xf]
      %v1131 = vld [vmem:[%s1127 + $0xc] sm:$0xf]
      %v1132 = vld [vmem:[%s1127 + $0x10] sm:$0xf]
      %v1133 = vld [vmem:[%s1127 + $0x14] sm:$0xf]
      %v1134 = vld [vmem:[%s1127 + $0x18] sm:$0xf]
      %v1135 = vld [vmem:[%s1127 + $0x1c] sm:$0xf]
      %v1136 = vld [vmem:[%s1127 + $0x20] sm:$0xf]
      %v1137 = vld [vmem:[%s1127 + $0x24] sm:$0xf]
      %v1138 = vld [vmem:[%s1127 + $0x28] sm:$0xf]
      %v1139 = vld [vmem:[%s1127 + $0x2c] sm:$0xf]
      %v1140 = vld [vmem:[%s1127 + $0x30] sm:$0xf]
      %v1141 = vld [vmem:[%s1127 + $0x34] sm:$0xf]
      %v1142 = vld [vmem:[%s1127 + $0x38] sm:$0xf]
      %v1143 = vld [vmem:[%s1127 + $0x3c] sm:$0xf]
      %v1160 = vunpack.c.l.b16 %v1128
      %v1161 = vunpack.c.l.b16 %v1129
      %v1162 = vunpack.c.l.b16 %v1130
      %v1163 = vunpack.c.l.b16 %v1131
      %v1164 = vunpack.c.l.b16 %v1132
      %v1165 = vunpack.c.l.b16 %v1133
      %v1166 = vunpack.c.l.b16 %v1134
      %v1167 = vunpack.c.l.b16 %v1135
      %v1168 = vunpack.c.l.b16 %v1136
      %v1169 = vunpack.c.l.b16 %v1137
      %v1170 = vunpack.c.l.b16 %v1138
      %v1171 = vunpack.c.l.b16 %v1139
      %v1172 = vunpack.c.l.b16 %v1140
      %v1173 = vunpack.c.l.b16 %v1141
      %v1174 = vunpack.c.l.b16 %v1142
      %v1175 = vunpack.c.l.b16 %v1143
      %v1176 = vpack.c.b16 %v1161, %v1160
      %v1177 = vpack.c.b16 %v1163, %v1162
      %v1178 = vpack.c.b16 %v1165, %v1164
      %v1179 = vpack.c.b16 %v1167, %v1166
      %v1180 = vpack.c.b16 %v1169, %v1168
      %v1181 = vpack.c.b16 %v1171, %v1170
      %v1182 = vpack.c.b16 %v1173, %v1172
      %v1183 = vpack.c.b16 %v1175, %v1174
      %1192 = vmatprep.subr.bf16.mxu0 0
      %1193 = vmatpush1.bf16.msra.mxu0 %v1176
      %1194 = vmatprep.subr.bf16.mxu0 0
      %1195 = vmatpush1.bf16.msra.mxu0 %v1177
      %1196 = vmatprep.subr.bf16.mxu0 0
      %1197 = vmatpush1.bf16.msra.mxu0 %v1178
      %1198 = vmatprep.subr.bf16.mxu0 0
      %1199 = vmatpush1.bf16.msra.mxu0 %v1179
      %1200 = vmatprep.subr.bf16.mxu0 0
      %1201 = vmatpush1.bf16.msra.mxu0 %v1180
      %1202 = vmatprep.subr.bf16.mxu0 0
      %1203 = vmatpush1.bf16.msra.mxu0 %v1181
      %1204 = vmatprep.subr.bf16.mxu0 0
      %1205 = vmatpush1.bf16.msra.mxu0 %v1182
      %1206 = vmatprep.subr.bf16.mxu0 0
      %1207 = vmatpush1.bf16.msra.mxu0 %v1183
      %1208 = vmatprep.subr.bf16.mxu0 0
      %1209 = vmatpush1.bf16.msra.mxu0 0
      %1210 = vmatprep.subr.bf16.mxu0 0
      %1211 = vmatpush1.bf16.msra.mxu0 0
      %1212 = vmatprep.subr.bf16.mxu0 0
      %1213 = vmatpush1.bf16.msra.mxu0 0
      %1214 = vmatprep.subr.bf16.mxu0 0
      %1215 = vmatpush1.bf16.msra.mxu0 0
      %1216 = vmatprep.subr.bf16.mxu0 0
      %1217 = vmatpush1.bf16.msra.mxu0 0
      %1218 = vmatprep.subr.bf16.mxu0 0
      %1219 = vmatpush1.bf16.msra.mxu0 0
      %1220 = vmatprep.subr.bf16.mxu0 0
      %1221 = vmatpush1.bf16.msra.mxu0 0
      %1222 = vmatprep.subr.bf16.mxu0 0
      %1223 = vmatpush1.bf16.msra.mxu0 0
      %1224 = vmatprep.mubr.bf16.mxu0 0
      %1225 = vmatmul.mubr.bf16.gmra.mrb[0].mxu0 %v1123
      %v1226 = vpop.f32.mrb[0].mxu0
      %v1227 = vadd.f32 0.0, %v1226
      %v1228 = vpop.f32.mrb[0].mxu0
      %v1229 = vpop.f32.mrb[0].mxu0
      %v1230 = vadd.f32 0.0, %v1229
      %v1231 = vpop.f32.mrb[0].mxu0
      %1232 = vmatprep.mubr.bf16.mxu0 0
      %1233 = vmatmul.mubr.bf16.gmra.mrb[0].mxu0 %v1124
      %v1234 = vpop.f32.mrb[0].mxu0
      %v1235 = vadd.f32 0.0, %v1234
      %v1236 = vpop.f32.mrb[0].mxu0
      %v1237 = vpop.f32.mrb[0].mxu0
      %v1238 = vadd.f32 0.0, %v1237
      %v1239 = vpop.f32.mrb[0].mxu0
      %1240 = vmatprep.mubr.bf16.mxu0 0
      %1241 = vmatmul.mubr.bf16.gmra.mrb[0].mxu0 %v1125
      %v1242 = vpop.f32.mrb[0].mxu0
      %v1243 = vadd.f32 0.0, %v1242
      %v1244 = vpop.f32.mrb[0].mxu0
      %v1245 = vpop.f32.mrb[0].mxu0
      %v1246 = vadd.f32 0.0, %v1245
      %v1247 = vpop.f32.mrb[0].mxu0
      %1248 = vmatprep.mubr.bf16.mxu0 0
      %1249 = vmatmul.mubr.bf16.gmra.mrb[0].mxu0 %v1126
      %v1250 = vpop.f32.mrb[0].mxu0
      %v1251 = vadd.f32 0.0, %v1250
      %v1252 = vpop.f32.mrb[0].mxu0
      %v1253 = vpop.f32.mrb[0].mxu0
      %v1254 = vadd.f32 0.0, %v1253
      %v1255 = vpop.f32.mrb[0].mxu0
      %1256 = vdwg.mxu0
      %v1257 = vadd.f32 %v1106, %v1227
      %v1258 = vadd.f32 %v1107, %v1230
      %v1259 = vadd.f32 %v1108, %v1235
      %v1260 = vadd.f32 %v1109, %v1238
      %v1261 = vadd.f32 %v1110, %v1243
      %v1262 = vadd.f32 %v1111, %v1246
      %v1263 = vadd.f32 %v1112, %v1251
      %v1264 = vadd.f32 %v1113, %v1254
      %s1265 = scalar_lea.vmem %s209, 160
      %v1266 = vld [vmem:[%s1265] sm:$0xff]
      %v1267 = vld [vmem:[%s1265 + $0x10] sm:$0xff]
      %v1268 = vld [vmem:[%s1265 + $0x20] sm:$0xff]
      %v1269 = vld [vmem:[%s1265 + $0x30] sm:$0xff]
      %v1270 = vld [vmem:[%s1265 + $0x40] sm:$0xff]
      %v1271 = vld [vmem:[%s1265 + $0x50] sm:$0xff]
      %v1272 = vld [vmem:[%s1265 + $0x60] sm:$0xff]
      %v1273 = vld [vmem:[%s1265 + $0x70] sm:$0xff]
      %v1274 = vpack.c.bf16 %v1267, %v1266
      %v1275 = vpack.c.bf16 %v1269, %v1268
      %v1276 = vpack.c.bf16 %v1271, %v1270
      %v1277 = vpack.c.bf16 %v1273, %v1272
      %s1278 = scalar_lea.vmem %s1, 448
      %v1279 = vld [vmem:[%s1278] sm:$0xf]
      %v1280 = vld [vmem:[%s1278 + $0x4] sm:$0xf]
      %v1281 = vld [vmem:[%s1278 + $0x8] sm:$0xf]
      %v1282 = vld [vmem:[%s1278 + $0xc] sm:$0xf]
      %v1283 = vld [vmem:[%s1278 + $0x10] sm:$0xf]
      %v1284 = vld [vmem:[%s1278 + $0x14] sm:$0xf]
      %v1285 = vld [vmem:[%s1278 + $0x18] sm:$0xf]
      %v1286 = vld [vmem:[%s1278 + $0x1c] sm:$0xf]
      %v1287 = vld [vmem:[%s1278 + $0x20] sm:$0xf]
      %v1288 = vld [vmem:[%s1278 + $0x24] sm:$0xf]
      %v1289 = vld [vmem:[%s1278 + $0x28] sm:$0xf]
      %v1290 = vld [vmem:[%s1278 + $0x2c] sm:$0xf]
      %v1291 = vld [vmem:[%s1278 + $0x30] sm:$0xf]
      %v1292 = vld [vmem:[%s1278 + $0x34] sm:$0xf]
      %v1293 = vld [vmem:[%s1278 + $0x38] sm:$0xf]
      %v1294 = vld [vmem:[%s1278 + $0x3c] sm:$0xf]
      %v1311 = vunpack.c.l.b16 %v1279
      %v1312 = vunpack.c.l.b16 %v1280
      %v1313 = vunpack.c.l.b16 %v1281
      %v1314 = vunpack.c.l.b16 %v1282
      %v1315 = vunpack.c.l.b16 %v1283
      %v1316 = vunpack.c.l.b16 %v1284
      %v1317 = vunpack.c.l.b16 %v1285
      %v1318 = vunpack.c.l.b16 %v1286
      %v1319 = vunpack.c.l.b16 %v1287
      %v1320 = vunpack.c.l.b16 %v1288
      %v1321 = vunpack.c.l.b16 %v1289
      %v1322 = vunpack.c.l.b16 %v1290
      %v1323 = vunpack.c.l.b16 %v1291
      %v1324 = vunpack.c.l.b16 %v1292
      %v1325 = vunpack.c.l.b16 %v1293
      %v1326 = vunpack.c.l.b16 %v1294
      %v1327 = vpack.c.b16 %v1312, %v1311
      %v1328 = vpack.c.b16 %v1314, %v1313
      %v1329 = vpack.c.b16 %v1316, %v1315
      %v1330 = vpack.c.b16 %v1318, %v1317
      %v1331 = vpack.c.b16 %v1320, %v1319
      %v1332 = vpack.c.b16 %v1322, %v1321
      %v1333 = vpack.c.b16 %v1324, %v1323
      %v1334 = vpack.c.b16 %v1326, %v1325
      %1343 = vmatprep.subr.bf16.mxu0 0
      %1344 = vmatpush1.bf16.msra.mxu0 %v1327
      %1345 = vmatprep.subr.bf16.mxu0 0
      %1346 = vmatpush1.bf16.msra.mxu0 %v1328
      %1347 = vmatprep.subr.bf16.mxu0 0
      %1348 = vmatpush1.bf16.msra.mxu0 %v1329
      %1349 = vmatprep.subr.bf16.mxu0 0
      %1350 = vmatpush1.bf16.msra.mxu0 %v1330
      %1351 = vmatprep.subr.bf16.mxu0 0
      %1352 = vmatpush1.bf16.msra.mxu0 %v1331
      %1353 = vmatprep.subr.bf16.mxu0 0
      %1354 = vmatpush1.bf16.msra.mxu0 %v1332
      %1355 = vmatprep.subr.bf16.mxu0 0
      %1356 = vmatpush1.bf16.msra.mxu0 %v1333
      %1357 = vmatprep.subr.bf16.mxu0 0
      %1358 = vmatpush1.bf16.msra.mxu0 %v1334
      %1359 = vmatprep.subr.bf16.mxu0 0
      %1360 = vmatpush1.bf16.msra.mxu0 0
      %1361 = vmatprep.subr.bf16.mxu0 0
      %1362 = vmatpush1.bf16.msra.mxu0 0
      %1363 = vmatprep.subr.bf16.mxu0 0
      %1364 = vmatpush1.bf16.msra.mxu0 0
      %1365 = vmatprep.subr.bf16.mxu0 0
      %1366 = vmatpush1.bf16.msra.mxu0 0
      %1367 = vmatprep.subr.bf16.mxu0 0
      %1368 = vmatpush1.bf16.msra.mxu0 0
      %1369 = vmatprep.subr.bf16.mxu0 0
      %1370 = vmatpush1.bf16.msra.mxu0 0
      %1371 = vmatprep.subr.bf16.mxu0 0
      %1372 = vmatpush1.bf16.msra.mxu0 0
      %1373 = vmatprep.subr.bf16.mxu0 0
      %1374 = vmatpush1.bf16.msra.mxu0 0
      %1375 = vmatprep.mubr.bf16.mxu0 0
      %1376 = vmatmul.mubr.bf16.gmra.mrb[0].mxu0 %v1274
      %v1377 = vpop.f32.mrb[0].mxu0
      %v1378 = vadd.f32 0.0, %v1377
      %v1379 = vpop.f32.mrb[0].mxu0
      %v1380 = vpop.f32.mrb[0].mxu0
      %v1381 = vadd.f32 0.0, %v1380
      %v1382 = vpop.f32.mrb[0].mxu0
      %1383 = vmatprep.mubr.bf16.mxu0 0
      %1384 = vmatmul.mubr.bf16.gmra.mrb[0].mxu0 %v1275
      %v1385 = vpop.f32.mrb[0].mxu0
      %v1386 = vadd.f32 0.0, %v1385
      %v1387 = vpop.f32.mrb[0].mxu0
      %v1388 = vpop.f32.mrb[0].mxu0
      %v1389 = vadd.f32 0.0, %v1388
      %v1390 = vpop.f32.mrb[0].mxu0
      %1391 = vmatprep.mubr.bf16.mxu0 0
      %1392 = vmatmul.mubr.bf16.gmra.mrb[0].mxu0 %v1276
      %v1393 = vpop.f32.mrb[0].mxu0
      %v1394 = vadd.f32 0.0, %v1393
      %v1395 = vpop.f32.mrb[0].mxu0
      %v1396 = vpop.f32.mrb[0].mxu0
      %v1397 = vadd.f32 0.0, %v1396
      %v1398 = vpop.f32.mrb[0].mxu0
      %1399 = vmatprep.mubr.bf16.mxu0 0
      %1400 = vmatmul.mubr.bf16.gmra.mrb[0].mxu0 %v1277
      %v1401 = vpop.f32.mrb[0].mxu0
      %v1402 = vadd.f32 0.0, %v1401
      %v1403 = vpop.f32.mrb[0].mxu0
      %v1404 = vpop.f32.mrb[0].mxu0
      %v1405 = vadd.f32 0.0, %v1404
      %v1406 = vpop.f32.mrb[0].mxu0
      %1407 = vdwg.mxu0
      %v1408 = vadd.f32 %v1257, %v1378
      %v1409 = vadd.f32 %v1258, %v1381
      %v1410 = vadd.f32 %v1259, %v1386
      %v1411 = vadd.f32 %v1260, %v1389
      %v1412 = vadd.f32 %v1261, %v1394
      %v1413 = vadd.f32 %v1262, %v1397
      %v1414 = vadd.f32 %v1263, %v1402
      %v1415 = vadd.f32 %v1264, %v1405
      %v1416 = vld [vmem:[%s1114 + $0x1] sm:$0xff]
      %v1417 = vld [vmem:[%s1114 + $0x11] sm:$0xff]
      %v1418 = vld [vmem:[%s1114 + $0x21] sm:$0xff]
      %v1419 = vld [vmem:[%s1114 + $0x31] sm:$0xff]
      %v1420 = vld [vmem:[%s1114 + $0x41] sm:$0xff]
      %v1421 = vld [vmem:[%s1114 + $0x51] sm:$0xff]
      %v1422 = vld [vmem:[%s1114 + $0x61] sm:$0xff]
      %v1423 = vld [vmem:[%s1114 + $0x71] sm:$0xff]
      %v1424 = vpack.c.bf16 %v1417, %v1416
      %v1425 = vpack.c.bf16 %v1419, %v1418
      %v1426 = vpack.c.bf16 %v1421, %v1420
      %v1427 = vpack.c.bf16 %v1423, %v1422
      %s1428 = scalar_lea.vmem %s1, 512
      %v1429 = vld [vmem:[%s1428] sm:$0xf]
      %v1430 = vld [vmem:[%s1428 + $0x4] sm:$0xf]
      %v1431 = vld [vmem:[%s1428 + $0x8] sm:$0xf]
      %v1432 = vld [vmem:[%s1428 + $0xc] sm:$0xf]
      %v1433 = vld [vmem:[%s1428 + $0x10] sm:$0xf]
      %v1434 = vld [vmem:[%s1428 + $0x14] sm:$0xf]
      %v1435 = vld [vmem:[%s1428 + $0x18] sm:$0xf]
      %v1436 = vld [vmem:[%s1428 + $0x1c] sm:$0xf]
      %v1437 = vld [vmem:[%s1428 + $0x20] sm:$0xf]
      %v1438 = vld [vmem:[%s1428 + $0x24] sm:$0xf]
      %v1439 = vld [vmem:[%s1428 + $0x28] sm:$0xf]
      %v1440 = vld [vmem:[%s1428 + $0x2c] sm:$0xf]
      %v1441 = vld [vmem:[%s1428 + $0x30] sm:$0xf]
      %v1442 = vld [vmem:[%s1428 + $0x34] sm:$0xf]
      %v1443 = vld [vmem:[%s1428 + $0x38] sm:$0xf]
      %v1444 = vld [vmem:[%s1428 + $0x3c] sm:$0xf]
      %v1461 = vunpack.c.l.b16 %v1429
      %v1462 = vunpack.c.l.b16 %v1430
      %v1463 = vunpack.c.l.b16 %v1431
      %v1464 = vunpack.c.l.b16 %v1432
      %v1465 = vunpack.c.l.b16 %v1433
      %v1466 = vunpack.c.l.b16 %v1434
      %v1467 = vunpack.c.l.b16 %v1435
      %v1468 = vunpack.c.l.b16 %v1436
      %v1469 = vunpack.c.l.b16 %v1437
      %v1470 = vunpack.c.l.b16 %v1438
      %v1471 = vunpack.c.l.b16 %v1439
      %v1472 = vunpack.c.l.b16 %v1440
      %v1473 = vunpack.c.l.b16 %v1441
      %v1474 = vunpack.c.l.b16 %v1442
      %v1475 = vunpack.c.l.b16 %v1443
      %v1476 = vunpack.c.l.b16 %v1444
      %v1477 = vpack.c.b16 %v1462, %v1461
      %v1478 = vpack.c.b16 %v1464, %v1463
      %v1479 = vpack.c.b16 %v1466, %v1465
      %v1480 = vpack.c.b16 %v1468, %v1467
      %v1481 = vpack.c.b16 %v1470, %v1469
      %v1482 = vpack.c.b16 %v1472, %v1471
      %v1483 = vpack.c.b16 %v1474, %v1473
      %v1484 = vpack.c.b16 %v1476, %v1475
      %1493 = vmatprep.subr.bf16.mxu0 0
      %1494 = vmatpush1.bf16.msra.mxu0 %v1477
      %1495 = vmatprep.subr.bf16.mxu0 0
      %1496 = vmatpush1.bf16.msra.mxu0 %v1478
      %1497 = vmatprep.subr.bf16.mxu0 0
      %1498 = vmatpush1.bf16.msra.mxu0 %v1479
      %1499 = vmatprep.subr.bf16.mxu0 0
      %1500 = vmatpush1.bf16.msra.mxu0 %v1480
      %1501 = vmatprep.subr.bf16.mxu0 0
      %1502 = vmatpush1.bf16.msra.mxu0 %v1481
      %1503 = vmatprep.subr.bf16.mxu0 0
      %1504 = vmatpush1.bf16.msra.mxu0 %v1482
      %1505 = vmatprep.subr.bf16.mxu0 0
      %1506 = vmatpush1.bf16.msra.mxu0 %v1483
      %1507 = vmatprep.subr.bf16.mxu0 0
      %1508 = vmatpush1.bf16.msra.mxu0 %v1484
      %1509 = vmatprep.subr.bf16.mxu0 0
      %1510 = vmatpush1.bf16.msra.mxu0 0
      %1511 = vmatprep.subr.bf16.mxu0 0
      %1512 = vmatpush1.bf16.msra.mxu0 0
      %1513 = vmatprep.subr.bf16.mxu0 0
      %1514 = vmatpush1.bf16.msra.mxu0 0
      %1515 = vmatprep.subr.bf16.mxu0 0
      %1516 = vmatpush1.bf16.msra.mxu0 0
      %1517 = vmatprep.subr.bf16.mxu0 0
      %1518 = vmatpush1.bf16.msra.mxu0 0
      %1519 = vmatprep.subr.bf16.mxu0 0
      %1520 = vmatpush1.bf16.msra.mxu0 0
      %1521 = vmatprep.subr.bf16.mxu0 0
      %1522 = vmatpush1.bf16.msra.mxu0 0
      %1523 = vmatprep.subr.bf16.mxu0 0
      %1524 = vmatpush1.bf16.msra.mxu0 0
      %1525 = vmatprep.mubr.bf16.mxu0 0
      %1526 = vmatmul.mubr.bf16.gmra.mrb[0].mxu0 %v1424
      %v1527 = vpop.f32.mrb[0].mxu0
      %v1528 = vadd.f32 0.0, %v1527
      %v1529 = vpop.f32.mrb[0].mxu0
      %v1530 = vpop.f32.mrb[0].mxu0
      %v1531 = vadd.f32 0.0, %v1530
      %v1532 = vpop.f32.mrb[0].mxu0
      %1533 = vmatprep.mubr.bf16.mxu0 0
      %1534 = vmatmul.mubr.bf16.gmra.mrb[0].mxu0 %v1425
      %v1535 = vpop.f32.mrb[0].mxu0
      %v1536 = vadd.f32 0.0, %v1535
      %v1537 = vpop.f32.mrb[0].mxu0
      %v1538 = vpop.f32.mrb[0].mxu0
      %v1539 = vadd.f32 0.0, %v1538
      %v1540 = vpop.f32.mrb[0].mxu0
      %1541 = vmatprep.mubr.bf16.mxu0 0
      %1542 = vmatmul.mubr.bf16.gmra.mrb[0].mxu0 %v1426
      %v1543 = vpop.f32.mrb[0].mxu0
      %v1544 = vadd.f32 0.0, %v1543
      %v1545 = vpop.f32.mrb[0].mxu0
      %v1546 = vpop.f32.mrb[0].mxu0
      %v1547 = vadd.f32 0.0, %v1546
      %v1548 = vpop.f32.mrb[0].mxu0
      %1549 = vmatprep.mubr.bf16.mxu0 0
      %1550 = vmatmul.mubr.bf16.gmra.mrb[0].mxu0 %v1427
      %v1551 = vpop.f32.mrb[0].mxu0
      %v1552 = vadd.f32 0.0, %v1551
      %v1553 = vpop.f32.mrb[0].mxu0
      %v1554 = vpop.f32.mrb[0].mxu0
      %v1555 = vadd.f32 0.0, %v1554
      %v1556 = vpop.f32.mrb[0].mxu0
      %1557 = vdwg.mxu0
      %v1558 = vadd.f32 %v1408, %v1528
      %v1559 = vadd.f32 %v1409, %v1531
      %v1560 = vadd.f32 %v1410, %v1536
      %v1561 = vadd.f32 %v1411, %v1539
      %v1562 = vadd.f32 %v1412, %v1544
      %v1563 = vadd.f32 %v1413, %v1547
      %v1564 = vadd.f32 %v1414, %v1552
      %v1565 = vadd.f32 %v1415, %v1555
      %1566 = vst [vmem:[%s218] sm:$0xff] %v1558
      %1567 = vst [vmem:[%s218 + $0x8] sm:$0xff] %v1559
      %1568 = vst [vmem:[%s218 + $0x10] sm:$0xff] %v1560
      %1569 = vst [vmem:[%s218 + $0x18] sm:$0xff] %v1561
      %1570 = vst [vmem:[%s218 + $0x20] sm:$0xff] %v1562
      %1571 = vst [vmem:[%s218 + $0x28] sm:$0xff] %v1563
      %1572 = vst [vmem:[%s218 + $0x30] sm:$0xff] %v1564
      %1573 = vst [vmem:[%s218 + $0x38] sm:$0xff] %v1565
      %v1574 = vadd.f32 %v1558, %v1559
      %v1575 = vadd.f32 %v1574, %v1560
      %v1576 = vadd.f32 %v1575, %v1561
      %v1577 = vadd.f32 %v1576, %v1562
      %v1578 = vadd.f32 %v1577, %v1563
      %v1579 = vadd.f32 %v1578, %v1564
      %v1580 = vadd.f32 %v1579, %v1565
      %v1581 = vrot.slane %v1580, 4
      %v1582 = vadd.f32 %v1580, %v1581
      %v1583 = vrot.slane %v1582, 2
      %v1584 = vadd.f32 %v1582, %v1583
      %v1585 = vrot.slane %v1584, 1
      %v1586 = vadd.f32 %v1584, %v1585
      %v1587 = vmul.f32 %v1558, %v1558
      %v1588 = vmul.f32 %v1559, %v1559
      %v1589 = vmul.f32 %v1560, %v1560
      %v1590 = vmul.f32 %v1561, %v1561
      %v1591 = vmul.f32 %v1562, %v1562
      %v1592 = vmul.f32 %v1563, %v1563
      %v1593 = vmul.f32 %v1564, %v1564
      %v1594 = vmul.f32 %v1565, %v1565
      %v1595 = vadd.f32 %v1587, %v1588
      %v1596 = vadd.f32 %v1595, %v1589
      %v1597 = vadd.f32 %v1596, %v1590
      %v1598 = vadd.f32 %v1597, %v1591
      %v1599 = vadd.f32 %v1598, %v1592
      %v1600 = vadd.f32 %v1599, %v1593
      %v1601 = vadd.f32 %v1600, %v1594
      %v1602 = vrot.slane %v1601, 4
      %v1603 = vadd.f32 %v1601, %v1602
      %v1604 = vrot.slane %v1603, 2
      %v1605 = vadd.f32 %v1603, %v1604
      %v1606 = vrot.slane %v1605, 1
      %v1607 = vadd.f32 %v1605, %v1606
      %vm1608 = vcmask 1040384
      %v1609 = vsel %vm1608, %v1586, %v1607
      %1610 = vst [vmem:[%s226] sm:$0x3] %v1609
      %s1611 = smul.u32 8, %s20
      %p1612 = scmp.lt.s32.totalorder %s19, 1
      %s1613 = scalar_select %p1612, %s19, 1
      %p1614 = scmp.lt.s32.totalorder %s1611, 7
      %s1615 = scalar_select %p1614, %s1611, 7
      %s1616 = smul.addr %s1613, 8
      %s1617 = sadd.s32 %s1615, %s1616
      %s1618 = smul.addr %s1617, 8
      %s1619 = scalar_lea.vmem %s2, %s1618
      %p1620 = scmp.lt.s32.totalorder %s19, 1
      %s1621 = scalar_select %p1620, %s19, 1
      %p1622 = scmp.lt.s32.totalorder %s20, 0
      %s1623 = scalar_select %p1622, %s20, 0
      %s1624 = sadd.s32 %s1623, %s1621
      %s1625 = smul.addr %s1624, 2
      %s1626 = scalar_lea.vmem %s3, %s1625
      // Predicated region
      $region29: #{encoder_block_forward.6} parent=27 // pred_check
        %p1627 = pneg %p96
      $region30: #{encoder_block_forward.6} parent=27 // pred_check_branch
        %1629 = sbr.rel (%p1627) target = $region32
      $region31: #{encoder_block_forward.6} parent=27 // pred_region
        %s1630 = smul.u32 8, %s20
      $region32: #{encoder_block_forward.6} parent=27 // pred_fallthru
        _
      // Predicated region
      $region33: #{encoder_block_forward.6} parent=27 // pred_check
        %p1631 = pneg %p124
      $region34: #{encoder_block_forward.6} parent=27 // pred_check_branch
        %1633 = sbr.rel (%p1631) target = $region36
      $region35: #{encoder_block_forward.6} parent=27 // pred_region
        _
      $region36: #{encoder_block_forward.6} parent=27 // pred_fallthru
        _
    $region28: #{encoder_block_forward.6} parent=5 // pred_fallthru
      _
    %p1634 = scmp.le.s32.totalorder 2, %s10
    // Predicated region
    $region37: #{encoder_block_forward.6} parent=5 // pred_check
      %p1635 = pneg %p1634
    $region38: #{encoder_block_forward.6} parent=5 // pred_check_branch
      %1637 = sbr.rel (%p1635) target = $region40
    $region39: #{encoder_block_forward.6} parent=5 // pred_region
      %s1638 = ssub.s32 %s10, 2
      // Predicated region
      $region41: #{encoder_block_forward.6} parent=39 // pred_check
        %p1639 = pneg %p102
      $region42: #{encoder_block_forward.6} parent=39 // pred_check_branch
        %1641 = sbr.rel (%p1639) target = $region44
      $region43: #{encoder_block_forward.6} parent=39 // pred_region
        %s1642 = smul.u32 8, %s22
        %p1643 = scmp.lt.s32.totalorder %s21, 1
        %s1644 = scalar_select %p1643, %s21, 1
        %p1645 = scmp.lt.s32.totalorder %s1642, 7
        %s1646 = scalar_select %p1645, %s1642, 7
        %s1647 = smul.addr %s1644, 8
        %s1648 = sadd.s32 %s1646, %s1647
        %s1649 = smul.addr %s1648, 8
        %s1650 = scalar_lea.vmem %s2, %s1649
      $region44: #{encoder_block_forward.6} parent=39 // pred_fallthru
        _
      // Predicated region
      $region45: #{encoder_block_forward.6} parent=39 // pred_check
        %p1651 = pneg %p130
      $region46: #{encoder_block_forward.6} parent=39 // pred_check_branch
        %1653 = sbr.rel (%p1651) target = $region48
      $region47: #{encoder_block_forward.6} parent=39 // pred_region
        %p1654 = scmp.lt.s32.totalorder %s21, 1
        %s1655 = scalar_select %p1654, %s21, 1
        %p1656 = scmp.lt.s32.totalorder %s22, 0
        %s1657 = scalar_select %p1656, %s22, 0
        %s1658 = sadd.s32 %s1657, %s1655
        %s1659 = smul.addr %s1658, 2
        %s1660 = scalar_lea.vmem %s3, %s1659
      $region48: #{encoder_block_forward.6} parent=39 // pred_fallthru
        _
    $region40: #{encoder_block_forward.6} parent=5 // pred_fallthru
      _
  $region6: #{encoder_block_forward.6} parent=0 // loop_footer
    %s14 = sadd.s32 1, %s10
  $region7: #{encoder_block_forward.6} parent=0 // loop_footer_branch
    %9 = sbr.rel target = $region3
  $region8: #{encoder_block_forward.6} parent=0 // loop_exit
    _

// kernel: encoder_block_forward.8
$region0: #{encoder_block_forward.8}
  #allocation0 [shape = 'u32[]', space=smem, size = 0x4, offset = 0x4, fixed_abs, tag = 'smem constant byte address 0x4 - core index']
  #allocation1 [shape = 'u32[144,128]{1,0:T(1,128)}', space=vmem, size = 0x12000, scoped, tag = 'internal scratch']
  %s0 = inlined_call_operand.vmem [shape: f32[2,1,10,10,128], index: 0, kind: input, shape index: {}]
  %s1 = inlined_call_operand.vmem [shape: f32[1,128], index: 1, kind: input, shape index: {}]
  %s2 = inlined_call_operand.vmem [shape: f32[1,128], index: 2, kind: input, shape index: {}]
  %s3 = inlined_call_operand.vmem [shape: bf16[9,128,128], index: 3, kind: input, shape index: {}]
  %s4 = inlined_call_operand.vmem [shape: f32[2,8,8,128], index: 4, kind: output, shape index: {0}]
  %s5 = inlined_call_operand.vmem [shape: f32[2,1,2,128], index: 5, kind: output, shape index: {1}]
  %6 = xla_tuple %s4, %s5
  %s7 = sld [smem:[#allocation0]]
  $region57: #{encoder_block_forward.8} parent=0
    _
  %s9 = ssub.s32 1, %s7
  %s10 = scalar_select 0, %s9, %s7
  loop: start=0, step=1, limit=4
  $region2: #{encoder_block_forward.8} parent=0 // loop_pre_header
    _
  $region3: #{encoder_block_forward.8} parent=0 // loop_header
    %s12 = sphi 0, %s16
    %p13 = scmp.ge.s32.totalorder %s12, 4
    %s19 = sphi 0, %s31
    %s20 = sphi 0, %s27
    %s21 = sphi 0, %s19
    %s22 = sphi 0, %s20
    %s23 = sphi 0, %s21
    %s24 = sphi 0, %s22
    %s36 = sphi 0, %s38
    %s39 = sphi 0, %s36
    %s40 = sphi 0, %s39
    %s56 = sphi 0, %s40
    %s60 = sphi 0, %s60
    %s62 = sphi 0, %s60
    %s63 = sphi 0, %s62
    %s77 = sphi 0, %s63
    %s81 = sphi 0, %s81
    %s83 = sphi 0, %s81
    %s84 = sphi 0, %s83
    %s98 = sphi 0, %s84
    %s102 = sphi 0, %s102
    %s104 = sphi 0, %s102
    %s105 = sphi 0, %s104
    %s119 = sphi 0, %s105
    %s127 = sphi 0, %s129
    %s130 = sphi 0, %s127
    %s131 = sphi 0, %s130
    %s147 = sphi 0, %s131
    %s155 = sphi 0, %s157
    %s158 = sphi 0, %s155
    %s159 = sphi 0, %s158
    %s175 = sphi 0, %s159
  $region4: #{encoder_block_forward.8} parent=0 // loop_header_branch
    %15 = sbr.rel (%p13) target = $region8
  $region5: #{encoder_block_forward.8} parent=0 // loop_body
    %s17 = ssub.s32 %s12, 1
    %s18 = ssub.s32 %s12, 2
    %s25 = sadd.s32 1, %s20
    %p26 = scmp.ge.s32.totalorder %s25, 1
    %s27 = scalar_select %p26, 0, %s25
    %s28 = sadd.s32 1, %s19
    %s29 = scalar_select %p26, %s28, %s19
    %p30 = scmp.ge.s32.totalorder %s29, 2
    %s31 = scalar_select %p30, 0, %s29
    %s32 = ssub.s32 %s19, %s31
    %s33 = ssub.s32 %s20, %s27
    %s34 = sor.u32 %s32, %s33
    %p35 = scmp.eq.s32.totalorder %s34, 0
    %s37 = sadd.s32 %s36, 1
    %s38 = scalar_select %p35, %s36, %s37
    %p41 = pneg %p35
    %p42 = scmp.eq.s32.totalorder %s12, 1
    %p43 = por %p41, %p42
    %p44 = scmp.ne.s32.totalorder %s36, %s39
    %p45 = scmp.eq.s32.totalorder %s12, 0
    %p46 = por %p44, %p45
    %p47 = scmp.ne.s32.totalorder %s36, %s39
    %p48 = scmp.eq.s32.totalorder %s17, 1
    %p49 = por %p47, %p48
    %p50 = scmp.ne.s32.totalorder %s39, %s40
    %p51 = scmp.eq.s32.totalorder %s17, 0
    %p52 = por %p50, %p51
    %p53 = scmp.ne.s32.totalorder %s39, %s40
    %p54 = scmp.eq.s32.totalorder %s18, 1
    %p55 = por %p53, %p54
    %p57 = scmp.ne.s32.totalorder %s40, %s56
    %p58 = scmp.eq.s32.totalorder %s18, 0
    %p59 = por %p57, %p58
    %s61 = sadd.s32 %s60, 1
    %p64 = scmp.eq.s32.totalorder %s12, 1
    %p65 = scmp.ne.s32.totalorder %s60, %s62
    %p66 = scmp.eq.s32.totalorder %s12, 0
    %p67 = por %p65, %p66
    %p68 = scmp.ne.s32.totalorder %s60, %s62
    %p69 = scmp.eq.s32.totalorder %s17, 1
    %p70 = por %p68, %p69
    %p71 = scmp.ne.s32.totalorder %s62, %s63
    %p72 = scmp.eq.s32.totalorder %s17, 0
    %p73 = por %p71, %p72
    %p74 = scmp.ne.s32.totalorder %s62, %s63
    %p75 = scmp.eq.s32.totalorder %s18, 1
    %p76 = por %p74, %p75
    %p78 = scmp.ne.s32.totalorder %s63, %s77
    %p79 = scmp.eq.s32.totalorder %s18, 0
    %p80 = por %p78, %p79
    %s82 = sadd.s32 %s81, 1
    %p85 = scmp.eq.s32.totalorder %s12, 1
    %p86 = scmp.ne.s32.totalorder %s81, %s83
    %p87 = scmp.eq.s32.totalorder %s12, 0
    %p88 = por %p86, %p87
    %p89 = scmp.ne.s32.totalorder %s81, %s83
    %p90 = scmp.eq.s32.totalorder %s17, 1
    %p91 = por %p89, %p90
    %p92 = scmp.ne.s32.totalorder %s83, %s84
    %p93 = scmp.eq.s32.totalorder %s17, 0
    %p94 = por %p92, %p93
    %p95 = scmp.ne.s32.totalorder %s83, %s84
    %p96 = scmp.eq.s32.totalorder %s18, 1
    %p97 = por %p95, %p96
    %p99 = scmp.ne.s32.totalorder %s84, %s98
    %p100 = scmp.eq.s32.totalorder %s18, 0
    %p101 = por %p99, %p100
    %s103 = sadd.s32 %s102, 1
    %p106 = scmp.eq.s32.totalorder %s12, 1
    %p107 = scmp.ne.s32.totalorder %s102, %s104
    %p108 = scmp.eq.s32.totalorder %s12, 0
    %p109 = por %p107, %p108
    %p110 = scmp.ne.s32.totalorder %s102, %s104
    %p111 = scmp.eq.s32.totalorder %s17, 1
    %p112 = por %p110, %p111
    %p113 = scmp.ne.s32.totalorder %s104, %s105
    %p114 = scmp.eq.s32.totalorder %s17, 0
    %p115 = por %p113, %p114
    %p116 = scmp.ne.s32.totalorder %s104, %s105
    %p117 = scmp.eq.s32.totalorder %s18, 1
    %p118 = por %p116, %p117
    %p120 = scmp.ne.s32.totalorder %s105, %s119
    %p121 = scmp.eq.s32.totalorder %s18, 0
    %p122 = por %p120, %p121
    %s123 = ssub.s32 %s19, %s31
    %s124 = ssub.s32 %s20, %s27
    %s125 = sor.u32 %s123, %s124
    %p126 = scmp.eq.s32.totalorder %s125, 0
    %s128 = sadd.s32 %s127, 1
    %s129 = scalar_select %p126, %s127, %s128
    %p132 = pneg %p126
    %p133 = scmp.eq.s32.totalorder %s12, 1
    %p134 = por %p132, %p133
    %p135 = scmp.ne.s32.totalorder %s127, %s130
    %p136 = scmp.eq.s32.totalorder %s12, 0
    %p137 = por %p135, %p136
    %p138 = scmp.ne.s32.totalorder %s127, %s130
    %p139 = scmp.eq.s32.totalorder %s17, 1
    %p140 = por %p138, %p139
    %p141 = scmp.ne.s32.totalorder %s130, %s131
    %p142 = scmp.eq.s32.totalorder %s17, 0
    %p143 = por %p141, %p142
    %p144 = scmp.ne.s32.totalorder %s130, %s131
    %p145 = scmp.eq.s32.totalorder %s18, 1
    %p146 = por %p144, %p145
    %p148 = scmp.ne.s32.totalorder %s131, %s147
    %p149 = scmp.eq.s32.totalorder %s18, 0
    %p150 = por %p148, %p149
    %s151 = ssub.s32 %s19, %s31
    %s152 = ssub.s32 %s20, %s27
    %s153 = sor.u32 %s151, %s152
    %p154 = scmp.eq.s32.totalorder %s153, 0
    %s156 = sadd.s32 %s155, 1
    %s157 = scalar_select %p154, %s155, %s156
    %p160 = pneg %p154
    %p161 = scmp.eq.s32.totalorder %s12, 1
    %p162 = por %p160, %p161
    %p163 = scmp.ne.s32.totalorder %s155, %s158
    %p164 = scmp.eq.s32.totalorder %s12, 0
    %p165 = por %p163, %p164
    %p166 = scmp.ne.s32.totalorder %s155, %s158
    %p167 = scmp.eq.s32.totalorder %s17, 1
    %p168 = por %p166, %p167
    %p169 = scmp.ne.s32.totalorder %s158, %s159
    %p170 = scmp.eq.s32.totalorder %s17, 0
    %p171 = por %p169, %p170
    %p172 = scmp.ne.s32.totalorder %s158, %s159
    %p173 = scmp.eq.s32.totalorder %s18, 1
    %p174 = por %p172, %p173
    %p176 = scmp.ne.s32.totalorder %s159, %s175
    %p177 = scmp.eq.s32.totalorder %s18, 0
    %p178 = por %p176, %p177
    %p179 = scmp.le.s32.totalorder 1, %s12
    %p180 = scmp.lt.s32.totalorder %s12, 3
    %p181 = pnand %p179, %p180
    %p182 = pneg %p181
    // Predicated region
    $region9: #{encoder_block_forward.8} parent=5 // pred_check
      _
    $region10: #{encoder_block_forward.8} parent=5 // pred_check_branch
      %184 = sbr.rel (%p181) target = $region12
    $region11: #{encoder_block_forward.8} parent=5 // pred_region
      %s185 = ssub.s32 %s12, 1
      // Predicated region
      $region13: #{encoder_block_forward.8} parent=11 // pred_check
        %p186 = pneg %p73
      $region14: #{encoder_block_forward.8} parent=11 // pred_check_branch
        %188 = sbr.rel (%p186) target = $region16
      $region15: #{encoder_block_forward.8} parent=11 // pred_region
        _
      $region16: #{encoder_block_forward.8} parent=11 // pred_fallthru
        _
      // Predicated region
      $region17: #{encoder_block_forward.8} parent=11 // pred_check
        %p189 = pneg %p94
      $region18: #{encoder_block_forward.8} parent=11 // pred_check_branch
        %191 = sbr.rel (%p189) target = $region20
      $region19: #{encoder_block_forward.8} parent=11 // pred_region
        _
      $region20: #{encoder_block_forward.8} parent=11 // pred_fallthru
        _
      // Predicated region
      $region21: #{encoder_block_forward.8} parent=11 // pred_check
        %p192 = pneg %p115
      $region22: #{encoder_block_forward.8} parent=11 // pred_check_branch
        %194 = sbr.rel (%p192) target = $region24
      $region23: #{encoder_block_forward.8} parent=11 // pred_region
        _
      $region24: #{encoder_block_forward.8} parent=11 // pred_fallthru
        _
    $region12: #{encoder_block_forward.8} parent=5 // pred_fallthru
      _
    %p195 = scmp.lt.s32.totalorder %s12, 2
    // Predicated region
    $region25: #{encoder_block_forward.8} parent=5 // pred_check
      %p196 = pneg %p195
    $region26: #{encoder_block_forward.8} parent=5 // pred_check_branch
      %198 = sbr.rel (%p196) target = $region28
    $region27: #{encoder_block_forward.8} parent=5 // pred_region
      // Predicated region
      $region29: #{encoder_block_forward.8} parent=27 // pred_check
        %p199 = pneg %p46
      $region30: #{encoder_block_forward.8} parent=27 // pred_check_branch
        %201 = sbr.rel (%p199) target = $region32
      $region31: #{encoder_block_forward.8} parent=27 // pred_region
        %p202 = scmp.lt.s32.totalorder %s19, 1
        %s203 = scalar_select %p202, %s19, 1
        %p204 = scmp.lt.s32.totalorder %s20, 0
        %s205 = scalar_select %p204, %s20, 0
        %s206 = smul.addr %s205, 20
        %s207 = smul.addr %s203, 20
        %s208 = sadd.s32 %s206, %s207
        %s209 = smul.addr %s208, 8
        %s210 = scalar_lea.vmem %s0, %s209
      $region32: #{encoder_block_forward.8} parent=27 // pred_fallthru
        _
    $region28: #{encoder_block_forward.8} parent=5 // pred_fallthru
      _
    %p211 = scmp.le.s32.totalorder 1, %s12
    %p212 = scmp.lt.s32.totalorder %s12, 3
    %p213 = pnand %p211, %p212
    %p214 = pneg %p213
    // Predicated region
    $region33: #{encoder_block_forward.8} parent=5 // pred_check
      _
    $region34: #{encoder_block_forward.8} parent=5 // pred_check_branch
      %216 = sbr.rel (%p213) target = $region36
    $region35: #{encoder_block_forward.8} parent=5 // pred_region
      %s217 = ssub.s32 %s12, 1
      %p218 = scmp.lt.s32.totalorder %s21, 1
      %s219 = scalar_select %p218, %s21, 1
      %p220 = scmp.lt.s32.totalorder %s22, 0
      %s221 = scalar_select %p220, %s22, 0
      %s222 = smul.addr %s221, 20
      %s223 = smul.addr %s219, 20
      %s224 = sadd.s32 %s222, %s223
      %s225 = smul.addr %s224, 8
      %s226 = scalar_lea.vmem %s0, %s225
      %p227 = pneg %p52
      %p228 = pneg %p49
      %p229 = pneg %p73
      %p230 = pneg %p70
      %p231 = pneg %p94
      %p232 = pneg %p91
      %p233 = pneg %p115
      %p234 = pneg %p112
      %p235 = pneg %p143
      %p236 = pneg %p140
      %s237 = smul.u32 8, %s22
      %p238 = scmp.lt.s32.totalorder %s21, 1
      %s239 = scalar_select %p238, %s21, 1
      %p240 = scmp.lt.s32.totalorder %s237, 7
      %s241 = scalar_select %p240, %s237, 7
      %s242 = smul.addr %s239, 8
      %s243 = sadd.s32 %s241, %s242
      %s244 = smul.addr %s243, 8
      %s245 = scalar_lea.vmem %s4, %s244
      %p246 = pneg %p171
      %p247 = pneg %p168
      %p248 = scmp.lt.s32.totalorder %s21, 1
      %s249 = scalar_select %p248, %s21, 1
      %p250 = scmp.lt.s32.totalorder %s22, 0
      %s251 = scalar_select %p250, %s22, 0
      %s252 = sadd.s32 %s251, %s249
      %s253 = smul.addr %s252, 2
      %s254 = scalar_lea.vmem %s5, %s253
      %p255 = scmp.lt.s32.totalorder %s21, 1
      %s256 = scalar_select %p255, %s21, 1
      %p257 = scmp.lt.s32.totalorder %s22, 0
      %s258 = scalar_select %p257, %s22, 0
      %s259 = smul.addr %s258, 20
      %s260 = smul.addr %s256, 20
      %s261 = sadd.s32 %s259, %s260
      %s262 = smul.addr %s261, 8
      %s263 = scalar_lea.vmem %s0, %s262
      %s264 = smul.u32 8, %s22
      %p265 = scmp.lt.s32.totalorder %s21, 1
      %s266 = scalar_select %p265, %s21, 1
      %p267 = scmp.lt.s32.totalorder %s264, 7
      %s268 = scalar_select %p267, %s264, 7
      %s269 = smul.addr %s266, 8
      %s270 = sadd.s32 %s268, %s269
      %s271 = smul.addr %s270, 8
      %s272 = scalar_lea.vmem %s4, %s271
      %s273 = smul.u32 8, %s22
      %p274 = scmp.lt.s32.totalorder %s21, 1
      %s275 = scalar_select %p274, %s21, 1
      %p276 = scmp.lt.s32.totalorder %s22, 0
      %s277 = scalar_select %p276, %s22, 0
      %s278 = sadd.s32 %s277, %s275
      %s279 = smul.addr %s278, 2
      %s280 = scalar_lea.vmem %s5, %s279
      %v282 = vld [vmem:[%s263] sm:$0xff]
      %v283 = vld [vmem:[%s263 + $0x8] sm:$0x3]
      %v284 = vld [vmem:[%s263 + $0x10] sm:$0xff]
      %v285 = vld [vmem:[%s263 + $0x18] sm:$0x3]
      %v286 = vld [vmem:[%s263 + $0x20] sm:$0xff]
      %v287 = vld [vmem:[%s263 + $0x28] sm:$0x3]
      %v288 = vld [vmem:[%s263 + $0x30] sm:$0xff]
      %v289 = vld [vmem:[%s263 + $0x38] sm:$0x3]
      %v290 = vld [vmem:[%s263 + $0x40] sm:$0xff]
      %v291 = vld [vmem:[%s263 + $0x48] sm:$0x3]
      %v292 = vld [vmem:[%s263 + $0x50] sm:$0xff]
      %v293 = vld [vmem:[%s263 + $0x58] sm:$0x3]
      %v294 = vld [vmem:[%s263 + $0x60] sm:$0xff]
      %v295 = vld [vmem:[%s263 + $0x68] sm:$0x3]
      %v296 = vld [vmem:[%s263 + $0x70] sm:$0xff]
      %v297 = vld [vmem:[%s263 + $0x78] sm:$0x3]
      %v298 = vld [vmem:[%s263 + $0x80] sm:$0xff]
      %v299 = vld [vmem:[%s263 + $0x88] sm:$0x3]
      %v300 = vld [vmem:[%s263 + $0x90] sm:$0xff]
      %v301 = vld [vmem:[%s263 + $0x98] sm:$0x3]
      %v302 = vld [vmem:[%s1] sm:$0x1]
      %v304 = vlaneseq
      %v305 = vshrl.u32 %v304, 7
      %v306 = vsub.s32 0, %v305
      %v307 = vrot.slane %v302, %v306
      %v309 = vmul.f32 %v282, %v307
      %v310 = vmul.f32 %v283, %v307
      %v311 = vmul.f32 %v284, %v307
      %v312 = vmul.f32 %v285, %v307
      %v313 = vmul.f32 %v286, %v307
      %v314 = vmul.f32 %v287, %v307
      %v315 = vmul.f32 %v288, %v307
      %v316 = vmul.f32 %v289, %v307
      %v317 = vmul.f32 %v290, %v307
      %v318 = vmul.f32 %v291, %v307
      %v319 = vmul.f32 %v292, %v307
      %v320 = vmul.f32 %v293, %v307
      %v321 = vmul.f32 %v294, %v307
      %v322 = vmul.f32 %v295, %v307
      %v323 = vmul.f32 %v296, %v307
      %v324 = vmul.f32 %v297, %v307
      %v325 = vmul.f32 %v298, %v307
      %v326 = vmul.f32 %v299, %v307
      %v327 = vmul.f32 %v300, %v307
      %v328 = vmul.f32 %v301, %v307
      %v329 = vld [vmem:[%s2] sm:$0x1]
      %v331 = vlaneseq
      %v332 = vshrl.u32 %v331, 7
      %v333 = vsub.s32 0, %v332
      %v334 = vrot.slane %v329, %v333
      %v336 = vadd.f32 %v309, %v334
      %v337 = vadd.f32 %v310, %v334
      %v338 = vadd.f32 %v311, %v334
      %v339 = vadd.f32 %v312, %v334
      %v340 = vadd.f32 %v313, %v334
      %v341 = vadd.f32 %v314, %v334
      %v342 = vadd.f32 %v315, %v334
      %v343 = vadd.f32 %v316, %v334
      %v344 = vadd.f32 %v317, %v334
      %v345 = vadd.f32 %v318, %v334
      %v346 = vadd.f32 %v319, %v334
      %v347 = vadd.f32 %v320, %v334
      %v348 = vadd.f32 %v321, %v334
      %v349 = vadd.f32 %v322, %v334
      %v350 = vadd.f32 %v323, %v334
      %v351 = vadd.f32 %v324, %v334
      %v352 = vadd.f32 %v325, %v334
      %v353 = vadd.f32 %v326, %v334
      %v354 = vadd.f32 %v327, %v334
      %v355 = vadd.f32 %v328, %v334
      %v356 = vmul.f32 %v336, 0.1
      %v357 = vmul.f32 %v337, 0.1
      %v358 = vmul.f32 %v338, 0.1
      %v359 = vmul.f32 %v339, 0.1
      %v360 = vmul.f32 %v340, 0.1
      %v361 = vmul.f32 %v341, 0.1
      %v362 = vmul.f32 %v342, 0.1
      %v363 = vmul.f32 %v343, 0.1
      %v364 = vmul.f32 %v344, 0.1
      %v365 = vmul.f32 %v345, 0.1
      %v366 = vmul.f32 %v346, 0.1
      %v367 = vmul.f32 %v347, 0.1
      %v368 = vmul.f32 %v348, 0.1
      %v369 = vmul.f32 %v349, 0.1
      %v370 = vmul.f32 %v350, 0.1
      %v371 = vmul.f32 %v351, 0.1
      %v372 = vmul.f32 %v352, 0.1
      %v373 = vmul.f32 %v353, 0.1
      %v374 = vmul.f32 %v354, 0.1
      %v375 = vmul.f32 %v355, 0.1
      %v376 = vmax.f32 %v336, %v356
      %v377 = vmax.f32 %v337, %v357
      %v378 = vmax.f32 %v338, %v358
      %v379 = vmax.f32 %v339, %v359
      %v380 = vmax.f32 %v340, %v360
      %v381 = vmax.f32 %v341, %v361
      %v382 = vmax.f32 %v342, %v362
      %v383 = vmax.f32 %v343, %v363
      %v384 = vmax.f32 %v344, %v364
      %v385 = vmax.f32 %v345, %v365
      %v386 = vmax.f32 %v346, %v366
      %v387 = vmax.f32 %v347, %v367
      %v388 = vmax.f32 %v348, %v368
      %v389 = vmax.f32 %v349, %v369
      %v390 = vmax.f32 %v350, %v370
      %v391 = vmax.f32 %v351, %v371
      %v392 = vmax.f32 %v352, %v372
      %v393 = vmax.f32 %v353, %v373
      %v394 = vmax.f32 %v354, %v374
      %v395 = vmax.f32 %v355, %v375
      %s396 = smul.u32 %s22, 8
      %v397 = vstv %s396
      %v398 = vadd.s32 %v397, 1
      %v399 = vadd.s32 %v397, 2
      %v400 = vadd.s32 %v397, 3
      %v401 = vadd.s32 %v397, 4
      %v402 = vadd.s32 %v397, 5
      %v403 = vadd.s32 %v397, 6
      %v404 = vadd.s32 %v397, 7
      %v405 = vadd.s32 %v397, 8
      %v406 = vadd.s32 %v397, 9
      %v407 = vlaneseq
      %v408 = vshrl.u32 %v407, 7
      %v409 = vadd.s32 %v408, 8
      %vm410 = vcmp.ge.s32.totalorder %v397, 1
      %vm411 = vcmp.ge.s32.totalorder %v398, 1
      %vm412 = vcmp.ge.s32.totalorder %v399, 1
      %vm413 = vcmp.ge.s32.totalorder %v400, 1
      %vm414 = vcmp.ge.s32.totalorder %v401, 1
      %vm415 = vcmp.ge.s32.totalorder %v402, 1
      %vm416 = vcmp.ge.s32.totalorder %v403, 1
      %vm417 = vcmp.ge.s32.totalorder %v404, 1
      %vm418 = vcmp.ge.s32.totalorder %v405, 1
      %vm419 = vcmp.ge.s32.totalorder %v406, 1
      %vm420 = vcmp.le.s32.totalorder %v397, 8
      %vm421 = vcmp.le.s32.totalorder %v398, 8
      %vm422 = vcmp.le.s32.totalorder %v399, 8
      %vm423 = vcmp.le.s32.totalorder %v400, 8
      %vm424 = vcmp.le.s32.totalorder %v401, 8
      %vm425 = vcmp.le.s32.totalorder %v402, 8
      %vm426 = vcmp.le.s32.totalorder %v403, 8
      %vm427 = vcmp.le.s32.totalorder %v404, 8
      %vm428 = vcmp.le.s32.totalorder %v405, 8
      %vm429 = vcmp.le.s32.totalorder %v406, 8
      %vm430 = vmand %vm410, %vm420
      %vm431 = vmand %vm411, %vm421
      %vm432 = vmand %vm412, %vm422
      %vm433 = vmand %vm413, %vm423
      %vm434 = vmand %vm414, %vm424
      %vm435 = vmand %vm415, %vm425
      %vm436 = vmand %vm416, %vm426
      %vm437 = vmand %vm417, %vm427
      %vm438 = vmand %vm418, %vm428
      %vm439 = vmand %vm419, %vm429
      %vm440 = vcmp.ge.s32.totalorder %v408, 1
      %vm441 = vcmp.ge.s32.totalorder %v409, 1
      %vm442 = vmand %vm430, %vm440
      %vm443 = vmand %vm430, %vm441
      %vm444 = vmand %vm431, %vm440
      %vm445 = vmand %vm431, %vm441
      %vm446 = vmand %vm432, %vm440
      %vm447 = vmand %vm432, %vm441
      %vm448 = vmand %vm433, %vm440
      %vm449 = vmand %vm433, %vm441
      %vm450 = vmand %vm434, %vm440
      %vm451 = vmand %vm434, %vm441
      %vm452 = vmand %vm435, %vm440
      %vm453 = vmand %vm435, %vm441
      %vm454 = vmand %vm436, %vm440
      %vm455 = vmand %vm436, %vm441
      %vm456 = vmand %vm437, %vm440
      %vm457 = vmand %vm437, %vm441
      %vm458 = vmand %vm438, %vm440
      %vm459 = vmand %vm438, %vm441
      %vm460 = vmand %vm439, %vm440
      %vm461 = vmand %vm439, %vm441
      %vm462 = vcmp.le.s32.totalorder %v408, 8
      %vm463 = vcmp.le.s32.totalorder %v409, 8
      %vm464 = vmand %vm442, %vm462
      %vm465 = vmand %vm443, %vm463
      %vm466 = vmand %vm444, %vm462
      %vm467 = vmand %vm445, %vm463
      %vm468 = vmand %vm446, %vm462
      %vm469 = vmand %vm447, %vm463
      %vm470 = vmand %vm448, %vm462
      %vm471 = vmand %vm449, %vm463
      %vm472 = vmand %vm450, %vm462
      %vm473 = vmand %vm451, %vm463
      %vm474 = vmand %vm452, %vm462
      %vm475 = vmand %vm453, %vm463
      %vm476 = vmand %vm454, %vm462
      %vm477 = vmand %vm455, %vm463
      %vm478 = vmand %vm456, %vm462
      %vm479 = vmand %vm457, %vm463
      %vm480 = vmand %vm458, %vm462
      %vm481 = vmand %vm459, %vm463
      %vm482 = vmand %vm460, %vm462
      %vm483 = vmand %vm461, %vm463
      %v484 = vsel %vm464, %v376, 0.0
      %v485 = vsel %vm465, %v377, 0.0
      %v486 = vsel %vm466, %v378, 0.0
      %v487 = vsel %vm467, %v379, 0.0
      %v488 = vsel %vm468, %v380, 0.0
      %v489 = vsel %vm469, %v381, 0.0
      %v490 = vsel %vm470, %v382, 0.0
      %v491 = vsel %vm471, %v383, 0.0
      %v492 = vsel %vm472, %v384, 0.0
      %v493 = vsel %vm473, %v385, 0.0
      %v494 = vsel %vm474, %v386, 0.0
      %v495 = vsel %vm475, %v387, 0.0
      %v496 = vsel %vm476, %v388, 0.0
      %v497 = vsel %vm477, %v389, 0.0
      %v498 = vsel %vm478, %v390, 0.0
      %v499 = vsel %vm479, %v391, 0.0
      %v500 = vsel %vm480, %v392, 0.0
      %v501 = vsel %vm481, %v393, 0.0
      %v502 = vsel %vm482, %v394, 0.0
      %v503 = vsel %vm483, %v395, 0.0
      %v504 = vpack.c.bf16 %v486, %v484
      %v505 = vpack.c.bf16 %v490, %v488
      %v506 = vpack.c.bf16 %v494, %v492
      %v507 = vpack.c.bf16 %v498, %v496
      %v508 = vld [vmem:[%s3] sm:$0xf]
      %v509 = vld [vmem:[%s3 + $0x4] sm:$0xf]
      %v510 = vld [vmem:[%s3 + $0x8] sm:$0xf]
      %v511 = vld [vmem:[%s3 + $0xc] sm:$0xf]
      %v512 = vld [vmem:[%s3 + $0x10] sm:$0xf]
      %v513 = vld [vmem:[%s3 + $0x14] sm:$0xf]
      %v514 = vld [vmem:[%s3 + $0x18] sm:$0xf]
      %v515 = vld [vmem:[%s3 + $0x1c] sm:$0xf]
      %v516 = vld [vmem:[%s3 + $0x20] sm:$0xf]
      %v517 = vld [vmem:[%s3 + $0x24] sm:$0xf]
      %v518 = vld [vmem:[%s3 + $0x28] sm:$0xf]
      %v519 = vld [vmem:[%s3 + $0x2c] sm:$0xf]
      %v520 = vld [vmem:[%s3 + $0x30] sm:$0xf]
      %v521 = vld [vmem:[%s3 + $0x34] sm:$0xf]
      %v522 = vld [vmem:[%s3 + $0x38] sm:$0xf]
      %v523 = vld [vmem:[%s3 + $0x3c] sm:$0xf]
      %vm540 = vcmask 1046528
      %v541 = vrot.slane %v484, 1
      %v542 = vrot.slane %v485, 1
      %v543 = vsel %vm540, %v541, %v542
      %v544 = vrot.slane %v486, 1
      %v545 = vrot.slane %v487, 1
      %v546 = vsel %vm540, %v544, %v545
      %v547 = vrot.slane %v488, 1
      %v548 = vrot.slane %v489, 1
      %v549 = vsel %vm540, %v547, %v548
      %v550 = vrot.slane %v490, 1
      %v551 = vrot.slane %v491, 1
      %v552 = vsel %vm540, %v550, %v551
      %v553 = vrot.slane %v492, 1
      %v554 = vrot.slane %v493, 1
      %v555 = vsel %vm540, %v553, %v554
      %v556 = vrot.slane %v494, 1
      %v557 = vrot.slane %v495, 1
      %v558 = vsel %vm540, %v556, %v557
      %v559 = vrot.slane %v496, 1
      %v560 = vrot.slane %v497, 1
      %v561 = vsel %vm540, %v559, %v560
      %v562 = vrot.slane %v498, 1
      %v563 = vrot.slane %v499, 1
      %v564 = vsel %vm540, %v562, %v563
      %v573 = vpack.c.bf16 %v546, %v543
      %v574 = vpack.c.bf16 %v552, %v549
      %v575 = vpack.c.bf16 %v558, %v555
      %v576 = vpack.c.bf16 %v564, %v561
      %s577 = scalar_lea.vmem %s3, 64
      %v578 = vld [vmem:[%s577] sm:$0xf]
      %v579 = vld [vmem:[%s577 + $0x4] sm:$0xf]
      %v580 = vld [vmem:[%s577 + $0x8] sm:$0xf]
      %v581 = vld [vmem:[%s577 + $0xc] sm:$0xf]
      %v582 = vld [vmem:[%s577 + $0x10] sm:$0xf]
      %v583 = vld [vmem:[%s577 + $0x14] sm:$0xf]
      %v584 = vld [vmem:[%s577 + $0x18] sm:$0xf]
      %v585 = vld [vmem:[%s577 + $0x1c] sm:$0xf]
      %v586 = vld [vmem:[%s577 + $0x20] sm:$0xf]
      %v587 = vld [vmem:[%s577 + $0x24] sm:$0xf]
      %v588 = vld [vmem:[%s577 + $0x28] sm:$0xf]
      %v589 = vld [vmem:[%s577 + $0x2c] sm:$0xf]
      %v590 = vld [vmem:[%s577 + $0x30] sm:$0xf]
      %v591 = vld [vmem:[%s577 + $0x34] sm:$0xf]
      %v592 = vld [vmem:[%s577 + $0x38] sm:$0xf]
      %v593 = vld [vmem:[%s577 + $0x3c] sm:$0xf]
      %v610 = vunpack.c.l.b16 %v578
      %v611 = vunpack.c.l.b16 %v579
      %v612 = vunpack.c.l.b16 %v580
      %v613 = vunpack.c.l.b16 %v581
      %v614 = vunpack.c.l.b16 %v582
      %v615 = vunpack.c.l.b16 %v583
      %v616 = vunpack.c.l.b16 %v584
      %v617 = vunpack.c.l.b16 %v585
      %v618 = vunpack.c.l.b16 %v586
      %v619 = vunpack.c.l.b16 %v587
      %v620 = vunpack.c.l.b16 %v588
      %v621 = vunpack.c.l.b16 %v589
      %v622 = vunpack.c.l.b16 %v590
      %v623 = vunpack.c.l.b16 %v591
      %v624 = vunpack.c.l.b16 %v592
      %v625 = vunpack.c.l.b16 %v593
      %v626 = vpack.c.b16 %v611, %v610
      %v627 = vpack.c.b16 %v613, %v612
      %v628 = vpack.c.b16 %v615, %v614
      %v629 = vpack.c.b16 %v617, %v616
      %v630 = vpack.c.b16 %v619, %v618
      %v631 = vpack.c.b16 %v621, %v620
      %v632 = vpack.c.b16 %v623, %v622
      %v633 = vpack.c.b16 %v625, %v624
      %642 = vmatprep.subr.bf16.mxu0 0
      %643 = vmatpush1.bf16.msra.mxu0 %v626
      %644 = vmatprep.subr.bf16.mxu0 0
      %645 = vmatpush1.bf16.msra.mxu0 %v627
      %646 = vmatprep.subr.bf16.mxu0 0
      %647 = vmatpush1.bf16.msra.mxu0 %v628
      %648 = vmatprep.subr.bf16.mxu0 0
      %649 = vmatpush1.bf16.msra.mxu0 %v629
      %650 = vmatprep.subr.bf16.mxu0 0
      %651 = vmatpush1.bf16.msra.mxu0 %v630
      %652 = vmatprep.subr.bf16.mxu0 0
      %653 = vmatpush1.bf16.msra.mxu0 %v631
      %654 = vmatprep.subr.bf16.mxu0 0
      %655 = vmatpush1.bf16.msra.mxu0 %v632
      %656 = vmatprep.subr.bf16.mxu0 0
      %657 = vmatpush1.bf16.msra.mxu0 %v633
      %658 = vmatprep.subr.bf16.mxu0 0
      %659 = vmatpush1.bf16.msra.mxu0 0
      %660 = vmatprep.subr.bf16.mxu0 0
      %661 = vmatpush1.bf16.msra.mxu0 0
      %662 = vmatprep.subr.bf16.mxu0 0
      %663 = vmatpush1.bf16.msra.mxu0 0
      %664 = vmatprep.subr.bf16.mxu0 0
      %665 = vmatpush1.bf16.msra.mxu0 0
      %666 = vmatprep.subr.bf16.mxu0 0
      %667 = vmatpush1.bf16.msra.mxu0 0
      %668 = vmatprep.subr.bf16.mxu0 0
      %669 = vmatpush1.bf16.msra.mxu0 0
      %670 = vmatprep.subr.bf16.mxu0 0
      %671 = vmatpush1.bf16.msra.mxu0 0
      %672 = vmatprep.subr.bf16.mxu0 0
      %673 = vmatpush1.bf16.msra.mxu0 0
      %674 = vmatprep.mubr.bf16.mxu0 0
      %675 = vmatmul.mubr.bf16.gmra.mrb[0].mxu0 %v573
      %v676 = vpop.f32.mrb[0].mxu0
      %v677 = vadd.f32 0.0, %v676
      %v678 = vpop.f32.mrb[0].mxu0
      %v679 = vpop.f32.mrb[0].mxu0
      %v680 = vadd.f32 0.0, %v679
      %v681 = vpop.f32.mrb[0].mxu0
      %682 = vmatprep.mubr.bf16.mxu0 0
      %683 = vmatmul.mubr.bf16.gmra.mrb[0].mxu0 %v574
      %v684 = vpop.f32.mrb[0].mxu0
      %v685 = vadd.f32 0.0, %v684
      %v686 = vpop.f32.mrb[0].mxu0
      %v687 = vpop.f32.mrb[0].mxu0
      %v688 = vadd.f32 0.0, %v687
      %v689 = vpop.f32.mrb[0].mxu0
      %690 = vmatprep.mubr.bf16.mxu0 0
      %691 = vmatmul.mubr.bf16.gmra.mrb[0].mxu0 %v575
      %v692 = vpop.f32.mrb[0].mxu0
      %v693 = vadd.f32 0.0, %v692
      %v694 = vpop.f32.mrb[0].mxu0
      %v695 = vpop.f32.mrb[0].mxu0
      %v696 = vadd.f32 0.0, %v695
      %v697 = vpop.f32.mrb[0].mxu0
      %698 = vmatprep.mubr.bf16.mxu0 0
      %699 = vmatmul.mubr.bf16.gmra.mrb[0].mxu0 %v576
      %v700 = vpop.f32.mrb[0].mxu0
      %v701 = vadd.f32 0.0, %v700
      %v702 = vpop.f32.mrb[0].mxu0
      %v703 = vpop.f32.mrb[0].mxu0
      %v704 = vadd.f32 0.0, %v703
      %v705 = vpop.f32.mrb[0].mxu0
      %706 = vdwg.mxu0
      %v723 = vunpack.c.l.b16 %v508
      %v724 = vunpack.c.l.b16 %v509
      %v725 = vunpack.c.l.b16 %v510
      %v726 = vunpack.c.l.b16 %v511
      %v727 = vunpack.c.l.b16 %v512
      %v728 = vunpack.c.l.b16 %v513
      %v729 = vunpack.c.l.b16 %v514
      %v730 = vunpack.c.l.b16 %v515
      %v731 = vunpack.c.l.b16 %v516
      %v732 = vunpack.c.l.b16 %v517
      %v733 = vunpack.c.l.b16 %v518
      %v734 = vunpack.c.l.b16 %v519
      %v735 = vunpack.c.l.b16 %v520
      %v736 = vunpack.c.l.b16 %v521
      %v737 = vunpack.c.l.b16 %v522
      %v738 = vunpack.c.l.b16 %v523
      %v739 = vpack.c.b16 %v724, %v723
      %v740 = vpack.c.b16 %v726, %v725
      %v741 = vpack.c.b16 %v728, %v727
      %v742 = vpack.c.b16 %v730, %v729
      %v743 = vpack.c.b16 %v732, %v731
      %v744 = vpack.c.b16 %v734, %v733
      %v745 = vpack.c.b16 %v736, %v735
      %v746 = vpack.c.b16 %v738, %v737
      %755 = vmatprep.subr.bf16.mxu0 0
      %756 = vmatpush1.bf16.msra.mxu0 %v739
      %757 = vmatprep.subr.bf16.mxu0 0
      %758 = vmatpush1.bf16.msra.mxu0 %v740
      %759 = vmatprep.subr.bf16.mxu0 0
      %760 = vmatpush1.bf16.msra.mxu0 %v741
      %761 = vmatprep.subr.bf16.mxu0 0
      %762 = vmatpush1.bf16.msra.mxu0 %v742
      %763 = vmatprep.subr.bf16.mxu0 0
      %764 = vmatpush1.bf16.msra.mxu0 %v743
      %765 = vmatprep.subr.bf16.mxu0 0
      %766 = vmatpush1.bf16.msra.mxu0 %v744
      %767 = vmatprep.subr.bf16.mxu0 0
      %768 = vmatpush1.bf16.msra.mxu0 %v745
      %769 = vmatprep.subr.bf16.mxu0 0
      %770 = vmatpush1.bf16.msra.mxu0 %v746
      %771 = vmatprep.subr.bf16.mxu0 0
      %772 = vmatpush1.bf16.msra.mxu0 0
      %773 = vmatprep.subr.bf16.mxu0 0
      %774 = vmatpush1.bf16.msra.mxu0 0
      %775 = vmatprep.subr.bf16.mxu0 0
      %776 = vmatpush1.bf16.msra.mxu0 0
      %777 = vmatprep.subr.bf16.mxu0 0
      %778 = vmatpush1.bf16.msra.mxu0 0
      %779 = vmatprep.subr.bf16.mxu0 0
      %780 = vmatpush1.bf16.msra.mxu0 0
      %781 = vmatprep.subr.bf16.mxu0 0
      %782 = vmatpush1.bf16.msra.mxu0 0
      %783 = vmatprep.subr.bf16.mxu0 0
      %784 = vmatpush1.bf16.msra.mxu0 0
      %785 = vmatprep.subr.bf16.mxu0 0
      %786 = vmatpush1.bf16.msra.mxu0 0
      %787 = vmatprep.mubr.bf16.mxu0 0
      %788 = vmatmul.mubr.bf16.gmra.mrb[0].mxu0 %v504
      %v789 = vpop.f32.mrb[0].mxu0
      %v790 = vadd.f32 %v677, %v789
      %v791 = vpop.f32.mrb[0].mxu0
      %v792 = vpop.f32.mrb[0].mxu0
      %v793 = vadd.f32 %v680, %v792
      %v794 = vpop.f32.mrb[0].mxu0
      %795 = vmatprep.mubr.bf16.mxu0 0
      %796 = vmatmul.mubr.bf16.gmra.mrb[0].mxu0 %v505
      %v797 = vpop.f32.mrb[0].mxu0
      %v798 = vadd.f32 %v685, %v797
      %v799 = vpop.f32.mrb[0].mxu0
      %v800 = vpop.f32.mrb[0].mxu0
      %v801 = vadd.f32 %v688, %v800
      %v802 = vpop.f32.mrb[0].mxu0
      %803 = vmatprep.mubr.bf16.mxu0 0
      %804 = vmatmul.mubr.bf16.gmra.mrb[0].mxu0 %v506
      %v805 = vpop.f32.mrb[0].mxu0
      %v806 = vadd.f32 %v693, %v805
      %v807 = vpop.f32.mrb[0].mxu0
      %v808 = vpop.f32.mrb[0].mxu0
      %v809 = vadd.f32 %v696, %v808
      %v810 = vpop.f32.mrb[0].mxu0
      %811 = vmatprep.mubr.bf16.mxu0 0
      %812 = vmatmul.mubr.bf16.gmra.mrb[0].mxu0 %v507
      %v813 = vpop.f32.mrb[0].mxu0
      %v814 = vadd.f32 %v701, %v813
      %v815 = vpop.f32.mrb[0].mxu0
      %v816 = vpop.f32.mrb[0].mxu0
      %v817 = vadd.f32 %v704, %v816
      %v818 = vpop.f32.mrb[0].mxu0
      %819 = vdwg.mxu0
      %vm820 = vcmask 1045504
      %v821 = vrot.slane %v484, 2
      %v822 = vrot.slane %v485, 2
      %v823 = vsel %vm820, %v821, %v822
      %v824 = vrot.slane %v486, 2
      %v825 = vrot.slane %v487, 2
      %v826 = vsel %vm820, %v824, %v825
      %v827 = vrot.slane %v488, 2
      %v828 = vrot.slane %v489, 2
      %v829 = vsel %vm820, %v827, %v828
      %v830 = vrot.slane %v490, 2
      %v831 = vrot.slane %v491, 2
      %v832 = vsel %vm820, %v830, %v831
      %v833 = vrot.slane %v492, 2
      %v834 = vrot.slane %v493, 2
      %v835 = vsel %vm820, %v833, %v834
      %v836 = vrot.slane %v494, 2
      %v837 = vrot.slane %v495, 2
      %v838 = vsel %vm820, %v836, %v837
      %v839 = vrot.slane %v496, 2
      %v840 = vrot.slane %v497, 2
      %v841 = vsel %vm820, %v839, %v840
      %v842 = vrot.slane %v498, 2
      %v843 = vrot.slane %v499, 2
      %v844 = vsel %vm820, %v842, %v843
      %v853 = vpack.c.bf16 %v826, %v823
      %v854 = vpack.c.bf16 %v832, %v829
      %v855 = vpack.c.bf16 %v838, %v835
      %v856 = vpack.c.bf16 %v844, %v841
      %s857 = scalar_lea.vmem %s3, 128
      %v858 = vld [vmem:[%s857] sm:$0xf]
      %v859 = vld [vmem:[%s857 + $0x4] sm:$0xf]
      %v860 = vld [vmem:[%s857 + $0x8] sm:$0xf]
      %v861 = vld [vmem:[%s857 + $0xc] sm:$0xf]
      %v862 = vld [vmem:[%s857 + $0x10] sm:$0xf]
      %v863 = vld [vmem:[%s857 + $0x14] sm:$0xf]
      %v864 = vld [vmem:[%s857 + $0x18] sm:$0xf]
      %v865 = vld [vmem:[%s857 + $0x1c] sm:$0xf]
      %v866 = vld [vmem:[%s857 + $0x20] sm:$0xf]
      %v867 = vld [vmem:[%s857 + $0x24] sm:$0xf]
      %v868 = vld [vmem:[%s857 + $0x28] sm:$0xf]
      %v869 = vld [vmem:[%s857 + $0x2c] sm:$0xf]
      %v870 = vld [vmem:[%s857 + $0x30] sm:$0xf]
      %v871 = vld [vmem:[%s857 + $0x34] sm:$0xf]
      %v872 = vld [vmem:[%s857 + $0x38] sm:$0xf]
      %v873 = vld [vmem:[%s857 + $0x3c] sm:$0xf]
      %v890 = vunpack.c.l.b16 %v858
      %v891 = vunpack.c.l.b16 %v859
      %v892 = vunpack.c.l.b16 %v860
      %v893 = vunpack.c.l.b16 %v861
      %v894 = vunpack.c.l.b16 %v862
      %v895 = vunpack.c.l.b16 %v863
      %v896 = vunpack.c.l.b16 %v864
      %v897 = vunpack.c.l.b16 %v865
      %v898 = vunpack.c.l.b16 %v866
      %v899 = vunpack.c.l.b16 %v867
      %v900 = vunpack.c.l.b16 %v868
      %v901 = vunpack.c.l.b16 %v869
      %v902 = vunpack.c.l.b16 %v870
      %v903 = vunpack.c.l.b16 %v871
      %v904 = vunpack.c.l.b16 %v872
      %v905 = vunpack.c.l.b16 %v873
      %v906 = vpack.c.b16 %v891, %v890
      %v907 = vpack.c.b16 %v893, %v892
      %v908 = vpack.c.b16 %v895, %v894
      %v909 = vpack.c.b16 %v897, %v896
      %v910 = vpack.c.b16 %v899, %v898
      %v911 = vpack.c.b16 %v901, %v900
      %v912 = vpack.c.b16 %v903, %v902
      %v913 = vpack.c.b16 %v905, %v904
      %922 = vmatprep.subr.bf16.mxu0 0
      %923 = vmatpush1.bf16.msra.mxu0 %v906
      %924 = vmatprep.subr.bf16.mxu0 0
      %925 = vmatpush1.bf16.msra.mxu0 %v907
      %926 = vmatprep.subr.bf16.mxu0 0
      %927 = vmatpush1.bf16.msra.mxu0 %v908
      %928 = vmatprep.subr.bf16.mxu0 0
      %929 = vmatpush1.bf16.msra.mxu0 %v909
      %930 = vmatprep.subr.bf16.mxu0 0
      %931 = vmatpush1.bf16.msra.mxu0 %v910
      %932 = vmatprep.subr.bf16.mxu0 0
      %933 = vmatpush1.bf16.msra.mxu0 %v911
      %934 = vmatprep.subr.bf16.mxu0 0
      %935 = vmatpush1.bf16.msra.mxu0 %v912
      %936 = vmatprep.subr.bf16.mxu0 0
      %937 = vmatpush1.bf16.msra.mxu0 %v913
      %938 = vmatprep.subr.bf16.mxu0 0
      %939 = vmatpush1.bf16.msra.mxu0 0
      %940 = vmatprep.subr.bf16.mxu0 0
      %941 = vmatpush1.bf16.msra.mxu0 0
      %942 = vmatprep.subr.bf16.mxu0 0
      %943 = vmatpush1.bf16.msra.mxu0 0
      %944 = vmatprep.subr.bf16.mxu0 0
      %945 = vmatpush1.bf16.msra.mxu0 0
      %946 = vmatprep.subr.bf16.mxu0 0
      %947 = vmatpush1.bf16.msra.mxu0 0
      %948 = vmatprep.subr.bf16.mxu0 0
      %949 = vmatpush1.bf16.msra.mxu0 0
      %950 = vmatprep.subr.bf16.mxu0 0
      %951 = vmatpush1.bf16.msra.mxu0 0
      %952 = vmatprep.subr.bf16.mxu0 0
      %953 = vmatpush1.bf16.msra.mxu0 0
      %954 = vmatprep.mubr.bf16.mxu0 0
      %955 = vmatmul.mubr.bf16.gmra.mrb[0].mxu0 %v853
      %v956 = vpop.f32.mrb[0].mxu0
      %v957 = vadd.f32 0.0, %v956
      %v958 = vpop.f32.mrb[0].mxu0
      %v959 = vpop.f32.mrb[0].mxu0
      %v960 = vadd.f32 0.0, %v959
      %v961 = vpop.f32.mrb[0].mxu0
      %962 = vmatprep.mubr.bf16.mxu0 0
      %963 = vmatmul.mubr.bf16.gmra.mrb[0].mxu0 %v854
      %v964 = vpop.f32.mrb[0].mxu0
      %v965 = vadd.f32 0.0, %v964
      %v966 = vpop.f32.mrb[0].mxu0
      %v967 = vpop.f32.mrb[0].mxu0
      %v968 = vadd.f32 0.0, %v967
      %v969 = vpop.f32.mrb[0].mxu0
      %970 = vmatprep.mubr.bf16.mxu0 0
      %971 = vmatmul.mubr.bf16.gmra.mrb[0].mxu0 %v855
      %v972 = vpop.f32.mrb[0].mxu0
      %v973 = vadd.f32 0.0, %v972
      %v974 = vpop.f32.mrb[0].mxu0
      %v975 = vpop.f32.mrb[0].mxu0
      %v976 = vadd.f32 0.0, %v975
      %v977 = vpop.f32.mrb[0].mxu0
      %978 = vmatprep.mubr.bf16.mxu0 0
      %979 = vmatmul.mubr.bf16.gmra.mrb[0].mxu0 %v856
      %v980 = vpop.f32.mrb[0].mxu0
      %v981 = vadd.f32 0.0, %v980
      %v982 = vpop.f32.mrb[0].mxu0
      %v983 = vpop.f32.mrb[0].mxu0
      %v984 = vadd.f32 0.0, %v983
      %v985 = vpop.f32.mrb[0].mxu0
      %986 = vdwg.mxu0
      %v987 = vadd.f32 %v790, %v957
      %v988 = vadd.f32 %v793, %v960
      %v989 = vadd.f32 %v798, %v965
      %v990 = vadd.f32 %v801, %v968
      %v991 = vadd.f32 %v806, %v973
      %v992 = vadd.f32 %v809, %v976
      %v993 = vadd.f32 %v814, %v981
      %v994 = vadd.f32 %v817, %v984
      %v995 = vpack.c.bf16 %v488, %v486
      %v996 = vpack.c.bf16 %v492, %v490
      %v997 = vpack.c.bf16 %v496, %v494
      %v998 = vpack.c.bf16 %v500, %v498
      %s999 = scalar_lea.vmem %s3, 192
      %v1000 = vld [vmem:[%s999] sm:$0xf]
      %v1001 = vld [vmem:[%s999 + $0x4] sm:$0xf]
      %v1002 = vld [vmem:[%s999 + $0x8] sm:$0xf]
      %v1003 = vld [vmem:[%s999 + $0xc] sm:$0xf]
      %v1004 = vld [vmem:[%s999 + $0x10] sm:$0xf]
      %v1005 = vld [vmem:[%s999 + $0x14] sm:$0xf]
      %v1006 = vld [vmem:[%s999 + $0x18] sm:$0xf]
      %v1007 = vld [vmem:[%s999 + $0x1c] sm:$0xf]
      %v1008 = vld [vmem:[%s999 + $0x20] sm:$0xf]
      %v1009 = vld [vmem:[%s999 + $0x24] sm:$0xf]
      %v1010 = vld [vmem:[%s999 + $0x28] sm:$0xf]
      %v1011 = vld [vmem:[%s999 + $0x2c] sm:$0xf]
      %v1012 = vld [vmem:[%s999 + $0x30] sm:$0xf]
      %v1013 = vld [vmem:[%s999 + $0x34] sm:$0xf]
      %v1014 = vld [vmem:[%s999 + $0x38] sm:$0xf]
      %v1015 = vld [vmem:[%s999 + $0x3c] sm:$0xf]
      %v1032 = vunpack.c.l.b16 %v1000
      %v1033 = vunpack.c.l.b16 %v1001
      %v1034 = vunpack.c.l.b16 %v1002
      %v1035 = vunpack.c.l.b16 %v1003
      %v1036 = vunpack.c.l.b16 %v1004
      %v1037 = vunpack.c.l.b16 %v1005
      %v1038 = vunpack.c.l.b16 %v1006
      %v1039 = vunpack.c.l.b16 %v1007
      %v1040 = vunpack.c.l.b16 %v1008
      %v1041 = vunpack.c.l.b16 %v1009
      %v1042 = vunpack.c.l.b16 %v1010
      %v1043 = vunpack.c.l.b16 %v1011
      %v1044 = vunpack.c.l.b16 %v1012
      %v1045 = vunpack.c.l.b16 %v1013
      %v1046 = vunpack.c.l.b16 %v1014
      %v1047 = vunpack.c.l.b16 %v1015
      %v1048 = vpack.c.b16 %v1033, %v1032
      %v1049 = vpack.c.b16 %v1035, %v1034
      %v1050 = vpack.c.b16 %v1037, %v1036
      %v1051 = vpack.c.b16 %v1039, %v1038
      %v1052 = vpack.c.b16 %v1041, %v1040
      %v1053 = vpack.c.b16 %v1043, %v1042
      %v1054 = vpack.c.b16 %v1045, %v1044
      %v1055 = vpack.c.b16 %v1047, %v1046
      %1064 = vmatprep.subr.bf16.mxu0 0
      %1065 = vmatpush1.bf16.msra.mxu0 %v1048
      %1066 = vmatprep.subr.bf16.mxu0 0
      %1067 = vmatpush1.bf16.msra.mxu0 %v1049
      %1068 = vmatprep.subr.bf16.mxu0 0
      %1069 = vmatpush1.bf16.msra.mxu0 %v1050
      %1070 = vmatprep.subr.bf16.mxu0 0
      %1071 = vmatpush1.bf16.msra.mxu0 %v1051
      %1072 = vmatprep.subr.bf16.mxu0 0
      %1073 = vmatpush1.bf16.msra.mxu0 %v1052
      %1074 = vmatprep.subr.bf16.mxu0 0
      %1075 = vmatpush1.bf16.msra.mxu0 %v1053
      %1076 = vmatprep.subr.bf16.mxu0 0
      %1077 = vmatpush1.bf16.msra.mxu0 %v1054
      %1078 = vmatprep.subr.bf16.mxu0 0
      %1079 = vmatpush1.bf16.msra.mxu0 %v1055
      %1080 = vmatprep.subr.bf16.mxu0 0
      %1081 = vmatpush1.bf16.msra.mxu0 0
      %1082 = vmatprep.subr.bf16.mxu0 0
      %1083 = vmatpush1.bf16.msra.mxu0 0
      %1084 = vmatprep.subr.bf16.mxu0 0
      %1085 = vmatpush1.bf16.msra.mxu0 0
      %1086 = vmatprep.subr.bf16.mxu0 0
      %1087 = vmatpush1.bf16.msra.mxu0 0
      %1088 = vmatprep.subr.bf16.mxu0 0
      %1089 = vmatpush1.bf16.msra.mxu0 0
      %1090 = vmatprep.subr.bf16.mxu0 0
      %1091 = vmatpush1.bf16.msra.mxu0 0
      %1092 = vmatprep.subr.bf16.mxu0 0
      %1093 = vmatpush1.bf16.msra.mxu0 0
      %1094 = vmatprep.subr.bf16.mxu0 0
      %1095 = vmatpush1.bf16.msra.mxu0 0
      %1096 = vmatprep.mubr.bf16.mxu0 0
      %1097 = vmatmul.mubr.bf16.gmra.mrb[0].mxu0 %v995
      %v1098 = vpop.f32.mrb[0].mxu0
      %v1099 = vadd.f32 0.0, %v1098
      %v1100 = vpop.f32.mrb[0].mxu0
      %v1101 = vpop.f32.mrb[0].mxu0
      %v1102 = vadd.f32 0.0, %v1101
      %v1103 = vpop.f32.mrb[0].mxu0
      %1104 = vmatprep.mubr.bf16.mxu0 0
      %1105 = vmatmul.mubr.bf16.gmra.mrb[0].mxu0 %v996
      %v1106 = vpop.f32.mrb[0].mxu0
      %v1107 = vadd.f32 0.0, %v1106
      %v1108 = vpop.f32.mrb[0].mxu0
      %v1109 = vpop.f32.mrb[0].mxu0
      %v1110 = vadd.f32 0.0, %v1109
      %v1111 = vpop.f32.mrb[0].mxu0
      %1112 = vmatprep.mubr.bf16.mxu0 0
      %1113 = vmatmul.mubr.bf16.gmra.mrb[0].mxu0 %v997
      %v1114 = vpop.f32.mrb[0].mxu0
      %v1115 = vadd.f32 0.0, %v1114
      %v1116 = vpop.f32.mrb[0].mxu0
      %v1117 = vpop.f32.mrb[0].mxu0
      %v1118 = vadd.f32 0.0, %v1117
      %v1119 = vpop.f32.mrb[0].mxu0
      %1120 = vmatprep.mubr.bf16.mxu0 0
      %1121 = vmatmul.mubr.bf16.gmra.mrb[0].mxu0 %v998
      %v1122 = vpop.f32.mrb[0].mxu0
      %v1123 = vadd.f32 0.0, %v1122
      %v1124 = vpop.f32.mrb[0].mxu0
      %v1125 = vpop.f32.mrb[0].mxu0
      %v1126 = vadd.f32 0.0, %v1125
      %v1127 = vpop.f32.mrb[0].mxu0
      %1128 = vdwg.mxu0
      %v1129 = vadd.f32 %v987, %v1099
      %v1130 = vadd.f32 %v988, %v1102
      %v1131 = vadd.f32 %v989, %v1107
      %v1132 = vadd.f32 %v990, %v1110
      %v1133 = vadd.f32 %v991, %v1115
      %v1134 = vadd.f32 %v992, %v1118
      %v1135 = vadd.f32 %v993, %v1123
      %v1136 = vadd.f32 %v994, %v1126
      %v1139 = vrot.slane %v500, 1
      %v1140 = vrot.slane %v501, 1
      %v1141 = vsel %vm540, %v1139, %v1140
      %v1143 = vpack.c.bf16 %v549, %v546
      %v1144 = vpack.c.bf16 %v555, %v552
      %v1145 = vpack.c.bf16 %v561, %v558
      %v1146 = vpack.c.bf16 %v1141, %v564
      %s1147 = scalar_lea.vmem %s3, 256
      %v1148 = vld [vmem:[%s1147] sm:$0xf]
      %v1149 = vld [vmem:[%s1147 + $0x4] sm:$0xf]
      %v1150 = vld [vmem:[%s1147 + $0x8] sm:$0xf]
      %v1151 = vld [vmem:[%s1147 + $0xc] sm:$0xf]
      %v1152 = vld [vmem:[%s1147 + $0x10] sm:$0xf]
      %v1153 = vld [vmem:[%s1147 + $0x14] sm:$0xf]
      %v1154 = vld [vmem:[%s1147 + $0x18] sm:$0xf]
      %v1155 = vld [vmem:[%s1147 + $0x1c] sm:$0xf]
      %v1156 = vld [vmem:[%s1147 + $0x20] sm:$0xf]
      %v1157 = vld [vmem:[%s1147 + $0x24] sm:$0xf]
      %v1158 = vld [vmem:[%s1147 + $0x28] sm:$0xf]
      %v1159 = vld [vmem:[%s1147 + $0x2c] sm:$0xf]
      %v1160 = vld [vmem:[%s1147 + $0x30] sm:$0xf]
      %v1161 = vld [vmem:[%s1147 + $0x34] sm:$0xf]
      %v1162 = vld [vmem:[%s1147 + $0x38] sm:$0xf]
      %v1163 = vld [vmem:[%s1147 + $0x3c] sm:$0xf]
      %v1180 = vunpack.c.l.b16 %v1148
      %v1181 = vunpack.c.l.b16 %v1149
      %v1182 = vunpack.c.l.b16 %v1150
      %v1183 = vunpack.c.l.b16 %v1151
      %v1184 = vunpack.c.l.b16 %v1152
      %v1185 = vunpack.c.l.b16 %v1153
      %v1186 = vunpack.c.l.b16 %v1154
      %v1187 = vunpack.c.l.b16 %v1155
      %v1188 = vunpack.c.l.b16 %v1156
      %v1189 = vunpack.c.l.b16 %v1157
      %v1190 = vunpack.c.l.b16 %v1158
      %v1191 = vunpack.c.l.b16 %v1159
      %v1192 = vunpack.c.l.b16 %v1160
      %v1193 = vunpack.c.l.b16 %v1161
      %v1194 = vunpack.c.l.b16 %v1162
      %v1195 = vunpack.c.l.b16 %v1163
      %v1196 = vpack.c.b16 %v1181, %v1180
      %v1197 = vpack.c.b16 %v1183, %v1182
      %v1198 = vpack.c.b16 %v1185, %v1184
      %v1199 = vpack.c.b16 %v1187, %v1186
      %v1200 = vpack.c.b16 %v1189, %v1188
      %v1201 = vpack.c.b16 %v1191, %v1190
      %v1202 = vpack.c.b16 %v1193, %v1192
      %v1203 = vpack.c.b16 %v1195, %v1194
      %1212 = vmatprep.subr.bf16.mxu0 0
      %1213 = vmatpush1.bf16.msra.mxu0 %v1196
      %1214 = vmatprep.subr.bf16.mxu0 0
      %1215 = vmatpush1.bf16.msra.mxu0 %v1197
      %1216 = vmatprep.subr.bf16.mxu0 0
      %1217 = vmatpush1.bf16.msra.mxu0 %v1198
      %1218 = vmatprep.subr.bf16.mxu0 0
      %1219 = vmatpush1.bf16.msra.mxu0 %v1199
      %1220 = vmatprep.subr.bf16.mxu0 0
      %1221 = vmatpush1.bf16.msra.mxu0 %v1200
      %1222 = vmatprep.subr.bf16.mxu0 0
      %1223 = vmatpush1.bf16.msra.mxu0 %v1201
      %1224 = vmatprep.subr.bf16.mxu0 0
      %1225 = vmatpush1.bf16.msra.mxu0 %v1202
      %1226 = vmatprep.subr.bf16.mxu0 0
      %1227 = vmatpush1.bf16.msra.mxu0 %v1203
      %1228 = vmatprep.subr.bf16.mxu0 0
      %1229 = vmatpush1.bf16.msra.mxu0 0
      %1230 = vmatprep.subr.bf16.mxu0 0
      %1231 = vmatpush1.bf16.msra.mxu0 0
      %1232 = vmatprep.subr.bf16.mxu0 0
      %1233 = vmatpush1.bf16.msra.mxu0 0
      %1234 = vmatprep.subr.bf16.mxu0 0
      %1235 = vmatpush1.bf16.msra.mxu0 0
      %1236 = vmatprep.subr.bf16.mxu0 0
      %1237 = vmatpush1.bf16.msra.mxu0 0
      %1238 = vmatprep.subr.bf16.mxu0 0
      %1239 = vmatpush1.bf16.msra.mxu0 0
      %1240 = vmatprep.subr.bf16.mxu0 0
      %1241 = vmatpush1.bf16.msra.mxu0 0
      %1242 = vmatprep.subr.bf16.mxu0 0
      %1243 = vmatpush1.bf16.msra.mxu0 0
      %1244 = vmatprep.mubr.bf16.mxu0 0
      %1245 = vmatmul.mubr.bf16.gmra.mrb[0].mxu0 %v1143
      %v1246 = vpop.f32.mrb[0].mxu0
      %v1247 = vadd.f32 0.0, %v1246
      %v1248 = vpop.f32.mrb[0].mxu0
      %v1249 = vpop.f32.mrb[0].mxu0
      %v1250 = vadd.f32 0.0, %v1249
      %v1251 = vpop.f32.mrb[0].mxu0
      %1252 = vmatprep.mubr.bf16.mxu0 0
      %1253 = vmatmul.mubr.bf16.gmra.mrb[0].mxu0 %v1144
      %v1254 = vpop.f32.mrb[0].mxu0
      %v1255 = vadd.f32 0.0, %v1254
      %v1256 = vpop.f32.mrb[0].mxu0
      %v1257 = vpop.f32.mrb[0].mxu0
      %v1258 = vadd.f32 0.0, %v1257
      %v1259 = vpop.f32.mrb[0].mxu0
      %1260 = vmatprep.mubr.bf16.mxu0 0
      %1261 = vmatmul.mubr.bf16.gmra.mrb[0].mxu0 %v1145
      %v1262 = vpop.f32.mrb[0].mxu0
      %v1263 = vadd.f32 0.0, %v1262
      %v1264 = vpop.f32.mrb[0].mxu0
      %v1265 = vpop.f32.mrb[0].mxu0
      %v1266 = vadd.f32 0.0, %v1265
      %v1267 = vpop.f32.mrb[0].mxu0
      %1268 = vmatprep.mubr.bf16.mxu0 0
      %1269 = vmatmul.mubr.bf16.gmra.mrb[0].mxu0 %v1146
      %v1270 = vpop.f32.mrb[0].mxu0
      %v1271 = vadd.f32 0.0, %v1270
      %v1272 = vpop.f32.mrb[0].mxu0
      %v1273 = vpop.f32.mrb[0].mxu0
      %v1274 = vadd.f32 0.0, %v1273
      %v1275 = vpop.f32.mrb[0].mxu0
      %1276 = vdwg.mxu0
      %v1277 = vadd.f32 %v1129, %v1247
      %v1278 = vadd.f32 %v1130, %v1250
      %v1279 = vadd.f32 %v1131, %v1255
      %v1280 = vadd.f32 %v1132, %v1258
      %v1281 = vadd.f32 %v1133, %v1263
      %v1282 = vadd.f32 %v1134, %v1266
      %v1283 = vadd.f32 %v1135, %v1271
      %v1284 = vadd.f32 %v1136, %v1274
      %v1285 = vrot.slane %v500, 2
      %v1286 = vrot.slane %v501, 2
      %v1287 = vsel %vm820, %v1285, %v1286
      %v1289 = vpack.c.bf16 %v829, %v826
      %v1290 = vpack.c.bf16 %v835, %v832
      %v1291 = vpack.c.bf16 %v841, %v838
      %v1292 = vpack.c.bf16 %v1287, %v844
      %s1293 = scalar_lea.vmem %s3, 320
      %v1294 = vld [vmem:[%s1293] sm:$0xf]
      %v1295 = vld [vmem:[%s1293 + $0x4] sm:$0xf]
      %v1296 = vld [vmem:[%s1293 + $0x8] sm:$0xf]
      %v1297 = vld [vmem:[%s1293 + $0xc] sm:$0xf]
      %v1298 = vld [vmem:[%s1293 + $0x10] sm:$0xf]
      %v1299 = vld [vmem:[%s1293 + $0x14] sm:$0xf]
      %v1300 = vld [vmem:[%s1293 + $0x18] sm:$0xf]
      %v1301 = vld [vmem:[%s1293 + $0x1c] sm:$0xf]
      %v1302 = vld [vmem:[%s1293 + $0x20] sm:$0xf]
      %v1303 = vld [vmem:[%s1293 + $0x24] sm:$0xf]
      %v1304 = vld [vmem:[%s1293 + $0x28] sm:$0xf]
      %v1305 = vld [vmem:[%s1293 + $0x2c] sm:$0xf]
      %v1306 = vld [vmem:[%s1293 + $0x30] sm:$0xf]
      %v1307 = vld [vmem:[%s1293 + $0x34] sm:$0xf]
      %v1308 = vld [vmem:[%s1293 + $0x38] sm:$0xf]
      %v1309 = vld [vmem:[%s1293 + $0x3c] sm:$0xf]
      %v1326 = vunpack.c.l.b16 %v1294
      %v1327 = vunpack.c.l.b16 %v1295
      %v1328 = vunpack.c.l.b16 %v1296
      %v1329 = vunpack.c.l.b16 %v1297
      %v1330 = vunpack.c.l.b16 %v1298
      %v1331 = vunpack.c.l.b16 %v1299
      %v1332 = vunpack.c.l.b16 %v1300
      %v1333 = vunpack.c.l.b16 %v1301
      %v1334 = vunpack.c.l.b16 %v1302
      %v1335 = vunpack.c.l.b16 %v1303
      %v1336 = vunpack.c.l.b16 %v1304
      %v1337 = vunpack.c.l.b16 %v1305
      %v1338 = vunpack.c.l.b16 %v1306
      %v1339 = vunpack.c.l.b16 %v1307
      %v1340 = vunpack.c.l.b16 %v1308
      %v1341 = vunpack.c.l.b16 %v1309
      %v1342 = vpack.c.b16 %v1327, %v1326
      %v1343 = vpack.c.b16 %v1329, %v1328
      %v1344 = vpack.c.b16 %v1331, %v1330
      %v1345 = vpack.c.b16 %v1333, %v1332
      %v1346 = vpack.c.b16 %v1335, %v1334
      %v1347 = vpack.c.b16 %v1337, %v1336
      %v1348 = vpack.c.b16 %v1339, %v1338
      %v1349 = vpack.c.b16 %v1341, %v1340
      %1358 = vmatprep.subr.bf16.mxu0 0
      %1359 = vmatpush1.bf16.msra.mxu0 %v1342
      %1360 = vmatprep.subr.bf16.mxu0 0
      %1361 = vmatpush1.bf16.msra.mxu0 %v1343
      %1362 = vmatprep.subr.bf16.mxu0 0
      %1363 = vmatpush1.bf16.msra.mxu0 %v1344
      %1364 = vmatprep.subr.bf16.mxu0 0
      %1365 = vmatpush1.bf16.msra.mxu0 %v1345
      %1366 = vmatprep.subr.bf16.mxu0 0
      %1367 = vmatpush1.bf16.msra.mxu0 %v1346
      %1368 = vmatprep.subr.bf16.mxu0 0
      %1369 = vmatpush1.bf16.msra.mxu0 %v1347
      %1370 = vmatprep.subr.bf16.mxu0 0
      %1371 = vmatpush1.bf16.msra.mxu0 %v1348
      %1372 = vmatprep.subr.bf16.mxu0 0
      %1373 = vmatpush1.bf16.msra.mxu0 %v1349
      %1374 = vmatprep.subr.bf16.mxu0 0
      %1375 = vmatpush1.bf16.msra.mxu0 0
      %1376 = vmatprep.subr.bf16.mxu0 0
      %1377 = vmatpush1.bf16.msra.mxu0 0
      %1378 = vmatprep.subr.bf16.mxu0 0
      %1379 = vmatpush1.bf16.msra.mxu0 0
      %1380 = vmatprep.subr.bf16.mxu0 0
      %1381 = vmatpush1.bf16.msra.mxu0 0
      %1382 = vmatprep.subr.bf16.mxu0 0
      %1383 = vmatpush1.bf16.msra.mxu0 0
      %1384 = vmatprep.subr.bf16.mxu0 0
      %1385 = vmatpush1.bf16.msra.mxu0 0
      %1386 = vmatprep.subr.bf16.mxu0 0
      %1387 = vmatpush1.bf16.msra.mxu0 0
      %1388 = vmatprep.subr.bf16.mxu0 0
      %1389 = vmatpush1.bf16.msra.mxu0 0
      %1390 = vmatprep.mubr.bf16.mxu0 0
      %1391 = vmatmul.mubr.bf16.gmra.mrb[0].mxu0 %v1289
      %v1392 = vpop.f32.mrb[0].mxu0
      %v1393 = vadd.f32 0.0, %v1392
      %v1394 = vpop.f32.mrb[0].mxu0
      %v1395 = vpop.f32.mrb[0].mxu0
      %v1396 = vadd.f32 0.0, %v1395
      %v1397 = vpop.f32.mrb[0].mxu0
      %1398 = vmatprep.mubr.bf16.mxu0 0
      %1399 = vmatmul.mubr.bf16.gmra.mrb[0].mxu0 %v1290
      %v1400 = vpop.f32.mrb[0].mxu0
      %v1401 = vadd.f32 0.0, %v1400
      %v1402 = vpop.f32.mrb[0].mxu0
      %v1403 = vpop.f32.mrb[0].mxu0
      %v1404 = vadd.f32 0.0, %v1403
      %v1405 = vpop.f32.mrb[0].mxu0
      %1406 = vmatprep.mubr.bf16.mxu0 0
      %1407 = vmatmul.mubr.bf16.gmra.mrb[0].mxu0 %v1291
      %v1408 = vpop.f32.mrb[0].mxu0
      %v1409 = vadd.f32 0.0, %v1408
      %v1410 = vpop.f32.mrb[0].mxu0
      %v1411 = vpop.f32.mrb[0].mxu0
      %v1412 = vadd.f32 0.0, %v1411
      %v1413 = vpop.f32.mrb[0].mxu0
      %1414 = vmatprep.mubr.bf16.mxu0 0
      %1415 = vmatmul.mubr.bf16.gmra.mrb[0].mxu0 %v1292
      %v1416 = vpop.f32.mrb[0].mxu0
      %v1417 = vadd.f32 0.0, %v1416
      %v1418 = vpop.f32.mrb[0].mxu0
      %v1419 = vpop.f32.mrb[0].mxu0
      %v1420 = vadd.f32 0.0, %v1419
      %v1421 = vpop.f32.mrb[0].mxu0
      %1422 = vdwg.mxu0
      %v1423 = vadd.f32 %v1277, %v1393
      %v1424 = vadd.f32 %v1278, %v1396
      %v1425 = vadd.f32 %v1279, %v1401
      %v1426 = vadd.f32 %v1280, %v1404
      %v1427 = vadd.f32 %v1281, %v1409
      %v1428 = vadd.f32 %v1282, %v1412
      %v1429 = vadd.f32 %v1283, %v1417
      %v1430 = vadd.f32 %v1284, %v1420
      %v1431 = vpack.c.bf16 %v502, %v500
      %s1432 = scalar_lea.vmem %s3, 384
      %v1433 = vld [vmem:[%s1432] sm:$0xf]
      %v1434 = vld [vmem:[%s1432 + $0x4] sm:$0xf]
      %v1435 = vld [vmem:[%s1432 + $0x8] sm:$0xf]
      %v1436 = vld [vmem:[%s1432 + $0xc] sm:$0xf]
      %v1437 = vld [vmem:[%s1432 + $0x10] sm:$0xf]
      %v1438 = vld [vmem:[%s1432 + $0x14] sm:$0xf]
      %v1439 = vld [vmem:[%s1432 + $0x18] sm:$0xf]
      %v1440 = vld [vmem:[%s1432 + $0x1c] sm:$0xf]
      %v1441 = vld [vmem:[%s1432 + $0x20] sm:$0xf]
      %v1442 = vld [vmem:[%s1432 + $0x24] sm:$0xf]
      %v1443 = vld [vmem:[%s1432 + $0x28] sm:$0xf]
      %v1444 = vld [vmem:[%s1432 + $0x2c] sm:$0xf]
      %v1445 = vld [vmem:[%s1432 + $0x30] sm:$0xf]
      %v1446 = vld [vmem:[%s1432 + $0x34] sm:$0xf]
      %v1447 = vld [vmem:[%s1432 + $0x38] sm:$0xf]
      %v1448 = vld [vmem:[%s1432 + $0x3c] sm:$0xf]
      %v1465 = vunpack.c.l.b16 %v1433
      %v1466 = vunpack.c.l.b16 %v1434
      %v1467 = vunpack.c.l.b16 %v1435
      %v1468 = vunpack.c.l.b16 %v1436
      %v1469 = vunpack.c.l.b16 %v1437
      %v1470 = vunpack.c.l.b16 %v1438
      %v1471 = vunpack.c.l.b16 %v1439
      %v1472 = vunpack.c.l.b16 %v1440
      %v1473 = vunpack.c.l.b16 %v1441
      %v1474 = vunpack.c.l.b16 %v1442
      %v1475 = vunpack.c.l.b16 %v1443
      %v1476 = vunpack.c.l.b16 %v1444
      %v1477 = vunpack.c.l.b16 %v1445
      %v1478 = vunpack.c.l.b16 %v1446
      %v1479 = vunpack.c.l.b16 %v1447
      %v1480 = vunpack.c.l.b16 %v1448
      %v1481 = vpack.c.b16 %v1466, %v1465
      %v1482 = vpack.c.b16 %v1468, %v1467
      %v1483 = vpack.c.b16 %v1470, %v1469
      %v1484 = vpack.c.b16 %v1472, %v1471
      %v1485 = vpack.c.b16 %v1474, %v1473
      %v1486 = vpack.c.b16 %v1476, %v1475
      %v1487 = vpack.c.b16 %v1478, %v1477
      %v1488 = vpack.c.b16 %v1480, %v1479
      %1497 = vmatprep.subr.bf16.mxu0 0
      %1498 = vmatpush1.bf16.msra.mxu0 %v1481
      %1499 = vmatprep.subr.bf16.mxu0 0
      %1500 = vmatpush1.bf16.msra.mxu0 %v1482
      %1501 = vmatprep.subr.bf16.mxu0 0
      %1502 = vmatpush1.bf16.msra.mxu0 %v1483
      %1503 = vmatprep.subr.bf16.mxu0 0
      %1504 = vmatpush1.bf16.msra.mxu0 %v1484
      %1505 = vmatprep.subr.bf16.mxu0 0
      %1506 = vmatpush1.bf16.msra.mxu0 %v1485
      %1507 = vmatprep.subr.bf16.mxu0 0
      %1508 = vmatpush1.bf16.msra.mxu0 %v1486
      %1509 = vmatprep.subr.bf16.mxu0 0
      %1510 = vmatpush1.bf16.msra.mxu0 %v1487
      %1511 = vmatprep.subr.bf16.mxu0 0
      %1512 = vmatpush1.bf16.msra.mxu0 %v1488
      %1513 = vmatprep.subr.bf16.mxu0 0
      %1514 = vmatpush1.bf16.msra.mxu0 0
      %1515 = vmatprep.subr.bf16.mxu0 0
      %1516 = vmatpush1.bf16.msra.mxu0 0
      %1517 = vmatprep.subr.bf16.mxu0 0
      %1518 = vmatpush1.bf16.msra.mxu0 0
      %1519 = vmatprep.subr.bf16.mxu0 0
      %1520 = vmatpush1.bf16.msra.mxu0 0
      %1521 = vmatprep.subr.bf16.mxu0 0
      %1522 = vmatpush1.bf16.msra.mxu0 0
      %1523 = vmatprep.subr.bf16.mxu0 0
      %1524 = vmatpush1.bf16.msra.mxu0 0
      %1525 = vmatprep.subr.bf16.mxu0 0
      %1526 = vmatpush1.bf16.msra.mxu0 0
      %1527 = vmatprep.subr.bf16.mxu0 0
      %1528 = vmatpush1.bf16.msra.mxu0 0
      %1529 = vmatprep.mubr.bf16.mxu0 0
      %1530 = vmatmul.mubr.bf16.gmra.mrb[0].mxu0 %v505
      %v1531 = vpop.f32.mrb[0].mxu0
      %v1532 = vadd.f32 0.0, %v1531
      %v1533 = vpop.f32.mrb[0].mxu0
      %v1534 = vpop.f32.mrb[0].mxu0
      %v1535 = vadd.f32 0.0, %v1534
      %v1536 = vpop.f32.mrb[0].mxu0
      %1537 = vmatprep.mubr.bf16.mxu0 0
      %1538 = vmatmul.mubr.bf16.gmra.mrb[0].mxu0 %v506
      %v1539 = vpop.f32.mrb[0].mxu0
      %v1540 = vadd.f32 0.0, %v1539
      %v1541 = vpop.f32.mrb[0].mxu0
      %v1542 = vpop.f32.mrb[0].mxu0
      %v1543 = vadd.f32 0.0, %v1542
      %v1544 = vpop.f32.mrb[0].mxu0
      %1545 = vmatprep.mubr.bf16.mxu0 0
      %1546 = vmatmul.mubr.bf16.gmra.mrb[0].mxu0 %v507
      %v1547 = vpop.f32.mrb[0].mxu0
      %v1548 = vadd.f32 0.0, %v1547
      %v1549 = vpop.f32.mrb[0].mxu0
      %v1550 = vpop.f32.mrb[0].mxu0
      %v1551 = vadd.f32 0.0, %v1550
      %v1552 = vpop.f32.mrb[0].mxu0
      %1553 = vmatprep.mubr.bf16.mxu0 0
      %1554 = vmatmul.mubr.bf16.gmra.mrb[0].mxu0 %v1431
      %v1555 = vpop.f32.mrb[0].mxu0
      %v1556 = vadd.f32 0.0, %v1555
      %v1557 = vpop.f32.mrb[0].mxu0
      %v1558 = vpop.f32.mrb[0].mxu0
      %v1559 = vadd.f32 0.0, %v1558
      %v1560 = vpop.f32.mrb[0].mxu0
      %1561 = vdwg.mxu0
      %v1562 = vadd.f32 %v1423, %v1532
      %v1563 = vadd.f32 %v1424, %v1535
      %v1564 = vadd.f32 %v1425, %v1540
      %v1565 = vadd.f32 %v1426, %v1543
      %v1566 = vadd.f32 %v1427, %v1548
      %v1567 = vadd.f32 %v1428, %v1551
      %v1568 = vadd.f32 %v1429, %v1556
      %v1569 = vadd.f32 %v1430, %v1559
      %v1572 = vrot.slane %v502, 1
      %v1573 = vrot.slane %v503, 1
      %v1574 = vsel %vm540, %v1572, %v1573
      %v1576 = vpack.c.bf16 %v1574, %v1141
      %s1577 = scalar_lea.vmem %s3, 448
      %v1578 = vld [vmem:[%s1577] sm:$0xf]
      %v1579 = vld [vmem:[%s1577 + $0x4] sm:$0xf]
      %v1580 = vld [vmem:[%s1577 + $0x8] sm:$0xf]
      %v1581 = vld [vmem:[%s1577 + $0xc] sm:$0xf]
      %v1582 = vld [vmem:[%s1577 + $0x10] sm:$0xf]
      %v1583 = vld [vmem:[%s1577 + $0x14] sm:$0xf]
      %v1584 = vld [vmem:[%s1577 + $0x18] sm:$0xf]
      %v1585 = vld [vmem:[%s1577 + $0x1c] sm:$0xf]
      %v1586 = vld [vmem:[%s1577 + $0x20] sm:$0xf]
      %v1587 = vld [vmem:[%s1577 + $0x24] sm:$0xf]
      %v1588 = vld [vmem:[%s1577 + $0x28] sm:$0xf]
      %v1589 = vld [vmem:[%s1577 + $0x2c] sm:$0xf]
      %v1590 = vld [vmem:[%s1577 + $0x30] sm:$0xf]
      %v1591 = vld [vmem:[%s1577 + $0x34] sm:$0xf]
      %v1592 = vld [vmem:[%s1577 + $0x38] sm:$0xf]
      %v1593 = vld [vmem:[%s1577 + $0x3c] sm:$0xf]
      %v1610 = vunpack.c.l.b16 %v1578
      %v1611 = vunpack.c.l.b16 %v1579
      %v1612 = vunpack.c.l.b16 %v1580
      %v1613 = vunpack.c.l.b16 %v1581
      %v1614 = vunpack.c.l.b16 %v1582
      %v1615 = vunpack.c.l.b16 %v1583
      %v1616 = vunpack.c.l.b16 %v1584
      %v1617 = vunpack.c.l.b16 %v1585
      %v1618 = vunpack.c.l.b16 %v1586
      %v1619 = vunpack.c.l.b16 %v1587
      %v1620 = vunpack.c.l.b16 %v1588
      %v1621 = vunpack.c.l.b16 %v1589
      %v1622 = vunpack.c.l.b16 %v1590
      %v1623 = vunpack.c.l.b16 %v1591
      %v1624 = vunpack.c.l.b16 %v1592
      %v1625 = vunpack.c.l.b16 %v1593
      %v1626 = vpack.c.b16 %v1611, %v1610
      %v1627 = vpack.c.b16 %v1613, %v1612
      %v1628 = vpack.c.b16 %v1615, %v1614
      %v1629 = vpack.c.b16 %v1617, %v1616
      %v1630 = vpack.c.b16 %v1619, %v1618
      %v1631 = vpack.c.b16 %v1621, %v1620
      %v1632 = vpack.c.b16 %v1623, %v1622
      %v1633 = vpack.c.b16 %v1625, %v1624
      %1642 = vmatprep.subr.bf16.mxu0 0
      %1643 = vmatpush1.bf16.msra.mxu0 %v1626
      %1644 = vmatprep.subr.bf16.mxu0 0
      %1645 = vmatpush1.bf16.msra.mxu0 %v1627
      %1646 = vmatprep.subr.bf16.mxu0 0
      %1647 = vmatpush1.bf16.msra.mxu0 %v1628
      %1648 = vmatprep.subr.bf16.mxu0 0
      %1649 = vmatpush1.bf16.msra.mxu0 %v1629
      %1650 = vmatprep.subr.bf16.mxu0 0
      %1651 = vmatpush1.bf16.msra.mxu0 %v1630
      %1652 = vmatprep.subr.bf16.mxu0 0
      %1653 = vmatpush1.bf16.msra.mxu0 %v1631
      %1654 = vmatprep.subr.bf16.mxu0 0
      %1655 = vmatpush1.bf16.msra.mxu0 %v1632
      %1656 = vmatprep.subr.bf16.mxu0 0
      %1657 = vmatpush1.bf16.msra.mxu0 %v1633
      %1658 = vmatprep.subr.bf16.mxu0 0
      %1659 = vmatpush1.bf16.msra.mxu0 0
      %1660 = vmatprep.subr.bf16.mxu0 0
      %1661 = vmatpush1.bf16.msra.mxu0 0
      %1662 = vmatprep.subr.bf16.mxu0 0
      %1663 = vmatpush1.bf16.msra.mxu0 0
      %1664 = vmatprep.subr.bf16.mxu0 0
      %1665 = vmatpush1.bf16.msra.mxu0 0
      %1666 = vmatprep.subr.bf16.mxu0 0
      %1667 = vmatpush1.bf16.msra.mxu0 0
      %1668 = vmatprep.subr.bf16.mxu0 0
      %1669 = vmatpush1.bf16.msra.mxu0 0
      %1670 = vmatprep.subr.bf16.mxu0 0
      %1671 = vmatpush1.bf16.msra.mxu0 0
      %1672 = vmatprep.subr.bf16.mxu0 0
      %1673 = vmatpush1.bf16.msra.mxu0 0
      %1674 = vmatprep.mubr.bf16.mxu0 0
      %1675 = vmatmul.mubr.bf16.gmra.mrb[0].mxu0 %v574
      %v1676 = vpop.f32.mrb[0].mxu0
      %v1677 = vadd.f32 0.0, %v1676
      %v1678 = vpop.f32.mrb[0].mxu0
      %v1679 = vpop.f32.mrb[0].mxu0
      %v1680 = vadd.f32 0.0, %v1679
      %v1681 = vpop.f32.mrb[0].mxu0
      %1682 = vmatprep.mubr.bf16.mxu0 0
      %1683 = vmatmul.mubr.bf16.gmra.mrb[0].mxu0 %v575
      %v1684 = vpop.f32.mrb[0].mxu0
      %v1685 = vadd.f32 0.0, %v1684
      %v1686 = vpop.f32.mrb[0].mxu0
      %v1687 = vpop.f32.mrb[0].mxu0
      %v1688 = vadd.f32 0.0, %v1687
      %v1689 = vpop.f32.mrb[0].mxu0
      %1690 = vmatprep.mubr.bf16.mxu0 0
      %1691 = vmatmul.mubr.bf16.gmra.mrb[0].mxu0 %v576
      %v1692 = vpop.f32.mrb[0].mxu0
      %v1693 = vadd.f32 0.0, %v1692
      %v1694 = vpop.f32.mrb[0].mxu0
      %v1695 = vpop.f32.mrb[0].mxu0
      %v1696 = vadd.f32 0.0, %v1695
      %v1697 = vpop.f32.mrb[0].mxu0
      %1698 = vmatprep.mubr.bf16.mxu0 0
      %1699 = vmatmul.mubr.bf16.gmra.mrb[0].mxu0 %v1576
      %v1700 = vpop.f32.mrb[0].mxu0
      %v1701 = vadd.f32 0.0, %v1700
      %v1702 = vpop.f32.mrb[0].mxu0
      %v1703 = vpop.f32.mrb[0].mxu0
      %v1704 = vadd.f32 0.0, %v1703
      %v1705 = vpop.f32.mrb[0].mxu0
      %1706 = vdwg.mxu0
      %v1707 = vadd.f32 %v1562, %v1677
      %v1708 = vadd.f32 %v1563, %v1680
      %v1709 = vadd.f32 %v1564, %v1685
      %v1710 = vadd.f32 %v1565, %v1688
      %v1711 = vadd.f32 %v1566, %v1693
      %v1712 = vadd.f32 %v1567, %v1696
      %v1713 = vadd.f32 %v1568, %v1701
      %v1714 = vadd.f32 %v1569, %v1704
      %v1715 = vrot.slane %v502, 2
      %v1716 = vrot.slane %v503, 2
      %v1717 = vsel %vm820, %v1715, %v1716
      %v1719 = vpack.c.bf16 %v1717, %v1287
      %s1720 = scalar_lea.vmem %s3, 512
      %v1721 = vld [vmem:[%s1720] sm:$0xf]
      %v1722 = vld [vmem:[%s1720 + $0x4] sm:$0xf]
      %v1723 = vld [vmem:[%s1720 + $0x8] sm:$0xf]
      %v1724 = vld [vmem:[%s1720 + $0xc] sm:$0xf]
      %v1725 = vld [vmem:[%s1720 + $0x10] sm:$0xf]
      %v1726 = vld [vmem:[%s1720 + $0x14] sm:$0xf]
      %v1727 = vld [vmem:[%s1720 + $0x18] sm:$0xf]
      %v1728 = vld [vmem:[%s1720 + $0x1c] sm:$0xf]
      %v1729 = vld [vmem:[%s1720 + $0x20] sm:$0xf]
      %v1730 = vld [vmem:[%s1720 + $0x24] sm:$0xf]
      %v1731 = vld [vmem:[%s1720 + $0x28] sm:$0xf]
      %v1732 = vld [vmem:[%s1720 + $0x2c] sm:$0xf]
      %v1733 = vld [vmem:[%s1720 + $0x30] sm:$0xf]
      %v1734 = vld [vmem:[%s1720 + $0x34] sm:$0xf]
      %v1735 = vld [vmem:[%s1720 + $0x38] sm:$0xf]
      %v1736 = vld [vmem:[%s1720 + $0x3c] sm:$0xf]
      %v1753 = vunpack.c.l.b16 %v1721
      %v1754 = vunpack.c.l.b16 %v1722
      %v1755 = vunpack.c.l.b16 %v1723
      %v1756 = vunpack.c.l.b16 %v1724
      %v1757 = vunpack.c.l.b16 %v1725
      %v1758 = vunpack.c.l.b16 %v1726
      %v1759 = vunpack.c.l.b16 %v1727
      %v1760 = vunpack.c.l.b16 %v1728
      %v1761 = vunpack.c.l.b16 %v1729
      %v1762 = vunpack.c.l.b16 %v1730
      %v1763 = vunpack.c.l.b16 %v1731
      %v1764 = vunpack.c.l.b16 %v1732
      %v1765 = vunpack.c.l.b16 %v1733
      %v1766 = vunpack.c.l.b16 %v1734
      %v1767 = vunpack.c.l.b16 %v1735
      %v1768 = vunpack.c.l.b16 %v1736
      %v1769 = vpack.c.b16 %v1754, %v1753
      %v1770 = vpack.c.b16 %v1756, %v1755
      %v1771 = vpack.c.b16 %v1758, %v1757
      %v1772 = vpack.c.b16 %v1760, %v1759
      %v1773 = vpack.c.b16 %v1762, %v1761
      %v1774 = vpack.c.b16 %v1764, %v1763
      %v1775 = vpack.c.b16 %v1766, %v1765
      %v1776 = vpack.c.b16 %v1768, %v1767
      %1785 = vmatprep.subr.bf16.mxu0 0
      %1786 = vmatpush1.bf16.msra.mxu0 %v1769
      %1787 = vmatprep.subr.bf16.mxu0 0
      %1788 = vmatpush1.bf16.msra.mxu0 %v1770
      %1789 = vmatprep.subr.bf16.mxu0 0
      %1790 = vmatpush1.bf16.msra.mxu0 %v1771
      %1791 = vmatprep.subr.bf16.mxu0 0
      %1792 = vmatpush1.bf16.msra.mxu0 %v1772
      %1793 = vmatprep.subr.bf16.mxu0 0
      %1794 = vmatpush1.bf16.msra.mxu0 %v1773
      %1795 = vmatprep.subr.bf16.mxu0 0
      %1796 = vmatpush1.bf16.msra.mxu0 %v1774
      %1797 = vmatprep.subr.bf16.mxu0 0
      %1798 = vmatpush1.bf16.msra.mxu0 %v1775
      %1799 = vmatprep.subr.bf16.mxu0 0
      %1800 = vmatpush1.bf16.msra.mxu0 %v1776
      %1801 = vmatprep.subr.bf16.mxu0 0
      %1802 = vmatpush1.bf16.msra.mxu0 0
      %1803 = vmatprep.subr.bf16.mxu0 0
      %1804 = vmatpush1.bf16.msra.mxu0 0
      %1805 = vmatprep.subr.bf16.mxu0 0
      %1806 = vmatpush1.bf16.msra.mxu0 0
      %1807 = vmatprep.subr.bf16.mxu0 0
      %1808 = vmatpush1.bf16.msra.mxu0 0
      %1809 = vmatprep.subr.bf16.mxu0 0
      %1810 = vmatpush1.bf16.msra.mxu0 0
      %1811 = vmatprep.subr.bf16.mxu0 0
      %1812 = vmatpush1.bf16.msra.mxu0 0
      %1813 = vmatprep.subr.bf16.mxu0 0
      %1814 = vmatpush1.bf16.msra.mxu0 0
      %1815 = vmatprep.subr.bf16.mxu0 0
      %1816 = vmatpush1.bf16.msra.mxu0 0
      %1817 = vmatprep.mubr.bf16.mxu0 0
      %1818 = vmatmul.mubr.bf16.gmra.mrb[0].mxu0 %v854
      %v1819 = vpop.f32.mrb[0].mxu0
      %v1820 = vadd.f32 0.0, %v1819
      %v1821 = vpop.f32.mrb[0].mxu0
      %v1822 = vpop.f32.mrb[0].mxu0
      %v1823 = vadd.f32 0.0, %v1822
      %v1824 = vpop.f32.mrb[0].mxu0
      %1825 = vmatprep.mubr.bf16.mxu0 0
      %1826 = vmatmul.mubr.bf16.gmra.mrb[0].mxu0 %v855
      %v1827 = vpop.f32.mrb[0].mxu0
      %v1828 = vadd.f32 0.0, %v1827
      %v1829 = vpop.f32.mrb[0].mxu0
      %v1830 = vpop.f32.mrb[0].mxu0
      %v1831 = vadd.f32 0.0, %v1830
      %v1832 = vpop.f32.mrb[0].mxu0
      %1833 = vmatprep.mubr.bf16.mxu0 0
      %1834 = vmatmul.mubr.bf16.gmra.mrb[0].mxu0 %v856
      %v1835 = vpop.f32.mrb[0].mxu0
      %v1836 = vadd.f32 0.0, %v1835
      %v1837 = vpop.f32.mrb[0].mxu0
      %v1838 = vpop.f32.mrb[0].mxu0
      %v1839 = vadd.f32 0.0, %v1838
      %v1840 = vpop.f32.mrb[0].mxu0
      %1841 = vmatprep.mubr.bf16.mxu0 0
      %1842 = vmatmul.mubr.bf16.gmra.mrb[0].mxu0 %v1719
      %v1843 = vpop.f32.mrb[0].mxu0
      %v1844 = vadd.f32 0.0, %v1843
      %v1845 = vpop.f32.mrb[0].mxu0
      %v1846 = vpop.f32.mrb[0].mxu0
      %v1847 = vadd.f32 0.0, %v1846
      %v1848 = vpop.f32.mrb[0].mxu0
      %1849 = vdwg.mxu0
      %v1850 = vadd.f32 %v1707, %v1820
      %v1851 = vadd.f32 %v1708, %v1823
      %v1852 = vadd.f32 %v1709, %v1828
      %v1853 = vadd.f32 %v1710, %v1831
      %v1854 = vadd.f32 %v1711, %v1836
      %v1855 = vadd.f32 %v1712, %v1839
      %v1856 = vadd.f32 %v1713, %v1844
      %v1857 = vadd.f32 %v1714, %v1847
      %1858 = vst [vmem:[%s272] sm:$0xff] %v1850
      %1859 = vst [vmem:[%s272 + $0x8] sm:$0xff] %v1851
      %1860 = vst [vmem:[%s272 + $0x10] sm:$0xff] %v1852
      %1861 = vst [vmem:[%s272 + $0x18] sm:$0xff] %v1853
      %1862 = vst [vmem:[%s272 + $0x20] sm:$0xff] %v1854
      %1863 = vst [vmem:[%s272 + $0x28] sm:$0xff] %v1855
      %1864 = vst [vmem:[%s272 + $0x30] sm:$0xff] %v1856
      %1865 = vst [vmem:[%s272 + $0x38] sm:$0xff] %v1857
      %v1866 = vadd.f32 %v1850, %v1851
      %v1867 = vadd.f32 %v1866, %v1852
      %v1868 = vadd.f32 %v1867, %v1853
      %v1869 = vadd.f32 %v1868, %v1854
      %v1870 = vadd.f32 %v1869, %v1855
      %v1871 = vadd.f32 %v1870, %v1856
      %v1872 = vadd.f32 %v1871, %v1857
      %v1873 = vrot.slane %v1872, 4
      %v1874 = vadd.f32 %v1872, %v1873
      %v1875 = vrot.slane %v1874, 2
      %v1876 = vadd.f32 %v1874, %v1875
      %v1877 = vrot.slane %v1876, 1
      %v1878 = vadd.f32 %v1876, %v1877
      %v1879 = vmul.f32 %v1850, %v1850
      %v1880 = vmul.f32 %v1851, %v1851
      %v1881 = vmul.f32 %v1852, %v1852
      %v1882 = vmul.f32 %v1853, %v1853
      %v1883 = vmul.f32 %v1854, %v1854
      %v1884 = vmul.f32 %v1855, %v1855
      %v1885 = vmul.f32 %v1856, %v1856
      %v1886 = vmul.f32 %v1857, %v1857
      %v1887 = vadd.f32 %v1879, %v1880
      %v1888 = vadd.f32 %v1887, %v1881
      %v1889 = vadd.f32 %v1888, %v1882
      %v1890 = vadd.f32 %v1889, %v1883
      %v1891 = vadd.f32 %v1890, %v1884
      %v1892 = vadd.f32 %v1891, %v1885
      %v1893 = vadd.f32 %v1892, %v1886
      %v1894 = vrot.slane %v1893, 4
      %v1895 = vadd.f32 %v1893, %v1894
      %v1896 = vrot.slane %v1895, 2
      %v1897 = vadd.f32 %v1895, %v1896
      %v1898 = vrot.slane %v1897, 1
      %v1899 = vadd.f32 %v1897, %v1898
      %vm1900 = vcmask 1040384
      %v1901 = vsel %vm1900, %v1878, %v1899
      %1902 = vst [vmem:[%s280] sm:$0x3] %v1901
      %s1903 = smul.u32 8, %s22
      %p1904 = scmp.lt.s32.totalorder %s21, 1
      %s1905 = scalar_select %p1904, %s21, 1
      %p1906 = scmp.lt.s32.totalorder %s1903, 7
      %s1907 = scalar_select %p1906, %s1903, 7
      %s1908 = smul.addr %s1905, 8
      %s1909 = sadd.s32 %s1907, %s1908
      %s1910 = smul.addr %s1909, 8
      %s1911 = scalar_lea.vmem %s4, %s1910
      %p1912 = scmp.lt.s32.totalorder %s21, 1
      %s1913 = scalar_select %p1912, %s21, 1
      %p1914 = scmp.lt.s32.totalorder %s22, 0
      %s1915 = scalar_select %p1914, %s22, 0
      %s1916 = sadd.s32 %s1915, %s1913
      %s1917 = smul.addr %s1916, 2
      %s1918 = scalar_lea.vmem %s5, %s1917
      // Predicated region
      $region37: #{encoder_block_forward.8} parent=35 // pred_check
        %p1919 = pneg %p140
      $region38: #{encoder_block_forward.8} parent=35 // pred_check_branch
        %1921 = sbr.rel (%p1919) target = $region40
      $region39: #{encoder_block_forward.8} parent=35 // pred_region
        %s1922 = smul.u32 8, %s22
      $region40: #{encoder_block_forward.8} parent=35 // pred_fallthru
        _
      // Predicated region
      $region41: #{encoder_block_forward.8} parent=35 // pred_check
        %p1923 = pneg %p168
      $region42: #{encoder_block_forward.8} parent=35 // pred_check_branch
        %1925 = sbr.rel (%p1923) target = $region44
      $region43: #{encoder_block_forward.8} parent=35 // pred_region
        _
      $region44: #{encoder_block_forward.8} parent=35 // pred_fallthru
        _
    $region36: #{encoder_block_forward.8} parent=5 // pred_fallthru
      _
    %p1926 = scmp.le.s32.totalorder 2, %s12
    // Predicated region
    $region45: #{encoder_block_forward.8} parent=5 // pred_check
      %p1927 = pneg %p1926
    $region46: #{encoder_block_forward.8} parent=5 // pred_check_branch
      %1929 = sbr.rel (%p1927) target = $region48
    $region47: #{encoder_block_forward.8} parent=5 // pred_region
      %s1930 = ssub.s32 %s12, 2
      // Predicated region
      $region49: #{encoder_block_forward.8} parent=47 // pred_check
        %p1931 = pneg %p146
      $region50: #{encoder_block_forward.8} parent=47 // pred_check_branch
        %1933 = sbr.rel (%p1931) target = $region52
      $region51: #{encoder_block_forward.8} parent=47 // pred_region
        %s1934 = smul.u32 8, %s24
        %p1935 = scmp.lt.s32.totalorder %s23, 1
        %s1936 = scalar_select %p1935, %s23, 1
        %p1937 = scmp.lt.s32.totalorder %s1934, 7
        %s1938 = scalar_select %p1937, %s1934, 7
        %s1939 = smul.addr %s1936, 8
        %s1940 = sadd.s32 %s1938, %s1939
        %s1941 = smul.addr %s1940, 8
        %s1942 = scalar_lea.vmem %s4, %s1941
      $region52: #{encoder_block_forward.8} parent=47 // pred_fallthru
        _
      // Predicated region
      $region53: #{encoder_block_forward.8} parent=47 // pred_check
        %p1943 = pneg %p174
      $region54: #{encoder_block_forward.8} parent=47 // pred_check_branch
        %1945 = sbr.rel (%p1943) target = $region56
      $region55: #{encoder_block_forward.8} parent=47 // pred_region
        %p1946 = scmp.lt.s32.totalorder %s23, 1
        %s1947 = scalar_select %p1946, %s23, 1
        %p1948 = scmp.lt.s32.totalorder %s24, 0
        %s1949 = scalar_select %p1948, %s24, 0
        %s1950 = sadd.s32 %s1949, %s1947
        %s1951 = smul.addr %s1950, 2
        %s1952 = scalar_lea.vmem %s5, %s1951
      $region56: #{encoder_block_forward.8} parent=47 // pred_fallthru
        _
    $region48: #{encoder_block_forward.8} parent=5 // pred_fallthru
      _
  $region6: #{encoder_block_forward.8} parent=0 // loop_footer
    %s16 = sadd.s32 1, %s12
  $region7: #{encoder_block_forward.8} parent=0 // loop_footer_branch
    %11 = sbr.rel target = $region3
  $region8: #{encoder_block_forward.8} parent=0 // loop_exit
    _

// kernel: encoder_block_forward.9
$region0: #{encoder_block_forward.9}
  #allocation0 [shape = 'u32[]', space=smem, size = 0x4, offset = 0x4, fixed_abs, tag = 'smem constant byte address 0x4 - core index']
  #allocation1 [shape = 'u32[144,128]{1,0:T(1,128)}', space=vmem, size = 0x12000, scoped, tag = 'internal scratch']
  %s0 = inlined_call_operand.vmem [shape: f32[2,1,10,10,128], index: 0, kind: input, shape index: {}]
  %s1 = inlined_call_operand.vmem [shape: f32[1,128], index: 1, kind: input, shape index: {}]
  %s2 = inlined_call_operand.vmem [shape: f32[1,128], index: 2, kind: input, shape index: {}]
  %s3 = inlined_call_operand.vmem [shape: bf16[9,128,128], index: 3, kind: input, shape index: {}]
  %s4 = inlined_call_operand.vmem [shape: f32[1,128], index: 4, kind: input, shape index: {}]
  %s5 = inlined_call_operand.vmem [shape: f32[2,8,8,128], index: 5, kind: input, shape index: {}]
  %s6 = inlined_call_operand.vmem [shape: f32[2,8,8,128], index: 6, kind: output, shape index: {0}]
  %s7 = inlined_call_operand.vmem [shape: f32[2,1,2,128], index: 7, kind: output, shape index: {1}]
  %8 = xla_tuple %s6, %s7
  %s9 = sld [smem:[#allocation0]]
  $region65: #{encoder_block_forward.9} parent=0
    _
  %s11 = ssub.s32 1, %s9
  %s12 = scalar_select 0, %s11, %s9
  loop: start=0, step=1, limit=4
  $region2: #{encoder_block_forward.9} parent=0 // loop_pre_header
    _
  $region3: #{encoder_block_forward.9} parent=0 // loop_header
    %s14 = sphi 0, %s18
    %p15 = scmp.ge.s32.totalorder %s14, 4
    %s21 = sphi 0, %s33
    %s22 = sphi 0, %s29
    %s23 = sphi 0, %s21
    %s24 = sphi 0, %s22
    %s25 = sphi 0, %s23
    %s26 = sphi 0, %s24
    %s38 = sphi 0, %s40
    %s41 = sphi 0, %s38
    %s42 = sphi 0, %s41
    %s58 = sphi 0, %s42
    %s62 = sphi 0, %s62
    %s64 = sphi 0, %s62
    %s65 = sphi 0, %s64
    %s79 = sphi 0, %s65
    %s83 = sphi 0, %s83
    %s85 = sphi 0, %s83
    %s86 = sphi 0, %s85
    %s100 = sphi 0, %s86
    %s104 = sphi 0, %s104
    %s106 = sphi 0, %s104
    %s107 = sphi 0, %s106
    %s121 = sphi 0, %s107
    %s125 = sphi 0, %s125
    %s127 = sphi 0, %s125
    %s128 = sphi 0, %s127
    %s142 = sphi 0, %s128
    %s150 = sphi 0, %s152
    %s153 = sphi 0, %s150
    %s154 = sphi 0, %s153
    %s170 = sphi 0, %s154
    %s178 = sphi 0, %s180
    %s181 = sphi 0, %s178
    %s182 = sphi 0, %s181
    %s198 = sphi 0, %s182
    %s206 = sphi 0, %s208
    %s209 = sphi 0, %s206
    %s210 = sphi 0, %s209
    %s226 = sphi 0, %s210
  $region4: #{encoder_block_forward.9} parent=0 // loop_header_branch
    %17 = sbr.rel (%p15) target = $region8
  $region5: #{encoder_block_forward.9} parent=0 // loop_body
    %s19 = ssub.s32 %s14, 1
    %s20 = ssub.s32 %s14, 2
    %s27 = sadd.s32 1, %s22
    %p28 = scmp.ge.s32.totalorder %s27, 1
    %s29 = scalar_select %p28, 0, %s27
    %s30 = sadd.s32 1, %s21
    %s31 = scalar_select %p28, %s30, %s21
    %p32 = scmp.ge.s32.totalorder %s31, 2
    %s33 = scalar_select %p32, 0, %s31
    %s34 = ssub.s32 %s21, %s33
    %s35 = ssub.s32 %s22, %s29
    %s36 = sor.u32 %s34, %s35
    %p37 = scmp.eq.s32.totalorder %s36, 0
    %s39 = sadd.s32 %s38, 1
    %s40 = scalar_select %p37, %s38, %s39
    %p43 = pneg %p37
    %p44 = scmp.eq.s32.totalorder %s14, 1
    %p45 = por %p43, %p44
    %p46 = scmp.ne.s32.totalorder %s38, %s41
    %p47 = scmp.eq.s32.totalorder %s14, 0
    %p48 = por %p46, %p47
    %p49 = scmp.ne.s32.totalorder %s38, %s41
    %p50 = scmp.eq.s32.totalorder %s19, 1
    %p51 = por %p49, %p50
    %p52 = scmp.ne.s32.totalorder %s41, %s42
    %p53 = scmp.eq.s32.totalorder %s19, 0
    %p54 = por %p52, %p53
    %p55 = scmp.ne.s32.totalorder %s41, %s42
    %p56 = scmp.eq.s32.totalorder %s20, 1
    %p57 = por %p55, %p56
    %p59 = scmp.ne.s32.totalorder %s42, %s58
    %p60 = scmp.eq.s32.totalorder %s20, 0
    %p61 = por %p59, %p60
    %s63 = sadd.s32 %s62, 1
    %p66 = scmp.eq.s32.totalorder %s14, 1
    %p67 = scmp.ne.s32.totalorder %s62, %s64
    %p68 = scmp.eq.s32.totalorder %s14, 0
    %p69 = por %p67, %p68
    %p70 = scmp.ne.s32.totalorder %s62, %s64
    %p71 = scmp.eq.s32.totalorder %s19, 1
    %p72 = por %p70, %p71
    %p73 = scmp.ne.s32.totalorder %s64, %s65
    %p74 = scmp.eq.s32.totalorder %s19, 0
    %p75 = por %p73, %p74
    %p76 = scmp.ne.s32.totalorder %s64, %s65
    %p77 = scmp.eq.s32.totalorder %s20, 1
    %p78 = por %p76, %p77
    %p80 = scmp.ne.s32.totalorder %s65, %s79
    %p81 = scmp.eq.s32.totalorder %s20, 0
    %p82 = por %p80, %p81
    %s84 = sadd.s32 %s83, 1
    %p87 = scmp.eq.s32.totalorder %s14, 1
    %p88 = scmp.ne.s32.totalorder %s83, %s85
    %p89 = scmp.eq.s32.totalorder %s14, 0
    %p90 = por %p88, %p89
    %p91 = scmp.ne.s32.totalorder %s83, %s85
    %p92 = scmp.eq.s32.totalorder %s19, 1
    %p93 = por %p91, %p92
    %p94 = scmp.ne.s32.totalorder %s85, %s86
    %p95 = scmp.eq.s32.totalorder %s19, 0
    %p96 = por %p94, %p95
    %p97 = scmp.ne.s32.totalorder %s85, %s86
    %p98 = scmp.eq.s32.totalorder %s20, 1
    %p99 = por %p97, %p98
    %p101 = scmp.ne.s32.totalorder %s86, %s100
    %p102 = scmp.eq.s32.totalorder %s20, 0
    %p103 = por %p101, %p102
    %s105 = sadd.s32 %s104, 1
    %p108 = scmp.eq.s32.totalorder %s14, 1
    %p109 = scmp.ne.s32.totalorder %s104, %s106
    %p110 = scmp.eq.s32.totalorder %s14, 0
    %p111 = por %p109, %p110
    %p112 = scmp.ne.s32.totalorder %s104, %s106
    %p113 = scmp.eq.s32.totalorder %s19, 1
    %p114 = por %p112, %p113
    %p115 = scmp.ne.s32.totalorder %s106, %s107
    %p116 = scmp.eq.s32.totalorder %s19, 0
    %p117 = por %p115, %p116
    %p118 = scmp.ne.s32.totalorder %s106, %s107
    %p119 = scmp.eq.s32.totalorder %s20, 1
    %p120 = por %p118, %p119
    %p122 = scmp.ne.s32.totalorder %s107, %s121
    %p123 = scmp.eq.s32.totalorder %s20, 0
    %p124 = por %p122, %p123
    %s126 = sadd.s32 %s125, 1
    %p129 = scmp.eq.s32.totalorder %s14, 1
    %p130 = scmp.ne.s32.totalorder %s125, %s127
    %p131 = scmp.eq.s32.totalorder %s14, 0
    %p132 = por %p130, %p131
    %p133 = scmp.ne.s32.totalorder %s125, %s127
    %p134 = scmp.eq.s32.totalorder %s19, 1
    %p135 = por %p133, %p134
    %p136 = scmp.ne.s32.totalorder %s127, %s128
    %p137 = scmp.eq.s32.totalorder %s19, 0
    %p138 = por %p136, %p137
    %p139 = scmp.ne.s32.totalorder %s127, %s128
    %p140 = scmp.eq.s32.totalorder %s20, 1
    %p141 = por %p139, %p140
    %p143 = scmp.ne.s32.totalorder %s128, %s142
    %p144 = scmp.eq.s32.totalorder %s20, 0
    %p145 = por %p143, %p144
    %s146 = ssub.s32 %s21, %s33
    %s147 = ssub.s32 %s22, %s29
    %s148 = sor.u32 %s146, %s147
    %p149 = scmp.eq.s32.totalorder %s148, 0
    %s151 = sadd.s32 %s150, 1
    %s152 = scalar_select %p149, %s150, %s151
    %p155 = pneg %p149
    %p156 = scmp.eq.s32.totalorder %s14, 1
    %p157 = por %p155, %p156
    %p158 = scmp.ne.s32.totalorder %s150, %s153
    %p159 = scmp.eq.s32.totalorder %s14, 0
    %p160 = por %p158, %p159
    %p161 = scmp.ne.s32.totalorder %s150, %s153
    %p162 = scmp.eq.s32.totalorder %s19, 1
    %p163 = por %p161, %p162
    %p164 = scmp.ne.s32.totalorder %s153, %s154
    %p165 = scmp.eq.s32.totalorder %s19, 0
    %p166 = por %p164, %p165
    %p167 = scmp.ne.s32.totalorder %s153, %s154
    %p168 = scmp.eq.s32.totalorder %s20, 1
    %p169 = por %p167, %p168
    %p171 = scmp.ne.s32.totalorder %s154, %s170
    %p172 = scmp.eq.s32.totalorder %s20, 0
    %p173 = por %p171, %p172
    %s174 = ssub.s32 %s21, %s33
    %s175 = ssub.s32 %s22, %s29
    %s176 = sor.u32 %s174, %s175
    %p177 = scmp.eq.s32.totalorder %s176, 0
    %s179 = sadd.s32 %s178, 1
    %s180 = scalar_select %p177, %s178, %s179
    %p183 = pneg %p177
    %p184 = scmp.eq.s32.totalorder %s14, 1
    %p185 = por %p183, %p184
    %p186 = scmp.ne.s32.totalorder %s178, %s181
    %p187 = scmp.eq.s32.totalorder %s14, 0
    %p188 = por %p186, %p187
    %p189 = scmp.ne.s32.totalorder %s178, %s181
    %p190 = scmp.eq.s32.totalorder %s19, 1
    %p191 = por %p189, %p190
    %p192 = scmp.ne.s32.totalorder %s181, %s182
    %p193 = scmp.eq.s32.totalorder %s19, 0
    %p194 = por %p192, %p193
    %p195 = scmp.ne.s32.totalorder %s181, %s182
    %p196 = scmp.eq.s32.totalorder %s20, 1
    %p197 = por %p195, %p196
    %p199 = scmp.ne.s32.totalorder %s182, %s198
    %p200 = scmp.eq.s32.totalorder %s20, 0
    %p201 = por %p199, %p200
    %s202 = ssub.s32 %s21, %s33
    %s203 = ssub.s32 %s22, %s29
    %s204 = sor.u32 %s202, %s203
    %p205 = scmp.eq.s32.totalorder %s204, 0
    %s207 = sadd.s32 %s206, 1
    %s208 = scalar_select %p205, %s206, %s207
    %p211 = pneg %p205
    %p212 = scmp.eq.s32.totalorder %s14, 1
    %p213 = por %p211, %p212
    %p214 = scmp.ne.s32.totalorder %s206, %s209
    %p215 = scmp.eq.s32.totalorder %s14, 0
    %p216 = por %p214, %p215
    %p217 = scmp.ne.s32.totalorder %s206, %s209
    %p218 = scmp.eq.s32.totalorder %s19, 1
    %p219 = por %p217, %p218
    %p220 = scmp.ne.s32.totalorder %s209, %s210
    %p221 = scmp.eq.s32.totalorder %s19, 0
    %p222 = por %p220, %p221
    %p223 = scmp.ne.s32.totalorder %s209, %s210
    %p224 = scmp.eq.s32.totalorder %s20, 1
    %p225 = por %p223, %p224
    %p227 = scmp.ne.s32.totalorder %s210, %s226
    %p228 = scmp.eq.s32.totalorder %s20, 0
    %p229 = por %p227, %p228
    %p230 = scmp.le.s32.totalorder 1, %s14
    %p231 = scmp.lt.s32.totalorder %s14, 3
    %p232 = pnand %p230, %p231
    %p233 = pneg %p232
    // Predicated region
    $region9: #{encoder_block_forward.9} parent=5 // pred_check
      _
    $region10: #{encoder_block_forward.9} parent=5 // pred_check_branch
      %235 = sbr.rel (%p232) target = $region12
    $region11: #{encoder_block_forward.9} parent=5 // pred_region
      %s236 = ssub.s32 %s14, 1
      // Predicated region
      $region13: #{encoder_block_forward.9} parent=11 // pred_check
        %p237 = pneg %p75
      $region14: #{encoder_block_forward.9} parent=11 // pred_check_branch
        %239 = sbr.rel (%p237) target = $region16
      $region15: #{encoder_block_forward.9} parent=11 // pred_region
        _
      $region16: #{encoder_block_forward.9} parent=11 // pred_fallthru
        _
      // Predicated region
      $region17: #{encoder_block_forward.9} parent=11 // pred_check
        %p240 = pneg %p96
      $region18: #{encoder_block_forward.9} parent=11 // pred_check_branch
        %242 = sbr.rel (%p240) target = $region20
      $region19: #{encoder_block_forward.9} parent=11 // pred_region
        _
      $region20: #{encoder_block_forward.9} parent=11 // pred_fallthru
        _
      // Predicated region
      $region21: #{encoder_block_forward.9} parent=11 // pred_check
        %p243 = pneg %p117
      $region22: #{encoder_block_forward.9} parent=11 // pred_check_branch
        %245 = sbr.rel (%p243) target = $region24
      $region23: #{encoder_block_forward.9} parent=11 // pred_region
        _
      $region24: #{encoder_block_forward.9} parent=11 // pred_fallthru
        _
      // Predicated region
      $region25: #{encoder_block_forward.9} parent=11 // pred_check
        %p246 = pneg %p138
      $region26: #{encoder_block_forward.9} parent=11 // pred_check_branch
        %248 = sbr.rel (%p246) target = $region28
      $region27: #{encoder_block_forward.9} parent=11 // pred_region
        _
      $region28: #{encoder_block_forward.9} parent=11 // pred_fallthru
        _
    $region12: #{encoder_block_forward.9} parent=5 // pred_fallthru
      _
    %p249 = scmp.lt.s32.totalorder %s14, 2
    // Predicated region
    $region29: #{encoder_block_forward.9} parent=5 // pred_check
      %p250 = pneg %p249
    $region30: #{encoder_block_forward.9} parent=5 // pred_check_branch
      %252 = sbr.rel (%p250) target = $region32
    $region31: #{encoder_block_forward.9} parent=5 // pred_region
      // Predicated region
      $region33: #{encoder_block_forward.9} parent=31 // pred_check
        %p253 = pneg %p48
      $region34: #{encoder_block_forward.9} parent=31 // pred_check_branch
        %255 = sbr.rel (%p253) target = $region36
      $region35: #{encoder_block_forward.9} parent=31 // pred_region
        %p256 = scmp.lt.s32.totalorder %s21, 1
        %s257 = scalar_select %p256, %s21, 1
        %p258 = scmp.lt.s32.totalorder %s22, 0
        %s259 = scalar_select %p258, %s22, 0
        %s260 = smul.addr %s259, 20
        %s261 = smul.addr %s257, 20
        %s262 = sadd.s32 %s260, %s261
        %s263 = smul.addr %s262, 8
        %s264 = scalar_lea.vmem %s0, %s263
      $region36: #{encoder_block_forward.9} parent=31 // pred_fallthru
        _
      // Predicated region
      $region37: #{encoder_block_forward.9} parent=31 // pred_check
        %p265 = pneg %p160
      $region38: #{encoder_block_forward.9} parent=31 // pred_check_branch
        %267 = sbr.rel (%p265) target = $region40
      $region39: #{encoder_block_forward.9} parent=31 // pred_region
        %s268 = smul.u32 8, %s22
        %p269 = scmp.lt.s32.totalorder %s21, 1
        %s270 = scalar_select %p269, %s21, 1
        %p271 = scmp.lt.s32.totalorder %s268, 7
        %s272 = scalar_select %p271, %s268, 7
        %s273 = smul.addr %s270, 8
        %s274 = sadd.s32 %s272, %s273
        %s275 = smul.addr %s274, 8
        %s276 = scalar_lea.vmem %s5, %s275
        %s277 = smul.u32 8, %s22
      $region40: #{encoder_block_forward.9} parent=31 // pred_fallthru
        _
    $region32: #{encoder_block_forward.9} parent=5 // pred_fallthru
      _
    %p278 = scmp.le.s32.totalorder 1, %s14
    %p279 = scmp.lt.s32.totalorder %s14, 3
    %p280 = pnand %p278, %p279
    %p281 = pneg %p280
    // Predicated region
    $region41: #{encoder_block_forward.9} parent=5 // pred_check
      _
    $region42: #{encoder_block_forward.9} parent=5 // pred_check_branch
      %283 = sbr.rel (%p280) target = $region44
    $region43: #{encoder_block_forward.9} parent=5 // pred_region
      %s284 = ssub.s32 %s14, 1
      %p285 = scmp.lt.s32.totalorder %s23, 1
      %s286 = scalar_select %p285, %s23, 1
      %p287 = scmp.lt.s32.totalorder %s24, 0
      %s288 = scalar_select %p287, %s24, 0
      %s289 = smul.addr %s288, 20
      %s290 = smul.addr %s286, 20
      %s291 = sadd.s32 %s289, %s290
      %s292 = smul.addr %s291, 8
      %s293 = scalar_lea.vmem %s0, %s292
      %p294 = pneg %p54
      %p295 = pneg %p51
      %p296 = pneg %p75
      %p297 = pneg %p72
      %p298 = pneg %p96
      %p299 = pneg %p93
      %p300 = pneg %p117
      %p301 = pneg %p114
      %p302 = pneg %p138
      %p303 = pneg %p135
      %s304 = smul.u32 8, %s24
      %p305 = scmp.lt.s32.totalorder %s23, 1
      %s306 = scalar_select %p305, %s23, 1
      %p307 = scmp.lt.s32.totalorder %s304, 7
      %s308 = scalar_select %p307, %s304, 7
      %s309 = smul.addr %s306, 8
      %s310 = sadd.s32 %s308, %s309
      %s311 = smul.addr %s310, 8
      %s312 = scalar_lea.vmem %s5, %s311
      %p313 = pneg %p166
      %p314 = pneg %p163
      %p315 = pneg %p194
      %p316 = pneg %p191
      %s317 = smul.u32 8, %s24
      %p318 = scmp.lt.s32.totalorder %s23, 1
      %s319 = scalar_select %p318, %s23, 1
      %p320 = scmp.lt.s32.totalorder %s317, 7
      %s321 = scalar_select %p320, %s317, 7
      %s322 = smul.addr %s319, 8
      %s323 = sadd.s32 %s321, %s322
      %s324 = smul.addr %s323, 8
      %s325 = scalar_lea.vmem %s6, %s324
      %p326 = pneg %p222
      %p327 = pneg %p219
      %p328 = scmp.lt.s32.totalorder %s23, 1
      %s329 = scalar_select %p328, %s23, 1
      %p330 = scmp.lt.s32.totalorder %s24, 0
      %s331 = scalar_select %p330, %s24, 0
      %s332 = sadd.s32 %s331, %s329
      %s333 = smul.addr %s332, 2
      %s334 = scalar_lea.vmem %s7, %s333
      %p335 = scmp.lt.s32.totalorder %s23, 1
      %s336 = scalar_select %p335, %s23, 1
      %p337 = scmp.lt.s32.totalorder %s24, 0
      %s338 = scalar_select %p337, %s24, 0
      %s339 = smul.addr %s338, 20
      %s340 = smul.addr %s336, 20
      %s341 = sadd.s32 %s339, %s340
      %s342 = smul.addr %s341, 8
      %s343 = scalar_lea.vmem %s0, %s342
      %s344 = smul.u32 8, %s24
      %p345 = scmp.lt.s32.totalorder %s23, 1
      %s346 = scalar_select %p345, %s23, 1
      %p347 = scmp.lt.s32.totalorder %s344, 7
      %s348 = scalar_select %p347, %s344, 7
      %s349 = smul.addr %s346, 8
      %s350 = sadd.s32 %s348, %s349
      %s351 = smul.addr %s350, 8
      %s352 = scalar_lea.vmem %s5, %s351
      %s353 = smul.u32 8, %s24
      %s354 = smul.u32 8, %s24
      %p355 = scmp.lt.s32.totalorder %s23, 1
      %s356 = scalar_select %p355, %s23, 1
      %p357 = scmp.lt.s32.totalorder %s354, 7
      %s358 = scalar_select %p357, %s354, 7
      %s359 = smul.addr %s356, 8
      %s360 = sadd.s32 %s358, %s359
      %s361 = smul.addr %s360, 8
      %s362 = scalar_lea.vmem %s6, %s361
      %s363 = smul.u32 8, %s24
      %p364 = scmp.lt.s32.totalorder %s23, 1
      %s365 = scalar_select %p364, %s23, 1
      %p366 = scmp.lt.s32.totalorder %s24, 0
      %s367 = scalar_select %p366, %s24, 0
      %s368 = sadd.s32 %s367, %s365
      %s369 = smul.addr %s368, 2
      %s370 = scalar_lea.vmem %s7, %s369
      %v372 = vld [vmem:[%s343] sm:$0xff]
      %v373 = vld [vmem:[%s343 + $0x8] sm:$0x3]
      %v374 = vld [vmem:[%s343 + $0x10] sm:$0xff]
      %v375 = vld [vmem:[%s343 + $0x18] sm:$0x3]
      %v376 = vld [vmem:[%s343 + $0x20] sm:$0xff]
      %v377 = vld [vmem:[%s343 + $0x28] sm:$0x3]
      %v378 = vld [vmem:[%s343 + $0x30] sm:$0xff]
      %v379 = vld [vmem:[%s343 + $0x38] sm:$0x3]
      %v380 = vld [vmem:[%s343 + $0x40] sm:$0xff]
      %v381 = vld [vmem:[%s343 + $0x48] sm:$0x3]
      %v382 = vld [vmem:[%s343 + $0x50] sm:$0xff]
      %v383 = vld [vmem:[%s343 + $0x58] sm:$0x3]
      %v384 = vld [vmem:[%s343 + $0x60] sm:$0xff]
      %v385 = vld [vmem:[%s343 + $0x68] sm:$0x3]
      %v386 = vld [vmem:[%s343 + $0x70] sm:$0xff]
      %v387 = vld [vmem:[%s343 + $0x78] sm:$0x3]
      %v388 = vld [vmem:[%s343 + $0x80] sm:$0xff]
      %v389 = vld [vmem:[%s343 + $0x88] sm:$0x3]
      %v390 = vld [vmem:[%s343 + $0x90] sm:$0xff]
      %v391 = vld [vmem:[%s343 + $0x98] sm:$0x3]
      %v392 = vld [vmem:[%s1] sm:$0x1]
      %v394 = vlaneseq
      %v395 = vshrl.u32 %v394, 7
      %v396 = vsub.s32 0, %v395
      %v397 = vrot.slane %v392, %v396
      %v399 = vmul.f32 %v372, %v397
      %v400 = vmul.f32 %v373, %v397
      %v401 = vmul.f32 %v374, %v397
      %v402 = vmul.f32 %v375, %v397
      %v403 = vmul.f32 %v376, %v397
      %v404 = vmul.f32 %v377, %v397
      %v405 = vmul.f32 %v378, %v397
      %v406 = vmul.f32 %v379, %v397
      %v407 = vmul.f32 %v380, %v397
      %v408 = vmul.f32 %v381, %v397
      %v409 = vmul.f32 %v382, %v397
      %v410 = vmul.f32 %v383, %v397
      %v411 = vmul.f32 %v384, %v397
      %v412 = vmul.f32 %v385, %v397
      %v413 = vmul.f32 %v386, %v397
      %v414 = vmul.f32 %v387, %v397
      %v415 = vmul.f32 %v388, %v397
      %v416 = vmul.f32 %v389, %v397
      %v417 = vmul.f32 %v390, %v397
      %v418 = vmul.f32 %v391, %v397
      %v419 = vld [vmem:[%s2] sm:$0x1]
      %v421 = vlaneseq
      %v422 = vshrl.u32 %v421, 7
      %v423 = vsub.s32 0, %v422
      %v424 = vrot.slane %v419, %v423
      %v426 = vadd.f32 %v399, %v424
      %v427 = vadd.f32 %v400, %v424
      %v428 = vadd.f32 %v401, %v424
      %v429 = vadd.f32 %v402, %v424
      %v430 = vadd.f32 %v403, %v424
      %v431 = vadd.f32 %v404, %v424
      %v432 = vadd.f32 %v405, %v424
      %v433 = vadd.f32 %v406, %v424
      %v434 = vadd.f32 %v407, %v424
      %v435 = vadd.f32 %v408, %v424
      %v436 = vadd.f32 %v409, %v424
      %v437 = vadd.f32 %v410, %v424
      %v438 = vadd.f32 %v411, %v424
      %v439 = vadd.f32 %v412, %v424
      %v440 = vadd.f32 %v413, %v424
      %v441 = vadd.f32 %v414, %v424
      %v442 = vadd.f32 %v415, %v424
      %v443 = vadd.f32 %v416, %v424
      %v444 = vadd.f32 %v417, %v424
      %v445 = vadd.f32 %v418, %v424
      %v446 = vmul.f32 %v426, 0.1
      %v447 = vmul.f32 %v427, 0.1
      %v448 = vmul.f32 %v428, 0.1
      %v449 = vmul.f32 %v429, 0.1
      %v450 = vmul.f32 %v430, 0.1
      %v451 = vmul.f32 %v431, 0.1
      %v452 = vmul.f32 %v432, 0.1
      %v453 = vmul.f32 %v433, 0.1
      %v454 = vmul.f32 %v434, 0.1
      %v455 = vmul.f32 %v435, 0.1
      %v456 = vmul.f32 %v436, 0.1
      %v457 = vmul.f32 %v437, 0.1
      %v458 = vmul.f32 %v438, 0.1
      %v459 = vmul.f32 %v439, 0.1
      %v460 = vmul.f32 %v440, 0.1
      %v461 = vmul.f32 %v441, 0.1
      %v462 = vmul.f32 %v442, 0.1
      %v463 = vmul.f32 %v443, 0.1
      %v464 = vmul.f32 %v444, 0.1
      %v465 = vmul.f32 %v445, 0.1
      %v466 = vmax.f32 %v426, %v446
      %v467 = vmax.f32 %v427, %v447
      %v468 = vmax.f32 %v428, %v448
      %v469 = vmax.f32 %v429, %v449
      %v470 = vmax.f32 %v430, %v450
      %v471 = vmax.f32 %v431, %v451
      %v472 = vmax.f32 %v432, %v452
      %v473 = vmax.f32 %v433, %v453
      %v474 = vmax.f32 %v434, %v454
      %v475 = vmax.f32 %v435, %v455
      %v476 = vmax.f32 %v436, %v456
      %v477 = vmax.f32 %v437, %v457
      %v478 = vmax.f32 %v438, %v458
      %v479 = vmax.f32 %v439, %v459
      %v480 = vmax.f32 %v440, %v460
      %v481 = vmax.f32 %v441, %v461
      %v482 = vmax.f32 %v442, %v462
      %v483 = vmax.f32 %v443, %v463
      %v484 = vmax.f32 %v444, %v464
      %v485 = vmax.f32 %v445, %v465
      %s486 = smul.u32 %s24, 8
      %v487 = vstv %s486
      %v488 = vadd.s32 %v487, 1
      %v489 = vadd.s32 %v487, 2
      %v490 = vadd.s32 %v487, 3
      %v491 = vadd.s32 %v487, 4
      %v492 = vadd.s32 %v487, 5
      %v493 = vadd.s32 %v487, 6
      %v494 = vadd.s32 %v487, 7
      %v495 = vadd.s32 %v487, 8
      %v496 = vadd.s32 %v487, 9
      %v497 = vlaneseq
      %v498 = vshrl.u32 %v497, 7
      %v499 = vadd.s32 %v498, 8
      %vm500 = vcmp.ge.s32.totalorder %v487, 1
      %vm501 = vcmp.ge.s32.totalorder %v488, 1
      %vm502 = vcmp.ge.s32.totalorder %v489, 1
      %vm503 = vcmp.ge.s32.totalorder %v490, 1
      %vm504 = vcmp.ge.s32.totalorder %v491, 1
      %vm505 = vcmp.ge.s32.totalorder %v492, 1
      %vm506 = vcmp.ge.s32.totalorder %v493, 1
      %vm507 = vcmp.ge.s32.totalorder %v494, 1
      %vm508 = vcmp.ge.s32.totalorder %v495, 1
      %vm509 = vcmp.ge.s32.totalorder %v496, 1
      %vm510 = vcmp.le.s32.totalorder %v487, 8
      %vm511 = vcmp.le.s32.totalorder %v488, 8
      %vm512 = vcmp.le.s32.totalorder %v489, 8
      %vm513 = vcmp.le.s32.totalorder %v490, 8
      %vm514 = vcmp.le.s32.totalorder %v491, 8
      %vm515 = vcmp.le.s32.totalorder %v492, 8
      %vm516 = vcmp.le.s32.totalorder %v493, 8
      %vm517 = vcmp.le.s32.totalorder %v494, 8
      %vm518 = vcmp.le.s32.totalorder %v495, 8
      %vm519 = vcmp.le.s32.totalorder %v496, 8
      %vm520 = vmand %vm500, %vm510
      %vm521 = vmand %vm501, %vm511
      %vm522 = vmand %vm502, %vm512
      %vm523 = vmand %vm503, %vm513
      %vm524 = vmand %vm504, %vm514
      %vm525 = vmand %vm505, %vm515
      %vm526 = vmand %vm506, %vm516
      %vm527 = vmand %vm507, %vm517
      %vm528 = vmand %vm508, %vm518
      %vm529 = vmand %vm509, %vm519
      %vm530 = vcmp.ge.s32.totalorder %v498, 1
      %vm531 = vcmp.ge.s32.totalorder %v499, 1
      %vm532 = vmand %vm520, %vm530
      %vm533 = vmand %vm520, %vm531
      %vm534 = vmand %vm521, %vm530
      %vm535 = vmand %vm521, %vm531
      %vm536 = vmand %vm522, %vm530
      %vm537 = vmand %vm522, %vm531
      %vm538 = vmand %vm523, %vm530
      %vm539 = vmand %vm523, %vm531
      %vm540 = vmand %vm524, %vm530
      %vm541 = vmand %vm524, %vm531
      %vm542 = vmand %vm525, %vm530
      %vm543 = vmand %vm525, %vm531
      %vm544 = vmand %vm526, %vm530
      %vm545 = vmand %vm526, %vm531
      %vm546 = vmand %vm527, %vm530
      %vm547 = vmand %vm527, %vm531
      %vm548 = vmand %vm528, %vm530
      %vm549 = vmand %vm528, %vm531
      %vm550 = vmand %vm529, %vm530
      %vm551 = vmand %vm529, %vm531
      %vm552 = vcmp.le.s32.totalorder %v498, 8
      %vm553 = vcmp.le.s32.totalorder %v499, 8
      %vm554 = vmand %vm532, %vm552
      %vm555 = vmand %vm533, %vm553
      %vm556 = vmand %vm534, %vm552
      %vm557 = vmand %vm535, %vm553
      %vm558 = vmand %vm536, %vm552
      %vm559 = vmand %vm537, %vm553
      %vm560 = vmand %vm538, %vm552
      %vm561 = vmand %vm539, %vm553
      %vm562 = vmand %vm540, %vm552
      %vm563 = vmand %vm541, %vm553
      %vm564 = vmand %vm542, %vm552
      %vm565 = vmand %vm543, %vm553
      %vm566 = vmand %vm544, %vm552
      %vm567 = vmand %vm545, %vm553
      %vm568 = vmand %vm546, %vm552
      %vm569 = vmand %vm547, %vm553
      %vm570 = vmand %vm548, %vm552
      %vm571 = vmand %vm549, %vm553
      %vm572 = vmand %vm550, %vm552
      %vm573 = vmand %vm551, %vm553
      %v574 = vsel %vm554, %v466, 0.0
      %v575 = vsel %vm555, %v467, 0.0
      %v576 = vsel %vm556, %v468, 0.0
      %v577 = vsel %vm557, %v469, 0.0
      %v578 = vsel %vm558, %v470, 0.0
      %v579 = vsel %vm559, %v471, 0.0
      %v580 = vsel %vm560, %v472, 0.0
      %v581 = vsel %vm561, %v473, 0.0
      %v582 = vsel %vm562, %v474, 0.0
      %v583 = vsel %vm563, %v475, 0.0
      %v584 = vsel %vm564, %v476, 0.0
      %v585 = vsel %vm565, %v477, 0.0
      %v586 = vsel %vm566, %v478, 0.0
      %v587 = vsel %vm567, %v479, 0.0
      %v588 = vsel %vm568, %v480, 0.0
      %v589 = vsel %vm569, %v481, 0.0
      %v590 = vsel %vm570, %v482, 0.0
      %v591 = vsel %vm571, %v483, 0.0
      %v592 = vsel %vm572, %v484, 0.0
      %v593 = vsel %vm573, %v485, 0.0
      %v594 = vpack.c.bf16 %v576, %v574
      %v595 = vpack.c.bf16 %v580, %v578
      %v596 = vpack.c.bf16 %v584, %v582
      %v597 = vpack.c.bf16 %v588, %v586
      %v598 = vld [vmem:[%s3] sm:$0xf]
      %v599 = vld [vmem:[%s3 + $0x4] sm:$0xf]
      %v600 = vld [vmem:[%s3 + $0x8] sm:$0xf]
      %v601 = vld [vmem:[%s3 + $0xc] sm:$0xf]
      %v602 = vld [vmem:[%s3 + $0x10] sm:$0xf]
      %v603 = vld [vmem:[%s3 + $0x14] sm:$0xf]
      %v604 = vld [vmem:[%s3 + $0x18] sm:$0xf]
      %v605 = vld [vmem:[%s3 + $0x1c] sm:$0xf]
      %v606 = vld [vmem:[%s3 + $0x20] sm:$0xf]
      %v607 = vld [vmem:[%s3 + $0x24] sm:$0xf]
      %v608 = vld [vmem:[%s3 + $0x28] sm:$0xf]
      %v609 = vld [vmem:[%s3 + $0x2c] sm:$0xf]
      %v610 = vld [vmem:[%s3 + $0x30] sm:$0xf]
      %v611 = vld [vmem:[%s3 + $0x34] sm:$0xf]
      %v612 = vld [vmem:[%s3 + $0x38] sm:$0xf]
      %v613 = vld [vmem:[%s3 + $0x3c] sm:$0xf]
      %vm630 = vcmask 1046528
      %v631 = vrot.slane %v574, 1
      %v632 = vrot.slane %v575, 1
      %v633 = vsel %vm630, %v631, %v632
      %v634 = vrot.slane %v576, 1
      %v635 = vrot.slane %v577, 1
      %v636 = vsel %vm630, %v634, %v635
      %v637 = vrot.slane %v578, 1
      %v638 = vrot.slane %v579, 1
      %v639 = vsel %vm630, %v637, %v638
      %v640 = vrot.slane %v580, 1
      %v641 = vrot.slane %v581, 1
      %v642 = vsel %vm630, %v640, %v641
      %v643 = vrot.slane %v582, 1
      %v644 = vrot.slane %v583, 1
      %v645 = vsel %vm630, %v643, %v644
      %v646 = vrot.slane %v584, 1
      %v647 = vrot.slane %v585, 1
      %v648 = vsel %vm630, %v646, %v647
      %v649 = vrot.slane %v586, 1
      %v650 = vrot.slane %v587, 1
      %v651 = vsel %vm630, %v649, %v650
      %v652 = vrot.slane %v588, 1
      %v653 = vrot.slane %v589, 1
      %v654 = vsel %vm630, %v652, %v653
      %v663 = vpack.c.bf16 %v636, %v633
      %v664 = vpack.c.bf16 %v642, %v639
      %v665 = vpack.c.bf16 %v648, %v645
      %v666 = vpack.c.bf16 %v654, %v651
      %s667 = scalar_lea.vmem %s3, 64
      %v668 = vld [vmem:[%s667] sm:$0xf]
      %v669 = vld [vmem:[%s667 + $0x4] sm:$0xf]
      %v670 = vld [vmem:[%s667 + $0x8] sm:$0xf]
      %v671 = vld [vmem:[%s667 + $0xc] sm:$0xf]
      %v672 = vld [vmem:[%s667 + $0x10] sm:$0xf]
      %v673 = vld [vmem:[%s667 + $0x14] sm:$0xf]
      %v674 = vld [vmem:[%s667 + $0x18] sm:$0xf]
      %v675 = vld [vmem:[%s667 + $0x1c] sm:$0xf]
      %v676 = vld [vmem:[%s667 + $0x20] sm:$0xf]
      %v677 = vld [vmem:[%s667 + $0x24] sm:$0xf]
      %v678 = vld [vmem:[%s667 + $0x28] sm:$0xf]
      %v679 = vld [vmem:[%s667 + $0x2c] sm:$0xf]
      %v680 = vld [vmem:[%s667 + $0x30] sm:$0xf]
      %v681 = vld [vmem:[%s667 + $0x34] sm:$0xf]
      %v682 = vld [vmem:[%s667 + $0x38] sm:$0xf]
      %v683 = vld [vmem:[%s667 + $0x3c] sm:$0xf]
      %v700 = vunpack.c.l.b16 %v668
      %v701 = vunpack.c.l.b16 %v669
      %v702 = vunpack.c.l.b16 %v670
      %v703 = vunpack.c.l.b16 %v671
      %v704 = vunpack.c.l.b16 %v672
      %v705 = vunpack.c.l.b16 %v673
      %v706 = vunpack.c.l.b16 %v674
      %v707 = vunpack.c.l.b16 %v675
      %v708 = vunpack.c.l.b16 %v676
      %v709 = vunpack.c.l.b16 %v677
      %v710 = vunpack.c.l.b16 %v678
      %v711 = vunpack.c.l.b16 %v679
      %v712 = vunpack.c.l.b16 %v680
      %v713 = vunpack.c.l.b16 %v681
      %v714 = vunpack.c.l.b16 %v682
      %v715 = vunpack.c.l.b16 %v683
      %v716 = vpack.c.b16 %v701, %v700
      %v717 = vpack.c.b16 %v703, %v702
      %v718 = vpack.c.b16 %v705, %v704
      %v719 = vpack.c.b16 %v707, %v706
      %v720 = vpack.c.b16 %v709, %v708
      %v721 = vpack.c.b16 %v711, %v710
      %v722 = vpack.c.b16 %v713, %v712
      %v723 = vpack.c.b16 %v715, %v714
      %732 = vmatprep.subr.bf16.mxu0 0
      %733 = vmatpush1.bf16.msra.mxu0 %v716
      %734 = vmatprep.subr.bf16.mxu0 0
      %735 = vmatpush1.bf16.msra.mxu0 %v717
      %736 = vmatprep.subr.bf16.mxu0 0
      %737 = vmatpush1.bf16.msra.mxu0 %v718
      %738 = vmatprep.subr.bf16.mxu0 0
      %739 = vmatpush1.bf16.msra.mxu0 %v719
      %740 = vmatprep.subr.bf16.mxu0 0
      %741 = vmatpush1.bf16.msra.mxu0 %v720
      %742 = vmatprep.subr.bf16.mxu0 0
      %743 = vmatpush1.bf16.msra.mxu0 %v721
      %744 = vmatprep.subr.bf16.mxu0 0
      %745 = vmatpush1.bf16.msra.mxu0 %v722
      %746 = vmatprep.subr.bf16.mxu0 0
      %747 = vmatpush1.bf16.msra.mxu0 %v723
      %748 = vmatprep.subr.bf16.mxu0 0
      %749 = vmatpush1.bf16.msra.mxu0 0
      %750 = vmatprep.subr.bf16.mxu0 0
      %751 = vmatpush1.bf16.msra.mxu0 0
      %752 = vmatprep.subr.bf16.mxu0 0
      %753 = vmatpush1.bf16.msra.mxu0 0
      %754 = vmatprep.subr.bf16.mxu0 0
      %755 = vmatpush1.bf16.msra.mxu0 0
      %756 = vmatprep.subr.bf16.mxu0 0
      %757 = vmatpush1.bf16.msra.mxu0 0
      %758 = vmatprep.subr.bf16.mxu0 0
      %759 = vmatpush1.bf16.msra.mxu0 0
      %760 = vmatprep.subr.bf16.mxu0 0
      %761 = vmatpush1.bf16.msra.mxu0 0
      %762 = vmatprep.subr.bf16.mxu0 0
      %763 = vmatpush1.bf16.msra.mxu0 0
      %764 = vmatprep.mubr.bf16.mxu0 0
      %765 = vmatmul.mubr.bf16.gmra.mrb[0].mxu0 %v663
      %v766 = vpop.f32.mrb[0].mxu0
      %v767 = vadd.f32 0.0, %v766
      %v768 = vpop.f32.mrb[0].mxu0
      %v769 = vpop.f32.mrb[0].mxu0
      %v770 = vadd.f32 0.0, %v769
      %v771 = vpop.f32.mrb[0].mxu0
      %772 = vmatprep.mubr.bf16.mxu0 0
      %773 = vmatmul.mubr.bf16.gmra.mrb[0].mxu0 %v664
      %v774 = vpop.f32.mrb[0].mxu0
      %v775 = vadd.f32 0.0, %v774
      %v776 = vpop.f32.mrb[0].mxu0
      %v777 = vpop.f32.mrb[0].mxu0
      %v778 = vadd.f32 0.0, %v777
      %v779 = vpop.f32.mrb[0].mxu0
      %780 = vmatprep.mubr.bf16.mxu0 0
      %781 = vmatmul.mubr.bf16.gmra.mrb[0].mxu0 %v665
      %v782 = vpop.f32.mrb[0].mxu0
      %v783 = vadd.f32 0.0, %v782
      %v784 = vpop.f32.mrb[0].mxu0
      %v785 = vpop.f32.mrb[0].mxu0
      %v786 = vadd.f32 0.0, %v785
      %v787 = vpop.f32.mrb[0].mxu0
      %788 = vmatprep.mubr.bf16.mxu0 0
      %789 = vmatmul.mubr.bf16.gmra.mrb[0].mxu0 %v666
      %v790 = vpop.f32.mrb[0].mxu0
      %v791 = vadd.f32 0.0, %v790
      %v792 = vpop.f32.mrb[0].mxu0
      %v793 = vpop.f32.mrb[0].mxu0
      %v794 = vadd.f32 0.0, %v793
      %v795 = vpop.f32.mrb[0].mxu0
      %796 = vdwg.mxu0
      %v813 = vunpack.c.l.b16 %v598
      %v814 = vunpack.c.l.b16 %v599
      %v815 = vunpack.c.l.b16 %v600
      %v816 = vunpack.c.l.b16 %v601
      %v817 = vunpack.c.l.b16 %v602
      %v818 = vunpack.c.l.b16 %v603
      %v819 = vunpack.c.l.b16 %v604
      %v820 = vunpack.c.l.b16 %v605
      %v821 = vunpack.c.l.b16 %v606
      %v822 = vunpack.c.l.b16 %v607
      %v823 = vunpack.c.l.b16 %v608
      %v824 = vunpack.c.l.b16 %v609
      %v825 = vunpack.c.l.b16 %v610
      %v826 = vunpack.c.l.b16 %v611
      %v827 = vunpack.c.l.b16 %v612
      %v828 = vunpack.c.l.b16 %v613
      %v829 = vpack.c.b16 %v814, %v813
      %v830 = vpack.c.b16 %v816, %v815
      %v831 = vpack.c.b16 %v818, %v817
      %v832 = vpack.c.b16 %v820, %v819
      %v833 = vpack.c.b16 %v822, %v821
      %v834 = vpack.c.b16 %v824, %v823
      %v835 = vpack.c.b16 %v826, %v825
      %v836 = vpack.c.b16 %v828, %v827
      %845 = vmatprep.subr.bf16.mxu0 0
      %846 = vmatpush1.bf16.msra.mxu0 %v829
      %847 = vmatprep.subr.bf16.mxu0 0
      %848 = vmatpush1.bf16.msra.mxu0 %v830
      %849 = vmatprep.subr.bf16.mxu0 0
      %850 = vmatpush1.bf16.msra.mxu0 %v831
      %851 = vmatprep.subr.bf16.mxu0 0
      %852 = vmatpush1.bf16.msra.mxu0 %v832
      %853 = vmatprep.subr.bf16.mxu0 0
      %854 = vmatpush1.bf16.msra.mxu0 %v833
      %855 = vmatprep.subr.bf16.mxu0 0
      %856 = vmatpush1.bf16.msra.mxu0 %v834
      %857 = vmatprep.subr.bf16.mxu0 0
      %858 = vmatpush1.bf16.msra.mxu0 %v835
      %859 = vmatprep.subr.bf16.mxu0 0
      %860 = vmatpush1.bf16.msra.mxu0 %v836
      %861 = vmatprep.subr.bf16.mxu0 0
      %862 = vmatpush1.bf16.msra.mxu0 0
      %863 = vmatprep.subr.bf16.mxu0 0
      %864 = vmatpush1.bf16.msra.mxu0 0
      %865 = vmatprep.subr.bf16.mxu0 0
      %866 = vmatpush1.bf16.msra.mxu0 0
      %867 = vmatprep.subr.bf16.mxu0 0
      %868 = vmatpush1.bf16.msra.mxu0 0
      %869 = vmatprep.subr.bf16.mxu0 0
      %870 = vmatpush1.bf16.msra.mxu0 0
      %871 = vmatprep.subr.bf16.mxu0 0
      %872 = vmatpush1.bf16.msra.mxu0 0
      %873 = vmatprep.subr.bf16.mxu0 0
      %874 = vmatpush1.bf16.msra.mxu0 0
      %875 = vmatprep.subr.bf16.mxu0 0
      %876 = vmatpush1.bf16.msra.mxu0 0
      %877 = vmatprep.mubr.bf16.mxu0 0
      %878 = vmatmul.mubr.bf16.gmra.mrb[0].mxu0 %v594
      %v879 = vpop.f32.mrb[0].mxu0
      %v880 = vadd.f32 %v767, %v879
      %v881 = vpop.f32.mrb[0].mxu0
      %v882 = vpop.f32.mrb[0].mxu0
      %v883 = vadd.f32 %v770, %v882
      %v884 = vpop.f32.mrb[0].mxu0
      %885 = vmatprep.mubr.bf16.mxu0 0
      %886 = vmatmul.mubr.bf16.gmra.mrb[0].mxu0 %v595
      %v887 = vpop.f32.mrb[0].mxu0
      %v888 = vadd.f32 %v775, %v887
      %v889 = vpop.f32.mrb[0].mxu0
      %v890 = vpop.f32.mrb[0].mxu0
      %v891 = vadd.f32 %v778, %v890
      %v892 = vpop.f32.mrb[0].mxu0
      %893 = vmatprep.mubr.bf16.mxu0 0
      %894 = vmatmul.mubr.bf16.gmra.mrb[0].mxu0 %v596
      %v895 = vpop.f32.mrb[0].mxu0
      %v896 = vadd.f32 %v783, %v895
      %v897 = vpop.f32.mrb[0].mxu0
      %v898 = vpop.f32.mrb[0].mxu0
      %v899 = vadd.f32 %v786, %v898
      %v900 = vpop.f32.mrb[0].mxu0
      %901 = vmatprep.mubr.bf16.mxu0 0
      %902 = vmatmul.mubr.bf16.gmra.mrb[0].mxu0 %v597
      %v903 = vpop.f32.mrb[0].mxu0
      %v904 = vadd.f32 %v791, %v903
      %v905 = vpop.f32.mrb[0].mxu0
      %v906 = vpop.f32.mrb[0].mxu0
      %v907 = vadd.f32 %v794, %v906
      %v908 = vpop.f32.mrb[0].mxu0
      %909 = vdwg.mxu0
      %vm910 = vcmask 1045504
      %v911 = vrot.slane %v574, 2
      %v912 = vrot.slane %v575, 2
      %v913 = vsel %vm910, %v911, %v912
      %v914 = vrot.slane %v576, 2
      %v915 = vrot.slane %v577, 2
      %v916 = vsel %vm910, %v914, %v915
      %v917 = vrot.slane %v578, 2
      %v918 = vrot.slane %v579, 2
      %v919 = vsel %vm910, %v917, %v918
      %v920 = vrot.slane %v580, 2
      %v921 = vrot.slane %v581, 2
      %v922 = vsel %vm910, %v920, %v921
      %v923 = vrot.slane %v582, 2
      %v924 = vrot.slane %v583, 2
      %v925 = vsel %vm910, %v923, %v924
      %v926 = vrot.slane %v584, 2
      %v927 = vrot.slane %v585, 2
      %v928 = vsel %vm910, %v926, %v927
      %v929 = vrot.slane %v586, 2
      %v930 = vrot.slane %v587, 2
      %v931 = vsel %vm910, %v929, %v930
      %v932 = vrot.slane %v588, 2
      %v933 = vrot.slane %v589, 2
      %v934 = vsel %vm910, %v932, %v933
      %v943 = vpack.c.bf16 %v916, %v913
      %v944 = vpack.c.bf16 %v922, %v919
      %v945 = vpack.c.bf16 %v928, %v925
      %v946 = vpack.c.bf16 %v934, %v931
      %s947 = scalar_lea.vmem %s3, 128
      %v948 = vld [vmem:[%s947] sm:$0xf]
      %v949 = vld [vmem:[%s947 + $0x4] sm:$0xf]
      %v950 = vld [vmem:[%s947 + $0x8] sm:$0xf]
      %v951 = vld [vmem:[%s947 + $0xc] sm:$0xf]
      %v952 = vld [vmem:[%s947 + $0x10] sm:$0xf]
      %v953 = vld [vmem:[%s947 + $0x14] sm:$0xf]
      %v954 = vld [vmem:[%s947 + $0x18] sm:$0xf]
      %v955 = vld [vmem:[%s947 + $0x1c] sm:$0xf]
      %v956 = vld [vmem:[%s947 + $0x20] sm:$0xf]
      %v957 = vld [vmem:[%s947 + $0x24] sm:$0xf]
      %v958 = vld [vmem:[%s947 + $0x28] sm:$0xf]
      %v959 = vld [vmem:[%s947 + $0x2c] sm:$0xf]
      %v960 = vld [vmem:[%s947 + $0x30] sm:$0xf]
      %v961 = vld [vmem:[%s947 + $0x34] sm:$0xf]
      %v962 = vld [vmem:[%s947 + $0x38] sm:$0xf]
      %v963 = vld [vmem:[%s947 + $0x3c] sm:$0xf]
      %v980 = vunpack.c.l.b16 %v948
      %v981 = vunpack.c.l.b16 %v949
      %v982 = vunpack.c.l.b16 %v950
      %v983 = vunpack.c.l.b16 %v951
      %v984 = vunpack.c.l.b16 %v952
      %v985 = vunpack.c.l.b16 %v953
      %v986 = vunpack.c.l.b16 %v954
      %v987 = vunpack.c.l.b16 %v955
      %v988 = vunpack.c.l.b16 %v956
      %v989 = vunpack.c.l.b16 %v957
      %v990 = vunpack.c.l.b16 %v958
      %v991 = vunpack.c.l.b16 %v959
      %v992 = vunpack.c.l.b16 %v960
      %v993 = vunpack.c.l.b16 %v961
      %v994 = vunpack.c.l.b16 %v962
      %v995 = vunpack.c.l.b16 %v963
      %v996 = vpack.c.b16 %v981, %v980
      %v997 = vpack.c.b16 %v983, %v982
      %v998 = vpack.c.b16 %v985, %v984
      %v999 = vpack.c.b16 %v987, %v986
      %v1000 = vpack.c.b16 %v989, %v988
      %v1001 = vpack.c.b16 %v991, %v990
      %v1002 = vpack.c.b16 %v993, %v992
      %v1003 = vpack.c.b16 %v995, %v994
      %1012 = vmatprep.subr.bf16.mxu0 0
      %1013 = vmatpush1.bf16.msra.mxu0 %v996
      %1014 = vmatprep.subr.bf16.mxu0 0
      %1015 = vmatpush1.bf16.msra.mxu0 %v997
      %1016 = vmatprep.subr.bf16.mxu0 0
      %1017 = vmatpush1.bf16.msra.mxu0 %v998
      %1018 = vmatprep.subr.bf16.mxu0 0
      %1019 = vmatpush1.bf16.msra.mxu0 %v999
      %1020 = vmatprep.subr.bf16.mxu0 0
      %1021 = vmatpush1.bf16.msra.mxu0 %v1000
      %1022 = vmatprep.subr.bf16.mxu0 0
      %1023 = vmatpush1.bf16.msra.mxu0 %v1001
      %1024 = vmatprep.subr.bf16.mxu0 0
      %1025 = vmatpush1.bf16.msra.mxu0 %v1002
      %1026 = vmatprep.subr.bf16.mxu0 0
      %1027 = vmatpush1.bf16.msra.mxu0 %v1003
      %1028 = vmatprep.subr.bf16.mxu0 0
      %1029 = vmatpush1.bf16.msra.mxu0 0
      %1030 = vmatprep.subr.bf16.mxu0 0
      %1031 = vmatpush1.bf16.msra.mxu0 0
      %1032 = vmatprep.subr.bf16.mxu0 0
      %1033 = vmatpush1.bf16.msra.mxu0 0
      %1034 = vmatprep.subr.bf16.mxu0 0
      %1035 = vmatpush1.bf16.msra.mxu0 0
      %1036 = vmatprep.subr.bf16.mxu0 0
      %1037 = vmatpush1.bf16.msra.mxu0 0
      %1038 = vmatprep.subr.bf16.mxu0 0
      %1039 = vmatpush1.bf16.msra.mxu0 0
      %1040 = vmatprep.subr.bf16.mxu0 0
      %1041 = vmatpush1.bf16.msra.mxu0 0
      %1042 = vmatprep.subr.bf16.mxu0 0
      %1043 = vmatpush1.bf16.msra.mxu0 0
      %1044 = vmatprep.mubr.bf16.mxu0 0
      %1045 = vmatmul.mubr.bf16.gmra.mrb[0].mxu0 %v943
      %v1046 = vpop.f32.mrb[0].mxu0
      %v1047 = vadd.f32 0.0, %v1046
      %v1048 = vpop.f32.mrb[0].mxu0
      %v1049 = vpop.f32.mrb[0].mxu0
      %v1050 = vadd.f32 0.0, %v1049
      %v1051 = vpop.f32.mrb[0].mxu0
      %1052 = vmatprep.mubr.bf16.mxu0 0
      %1053 = vmatmul.mubr.bf16.gmra.mrb[0].mxu0 %v944
      %v1054 = vpop.f32.mrb[0].mxu0
      %v1055 = vadd.f32 0.0, %v1054
      %v1056 = vpop.f32.mrb[0].mxu0
      %v1057 = vpop.f32.mrb[0].mxu0
      %v1058 = vadd.f32 0.0, %v1057
      %v1059 = vpop.f32.mrb[0].mxu0
      %1060 = vmatprep.mubr.bf16.mxu0 0
      %1061 = vmatmul.mubr.bf16.gmra.mrb[0].mxu0 %v945
      %v1062 = vpop.f32.mrb[0].mxu0
      %v1063 = vadd.f32 0.0, %v1062
      %v1064 = vpop.f32.mrb[0].mxu0
      %v1065 = vpop.f32.mrb[0].mxu0
      %v1066 = vadd.f32 0.0, %v1065
      %v1067 = vpop.f32.mrb[0].mxu0
      %1068 = vmatprep.mubr.bf16.mxu0 0
      %1069 = vmatmul.mubr.bf16.gmra.mrb[0].mxu0 %v946
      %v1070 = vpop.f32.mrb[0].mxu0
      %v1071 = vadd.f32 0.0, %v1070
      %v1072 = vpop.f32.mrb[0].mxu0
      %v1073 = vpop.f32.mrb[0].mxu0
      %v1074 = vadd.f32 0.0, %v1073
      %v1075 = vpop.f32.mrb[0].mxu0
      %1076 = vdwg.mxu0
      %v1077 = vadd.f32 %v880, %v1047
      %v1078 = vadd.f32 %v883, %v1050
      %v1079 = vadd.f32 %v888, %v1055
      %v1080 = vadd.f32 %v891, %v1058
      %v1081 = vadd.f32 %v896, %v1063
      %v1082 = vadd.f32 %v899, %v1066
      %v1083 = vadd.f32 %v904, %v1071
      %v1084 = vadd.f32 %v907, %v1074
      %v1085 = vpack.c.bf16 %v578, %v576
      %v1086 = vpack.c.bf16 %v582, %v580
      %v1087 = vpack.c.bf16 %v586, %v584
      %v1088 = vpack.c.bf16 %v590, %v588
      %s1089 = scalar_lea.vmem %s3, 192
      %v1090 = vld [vmem:[%s1089] sm:$0xf]
      %v1091 = vld [vmem:[%s1089 + $0x4] sm:$0xf]
      %v1092 = vld [vmem:[%s1089 + $0x8] sm:$0xf]
      %v1093 = vld [vmem:[%s1089 + $0xc] sm:$0xf]
      %v1094 = vld [vmem:[%s1089 + $0x10] sm:$0xf]
      %v1095 = vld [vmem:[%s1089 + $0x14] sm:$0xf]
      %v1096 = vld [vmem:[%s1089 + $0x18] sm:$0xf]
      %v1097 = vld [vmem:[%s1089 + $0x1c] sm:$0xf]
      %v1098 = vld [vmem:[%s1089 + $0x20] sm:$0xf]
      %v1099 = vld [vmem:[%s1089 + $0x24] sm:$0xf]
      %v1100 = vld [vmem:[%s1089 + $0x28] sm:$0xf]
      %v1101 = vld [vmem:[%s1089 + $0x2c] sm:$0xf]
      %v1102 = vld [vmem:[%s1089 + $0x30] sm:$0xf]
      %v1103 = vld [vmem:[%s1089 + $0x34] sm:$0xf]
      %v1104 = vld [vmem:[%s1089 + $0x38] sm:$0xf]
      %v1105 = vld [vmem:[%s1089 + $0x3c] sm:$0xf]
      %v1122 = vunpack.c.l.b16 %v1090
      %v1123 = vunpack.c.l.b16 %v1091
      %v1124 = vunpack.c.l.b16 %v1092
      %v1125 = vunpack.c.l.b16 %v1093
      %v1126 = vunpack.c.l.b16 %v1094
      %v1127 = vunpack.c.l.b16 %v1095
      %v1128 = vunpack.c.l.b16 %v1096
      %v1129 = vunpack.c.l.b16 %v1097
      %v1130 = vunpack.c.l.b16 %v1098
      %v1131 = vunpack.c.l.b16 %v1099
      %v1132 = vunpack.c.l.b16 %v1100
      %v1133 = vunpack.c.l.b16 %v1101
      %v1134 = vunpack.c.l.b16 %v1102
      %v1135 = vunpack.c.l.b16 %v1103
      %v1136 = vunpack.c.l.b16 %v1104
      %v1137 = vunpack.c.l.b16 %v1105
      %v1138 = vpack.c.b16 %v1123, %v1122
      %v1139 = vpack.c.b16 %v1125, %v1124
      %v1140 = vpack.c.b16 %v1127, %v1126
      %v1141 = vpack.c.b16 %v1129, %v1128
      %v1142 = vpack.c.b16 %v1131, %v1130
      %v1143 = vpack.c.b16 %v1133, %v1132
      %v1144 = vpack.c.b16 %v1135, %v1134
      %v1145 = vpack.c.b16 %v1137, %v1136
      %1154 = vmatprep.subr.bf16.mxu0 0
      %1155 = vmatpush1.bf16.msra.mxu0 %v1138
      %1156 = vmatprep.subr.bf16.mxu0 0
      %1157 = vmatpush1.bf16.msra.mxu0 %v1139
      %1158 = vmatprep.subr.bf16.mxu0 0
      %1159 = vmatpush1.bf16.msra.mxu0 %v1140
      %1160 = vmatprep.subr.bf16.mxu0 0
      %1161 = vmatpush1.bf16.msra.mxu0 %v1141
      %1162 = vmatprep.subr.bf16.mxu0 0
      %1163 = vmatpush1.bf16.msra.mxu0 %v1142
      %1164 = vmatprep.subr.bf16.mxu0 0
      %1165 = vmatpush1.bf16.msra.mxu0 %v1143
      %1166 = vmatprep.subr.bf16.mxu0 0
      %1167 = vmatpush1.bf16.msra.mxu0 %v1144
      %1168 = vmatprep.subr.bf16.mxu0 0
      %1169 = vmatpush1.bf16.msra.mxu0 %v1145
      %1170 = vmatprep.subr.bf16.mxu0 0
      %1171 = vmatpush1.bf16.msra.mxu0 0
      %1172 = vmatprep.subr.bf16.mxu0 0
      %1173 = vmatpush1.bf16.msra.mxu0 0
      %1174 = vmatprep.subr.bf16.mxu0 0
      %1175 = vmatpush1.bf16.msra.mxu0 0
      %1176 = vmatprep.subr.bf16.mxu0 0
      %1177 = vmatpush1.bf16.msra.mxu0 0
      %1178 = vmatprep.subr.bf16.mxu0 0
      %1179 = vmatpush1.bf16.msra.mxu0 0
      %1180 = vmatprep.subr.bf16.mxu0 0
      %1181 = vmatpush1.bf16.msra.mxu0 0
      %1182 = vmatprep.subr.bf16.mxu0 0
      %1183 = vmatpush1.bf16.msra.mxu0 0
      %1184 = vmatprep.subr.bf16.mxu0 0
      %1185 = vmatpush1.bf16.msra.mxu0 0
      %1186 = vmatprep.mubr.bf16.mxu0 0
      %1187 = vmatmul.mubr.bf16.gmra.mrb[0].mxu0 %v1085
      %v1188 = vpop.f32.mrb[0].mxu0
      %v1189 = vadd.f32 0.0, %v1188
      %v1190 = vpop.f32.mrb[0].mxu0
      %v1191 = vpop.f32.mrb[0].mxu0
      %v1192 = vadd.f32 0.0, %v1191
      %v1193 = vpop.f32.mrb[0].mxu0
      %1194 = vmatprep.mubr.bf16.mxu0 0
      %1195 = vmatmul.mubr.bf16.gmra.mrb[0].mxu0 %v1086
      %v1196 = vpop.f32.mrb[0].mxu0
      %v1197 = vadd.f32 0.0, %v1196
      %v1198 = vpop.f32.mrb[0].mxu0
      %v1199 = vpop.f32.mrb[0].mxu0
      %v1200 = vadd.f32 0.0, %v1199
      %v1201 = vpop.f32.mrb[0].mxu0
      %1202 = vmatprep.mubr.bf16.mxu0 0
      %1203 = vmatmul.mubr.bf16.gmra.mrb[0].mxu0 %v1087
      %v1204 = vpop.f32.mrb[0].mxu0
      %v1205 = vadd.f32 0.0, %v1204
      %v1206 = vpop.f32.mrb[0].mxu0
      %v1207 = vpop.f32.mrb[0].mxu0
      %v1208 = vadd.f32 0.0, %v1207
      %v1209 = vpop.f32.mrb[0].mxu0
      %1210 = vmatprep.mubr.bf16.mxu0 0
      %1211 = vmatmul.mubr.bf16.gmra.mrb[0].mxu0 %v1088
      %v1212 = vpop.f32.mrb[0].mxu0
      %v1213 = vadd.f32 0.0, %v1212
      %v1214 = vpop.f32.mrb[0].mxu0
      %v1215 = vpop.f32.mrb[0].mxu0
      %v1216 = vadd.f32 0.0, %v1215
      %v1217 = vpop.f32.mrb[0].mxu0
      %1218 = vdwg.mxu0
      %v1219 = vadd.f32 %v1077, %v1189
      %v1220 = vadd.f32 %v1078, %v1192
      %v1221 = vadd.f32 %v1079, %v1197
      %v1222 = vadd.f32 %v1080, %v1200
      %v1223 = vadd.f32 %v1081, %v1205
      %v1224 = vadd.f32 %v1082, %v1208
      %v1225 = vadd.f32 %v1083, %v1213
      %v1226 = vadd.f32 %v1084, %v1216
      %v1229 = vrot.slane %v590, 1
      %v1230 = vrot.slane %v591, 1
      %v1231 = vsel %vm630, %v1229, %v1230
      %v1233 = vpack.c.bf16 %v639, %v636
      %v1234 = vpack.c.bf16 %v645, %v642
      %v1235 = vpack.c.bf16 %v651, %v648
      %v1236 = vpack.c.bf16 %v1231, %v654
      %s1237 = scalar_lea.vmem %s3, 256
      %v1238 = vld [vmem:[%s1237] sm:$0xf]
      %v1239 = vld [vmem:[%s1237 + $0x4] sm:$0xf]
      %v1240 = vld [vmem:[%s1237 + $0x8] sm:$0xf]
      %v1241 = vld [vmem:[%s1237 + $0xc] sm:$0xf]
      %v1242 = vld [vmem:[%s1237 + $0x10] sm:$0xf]
      %v1243 = vld [vmem:[%s1237 + $0x14] sm:$0xf]
      %v1244 = vld [vmem:[%s1237 + $0x18] sm:$0xf]
      %v1245 = vld [vmem:[%s1237 + $0x1c] sm:$0xf]
      %v1246 = vld [vmem:[%s1237 + $0x20] sm:$0xf]
      %v1247 = vld [vmem:[%s1237 + $0x24] sm:$0xf]
      %v1248 = vld [vmem:[%s1237 + $0x28] sm:$0xf]
      %v1249 = vld [vmem:[%s1237 + $0x2c] sm:$0xf]
      %v1250 = vld [vmem:[%s1237 + $0x30] sm:$0xf]
      %v1251 = vld [vmem:[%s1237 + $0x34] sm:$0xf]
      %v1252 = vld [vmem:[%s1237 + $0x38] sm:$0xf]
      %v1253 = vld [vmem:[%s1237 + $0x3c] sm:$0xf]
      %v1270 = vunpack.c.l.b16 %v1238
      %v1271 = vunpack.c.l.b16 %v1239
      %v1272 = vunpack.c.l.b16 %v1240
      %v1273 = vunpack.c.l.b16 %v1241
      %v1274 = vunpack.c.l.b16 %v1242
      %v1275 = vunpack.c.l.b16 %v1243
      %v1276 = vunpack.c.l.b16 %v1244
      %v1277 = vunpack.c.l.b16 %v1245
      %v1278 = vunpack.c.l.b16 %v1246
      %v1279 = vunpack.c.l.b16 %v1247
      %v1280 = vunpack.c.l.b16 %v1248
      %v1281 = vunpack.c.l.b16 %v1249
      %v1282 = vunpack.c.l.b16 %v1250
      %v1283 = vunpack.c.l.b16 %v1251
      %v1284 = vunpack.c.l.b16 %v1252
      %v1285 = vunpack.c.l.b16 %v1253
      %v1286 = vpack.c.b16 %v1271, %v1270
      %v1287 = vpack.c.b16 %v1273, %v1272
      %v1288 = vpack.c.b16 %v1275, %v1274
      %v1289 = vpack.c.b16 %v1277, %v1276
      %v1290 = vpack.c.b16 %v1279, %v1278
      %v1291 = vpack.c.b16 %v1281, %v1280
      %v1292 = vpack.c.b16 %v1283, %v1282
      %v1293 = vpack.c.b16 %v1285, %v1284
      %1302 = vmatprep.subr.bf16.mxu0 0
      %1303 = vmatpush1.bf16.msra.mxu0 %v1286
      %1304 = vmatprep.subr.bf16.mxu0 0
      %1305 = vmatpush1.bf16.msra.mxu0 %v1287
      %1306 = vmatprep.subr.bf16.mxu0 0
      %1307 = vmatpush1.bf16.msra.mxu0 %v1288
      %1308 = vmatprep.subr.bf16.mxu0 0
      %1309 = vmatpush1.bf16.msra.mxu0 %v1289
      %1310 = vmatprep.subr.bf16.mxu0 0
      %1311 = vmatpush1.bf16.msra.mxu0 %v1290
      %1312 = vmatprep.subr.bf16.mxu0 0
      %1313 = vmatpush1.bf16.msra.mxu0 %v1291
      %1314 = vmatprep.subr.bf16.mxu0 0
      %1315 = vmatpush1.bf16.msra.mxu0 %v1292
      %1316 = vmatprep.subr.bf16.mxu0 0
      %1317 = vmatpush1.bf16.msra.mxu0 %v1293
      %1318 = vmatprep.subr.bf16.mxu0 0
      %1319 = vmatpush1.bf16.msra.mxu0 0
      %1320 = vmatprep.subr.bf16.mxu0 0
      %1321 = vmatpush1.bf16.msra.mxu0 0
      %1322 = vmatprep.subr.bf16.mxu0 0
      %1323 = vmatpush1.bf16.msra.mxu0 0
      %1324 = vmatprep.subr.bf16.mxu0 0
      %1325 = vmatpush1.bf16.msra.mxu0 0
      %1326 = vmatprep.subr.bf16.mxu0 0
      %1327 = vmatpush1.bf16.msra.mxu0 0
      %1328 = vmatprep.subr.bf16.mxu0 0
      %1329 = vmatpush1.bf16.msra.mxu0 0
      %1330 = vmatprep.subr.bf16.mxu0 0
      %1331 = vmatpush1.bf16.msra.mxu0 0
      %1332 = vmatprep.subr.bf16.mxu0 0
      %1333 = vmatpush1.bf16.msra.mxu0 0
      %1334 = vmatprep.mubr.bf16.mxu0 0
      %1335 = vmatmul.mubr.bf16.gmra.mrb[0].mxu0 %v1233
      %v1336 = vpop.f32.mrb[0].mxu0
      %v1337 = vadd.f32 0.0, %v1336
      %v1338 = vpop.f32.mrb[0].mxu0
      %v1339 = vpop.f32.mrb[0].mxu0
      %v1340 = vadd.f32 0.0, %v1339
      %v1341 = vpop.f32.mrb[0].mxu0
      %1342 = vmatprep.mubr.bf16.mxu0 0
      %1343 = vmatmul.mubr.bf16.gmra.mrb[0].mxu0 %v1234
      %v1344 = vpop.f32.mrb[0].mxu0
      %v1345 = vadd.f32 0.0, %v1344
      %v1346 = vpop.f32.mrb[0].mxu0
      %v1347 = vpop.f32.mrb[0].mxu0
      %v1348 = vadd.f32 0.0, %v1347
      %v1349 = vpop.f32.mrb[0].mxu0
      %1350 = vmatprep.mubr.bf16.mxu0 0
      %1351 = vmatmul.mubr.bf16.gmra.mrb[0].mxu0 %v1235
      %v1352 = vpop.f32.mrb[0].mxu0
      %v1353 = vadd.f32 0.0, %v1352
      %v1354 = vpop.f32.mrb[0].mxu0
      %v1355 = vpop.f32.mrb[0].mxu0
      %v1356 = vadd.f32 0.0, %v1355
      %v1357 = vpop.f32.mrb[0].mxu0
      %1358 = vmatprep.mubr.bf16.mxu0 0
      %1359 = vmatmul.mubr.bf16.gmra.mrb[0].mxu0 %v1236
      %v1360 = vpop.f32.mrb[0].mxu0
      %v1361 = vadd.f32 0.0, %v1360
      %v1362 = vpop.f32.mrb[0].mxu0
      %v1363 = vpop.f32.mrb[0].mxu0
      %v1364 = vadd.f32 0.0, %v1363
      %v1365 = vpop.f32.mrb[0].mxu0
      %1366 = vdwg.mxu0
      %v1367 = vadd.f32 %v1219, %v1337
      %v1368 = vadd.f32 %v1220, %v1340
      %v1369 = vadd.f32 %v1221, %v1345
      %v1370 = vadd.f32 %v1222, %v1348
      %v1371 = vadd.f32 %v1223, %v1353
      %v1372 = vadd.f32 %v1224, %v1356
      %v1373 = vadd.f32 %v1225, %v1361
      %v1374 = vadd.f32 %v1226, %v1364
      %v1375 = vrot.slane %v590, 2
      %v1376 = vrot.slane %v591, 2
      %v1377 = vsel %vm910, %v1375, %v1376
      %v1379 = vpack.c.bf16 %v919, %v916
      %v1380 = vpack.c.bf16 %v925, %v922
      %v1381 = vpack.c.bf16 %v931, %v928
      %v1382 = vpack.c.bf16 %v1377, %v934
      %s1383 = scalar_lea.vmem %s3, 320
      %v1384 = vld [vmem:[%s1383] sm:$0xf]
      %v1385 = vld [vmem:[%s1383 + $0x4] sm:$0xf]
      %v1386 = vld [vmem:[%s1383 + $0x8] sm:$0xf]
      %v1387 = vld [vmem:[%s1383 + $0xc] sm:$0xf]
      %v1388 = vld [vmem:[%s1383 + $0x10] sm:$0xf]
      %v1389 = vld [vmem:[%s1383 + $0x14] sm:$0xf]
      %v1390 = vld [vmem:[%s1383 + $0x18] sm:$0xf]
      %v1391 = vld [vmem:[%s1383 + $0x1c] sm:$0xf]
      %v1392 = vld [vmem:[%s1383 + $0x20] sm:$0xf]
      %v1393 = vld [vmem:[%s1383 + $0x24] sm:$0xf]
      %v1394 = vld [vmem:[%s1383 + $0x28] sm:$0xf]
      %v1395 = vld [vmem:[%s1383 + $0x2c] sm:$0xf]
      %v1396 = vld [vmem:[%s1383 + $0x30] sm:$0xf]
      %v1397 = vld [vmem:[%s1383 + $0x34] sm:$0xf]
      %v1398 = vld [vmem:[%s1383 + $0x38] sm:$0xf]
      %v1399 = vld [vmem:[%s1383 + $0x3c] sm:$0xf]
      %v1416 = vunpack.c.l.b16 %v1384
      %v1417 = vunpack.c.l.b16 %v1385
      %v1418 = vunpack.c.l.b16 %v1386
      %v1419 = vunpack.c.l.b16 %v1387
      %v1420 = vunpack.c.l.b16 %v1388
      %v1421 = vunpack.c.l.b16 %v1389
      %v1422 = vunpack.c.l.b16 %v1390
      %v1423 = vunpack.c.l.b16 %v1391
      %v1424 = vunpack.c.l.b16 %v1392
      %v1425 = vunpack.c.l.b16 %v1393
      %v1426 = vunpack.c.l.b16 %v1394
      %v1427 = vunpack.c.l.b16 %v1395
      %v1428 = vunpack.c.l.b16 %v1396
      %v1429 = vunpack.c.l.b16 %v1397
      %v1430 = vunpack.c.l.b16 %v1398
      %v1431 = vunpack.c.l.b16 %v1399
      %v1432 = vpack.c.b16 %v1417, %v1416
      %v1433 = vpack.c.b16 %v1419, %v1418
      %v1434 = vpack.c.b16 %v1421, %v1420
      %v1435 = vpack.c.b16 %v1423, %v1422
      %v1436 = vpack.c.b16 %v1425, %v1424
      %v1437 = vpack.c.b16 %v1427, %v1426
      %v1438 = vpack.c.b16 %v1429, %v1428
      %v1439 = vpack.c.b16 %v1431, %v1430
      %1448 = vmatprep.subr.bf16.mxu0 0
      %1449 = vmatpush1.bf16.msra.mxu0 %v1432
      %1450 = vmatprep.subr.bf16.mxu0 0
      %1451 = vmatpush1.bf16.msra.mxu0 %v1433
      %1452 = vmatprep.subr.bf16.mxu0 0
      %1453 = vmatpush1.bf16.msra.mxu0 %v1434
      %1454 = vmatprep.subr.bf16.mxu0 0
      %1455 = vmatpush1.bf16.msra.mxu0 %v1435
      %1456 = vmatprep.subr.bf16.mxu0 0
      %1457 = vmatpush1.bf16.msra.mxu0 %v1436
      %1458 = vmatprep.subr.bf16.mxu0 0
      %1459 = vmatpush1.bf16.msra.mxu0 %v1437
      %1460 = vmatprep.subr.bf16.mxu0 0
      %1461 = vmatpush1.bf16.msra.mxu0 %v1438
      %1462 = vmatprep.subr.bf16.mxu0 0
      %1463 = vmatpush1.bf16.msra.mxu0 %v1439
      %1464 = vmatprep.subr.bf16.mxu0 0
      %1465 = vmatpush1.bf16.msra.mxu0 0
      %1466 = vmatprep.subr.bf16.mxu0 0
      %1467 = vmatpush1.bf16.msra.mxu0 0
      %1468 = vmatprep.subr.bf16.mxu0 0
      %1469 = vmatpush1.bf16.msra.mxu0 0
      %1470 = vmatprep.subr.bf16.mxu0 0
      %1471 = vmatpush1.bf16.msra.mxu0 0
      %1472 = vmatprep.subr.bf16.mxu0 0
      %1473 = vmatpush1.bf16.msra.mxu0 0
      %1474 = vmatprep.subr.bf16.mxu0 0
      %1475 = vmatpush1.bf16.msra.mxu0 0
      %1476 = vmatprep.subr.bf16.mxu0 0
      %1477 = vmatpush1.bf16.msra.mxu0 0
      %1478 = vmatprep.subr.bf16.mxu0 0
      %1479 = vmatpush1.bf16.msra.mxu0 0
      %1480 = vmatprep.mubr.bf16.mxu0 0
      %1481 = vmatmul.mubr.bf16.gmra.mrb[0].mxu0 %v1379
      %v1482 = vpop.f32.mrb[0].mxu0
      %v1483 = vadd.f32 0.0, %v1482
      %v1484 = vpop.f32.mrb[0].mxu0
      %v1485 = vpop.f32.mrb[0].mxu0
      %v1486 = vadd.f32 0.0, %v1485
      %v1487 = vpop.f32.mrb[0].mxu0
      %1488 = vmatprep.mubr.bf16.mxu0 0
      %1489 = vmatmul.mubr.bf16.gmra.mrb[0].mxu0 %v1380
      %v1490 = vpop.f32.mrb[0].mxu0
      %v1491 = vadd.f32 0.0, %v1490
      %v1492 = vpop.f32.mrb[0].mxu0
      %v1493 = vpop.f32.mrb[0].mxu0
      %v1494 = vadd.f32 0.0, %v1493
      %v1495 = vpop.f32.mrb[0].mxu0
      %1496 = vmatprep.mubr.bf16.mxu0 0
      %1497 = vmatmul.mubr.bf16.gmra.mrb[0].mxu0 %v1381
      %v1498 = vpop.f32.mrb[0].mxu0
      %v1499 = vadd.f32 0.0, %v1498
      %v1500 = vpop.f32.mrb[0].mxu0
      %v1501 = vpop.f32.mrb[0].mxu0
      %v1502 = vadd.f32 0.0, %v1501
      %v1503 = vpop.f32.mrb[0].mxu0
      %1504 = vmatprep.mubr.bf16.mxu0 0
      %1505 = vmatmul.mubr.bf16.gmra.mrb[0].mxu0 %v1382
      %v1506 = vpop.f32.mrb[0].mxu0
      %v1507 = vadd.f32 0.0, %v1506
      %v1508 = vpop.f32.mrb[0].mxu0
      %v1509 = vpop.f32.mrb[0].mxu0
      %v1510 = vadd.f32 0.0, %v1509
      %v1511 = vpop.f32.mrb[0].mxu0
      %1512 = vdwg.mxu0
      %v1513 = vadd.f32 %v1367, %v1483
      %v1514 = vadd.f32 %v1368, %v1486
      %v1515 = vadd.f32 %v1369, %v1491
      %v1516 = vadd.f32 %v1370, %v1494
      %v1517 = vadd.f32 %v1371, %v1499
      %v1518 = vadd.f32 %v1372, %v1502
      %v1519 = vadd.f32 %v1373, %v1507
      %v1520 = vadd.f32 %v1374, %v1510
      %v1521 = vpack.c.bf16 %v592, %v590
      %s1522 = scalar_lea.vmem %s3, 384
      %v1523 = vld [vmem:[%s1522] sm:$0xf]
      %v1524 = vld [vmem:[%s1522 + $0x4] sm:$0xf]
      %v1525 = vld [vmem:[%s1522 + $0x8] sm:$0xf]
      %v1526 = vld [vmem:[%s1522 + $0xc] sm:$0xf]
      %v1527 = vld [vmem:[%s1522 + $0x10] sm:$0xf]
      %v1528 = vld [vmem:[%s1522 + $0x14] sm:$0xf]
      %v1529 = vld [vmem:[%s1522 + $0x18] sm:$0xf]
      %v1530 = vld [vmem:[%s1522 + $0x1c] sm:$0xf]
      %v1531 = vld [vmem:[%s1522 + $0x20] sm:$0xf]
      %v1532 = vld [vmem:[%s1522 + $0x24] sm:$0xf]
      %v1533 = vld [vmem:[%s1522 + $0x28] sm:$0xf]
      %v1534 = vld [vmem:[%s1522 + $0x2c] sm:$0xf]
      %v1535 = vld [vmem:[%s1522 + $0x30] sm:$0xf]
      %v1536 = vld [vmem:[%s1522 + $0x34] sm:$0xf]
      %v1537 = vld [vmem:[%s1522 + $0x38] sm:$0xf]
      %v1538 = vld [vmem:[%s1522 + $0x3c] sm:$0xf]
      %v1555 = vunpack.c.l.b16 %v1523
      %v1556 = vunpack.c.l.b16 %v1524
      %v1557 = vunpack.c.l.b16 %v1525
      %v1558 = vunpack.c.l.b16 %v1526
      %v1559 = vunpack.c.l.b16 %v1527
      %v1560 = vunpack.c.l.b16 %v1528
      %v1561 = vunpack.c.l.b16 %v1529
      %v1562 = vunpack.c.l.b16 %v1530
      %v1563 = vunpack.c.l.b16 %v1531
      %v1564 = vunpack.c.l.b16 %v1532
      %v1565 = vunpack.c.l.b16 %v1533
      %v1566 = vunpack.c.l.b16 %v1534
      %v1567 = vunpack.c.l.b16 %v1535
      %v1568 = vunpack.c.l.b16 %v1536
      %v1569 = vunpack.c.l.b16 %v1537
      %v1570 = vunpack.c.l.b16 %v1538
      %v1571 = vpack.c.b16 %v1556, %v1555
      %v1572 = vpack.c.b16 %v1558, %v1557
      %v1573 = vpack.c.b16 %v1560, %v1559
      %v1574 = vpack.c.b16 %v1562, %v1561
      %v1575 = vpack.c.b16 %v1564, %v1563
      %v1576 = vpack.c.b16 %v1566, %v1565
      %v1577 = vpack.c.b16 %v1568, %v1567
      %v1578 = vpack.c.b16 %v1570, %v1569
      %1587 = vmatprep.subr.bf16.mxu0 0
      %1588 = vmatpush1.bf16.msra.mxu0 %v1571
      %1589 = vmatprep.subr.bf16.mxu0 0
      %1590 = vmatpush1.bf16.msra.mxu0 %v1572
      %1591 = vmatprep.subr.bf16.mxu0 0
      %1592 = vmatpush1.bf16.msra.mxu0 %v1573
      %1593 = vmatprep.subr.bf16.mxu0 0
      %1594 = vmatpush1.bf16.msra.mxu0 %v1574
      %1595 = vmatprep.subr.bf16.mxu0 0
      %1596 = vmatpush1.bf16.msra.mxu0 %v1575
      %1597 = vmatprep.subr.bf16.mxu0 0
      %1598 = vmatpush1.bf16.msra.mxu0 %v1576
      %1599 = vmatprep.subr.bf16.mxu0 0
      %1600 = vmatpush1.bf16.msra.mxu0 %v1577
      %1601 = vmatprep.subr.bf16.mxu0 0
      %1602 = vmatpush1.bf16.msra.mxu0 %v1578
      %1603 = vmatprep.subr.bf16.mxu0 0
      %1604 = vmatpush1.bf16.msra.mxu0 0
      %1605 = vmatprep.subr.bf16.mxu0 0
      %1606 = vmatpush1.bf16.msra.mxu0 0
      %1607 = vmatprep.subr.bf16.mxu0 0
      %1608 = vmatpush1.bf16.msra.mxu0 0
      %1609 = vmatprep.subr.bf16.mxu0 0
      %1610 = vmatpush1.bf16.msra.mxu0 0
      %1611 = vmatprep.subr.bf16.mxu0 0
      %1612 = vmatpush1.bf16.msra.mxu0 0
      %1613 = vmatprep.subr.bf16.mxu0 0
      %1614 = vmatpush1.bf16.msra.mxu0 0
      %1615 = vmatprep.subr.bf16.mxu0 0
      %1616 = vmatpush1.bf16.msra.mxu0 0
      %1617 = vmatprep.subr.bf16.mxu0 0
      %1618 = vmatpush1.bf16.msra.mxu0 0
      %1619 = vmatprep.mubr.bf16.mxu0 0
      %1620 = vmatmul.mubr.bf16.gmra.mrb[0].mxu0 %v595
      %v1621 = vpop.f32.mrb[0].mxu0
      %v1622 = vadd.f32 0.0, %v1621
      %v1623 = vpop.f32.mrb[0].mxu0
      %v1624 = vpop.f32.mrb[0].mxu0
      %v1625 = vadd.f32 0.0, %v1624
      %v1626 = vpop.f32.mrb[0].mxu0
      %1627 = vmatprep.mubr.bf16.mxu0 0
      %1628 = vmatmul.mubr.bf16.gmra.mrb[0].mxu0 %v596
      %v1629 = vpop.f32.mrb[0].mxu0
      %v1630 = vadd.f32 0.0, %v1629
      %v1631 = vpop.f32.mrb[0].mxu0
      %v1632 = vpop.f32.mrb[0].mxu0
      %v1633 = vadd.f32 0.0, %v1632
      %v1634 = vpop.f32.mrb[0].mxu0
      %1635 = vmatprep.mubr.bf16.mxu0 0
      %1636 = vmatmul.mubr.bf16.gmra.mrb[0].mxu0 %v597
      %v1637 = vpop.f32.mrb[0].mxu0
      %v1638 = vadd.f32 0.0, %v1637
      %v1639 = vpop.f32.mrb[0].mxu0
      %v1640 = vpop.f32.mrb[0].mxu0
      %v1641 = vadd.f32 0.0, %v1640
      %v1642 = vpop.f32.mrb[0].mxu0
      %1643 = vmatprep.mubr.bf16.mxu0 0
      %1644 = vmatmul.mubr.bf16.gmra.mrb[0].mxu0 %v1521
      %v1645 = vpop.f32.mrb[0].mxu0
      %v1646 = vadd.f32 0.0, %v1645
      %v1647 = vpop.f32.mrb[0].mxu0
      %v1648 = vpop.f32.mrb[0].mxu0
      %v1649 = vadd.f32 0.0, %v1648
      %v1650 = vpop.f32.mrb[0].mxu0
      %1651 = vdwg.mxu0
      %v1652 = vadd.f32 %v1513, %v1622
      %v1653 = vadd.f32 %v1514, %v1625
      %v1654 = vadd.f32 %v1515, %v1630
      %v1655 = vadd.f32 %v1516, %v1633
      %v1656 = vadd.f32 %v1517, %v1638
      %v1657 = vadd.f32 %v1518, %v1641
      %v1658 = vadd.f32 %v1519, %v1646
      %v1659 = vadd.f32 %v1520, %v1649
      %v1662 = vrot.slane %v592, 1
      %v1663 = vrot.slane %v593, 1
      %v1664 = vsel %vm630, %v1662, %v1663
      %v1666 = vpack.c.bf16 %v1664, %v1231
      %s1667 = scalar_lea.vmem %s3, 448
      %v1668 = vld [vmem:[%s1667] sm:$0xf]
      %v1669 = vld [vmem:[%s1667 + $0x4] sm:$0xf]
      %v1670 = vld [vmem:[%s1667 + $0x8] sm:$0xf]
      %v1671 = vld [vmem:[%s1667 + $0xc] sm:$0xf]
      %v1672 = vld [vmem:[%s1667 + $0x10] sm:$0xf]
      %v1673 = vld [vmem:[%s1667 + $0x14] sm:$0xf]
      %v1674 = vld [vmem:[%s1667 + $0x18] sm:$0xf]
      %v1675 = vld [vmem:[%s1667 + $0x1c] sm:$0xf]
      %v1676 = vld [vmem:[%s1667 + $0x20] sm:$0xf]
      %v1677 = vld [vmem:[%s1667 + $0x24] sm:$0xf]
      %v1678 = vld [vmem:[%s1667 + $0x28] sm:$0xf]
      %v1679 = vld [vmem:[%s1667 + $0x2c] sm:$0xf]
      %v1680 = vld [vmem:[%s1667 + $0x30] sm:$0xf]
      %v1681 = vld [vmem:[%s1667 + $0x34] sm:$0xf]
      %v1682 = vld [vmem:[%s1667 + $0x38] sm:$0xf]
      %v1683 = vld [vmem:[%s1667 + $0x3c] sm:$0xf]
      %v1700 = vunpack.c.l.b16 %v1668
      %v1701 = vunpack.c.l.b16 %v1669
      %v1702 = vunpack.c.l.b16 %v1670
      %v1703 = vunpack.c.l.b16 %v1671
      %v1704 = vunpack.c.l.b16 %v1672
      %v1705 = vunpack.c.l.b16 %v1673
      %v1706 = vunpack.c.l.b16 %v1674
      %v1707 = vunpack.c.l.b16 %v1675
      %v1708 = vunpack.c.l.b16 %v1676
      %v1709 = vunpack.c.l.b16 %v1677
      %v1710 = vunpack.c.l.b16 %v1678
      %v1711 = vunpack.c.l.b16 %v1679
      %v1712 = vunpack.c.l.b16 %v1680
      %v1713 = vunpack.c.l.b16 %v1681
      %v1714 = vunpack.c.l.b16 %v1682
      %v1715 = vunpack.c.l.b16 %v1683
      %v1716 = vpack.c.b16 %v1701, %v1700
      %v1717 = vpack.c.b16 %v1703, %v1702
      %v1718 = vpack.c.b16 %v1705, %v1704
      %v1719 = vpack.c.b16 %v1707, %v1706
      %v1720 = vpack.c.b16 %v1709, %v1708
      %v1721 = vpack.c.b16 %v1711, %v1710
      %v1722 = vpack.c.b16 %v1713, %v1712
      %v1723 = vpack.c.b16 %v1715, %v1714
      %1732 = vmatprep.subr.bf16.mxu0 0
      %1733 = vmatpush1.bf16.msra.mxu0 %v1716
      %1734 = vmatprep.subr.bf16.mxu0 0
      %1735 = vmatpush1.bf16.msra.mxu0 %v1717
      %1736 = vmatprep.subr.bf16.mxu0 0
      %1737 = vmatpush1.bf16.msra.mxu0 %v1718
      %1738 = vmatprep.subr.bf16.mxu0 0
      %1739 = vmatpush1.bf16.msra.mxu0 %v1719
      %1740 = vmatprep.subr.bf16.mxu0 0
      %1741 = vmatpush1.bf16.msra.mxu0 %v1720
      %1742 = vmatprep.subr.bf16.mxu0 0
      %1743 = vmatpush1.bf16.msra.mxu0 %v1721
      %1744 = vmatprep.subr.bf16.mxu0 0
      %1745 = vmatpush1.bf16.msra.mxu0 %v1722
      %1746 = vmatprep.subr.bf16.mxu0 0
      %1747 = vmatpush1.bf16.msra.mxu0 %v1723
      %1748 = vmatprep.subr.bf16.mxu0 0
      %1749 = vmatpush1.bf16.msra.mxu0 0
      %1750 = vmatprep.subr.bf16.mxu0 0
      %1751 = vmatpush1.bf16.msra.mxu0 0
      %1752 = vmatprep.subr.bf16.mxu0 0
      %1753 = vmatpush1.bf16.msra.mxu0 0
      %1754 = vmatprep.subr.bf16.mxu0 0
      %1755 = vmatpush1.bf16.msra.mxu0 0
      %1756 = vmatprep.subr.bf16.mxu0 0
      %1757 = vmatpush1.bf16.msra.mxu0 0
      %1758 = vmatprep.subr.bf16.mxu0 0
      %1759 = vmatpush1.bf16.msra.mxu0 0
      %1760 = vmatprep.subr.bf16.mxu0 0
      %1761 = vmatpush1.bf16.msra.mxu0 0
      %1762 = vmatprep.subr.bf16.mxu0 0
      %1763 = vmatpush1.bf16.msra.mxu0 0
      %1764 = vmatprep.mubr.bf16.mxu0 0
      %1765 = vmatmul.mubr.bf16.gmra.mrb[0].mxu0 %v664
      %v1766 = vpop.f32.mrb[0].mxu0
      %v1767 = vadd.f32 0.0, %v1766
      %v1768 = vpop.f32.mrb[0].mxu0
      %v1769 = vpop.f32.mrb[0].mxu0
      %v1770 = vadd.f32 0.0, %v1769
      %v1771 = vpop.f32.mrb[0].mxu0
      %1772 = vmatprep.mubr.bf16.mxu0 0
      %1773 = vmatmul.mubr.bf16.gmra.mrb[0].mxu0 %v665
      %v1774 = vpop.f32.mrb[0].mxu0
      %v1775 = vadd.f32 0.0, %v1774
      %v1776 = vpop.f32.mrb[0].mxu0
      %v1777 = vpop.f32.mrb[0].mxu0
      %v1778 = vadd.f32 0.0, %v1777
      %v1779 = vpop.f32.mrb[0].mxu0
      %1780 = vmatprep.mubr.bf16.mxu0 0
      %1781 = vmatmul.mubr.bf16.gmra.mrb[0].mxu0 %v666
      %v1782 = vpop.f32.mrb[0].mxu0
      %v1783 = vadd.f32 0.0, %v1782
      %v1784 = vpop.f32.mrb[0].mxu0
      %v1785 = vpop.f32.mrb[0].mxu0
      %v1786 = vadd.f32 0.0, %v1785
      %v1787 = vpop.f32.mrb[0].mxu0
      %1788 = vmatprep.mubr.bf16.mxu0 0
      %1789 = vmatmul.mubr.bf16.gmra.mrb[0].mxu0 %v1666
      %v1790 = vpop.f32.mrb[0].mxu0
      %v1791 = vadd.f32 0.0, %v1790
      %v1792 = vpop.f32.mrb[0].mxu0
      %v1793 = vpop.f32.mrb[0].mxu0
      %v1794 = vadd.f32 0.0, %v1793
      %v1795 = vpop.f32.mrb[0].mxu0
      %1796 = vdwg.mxu0
      %v1797 = vadd.f32 %v1652, %v1767
      %v1798 = vadd.f32 %v1653, %v1770
      %v1799 = vadd.f32 %v1654, %v1775
      %v1800 = vadd.f32 %v1655, %v1778
      %v1801 = vadd.f32 %v1656, %v1783
      %v1802 = vadd.f32 %v1657, %v1786
      %v1803 = vadd.f32 %v1658, %v1791
      %v1804 = vadd.f32 %v1659, %v1794
      %v1805 = vrot.slane %v592, 2
      %v1806 = vrot.slane %v593, 2
      %v1807 = vsel %vm910, %v1805, %v1806
      %v1809 = vpack.c.bf16 %v1807, %v1377
      %s1810 = scalar_lea.vmem %s3, 512
      %v1811 = vld [vmem:[%s1810] sm:$0xf]
      %v1812 = vld [vmem:[%s1810 + $0x4] sm:$0xf]
      %v1813 = vld [vmem:[%s1810 + $0x8] sm:$0xf]
      %v1814 = vld [vmem:[%s1810 + $0xc] sm:$0xf]
      %v1815 = vld [vmem:[%s1810 + $0x10] sm:$0xf]
      %v1816 = vld [vmem:[%s1810 + $0x14] sm:$0xf]
      %v1817 = vld [vmem:[%s1810 + $0x18] sm:$0xf]
      %v1818 = vld [vmem:[%s1810 + $0x1c] sm:$0xf]
      %v1819 = vld [vmem:[%s1810 + $0x20] sm:$0xf]
      %v1820 = vld [vmem:[%s1810 + $0x24] sm:$0xf]
      %v1821 = vld [vmem:[%s1810 + $0x28] sm:$0xf]
      %v1822 = vld [vmem:[%s1810 + $0x2c] sm:$0xf]
      %v1823 = vld [vmem:[%s1810 + $0x30] sm:$0xf]
      %v1824 = vld [vmem:[%s1810 + $0x34] sm:$0xf]
      %v1825 = vld [vmem:[%s1810 + $0x38] sm:$0xf]
      %v1826 = vld [vmem:[%s1810 + $0x3c] sm:$0xf]
      %v1843 = vunpack.c.l.b16 %v1811
      %v1844 = vunpack.c.l.b16 %v1812
      %v1845 = vunpack.c.l.b16 %v1813
      %v1846 = vunpack.c.l.b16 %v1814
      %v1847 = vunpack.c.l.b16 %v1815
      %v1848 = vunpack.c.l.b16 %v1816
      %v1849 = vunpack.c.l.b16 %v1817
      %v1850 = vunpack.c.l.b16 %v1818
      %v1851 = vunpack.c.l.b16 %v1819
      %v1852 = vunpack.c.l.b16 %v1820
      %v1853 = vunpack.c.l.b16 %v1821
      %v1854 = vunpack.c.l.b16 %v1822
      %v1855 = vunpack.c.l.b16 %v1823
      %v1856 = vunpack.c.l.b16 %v1824
      %v1857 = vunpack.c.l.b16 %v1825
      %v1858 = vunpack.c.l.b16 %v1826
      %v1859 = vpack.c.b16 %v1844, %v1843
      %v1860 = vpack.c.b16 %v1846, %v1845
      %v1861 = vpack.c.b16 %v1848, %v1847
      %v1862 = vpack.c.b16 %v1850, %v1849
      %v1863 = vpack.c.b16 %v1852, %v1851
      %v1864 = vpack.c.b16 %v1854, %v1853
      %v1865 = vpack.c.b16 %v1856, %v1855
      %v1866 = vpack.c.b16 %v1858, %v1857
      %1875 = vmatprep.subr.bf16.mxu0 0
      %1876 = vmatpush1.bf16.msra.mxu0 %v1859
      %1877 = vmatprep.subr.bf16.mxu0 0
      %1878 = vmatpush1.bf16.msra.mxu0 %v1860
      %1879 = vmatprep.subr.bf16.mxu0 0
      %1880 = vmatpush1.bf16.msra.mxu0 %v1861
      %1881 = vmatprep.subr.bf16.mxu0 0
      %1882 = vmatpush1.bf16.msra.mxu0 %v1862
      %1883 = vmatprep.subr.bf16.mxu0 0
      %1884 = vmatpush1.bf16.msra.mxu0 %v1863
      %1885 = vmatprep.subr.bf16.mxu0 0
      %1886 = vmatpush1.bf16.msra.mxu0 %v1864
      %1887 = vmatprep.subr.bf16.mxu0 0
      %1888 = vmatpush1.bf16.msra.mxu0 %v1865
      %1889 = vmatprep.subr.bf16.mxu0 0
      %1890 = vmatpush1.bf16.msra.mxu0 %v1866
      %1891 = vmatprep.subr.bf16.mxu0 0
      %1892 = vmatpush1.bf16.msra.mxu0 0
      %1893 = vmatprep.subr.bf16.mxu0 0
      %1894 = vmatpush1.bf16.msra.mxu0 0
      %1895 = vmatprep.subr.bf16.mxu0 0
      %1896 = vmatpush1.bf16.msra.mxu0 0
      %1897 = vmatprep.subr.bf16.mxu0 0
      %1898 = vmatpush1.bf16.msra.mxu0 0
      %1899 = vmatprep.subr.bf16.mxu0 0
      %1900 = vmatpush1.bf16.msra.mxu0 0
      %1901 = vmatprep.subr.bf16.mxu0 0
      %1902 = vmatpush1.bf16.msra.mxu0 0
      %1903 = vmatprep.subr.bf16.mxu0 0
      %1904 = vmatpush1.bf16.msra.mxu0 0
      %1905 = vmatprep.subr.bf16.mxu0 0
      %1906 = vmatpush1.bf16.msra.mxu0 0
      %1907 = vmatprep.mubr.bf16.mxu0 0
      %1908 = vmatmul.mubr.bf16.gmra.mrb[0].mxu0 %v944
      %v1909 = vpop.f32.mrb[0].mxu0
      %v1910 = vadd.f32 0.0, %v1909
      %v1911 = vpop.f32.mrb[0].mxu0
      %v1912 = vpop.f32.mrb[0].mxu0
      %v1913 = vadd.f32 0.0, %v1912
      %v1914 = vpop.f32.mrb[0].mxu0
      %1915 = vmatprep.mubr.bf16.mxu0 0
      %1916 = vmatmul.mubr.bf16.gmra.mrb[0].mxu0 %v945
      %v1917 = vpop.f32.mrb[0].mxu0
      %v1918 = vadd.f32 0.0, %v1917
      %v1919 = vpop.f32.mrb[0].mxu0
      %v1920 = vpop.f32.mrb[0].mxu0
      %v1921 = vadd.f32 0.0, %v1920
      %v1922 = vpop.f32.mrb[0].mxu0
      %1923 = vmatprep.mubr.bf16.mxu0 0
      %1924 = vmatmul.mubr.bf16.gmra.mrb[0].mxu0 %v946
      %v1925 = vpop.f32.mrb[0].mxu0
      %v1926 = vadd.f32 0.0, %v1925
      %v1927 = vpop.f32.mrb[0].mxu0
      %v1928 = vpop.f32.mrb[0].mxu0
      %v1929 = vadd.f32 0.0, %v1928
      %v1930 = vpop.f32.mrb[0].mxu0
      %1931 = vmatprep.mubr.bf16.mxu0 0
      %1932 = vmatmul.mubr.bf16.gmra.mrb[0].mxu0 %v1809
      %v1933 = vpop.f32.mrb[0].mxu0
      %v1934 = vadd.f32 0.0, %v1933
      %v1935 = vpop.f32.mrb[0].mxu0
      %v1936 = vpop.f32.mrb[0].mxu0
      %v1937 = vadd.f32 0.0, %v1936
      %v1938 = vpop.f32.mrb[0].mxu0
      %1939 = vdwg.mxu0
      %v1940 = vadd.f32 %v1797, %v1910
      %v1941 = vadd.f32 %v1798, %v1913
      %v1942 = vadd.f32 %v1799, %v1918
      %v1943 = vadd.f32 %v1800, %v1921
      %v1944 = vadd.f32 %v1801, %v1926
      %v1945 = vadd.f32 %v1802, %v1929
      %v1946 = vadd.f32 %v1803, %v1934
      %v1947 = vadd.f32 %v1804, %v1937
      %v1948 = vld [vmem:[%s4] sm:$0x1]
      %v1950 = vlaneseq
      %v1951 = vshrl.u32 %v1950, 7
      %v1952 = vsub.s32 0, %v1951
      %v1953 = vrot.slane %v1948, %v1952
      %v1955 = vadd.f32 %v1940, %v1953
      %v1956 = vadd.f32 %v1941, %v1953
      %v1957 = vadd.f32 %v1942, %v1953
      %v1958 = vadd.f32 %v1943, %v1953
      %v1959 = vadd.f32 %v1944, %v1953
      %v1960 = vadd.f32 %v1945, %v1953
      %v1961 = vadd.f32 %v1946, %v1953
      %v1962 = vadd.f32 %v1947, %v1953
      %v1963 = vld [vmem:[%s352] sm:$0xff]
      %v1964 = vld [vmem:[%s352 + $0x8] sm:$0xff]
      %v1965 = vld [vmem:[%s352 + $0x10] sm:$0xff]
      %v1966 = vld [vmem:[%s352 + $0x18] sm:$0xff]
      %v1967 = vld [vmem:[%s352 + $0x20] sm:$0xff]
      %v1968 = vld [vmem:[%s352 + $0x28] sm:$0xff]
      %v1969 = vld [vmem:[%s352 + $0x30] sm:$0xff]
      %v1970 = vld [vmem:[%s352 + $0x38] sm:$0xff]
      %v1971 = vadd.f32 %v1955, %v1963
      %v1972 = vadd.f32 %v1956, %v1964
      %v1973 = vadd.f32 %v1957, %v1965
      %v1974 = vadd.f32 %v1958, %v1966
      %v1975 = vadd.f32 %v1959, %v1967
      %v1976 = vadd.f32 %v1960, %v1968
      %v1977 = vadd.f32 %v1961, %v1969
      %v1978 = vadd.f32 %v1962, %v1970
      %1979 = vst [vmem:[%s362] sm:$0xff] %v1971
      %1980 = vst [vmem:[%s362 + $0x8] sm:$0xff] %v1972
      %1981 = vst [vmem:[%s362 + $0x10] sm:$0xff] %v1973
      %1982 = vst [vmem:[%s362 + $0x18] sm:$0xff] %v1974
      %1983 = vst [vmem:[%s362 + $0x20] sm:$0xff] %v1975
      %1984 = vst [vmem:[%s362 + $0x28] sm:$0xff] %v1976
      %1985 = vst [vmem:[%s362 + $0x30] sm:$0xff] %v1977
      %1986 = vst [vmem:[%s362 + $0x38] sm:$0xff] %v1978
      %v1987 = vadd.f32 %v1971, %v1972
      %v1988 = vadd.f32 %v1987, %v1973
      %v1989 = vadd.f32 %v1988, %v1974
      %v1990 = vadd.f32 %v1989, %v1975
      %v1991 = vadd.f32 %v1990, %v1976
      %v1992 = vadd.f32 %v1991, %v1977
      %v1993 = vadd.f32 %v1992, %v1978
      %v1994 = vrot.slane %v1993, 4
      %v1995 = vadd.f32 %v1993, %v1994
      %v1996 = vrot.slane %v1995, 2
      %v1997 = vadd.f32 %v1995, %v1996
      %v1998 = vrot.slane %v1997, 1
      %v1999 = vadd.f32 %v1997, %v1998
      %v2000 = vmul.f32 %v1971, %v1971
      %v2001 = vmul.f32 %v1972, %v1972
      %v2002 = vmul.f32 %v1973, %v1973
      %v2003 = vmul.f32 %v1974, %v1974
      %v2004 = vmul.f32 %v1975, %v1975
      %v2005 = vmul.f32 %v1976, %v1976
      %v2006 = vmul.f32 %v1977, %v1977
      %v2007 = vmul.f32 %v1978, %v1978
      %v2008 = vadd.f32 %v2000, %v2001
      %v2009 = vadd.f32 %v2008, %v2002
      %v2010 = vadd.f32 %v2009, %v2003
      %v2011 = vadd.f32 %v2010, %v2004
      %v2012 = vadd.f32 %v2011, %v2005
      %v2013 = vadd.f32 %v2012, %v2006
      %v2014 = vadd.f32 %v2013, %v2007
      %v2015 = vrot.slane %v2014, 4
      %v2016 = vadd.f32 %v2014, %v2015
      %v2017 = vrot.slane %v2016, 2
      %v2018 = vadd.f32 %v2016, %v2017
      %v2019 = vrot.slane %v2018, 1
      %v2020 = vadd.f32 %v2018, %v2019
      %vm2021 = vcmask 1040384
      %v2022 = vsel %vm2021, %v1999, %v2020
      %2023 = vst [vmem:[%s370] sm:$0x3] %v2022
      %s2024 = smul.u32 8, %s24
      %p2025 = scmp.lt.s32.totalorder %s23, 1
      %s2026 = scalar_select %p2025, %s23, 1
      %p2027 = scmp.lt.s32.totalorder %s2024, 7
      %s2028 = scalar_select %p2027, %s2024, 7
      %s2029 = smul.addr %s2026, 8
      %s2030 = sadd.s32 %s2028, %s2029
      %s2031 = smul.addr %s2030, 8
      %s2032 = scalar_lea.vmem %s6, %s2031
      %p2033 = scmp.lt.s32.totalorder %s23, 1
      %s2034 = scalar_select %p2033, %s23, 1
      %p2035 = scmp.lt.s32.totalorder %s24, 0
      %s2036 = scalar_select %p2035, %s24, 0
      %s2037 = sadd.s32 %s2036, %s2034
      %s2038 = smul.addr %s2037, 2
      %s2039 = scalar_lea.vmem %s7, %s2038
      // Predicated region
      $region45: #{encoder_block_forward.9} parent=43 // pred_check
        %p2040 = pneg %p191
      $region46: #{encoder_block_forward.9} parent=43 // pred_check_branch
        %2042 = sbr.rel (%p2040) target = $region48
      $region47: #{encoder_block_forward.9} parent=43 // pred_region
        %s2043 = smul.u32 8, %s24
      $region48: #{encoder_block_forward.9} parent=43 // pred_fallthru
        _
      // Predicated region
      $region49: #{encoder_block_forward.9} parent=43 // pred_check
        %p2044 = pneg %p219
      $region50: #{encoder_block_forward.9} parent=43 // pred_check_branch
        %2046 = sbr.rel (%p2044) target = $region52
      $region51: #{encoder_block_forward.9} parent=43 // pred_region
        _
      $region52: #{encoder_block_forward.9} parent=43 // pred_fallthru
        _
    $region44: #{encoder_block_forward.9} parent=5 // pred_fallthru
      _
    %p2047 = scmp.le.s32.totalorder 2, %s14
    // Predicated region
    $region53: #{encoder_block_forward.9} parent=5 // pred_check
      %p2048 = pneg %p2047
    $region54: #{encoder_block_forward.9} parent=5 // pred_check_branch
      %2050 = sbr.rel (%p2048) target = $region56
    $region55: #{encoder_block_forward.9} parent=5 // pred_region
      %s2051 = ssub.s32 %s14, 2
      // Predicated region
      $region57: #{encoder_block_forward.9} parent=55 // pred_check
        %p2052 = pneg %p197
      $region58: #{encoder_block_forward.9} parent=55 // pred_check_branch
        %2054 = sbr.rel (%p2052) target = $region60
      $region59: #{encoder_block_forward.9} parent=55 // pred_region
        %s2055 = smul.u32 8, %s26
        %p2056 = scmp.lt.s32.totalorder %s25, 1
        %s2057 = scalar_select %p2056, %s25, 1
        %p2058 = scmp.lt.s32.totalorder %s2055, 7
        %s2059 = scalar_select %p2058, %s2055, 7
        %s2060 = smul.addr %s2057, 8
        %s2061 = sadd.s32 %s2059, %s2060
        %s2062 = smul.addr %s2061, 8
        %s2063 = scalar_lea.vmem %s6, %s2062
      $region60: #{encoder_block_forward.9} parent=55 // pred_fallthru
        _
      // Predicated region
      $region61: #{encoder_block_forward.9} parent=55 // pred_check
        %p2064 = pneg %p225
      $region62: #{encoder_block_forward.9} parent=55 // pred_check_branch
        %2066 = sbr.rel (%p2064) target = $region64
      $region63: #{encoder_block_forward.9} parent=55 // pred_region
        %p2067 = scmp.lt.s32.totalorder %s25, 1
        %s2068 = scalar_select %p2067, %s25, 1
        %p2069 = scmp.lt.s32.totalorder %s26, 0
        %s2070 = scalar_select %p2069, %s26, 0
        %s2071 = sadd.s32 %s2070, %s2068
        %s2072 = smul.addr %s2071, 2
        %s2073 = scalar_lea.vmem %s7, %s2072
      $region64: #{encoder_block_forward.9} parent=55 // pred_fallthru
        _
    $region56: #{encoder_block_forward.9} parent=5 // pred_fallthru
      _
  $region6: #{encoder_block_forward.9} parent=0 // loop_footer
    %s18 = sadd.s32 1, %s14
  $region7: #{encoder_block_forward.9} parent=0 // loop_footer_branch
    %13 = sbr.rel target = $region3
  $region8: #{encoder_block_forward.9} parent=0 // loop_exit
    _

// kernel: encoder_block_forward.11
$region0: #{encoder_block_forward.11}
  #allocation0 [shape = 'u32[]', space=smem, size = 0x4, offset = 0x4, fixed_abs, tag = 'smem constant byte address 0x4 - core index']
  #allocation1 [shape = 'u32[144,128]{1,0:T(1,128)}', space=vmem, size = 0x12000, scoped, tag = 'internal scratch']
  %s0 = inlined_call_operand.vmem [shape: f32[2,1,10,10,128], index: 0, kind: input, shape index: {}]
  %s1 = inlined_call_operand.vmem [shape: f32[1,128], index: 1, kind: input, shape index: {}]
  %s2 = inlined_call_operand.vmem [shape: f32[1,128], index: 2, kind: input, shape index: {}]
  %s3 = inlined_call_operand.vmem [shape: bf16[9,128,128], index: 3, kind: input, shape index: {}]
  %s4 = inlined_call_operand.vmem [shape: f32[1,128], index: 4, kind: input, shape index: {}]
  %s5 = inlined_call_operand.vmem [shape: f32[2,8,8,128], index: 5, kind: input, shape index: {}]
  %s6 = inlined_call_operand.vmem [shape: f32[2,8,8,128], index: 6, kind: output, shape index: {0}]
  %s7 = inlined_call_operand.hbm [shape: f32[2,1,2,128], index: 7, kind: output, shape index: {1}]
  %8 = xla_tuple %s6, %s7
  %s9 = sld [smem:[#allocation0]]
  $region65: #{encoder_block_forward.11} parent=0
    _
  %s11 = ssub.s32 1, %s9
  %s12 = scalar_select 0, %s11, %s9
  $region1: #{encoder_block_forward.11} parent=0
    #allocation2 [shape = 'u8[2048]{0}', space=vmem, size = 0x800, scoped, tag = 'output window, operand 1']
    #allocation3 [shape = 's32[2]{0}', space=sflag, size = 0x8, scoped, tag = 'scoped memory for encoder_block_forward.11']
    %13 = vsyncpa [#allocation3], 0
    %s14 = scalar_lea.sflag [#allocation3], 1
    %15 = vsyncpa %s14, 0
    loop: start=0, step=1, limit=4
    $region2: #{encoder_block_forward.11} parent=1 // loop_pre_header
      _
    $region3: #{encoder_block_forward.11} parent=1 // loop_header
      %s17 = sphi 0, %s21
      %p18 = scmp.ge.s32.totalorder %s17, 4
      %s24 = sphi 0, %s36
      %s25 = sphi 0, %s32
      %s26 = sphi 0, %s24
      %s27 = sphi 0, %s25
      %s28 = sphi 0, %s26
      %s29 = sphi 0, %s27
      %s41 = sphi 0, %s43
      %s44 = sphi 0, %s41
      %s45 = sphi 0, %s44
      %s61 = sphi 0, %s45
      %s65 = sphi 0, %s65
      %s67 = sphi 0, %s65
      %s68 = sphi 0, %s67
      %s82 = sphi 0, %s68
      %s86 = sphi 0, %s86
      %s88 = sphi 0, %s86
      %s89 = sphi 0, %s88
      %s103 = sphi 0, %s89
      %s107 = sphi 0, %s107
      %s109 = sphi 0, %s107
      %s110 = sphi 0, %s109
      %s124 = sphi 0, %s110
      %s128 = sphi 0, %s128
      %s130 = sphi 0, %s128
      %s131 = sphi 0, %s130
      %s145 = sphi 0, %s131
      %s153 = sphi 0, %s155
      %s156 = sphi 0, %s153
      %s157 = sphi 0, %s156
      %s173 = sphi 0, %s157
      %s181 = sphi 0, %s183
      %s184 = sphi 0, %s181
      %s185 = sphi 0, %s184
      %s201 = sphi 0, %s185
      %s209 = sphi 0, %s211
      %s212 = sphi 0, %s209
      %s213 = sphi 0, %s212
      %s229 = sphi 0, %s213
    $region4: #{encoder_block_forward.11} parent=1 // loop_header_branch
      %20 = sbr.rel (%p18) target = $region8
    $region5: #{encoder_block_forward.11} parent=1 // loop_body
      %s22 = ssub.s32 %s17, 1
      %s23 = ssub.s32 %s17, 2
      %s30 = sadd.s32 1, %s25
      %p31 = scmp.ge.s32.totalorder %s30, 1
      %s32 = scalar_select %p31, 0, %s30
      %s33 = sadd.s32 1, %s24
      %s34 = scalar_select %p31, %s33, %s24
      %p35 = scmp.ge.s32.totalorder %s34, 2
      %s36 = scalar_select %p35, 0, %s34
      %s37 = ssub.s32 %s24, %s36
      %s38 = ssub.s32 %s25, %s32
      %s39 = sor.u32 %s37, %s38
      %p40 = scmp.eq.s32.totalorder %s39, 0
      %s42 = sadd.s32 %s41, 1
      %s43 = scalar_select %p40, %s41, %s42
      %p46 = pneg %p40
      %p47 = scmp.eq.s32.totalorder %s17, 1
      %p48 = por %p46, %p47
      %p49 = scmp.ne.s32.totalorder %s41, %s44
      %p50 = scmp.eq.s32.totalorder %s17, 0
      %p51 = por %p49, %p50
      %p52 = scmp.ne.s32.totalorder %s41, %s44
      %p53 = scmp.eq.s32.totalorder %s22, 1
      %p54 = por %p52, %p53
      %p55 = scmp.ne.s32.totalorder %s44, %s45
      %p56 = scmp.eq.s32.totalorder %s22, 0
      %p57 = por %p55, %p56
      %p58 = scmp.ne.s32.totalorder %s44, %s45
      %p59 = scmp.eq.s32.totalorder %s23, 1
      %p60 = por %p58, %p59
      %p62 = scmp.ne.s32.totalorder %s45, %s61
      %p63 = scmp.eq.s32.totalorder %s23, 0
      %p64 = por %p62, %p63
      %s66 = sadd.s32 %s65, 1
      %p69 = scmp.eq.s32.totalorder %s17, 1
      %p70 = scmp.ne.s32.totalorder %s65, %s67
      %p71 = scmp.eq.s32.totalorder %s17, 0
      %p72 = por %p70, %p71
      %p73 = scmp.ne.s32.totalorder %s65, %s67
      %p74 = scmp.eq.s32.totalorder %s22, 1
      %p75 = por %p73, %p74
      %p76 = scmp.ne.s32.totalorder %s67, %s68
      %p77 = scmp.eq.s32.totalorder %s22, 0
      %p78 = por %p76, %p77
      %p79 = scmp.ne.s32.totalorder %s67, %s68
      %p80 = scmp.eq.s32.totalorder %s23, 1
      %p81 = por %p79, %p80
      %p83 = scmp.ne.s32.totalorder %s68, %s82
      %p84 = scmp.eq.s32.totalorder %s23, 0
      %p85 = por %p83, %p84
      %s87 = sadd.s32 %s86, 1
      %p90 = scmp.eq.s32.totalorder %s17, 1
      %p91 = scmp.ne.s32.totalorder %s86, %s88
      %p92 = scmp.eq.s32.totalorder %s17, 0
      %p93 = por %p91, %p92
      %p94 = scmp.ne.s32.totalorder %s86, %s88
      %p95 = scmp.eq.s32.totalorder %s22, 1
      %p96 = por %p94, %p95
      %p97 = scmp.ne.s32.totalorder %s88, %s89
      %p98 = scmp.eq.s32.totalorder %s22, 0
      %p99 = por %p97, %p98
      %p100 = scmp.ne.s32.totalorder %s88, %s89
      %p101 = scmp.eq.s32.totalorder %s23, 1
      %p102 = por %p100, %p101
      %p104 = scmp.ne.s32.totalorder %s89, %s103
      %p105 = scmp.eq.s32.totalorder %s23, 0
      %p106 = por %p104, %p105
      %s108 = sadd.s32 %s107, 1
      %p111 = scmp.eq.s32.totalorder %s17, 1
      %p112 = scmp.ne.s32.totalorder %s107, %s109
      %p113 = scmp.eq.s32.totalorder %s17, 0
      %p114 = por %p112, %p113
      %p115 = scmp.ne.s32.totalorder %s107, %s109
      %p116 = scmp.eq.s32.totalorder %s22, 1
      %p117 = por %p115, %p116
      %p118 = scmp.ne.s32.totalorder %s109, %s110
      %p119 = scmp.eq.s32.totalorder %s22, 0
      %p120 = por %p118, %p119
      %p121 = scmp.ne.s32.totalorder %s109, %s110
      %p122 = scmp.eq.s32.totalorder %s23, 1
      %p123 = por %p121, %p122
      %p125 = scmp.ne.s32.totalorder %s110, %s124
      %p126 = scmp.eq.s32.totalorder %s23, 0
      %p127 = por %p125, %p126
      %s129 = sadd.s32 %s128, 1
      %p132 = scmp.eq.s32.totalorder %s17, 1
      %p133 = scmp.ne.s32.totalorder %s128, %s130
      %p134 = scmp.eq.s32.totalorder %s17, 0
      %p135 = por %p133, %p134
      %p136 = scmp.ne.s32.totalorder %s128, %s130
      %p137 = scmp.eq.s32.totalorder %s22, 1
      %p138 = por %p136, %p137
      %p139 = scmp.ne.s32.totalorder %s130, %s131
      %p140 = scmp.eq.s32.totalorder %s22, 0
      %p141 = por %p139, %p140
      %p142 = scmp.ne.s32.totalorder %s130, %s131
      %p143 = scmp.eq.s32.totalorder %s23, 1
      %p144 = por %p142, %p143
      %p146 = scmp.ne.s32.totalorder %s131, %s145
      %p147 = scmp.eq.s32.totalorder %s23, 0
      %p148 = por %p146, %p147
      %s149 = ssub.s32 %s24, %s36
      %s150 = ssub.s32 %s25, %s32
      %s151 = sor.u32 %s149, %s150
      %p152 = scmp.eq.s32.totalorder %s151, 0
      %s154 = sadd.s32 %s153, 1
      %s155 = scalar_select %p152, %s153, %s154
      %p158 = pneg %p152
      %p159 = scmp.eq.s32.totalorder %s17, 1
      %p160 = por %p158, %p159
      %p161 = scmp.ne.s32.totalorder %s153, %s156
      %p162 = scmp.eq.s32.totalorder %s17, 0
      %p163 = por %p161, %p162
      %p164 = scmp.ne.s32.totalorder %s153, %s156
      %p165 = scmp.eq.s32.totalorder %s22, 1
      %p166 = por %p164, %p165
      %p167 = scmp.ne.s32.totalorder %s156, %s157
      %p168 = scmp.eq.s32.totalorder %s22, 0
      %p169 = por %p167, %p168
      %p170 = scmp.ne.s32.totalorder %s156, %s157
      %p171 = scmp.eq.s32.totalorder %s23, 1
      %p172 = por %p170, %p171
      %p174 = scmp.ne.s32.totalorder %s157, %s173
      %p175 = scmp.eq.s32.totalorder %s23, 0
      %p176 = por %p174, %p175
      %s177 = ssub.s32 %s24, %s36
      %s178 = ssub.s32 %s25, %s32
      %s179 = sor.u32 %s177, %s178
      %p180 = scmp.eq.s32.totalorder %s179, 0
      %s182 = sadd.s32 %s181, 1
      %s183 = scalar_select %p180, %s181, %s182
      %p186 = pneg %p180
      %p187 = scmp.eq.s32.totalorder %s17, 1
      %p188 = por %p186, %p187
      %p189 = scmp.ne.s32.totalorder %s181, %s184
      %p190 = scmp.eq.s32.totalorder %s17, 0
      %p191 = por %p189, %p190
      %p192 = scmp.ne.s32.totalorder %s181, %s184
      %p193 = scmp.eq.s32.totalorder %s22, 1
      %p194 = por %p192, %p193
      %p195 = scmp.ne.s32.totalorder %s184, %s185
      %p196 = scmp.eq.s32.totalorder %s22, 0
      %p197 = por %p195, %p196
      %p198 = scmp.ne.s32.totalorder %s184, %s185
      %p199 = scmp.eq.s32.totalorder %s23, 1
      %p200 = por %p198, %p199
      %p202 = scmp.ne.s32.totalorder %s185, %s201
      %p203 = scmp.eq.s32.totalorder %s23, 0
      %p204 = por %p202, %p203
      %s205 = ssub.s32 %s24, %s36
      %s206 = ssub.s32 %s25, %s32
      %s207 = sor.u32 %s205, %s206
      %p208 = scmp.eq.s32.totalorder %s207, 0
      %s210 = sadd.s32 %s209, 1
      %s211 = scalar_select %p208, %s209, %s210
      %p214 = pneg %p208
      %p215 = scmp.eq.s32.totalorder %s17, 1
      %p216 = por %p214, %p215
      %p217 = scmp.ne.s32.totalorder %s209, %s212
      %p218 = scmp.eq.s32.totalorder %s17, 0
      %p219 = por %p217, %p218
      %p220 = scmp.ne.s32.totalorder %s209, %s212
      %p221 = scmp.eq.s32.totalorder %s22, 1
      %p222 = por %p220, %p221
      %p223 = scmp.ne.s32.totalorder %s212, %s213
      %p224 = scmp.eq.s32.totalorder %s22, 0
      %p225 = por %p223, %p224
      %p226 = scmp.ne.s32.totalorder %s212, %s213
      %p227 = scmp.eq.s32.totalorder %s23, 1
      %p228 = por %p226, %p227
      %p230 = scmp.ne.s32.totalorder %s213, %s229
      %p231 = scmp.eq.s32.totalorder %s23, 0
      %p232 = por %p230, %p231
      %p233 = scmp.le.s32.totalorder 1, %s17
      %p234 = scmp.lt.s32.totalorder %s17, 3
      %p235 = pnand %p233, %p234
      %p236 = pneg %p235
      // Predicated region
      $region9: #{encoder_block_forward.11} parent=5 // pred_check
        _
      $region10: #{encoder_block_forward.11} parent=5 // pred_check_branch
        %238 = sbr.rel (%p235) target = $region12
      $region11: #{encoder_block_forward.11} parent=5 // pred_region
        %s239 = ssub.s32 %s17, 1
        // Predicated region
        $region13: #{encoder_block_forward.11} parent=11 // pred_check
          %p240 = pneg %p78
        $region14: #{encoder_block_forward.11} parent=11 // pred_check_branch
          %242 = sbr.rel (%p240) target = $region16
        $region15: #{encoder_block_forward.11} parent=11 // pred_region
          _
        $region16: #{encoder_block_forward.11} parent=11 // pred_fallthru
          _
        // Predicated region
        $region17: #{encoder_block_forward.11} parent=11 // pred_check
          %p243 = pneg %p99
        $region18: #{encoder_block_forward.11} parent=11 // pred_check_branch
          %245 = sbr.rel (%p243) target = $region20
        $region19: #{encoder_block_forward.11} parent=11 // pred_region
          _
        $region20: #{encoder_block_forward.11} parent=11 // pred_fallthru
          _
        // Predicated region
        $region21: #{encoder_block_forward.11} parent=11 // pred_check
          %p246 = pneg %p120
        $region22: #{encoder_block_forward.11} parent=11 // pred_check_branch
          %248 = sbr.rel (%p246) target = $region24
        $region23: #{encoder_block_forward.11} parent=11 // pred_region
          _
        $region24: #{encoder_block_forward.11} parent=11 // pred_fallthru
          _
        // Predicated region
        $region25: #{encoder_block_forward.11} parent=11 // pred_check
          %p249 = pneg %p141
        $region26: #{encoder_block_forward.11} parent=11 // pred_check_branch
          %251 = sbr.rel (%p249) target = $region28
        $region27: #{encoder_block_forward.11} parent=11 // pred_region
          _
        $region28: #{encoder_block_forward.11} parent=11 // pred_fallthru
          _
      $region12: #{encoder_block_forward.11} parent=5 // pred_fallthru
        _
      %p252 = scmp.lt.s32.totalorder %s17, 2
      // Predicated region
      $region29: #{encoder_block_forward.11} parent=5 // pred_check
        %p253 = pneg %p252
      $region30: #{encoder_block_forward.11} parent=5 // pred_check_branch
        %255 = sbr.rel (%p253) target = $region32
      $region31: #{encoder_block_forward.11} parent=5 // pred_region
        // Predicated region
        $region33: #{encoder_block_forward.11} parent=31 // pred_check
          %p256 = pneg %p51
        $region34: #{encoder_block_forward.11} parent=31 // pred_check_branch
          %258 = sbr.rel (%p256) target = $region36
        $region35: #{encoder_block_forward.11} parent=31 // pred_region
          %p259 = scmp.lt.s32.totalorder %s24, 1
          %s260 = scalar_select %p259, %s24, 1
          %p261 = scmp.lt.s32.totalorder %s25, 0
          %s262 = scalar_select %p261, %s25, 0
          %s263 = smul.addr %s262, 20
          %s264 = smul.addr %s260, 20
          %s265 = sadd.s32 %s263, %s264
          %s266 = smul.addr %s265, 8
          %s267 = scalar_lea.vmem %s0, %s266
        $region36: #{encoder_block_forward.11} parent=31 // pred_fallthru
          _
        // Predicated region
        $region37: #{encoder_block_forward.11} parent=31 // pred_check
          %p268 = pneg %p163
        $region38: #{encoder_block_forward.11} parent=31 // pred_check_branch
          %270 = sbr.rel (%p268) target = $region40
        $region39: #{encoder_block_forward.11} parent=31 // pred_region
          %s271 = smul.u32 8, %s25
          %p272 = scmp.lt.s32.totalorder %s24, 1
          %s273 = scalar_select %p272, %s24, 1
          %p274 = scmp.lt.s32.totalorder %s271, 7
          %s275 = scalar_select %p274, %s271, 7
          %s276 = smul.addr %s273, 8
          %s277 = sadd.s32 %s275, %s276
          %s278 = smul.addr %s277, 8
          %s279 = scalar_lea.vmem %s5, %s278
          %s280 = smul.u32 8, %s25
        $region40: #{encoder_block_forward.11} parent=31 // pred_fallthru
          _
      $region32: #{encoder_block_forward.11} parent=5 // pred_fallthru
        _
      %p281 = scmp.le.s32.totalorder 1, %s17
      %p282 = scmp.lt.s32.totalorder %s17, 3
      %p283 = pnand %p281, %p282
      %p284 = pneg %p283
      // Predicated region
      $region41: #{encoder_block_forward.11} parent=5 // pred_check
        _
      $region42: #{encoder_block_forward.11} parent=5 // pred_check_branch
        %286 = sbr.rel (%p283) target = $region44
      $region43: #{encoder_block_forward.11} parent=5 // pred_region
        %s287 = ssub.s32 %s17, 1
        %p288 = scmp.lt.s32.totalorder %s26, 1
        %s289 = scalar_select %p288, %s26, 1
        %p290 = scmp.lt.s32.totalorder %s27, 0
        %s291 = scalar_select %p290, %s27, 0
        %s292 = smul.addr %s291, 20
        %s293 = smul.addr %s289, 20
        %s294 = sadd.s32 %s292, %s293
        %s295 = smul.addr %s294, 8
        %s296 = scalar_lea.vmem %s0, %s295
        %p297 = pneg %p57
        %p298 = pneg %p54
        %p299 = pneg %p78
        %p300 = pneg %p75
        %p301 = pneg %p99
        %p302 = pneg %p96
        %p303 = pneg %p120
        %p304 = pneg %p117
        %p305 = pneg %p141
        %p306 = pneg %p138
        %s307 = smul.u32 8, %s27
        %p308 = scmp.lt.s32.totalorder %s26, 1
        %s309 = scalar_select %p308, %s26, 1
        %p310 = scmp.lt.s32.totalorder %s307, 7
        %s311 = scalar_select %p310, %s307, 7
        %s312 = smul.addr %s309, 8
        %s313 = sadd.s32 %s311, %s312
        %s314 = smul.addr %s313, 8
        %s315 = scalar_lea.vmem %s5, %s314
        %p316 = pneg %p169
        %p317 = pneg %p166
        %p318 = pneg %p197
        %p319 = pneg %p194
        %s320 = smul.u32 8, %s27
        %p321 = scmp.lt.s32.totalorder %s26, 1
        %s322 = scalar_select %p321, %s26, 1
        %p323 = scmp.lt.s32.totalorder %s320, 7
        %s324 = scalar_select %p323, %s320, 7
        %s325 = smul.addr %s322, 8
        %s326 = sadd.s32 %s324, %s325
        %s327 = smul.addr %s326, 8
        %s328 = scalar_lea.vmem %s6, %s327
        %p329 = pneg %p225
        %p330 = pneg %p222
        %s331 = sand.u32 %s212, 1
        %s332 = scalar_lea.sflag [#allocation3], %s331
        %s333 = sand.u32 %s212, 1
        %s334 = smul.addr %s333, 2
        %s335 = scalar_lea.vmem [#allocation2], %s334
        %p336 = scmp.lt.s32.totalorder %s26, 1
        %s337 = scalar_select %p336, %s26, 1
        %p338 = scmp.lt.s32.totalorder %s27, 0
        %s339 = scalar_select %p338, %s27, 0
        %s340 = smul.addr %s339, 20
        %s341 = smul.addr %s337, 20
        %s342 = sadd.s32 %s340, %s341
        %s343 = smul.addr %s342, 8
        %s344 = scalar_lea.vmem %s0, %s343
        %s345 = smul.u32 8, %s27
        %p346 = scmp.lt.s32.totalorder %s26, 1
        %s347 = scalar_select %p346, %s26, 1
        %p348 = scmp.lt.s32.totalorder %s345, 7
        %s349 = scalar_select %p348, %s345, 7
        %s350 = smul.addr %s347, 8
        %s351 = sadd.s32 %s349, %s350
        %s352 = smul.addr %s351, 8
        %s353 = scalar_lea.vmem %s5, %s352
        %s354 = smul.u32 8, %s27
        %s355 = smul.u32 8, %s27
        %p356 = scmp.lt.s32.totalorder %s26, 1
        %s357 = scalar_select %p356, %s26, 1
        %p358 = scmp.lt.s32.totalorder %s355, 7
        %s359 = scalar_select %p358, %s355, 7
        %s360 = smul.addr %s357, 8
        %s361 = sadd.s32 %s359, %s360
        %s362 = smul.addr %s361, 8
        %s363 = scalar_lea.vmem %s6, %s362
        %s364 = smul.u32 8, %s27
        %v366 = vld [vmem:[%s344] sm:$0xff]
        %v367 = vld [vmem:[%s344 + $0x8] sm:$0x3]
        %v368 = vld [vmem:[%s344 + $0x10] sm:$0xff]
        %v369 = vld [vmem:[%s344 + $0x18] sm:$0x3]
        %v370 = vld [vmem:[%s344 + $0x20] sm:$0xff]
        %v371 = vld [vmem:[%s344 + $0x28] sm:$0x3]
        %v372 = vld [vmem:[%s344 + $0x30] sm:$0xff]
        %v373 = vld [vmem:[%s344 + $0x38] sm:$0x3]
        %v374 = vld [vmem:[%s344 + $0x40] sm:$0xff]
        %v375 = vld [vmem:[%s344 + $0x48] sm:$0x3]
        %v376 = vld [vmem:[%s344 + $0x50] sm:$0xff]
        %v377 = vld [vmem:[%s344 + $0x58] sm:$0x3]
        %v378 = vld [vmem:[%s344 + $0x60] sm:$0xff]
        %v379 = vld [vmem:[%s344 + $0x68] sm:$0x3]
        %v380 = vld [vmem:[%s344 + $0x70] sm:$0xff]
        %v381 = vld [vmem:[%s344 + $0x78] sm:$0x3]
        %v382 = vld [vmem:[%s344 + $0x80] sm:$0xff]
        %v383 = vld [vmem:[%s344 + $0x88] sm:$0x3]
        %v384 = vld [vmem:[%s344 + $0x90] sm:$0xff]
        %v385 = vld [vmem:[%s344 + $0x98] sm:$0x3]
        %v386 = vld [vmem:[%s1] sm:$0x1]
        %v388 = vlaneseq
        %v389 = vshrl.u32 %v388, 7
        %v390 = vsub.s32 0, %v389
        %v391 = vrot.slane %v386, %v390
        %v393 = vmul.f32 %v366, %v391
        %v394 = vmul.f32 %v367, %v391
        %v395 = vmul.f32 %v368, %v391
        %v396 = vmul.f32 %v369, %v391
        %v397 = vmul.f32 %v370, %v391
        %v398 = vmul.f32 %v371, %v391
        %v399 = vmul.f32 %v372, %v391
        %v400 = vmul.f32 %v373, %v391
        %v401 = vmul.f32 %v374, %v391
        %v402 = vmul.f32 %v375, %v391
        %v403 = vmul.f32 %v376, %v391
        %v404 = vmul.f32 %v377, %v391
        %v405 = vmul.f32 %v378, %v391
        %v406 = vmul.f32 %v379, %v391
        %v407 = vmul.f32 %v380, %v391
        %v408 = vmul.f32 %v381, %v391
        %v409 = vmul.f32 %v382, %v391
        %v410 = vmul.f32 %v383, %v391
        %v411 = vmul.f32 %v384, %v391
        %v412 = vmul.f32 %v385, %v391
        %v413 = vld [vmem:[%s2] sm:$0x1]
        %v415 = vlaneseq
        %v416 = vshrl.u32 %v415, 7
        %v417 = vsub.s32 0, %v416
        %v418 = vrot.slane %v413, %v417
        %v420 = vadd.f32 %v393, %v418
        %v421 = vadd.f32 %v394, %v418
        %v422 = vadd.f32 %v395, %v418
        %v423 = vadd.f32 %v396, %v418
        %v424 = vadd.f32 %v397, %v418
        %v425 = vadd.f32 %v398, %v418
        %v426 = vadd.f32 %v399, %v418
        %v427 = vadd.f32 %v400, %v418
        %v428 = vadd.f32 %v401, %v418
        %v429 = vadd.f32 %v402, %v418
        %v430 = vadd.f32 %v403, %v418
        %v431 = vadd.f32 %v404, %v418
        %v432 = vadd.f32 %v405, %v418
        %v433 = vadd.f32 %v406, %v418
        %v434 = vadd.f32 %v407, %v418
        %v435 = vadd.f32 %v408, %v418
        %v436 = vadd.f32 %v409, %v418
        %v437 = vadd.f32 %v410, %v418
        %v438 = vadd.f32 %v411, %v418
        %v439 = vadd.f32 %v412, %v418
        %v440 = vmul.f32 %v420, 0.1
        %v441 = vmul.f32 %v421, 0.1
        %v442 = vmul.f32 %v422, 0.1
        %v443 = vmul.f32 %v423, 0.1
        %v444 = vmul.f32 %v424, 0.1
        %v445 = vmul.f32 %v425, 0.1
        %v446 = vmul.f32 %v426, 0.1
        %v447 = vmul.f32 %v427, 0.1
        %v448 = vmul.f32 %v428, 0.1
        %v449 = vmul.f32 %v429, 0.1
        %v450 = vmul.f32 %v430, 0.1
        %v451 = vmul.f32 %v431, 0.1
        %v452 = vmul.f32 %v432, 0.1
        %v453 = vmul.f32 %v433, 0.1
        %v454 = vmul.f32 %v434, 0.1
        %v455 = vmul.f32 %v435, 0.1
        %v456 = vmul.f32 %v436, 0.1
        %v457 = vmul.f32 %v437, 0.1
        %v458 = vmul.f32 %v438, 0.1
        %v459 = vmul.f32 %v439, 0.1
        %v460 = vmax.f32 %v420, %v440
        %v461 = vmax.f32 %v421, %v441
        %v462 = vmax.f32 %v422, %v442
        %v463 = vmax.f32 %v423, %v443
        %v464 = vmax.f32 %v424, %v444
        %v465 = vmax.f32 %v425, %v445
        %v466 = vmax.f32 %v426, %v446
        %v467 = vmax.f32 %v427, %v447
        %v468 = vmax.f32 %v428, %v448
        %v469 = vmax.f32 %v429, %v449
        %v470 = vmax.f32 %v430, %v450
        %v471 = vmax.f32 %v431, %v451
        %v472 = vmax.f32 %v432, %v452
        %v473 = vmax.f32 %v433, %v453
        %v474 = vmax.f32 %v434, %v454
        %v475 = vmax.f32 %v435, %v455
        %v476 = vmax.f32 %v436, %v456
        %v477 = vmax.f32 %v437, %v457
        %v478 = vmax.f32 %v438, %v458
        %v479 = vmax.f32 %v439, %v459
        %s480 = smul.u32 %s27, 8
        %v481 = vstv %s480
        %v482 = vadd.s32 %v481, 1
        %v483 = vadd.s32 %v481, 2
        %v484 = vadd.s32 %v481, 3
        %v485 = vadd.s32 %v481, 4
        %v486 = vadd.s32 %v481, 5
        %v487 = vadd.s32 %v481, 6
        %v488 = vadd.s32 %v481, 7
        %v489 = vadd.s32 %v481, 8
        %v490 = vadd.s32 %v481, 9
        %v491 = vlaneseq
        %v492 = vshrl.u32 %v491, 7
        %v493 = vadd.s32 %v492, 8
        %vm494 = vcmp.ge.s32.totalorder %v481, 1
        %vm495 = vcmp.ge.s32.totalorder %v482, 1
        %vm496 = vcmp.ge.s32.totalorder %v483, 1
        %vm497 = vcmp.ge.s32.totalorder %v484, 1
        %vm498 = vcmp.ge.s32.totalorder %v485, 1
        %vm499 = vcmp.ge.s32.totalorder %v486, 1
        %vm500 = vcmp.ge.s32.totalorder %v487, 1
        %vm501 = vcmp.ge.s32.totalorder %v488, 1
        %vm502 = vcmp.ge.s32.totalorder %v489, 1
        %vm503 = vcmp.ge.s32.totalorder %v490, 1
        %vm504 = vcmp.le.s32.totalorder %v481, 8
        %vm505 = vcmp.le.s32.totalorder %v482, 8
        %vm506 = vcmp.le.s32.totalorder %v483, 8
        %vm507 = vcmp.le.s32.totalorder %v484, 8
        %vm508 = vcmp.le.s32.totalorder %v485, 8
        %vm509 = vcmp.le.s32.totalorder %v486, 8
        %vm510 = vcmp.le.s32.totalorder %v487, 8
        %vm511 = vcmp.le.s32.totalorder %v488, 8
        %vm512 = vcmp.le.s32.totalorder %v489, 8
        %vm513 = vcmp.le.s32.totalorder %v490, 8
        %vm514 = vmand %vm494, %vm504
        %vm515 = vmand %vm495, %vm505
        %vm516 = vmand %vm496, %vm506
        %vm517 = vmand %vm497, %vm507
        %vm518 = vmand %vm498, %vm508
        %vm519 = vmand %vm499, %vm509
        %vm520 = vmand %vm500, %vm510
        %vm521 = vmand %vm501, %vm511
        %vm522 = vmand %vm502, %vm512
        %vm523 = vmand %vm503, %vm513
        %vm524 = vcmp.ge.s32.totalorder %v492, 1
        %vm525 = vcmp.ge.s32.totalorder %v493, 1
        %vm526 = vmand %vm514, %vm524
        %vm527 = vmand %vm514, %vm525
        %vm528 = vmand %vm515, %vm524
        %vm529 = vmand %vm515, %vm525
        %vm530 = vmand %vm516, %vm524
        %vm531 = vmand %vm516, %vm525
        %vm532 = vmand %vm517, %vm524
        %vm533 = vmand %vm517, %vm525
        %vm534 = vmand %vm518, %vm524
        %vm535 = vmand %vm518, %vm525
        %vm536 = vmand %vm519, %vm524
        %vm537 = vmand %vm519, %vm525
        %vm538 = vmand %vm520, %vm524
        %vm539 = vmand %vm520, %vm525
        %vm540 = vmand %vm521, %vm524
        %vm541 = vmand %vm521, %vm525
        %vm542 = vmand %vm522, %vm524
        %vm543 = vmand %vm522, %vm525
        %vm544 = vmand %vm523, %vm524
        %vm545 = vmand %vm523, %vm525
        %vm546 = vcmp.le.s32.totalorder %v492, 8
        %vm547 = vcmp.le.s32.totalorder %v493, 8
        %vm548 = vmand %vm526, %vm546
        %vm549 = vmand %vm527, %vm547
        %vm550 = vmand %vm528, %vm546
        %vm551 = vmand %vm529, %vm547
        %vm552 = vmand %vm530, %vm546
        %vm553 = vmand %vm531, %vm547
        %vm554 = vmand %vm532, %vm546
        %vm555 = vmand %vm533, %vm547
        %vm556 = vmand %vm534, %vm546
        %vm557 = vmand %vm535, %vm547
        %vm558 = vmand %vm536, %vm546
        %vm559 = vmand %vm537, %vm547
        %vm560 = vmand %vm538, %vm546
        %vm561 = vmand %vm539, %vm547
        %vm562 = vmand %vm540, %vm546
        %vm563 = vmand %vm541, %vm547
        %vm564 = vmand %vm542, %vm546
        %vm565 = vmand %vm543, %vm547
        %vm566 = vmand %vm544, %vm546
        %vm567 = vmand %vm545, %vm547
        %v568 = vsel %vm548, %v460, 0.0
        %v569 = vsel %vm549, %v461, 0.0
        %v570 = vsel %vm550, %v462, 0.0
        %v571 = vsel %vm551, %v463, 0.0
        %v572 = vsel %vm552, %v464, 0.0
        %v573 = vsel %vm553, %v465, 0.0
        %v574 = vsel %vm554, %v466, 0.0
        %v575 = vsel %vm555, %v467, 0.0
        %v576 = vsel %vm556, %v468, 0.0
        %v577 = vsel %vm557, %v469, 0.0
        %v578 = vsel %vm558, %v470, 0.0
        %v579 = vsel %vm559, %v471, 0.0
        %v580 = vsel %vm560, %v472, 0.0
        %v581 = vsel %vm561, %v473, 0.0
        %v582 = vsel %vm562, %v474, 0.0
        %v583 = vsel %vm563, %v475, 0.0
        %v584 = vsel %vm564, %v476, 0.0
        %v585 = vsel %vm565, %v477, 0.0
        %v586 = vsel %vm566, %v478, 0.0
        %v587 = vsel %vm567, %v479, 0.0
        %v588 = vpack.c.bf16 %v570, %v568
        %v589 = vpack.c.bf16 %v574, %v572
        %v590 = vpack.c.bf16 %v578, %v576
        %v591 = vpack.c.bf16 %v582, %v580
        %v592 = vld [vmem:[%s3] sm:$0xf]
        %v593 = vld [vmem:[%s3 + $0x4] sm:$0xf]
        %v594 = vld [vmem:[%s3 + $0x8] sm:$0xf]
        %v595 = vld [vmem:[%s3 + $0xc] sm:$0xf]
        %v596 = vld [vmem:[%s3 + $0x10] sm:$0xf]
        %v597 = vld [vmem:[%s3 + $0x14] sm:$0xf]
        %v598 = vld [vmem:[%s3 + $0x18] sm:$0xf]
        %v599 = vld [vmem:[%s3 + $0x1c] sm:$0xf]
        %v600 = vld [vmem:[%s3 + $0x20] sm:$0xf]
        %v601 = vld [vmem:[%s3 + $0x24] sm:$0xf]
        %v602 = vld [vmem:[%s3 + $0x28] sm:$0xf]
        %v603 = vld [vmem:[%s3 + $0x2c] sm:$0xf]
        %v604 = vld [vmem:[%s3 + $0x30] sm:$0xf]
        %v605 = vld [vmem:[%s3 + $0x34] sm:$0xf]
        %v606 = vld [vmem:[%s3 + $0x38] sm:$0xf]
        %v607 = vld [vmem:[%s3 + $0x3c] sm:$0xf]
        %vm624 = vcmask 1046528
        %v625 = vrot.slane %v568, 1
        %v626 = vrot.slane %v569, 1
        %v627 = vsel %vm624, %v625, %v626
        %v628 = vrot.slane %v570, 1
        %v629 = vrot.slane %v571, 1
        %v630 = vsel %vm624, %v628, %v629
        %v631 = vrot.slane %v572, 1
        %v632 = vrot.slane %v573, 1
        %v633 = vsel %vm624, %v631, %v632
        %v634 = vrot.slane %v574, 1
        %v635 = vrot.slane %v575, 1
        %v636 = vsel %vm624, %v634, %v635
        %v637 = vrot.slane %v576, 1
        %v638 = vrot.slane %v577, 1
        %v639 = vsel %vm624, %v637, %v638
        %v640 = vrot.slane %v578, 1
        %v641 = vrot.slane %v579, 1
        %v642 = vsel %vm624, %v640, %v641
        %v643 = vrot.slane %v580, 1
        %v644 = vrot.slane %v581, 1
        %v645 = vsel %vm624, %v643, %v644
        %v646 = vrot.slane %v582, 1
        %v647 = vrot.slane %v583, 1
        %v648 = vsel %vm624, %v646, %v647
        %v657 = vpack.c.bf16 %v630, %v627
        %v658 = vpack.c.bf16 %v636, %v633
        %v659 = vpack.c.bf16 %v642, %v639
        %v660 = vpack.c.bf16 %v648, %v645
        %s661 = scalar_lea.vmem %s3, 64
        %v662 = vld [vmem:[%s661] sm:$0xf]
        %v663 = vld [vmem:[%s661 + $0x4] sm:$0xf]
        %v664 = vld [vmem:[%s661 + $0x8] sm:$0xf]
        %v665 = vld [vmem:[%s661 + $0xc] sm:$0xf]
        %v666 = vld [vmem:[%s661 + $0x10] sm:$0xf]
        %v667 = vld [vmem:[%s661 + $0x14] sm:$0xf]
        %v668 = vld [vmem:[%s661 + $0x18] sm:$0xf]
        %v669 = vld [vmem:[%s661 + $0x1c] sm:$0xf]
        %v670 = vld [vmem:[%s661 + $0x20] sm:$0xf]
        %v671 = vld [vmem:[%s661 + $0x24] sm:$0xf]
        %v672 = vld [vmem:[%s661 + $0x28] sm:$0xf]
        %v673 = vld [vmem:[%s661 + $0x2c] sm:$0xf]
        %v674 = vld [vmem:[%s661 + $0x30] sm:$0xf]
        %v675 = vld [vmem:[%s661 + $0x34] sm:$0xf]
        %v676 = vld [vmem:[%s661 + $0x38] sm:$0xf]
        %v677 = vld [vmem:[%s661 + $0x3c] sm:$0xf]
        %v694 = vunpack.c.l.b16 %v662
        %v695 = vunpack.c.l.b16 %v663
        %v696 = vunpack.c.l.b16 %v664
        %v697 = vunpack.c.l.b16 %v665
        %v698 = vunpack.c.l.b16 %v666
        %v699 = vunpack.c.l.b16 %v667
        %v700 = vunpack.c.l.b16 %v668
        %v701 = vunpack.c.l.b16 %v669
        %v702 = vunpack.c.l.b16 %v670
        %v703 = vunpack.c.l.b16 %v671
        %v704 = vunpack.c.l.b16 %v672
        %v705 = vunpack.c.l.b16 %v673
        %v706 = vunpack.c.l.b16 %v674
        %v707 = vunpack.c.l.b16 %v675
        %v708 = vunpack.c.l.b16 %v676
        %v709 = vunpack.c.l.b16 %v677
        %v710 = vpack.c.b16 %v695, %v694
        %v711 = vpack.c.b16 %v697, %v696
        %v712 = vpack.c.b16 %v699, %v698
        %v713 = vpack.c.b16 %v701, %v700
        %v714 = vpack.c.b16 %v703, %v702
        %v715 = vpack.c.b16 %v705, %v704
        %v716 = vpack.c.b16 %v707, %v706
        %v717 = vpack.c.b16 %v709, %v708
        %726 = vmatprep.subr.bf16.mxu0 0
        %727 = vmatpush1.bf16.msra.mxu0 %v710
        %728 = vmatprep.subr.bf16.mxu0 0
        %729 = vmatpush1.bf16.msra.mxu0 %v711
        %730 = vmatprep.subr.bf16.mxu0 0
        %731 = vmatpush1.bf16.msra.mxu0 %v712
        %732 = vmatprep.subr.bf16.mxu0 0
        %733 = vmatpush1.bf16.msra.mxu0 %v713
        %734 = vmatprep.subr.bf16.mxu0 0
        %735 = vmatpush1.bf16.msra.mxu0 %v714
        %736 = vmatprep.subr.bf16.mxu0 0
        %737 = vmatpush1.bf16.msra.mxu0 %v715
        %738 = vmatprep.subr.bf16.mxu0 0
        %739 = vmatpush1.bf16.msra.mxu0 %v716
        %740 = vmatprep.subr.bf16.mxu0 0
        %741 = vmatpush1.bf16.msra.mxu0 %v717
        %742 = vmatprep.subr.bf16.mxu0 0
        %743 = vmatpush1.bf16.msra.mxu0 0
        %744 = vmatprep.subr.bf16.mxu0 0
        %745 = vmatpush1.bf16.msra.mxu0 0
        %746 = vmatprep.subr.bf16.mxu0 0
        %747 = vmatpush1.bf16.msra.mxu0 0
        %748 = vmatprep.subr.bf16.mxu0 0
        %749 = vmatpush1.bf16.msra.mxu0 0
        %750 = vmatprep.subr.bf16.mxu0 0
        %751 = vmatpush1.bf16.msra.mxu0 0
        %752 = vmatprep.subr.bf16.mxu0 0
        %753 = vmatpush1.bf16.msra.mxu0 0
        %754 = vmatprep.subr.bf16.mxu0 0
        %755 = vmatpush1.bf16.msra.mxu0 0
        %756 = vmatprep.subr.bf16.mxu0 0
        %757 = vmatpush1.bf16.msra.mxu0 0
        %758 = vmatprep.mubr.bf16.mxu0 0
        %759 = vmatmul.mubr.bf16.gmra.mrb[0].mxu0 %v657
        %v760 = vpop.f32.mrb[0].mxu0
        %v761 = vadd.f32 0.0, %v760
        %v762 = vpop.f32.mrb[0].mxu0
        %v763 = vpop.f32.mrb[0].mxu0
        %v764 = vadd.f32 0.0, %v763
        %v765 = vpop.f32.mrb[0].mxu0
        %766 = vmatprep.mubr.bf16.mxu0 0
        %767 = vmatmul.mubr.bf16.gmra.mrb[0].mxu0 %v658
        %v768 = vpop.f32.mrb[0].mxu0
        %v769 = vadd.f32 0.0, %v768
        %v770 = vpop.f32.mrb[0].mxu0
        %v771 = vpop.f32.mrb[0].mxu0
        %v772 = vadd.f32 0.0, %v771
        %v773 = vpop.f32.mrb[0].mxu0
        %774 = vmatprep.mubr.bf16.mxu0 0
        %775 = vmatmul.mubr.bf16.gmra.mrb[0].mxu0 %v659
        %v776 = vpop.f32.mrb[0].mxu0
        %v777 = vadd.f32 0.0, %v776
        %v778 = vpop.f32.mrb[0].mxu0
        %v779 = vpop.f32.mrb[0].mxu0
        %v780 = vadd.f32 0.0, %v779
        %v781 = vpop.f32.mrb[0].mxu0
        %782 = vmatprep.mubr.bf16.mxu0 0
        %783 = vmatmul.mubr.bf16.gmra.mrb[0].mxu0 %v660
        %v784 = vpop.f32.mrb[0].mxu0
        %v785 = vadd.f32 0.0, %v784
        %v786 = vpop.f32.mrb[0].mxu0
        %v787 = vpop.f32.mrb[0].mxu0
        %v788 = vadd.f32 0.0, %v787
        %v789 = vpop.f32.mrb[0].mxu0
        %790 = vdwg.mxu0
        %v807 = vunpack.c.l.b16 %v592
        %v808 = vunpack.c.l.b16 %v593
        %v809 = vunpack.c.l.b16 %v594
        %v810 = vunpack.c.l.b16 %v595
        %v811 = vunpack.c.l.b16 %v596
        %v812 = vunpack.c.l.b16 %v597
        %v813 = vunpack.c.l.b16 %v598
        %v814 = vunpack.c.l.b16 %v599
        %v815 = vunpack.c.l.b16 %v600
        %v816 = vunpack.c.l.b16 %v601
        %v817 = vunpack.c.l.b16 %v602
        %v818 = vunpack.c.l.b16 %v603
        %v819 = vunpack.c.l.b16 %v604
        %v820 = vunpack.c.l.b16 %v605
        %v821 = vunpack.c.l.b16 %v606
        %v822 = vunpack.c.l.b16 %v607
        %v823 = vpack.c.b16 %v808, %v807
        %v824 = vpack.c.b16 %v810, %v809
        %v825 = vpack.c.b16 %v812, %v811
        %v826 = vpack.c.b16 %v814, %v813
        %v827 = vpack.c.b16 %v816, %v815
        %v828 = vpack.c.b16 %v818, %v817
        %v829 = vpack.c.b16 %v820, %v819
        %v830 = vpack.c.b16 %v822, %v821
        %839 = vmatprep.subr.bf16.mxu0 0
        %840 = vmatpush1.bf16.msra.mxu0 %v823
        %841 = vmatprep.subr.bf16.mxu0 0
        %842 = vmatpush1.bf16.msra.mxu0 %v824
        %843 = vmatprep.subr.bf16.mxu0 0
        %844 = vmatpush1.bf16.msra.mxu0 %v825
        %845 = vmatprep.subr.bf16.mxu0 0
        %846 = vmatpush1.bf16.msra.mxu0 %v826
        %847 = vmatprep.subr.bf16.mxu0 0
        %848 = vmatpush1.bf16.msra.mxu0 %v827
        %849 = vmatprep.subr.bf16.mxu0 0
        %850 = vmatpush1.bf16.msra.mxu0 %v828
        %851 = vmatprep.subr.bf16.mxu0 0
        %852 = vmatpush1.bf16.msra.mxu0 %v829
        %853 = vmatprep.subr.bf16.mxu0 0
        %854 = vmatpush1.bf16.msra.mxu0 %v830
        %855 = vmatprep.subr.bf16.mxu0 0
        %856 = vmatpush1.bf16.msra.mxu0 0
        %857 = vmatprep.subr.bf16.mxu0 0
        %858 = vmatpush1.bf16.msra.mxu0 0
        %859 = vmatprep.subr.bf16.mxu0 0
        %860 = vmatpush1.bf16.msra.mxu0 0
        %861 = vmatprep.subr.bf16.mxu0 0
        %862 = vmatpush1.bf16.msra.mxu0 0
        %863 = vmatprep.subr.bf16.mxu0 0
        %864 = vmatpush1.bf16.msra.mxu0 0
        %865 = vmatprep.subr.bf16.mxu0 0
        %866 = vmatpush1.bf16.msra.mxu0 0
        %867 = vmatprep.subr.bf16.mxu0 0
        %868 = vmatpush1.bf16.msra.mxu0 0
        %869 = vmatprep.subr.bf16.mxu0 0
        %870 = vmatpush1.bf16.msra.mxu0 0
        %871 = vmatprep.mubr.bf16.mxu0 0
        %872 = vmatmul.mubr.bf16.gmra.mrb[0].mxu0 %v588
        %v873 = vpop.f32.mrb[0].mxu0
        %v874 = vadd.f32 %v761, %v873
        %v875 = vpop.f32.mrb[0].mxu0
        %v876 = vpop.f32.mrb[0].mxu0
        %v877 = vadd.f32 %v764, %v876
        %v878 = vpop.f32.mrb[0].mxu0
        %879 = vmatprep.mubr.bf16.mxu0 0
        %880 = vmatmul.mubr.bf16.gmra.mrb[0].mxu0 %v589
        %v881 = vpop.f32.mrb[0].mxu0
        %v882 = vadd.f32 %v769, %v881
        %v883 = vpop.f32.mrb[0].mxu0
        %v884 = vpop.f32.mrb[0].mxu0
        %v885 = vadd.f32 %v772, %v884
        %v886 = vpop.f32.mrb[0].mxu0
        %887 = vmatprep.mubr.bf16.mxu0 0
        %888 = vmatmul.mubr.bf16.gmra.mrb[0].mxu0 %v590
        %v889 = vpop.f32.mrb[0].mxu0
        %v890 = vadd.f32 %v777, %v889
        %v891 = vpop.f32.mrb[0].mxu0
        %v892 = vpop.f32.mrb[0].mxu0
        %v893 = vadd.f32 %v780, %v892
        %v894 = vpop.f32.mrb[0].mxu0
        %895 = vmatprep.mubr.bf16.mxu0 0
        %896 = vmatmul.mubr.bf16.gmra.mrb[0].mxu0 %v591
        %v897 = vpop.f32.mrb[0].mxu0
        %v898 = vadd.f32 %v785, %v897
        %v899 = vpop.f32.mrb[0].mxu0
        %v900 = vpop.f32.mrb[0].mxu0
        %v901 = vadd.f32 %v788, %v900
        %v902 = vpop.f32.mrb[0].mxu0
        %903 = vdwg.mxu0
        %vm904 = vcmask 1045504
        %v905 = vrot.slane %v568, 2
        %v906 = vrot.slane %v569, 2
        %v907 = vsel %vm904, %v905, %v906
        %v908 = vrot.slane %v570, 2
        %v909 = vrot.slane %v571, 2
        %v910 = vsel %vm904, %v908, %v909
        %v911 = vrot.slane %v572, 2
        %v912 = vrot.slane %v573, 2
        %v913 = vsel %vm904, %v911, %v912
        %v914 = vrot.slane %v574, 2
        %v915 = vrot.slane %v575, 2
        %v916 = vsel %vm904, %v914, %v915
        %v917 = vrot.slane %v576, 2
        %v918 = vrot.slane %v577, 2
        %v919 = vsel %vm904, %v917, %v918
        %v920 = vrot.slane %v578, 2
        %v921 = vrot.slane %v579, 2
        %v922 = vsel %vm904, %v920, %v921
        %v923 = vrot.slane %v580, 2
        %v924 = vrot.slane %v581, 2
        %v925 = vsel %vm904, %v923, %v924
        %v926 = vrot.slane %v582, 2
        %v927 = vrot.slane %v583, 2
        %v928 = vsel %vm904, %v926, %v927
        %v937 = vpack.c.bf16 %v910, %v907
        %v938 = vpack.c.bf16 %v916, %v913
        %v939 = vpack.c.bf16 %v922, %v919
        %v940 = vpack.c.bf16 %v928, %v925
        %s941 = scalar_lea.vmem %s3, 128
        %v942 = vld [vmem:[%s941] sm:$0xf]
        %v943 = vld [vmem:[%s941 + $0x4] sm:$0xf]
        %v944 = vld [vmem:[%s941 + $0x8] sm:$0xf]
        %v945 = vld [vmem:[%s941 + $0xc] sm:$0xf]
        %v946 = vld [vmem:[%s941 + $0x10] sm:$0xf]
        %v947 = vld [vmem:[%s941 + $0x14] sm:$0xf]
        %v948 = vld [vmem:[%s941 + $0x18] sm:$0xf]
        %v949 = vld [vmem:[%s941 + $0x1c] sm:$0xf]
        %v950 = vld [vmem:[%s941 + $0x20] sm:$0xf]
        %v951 = vld [vmem:[%s941 + $0x24] sm:$0xf]
        %v952 = vld [vmem:[%s941 + $0x28] sm:$0xf]
        %v953 = vld [vmem:[%s941 + $0x2c] sm:$0xf]
        %v954 = vld [vmem:[%s941 + $0x30] sm:$0xf]
        %v955 = vld [vmem:[%s941 + $0x34] sm:$0xf]
        %v956 = vld [vmem:[%s941 + $0x38] sm:$0xf]
        %v957 = vld [vmem:[%s941 + $0x3c] sm:$0xf]
        %v974 = vunpack.c.l.b16 %v942
        %v975 = vunpack.c.l.b16 %v943
        %v976 = vunpack.c.l.b16 %v944
        %v977 = vunpack.c.l.b16 %v945
        %v978 = vunpack.c.l.b16 %v946
        %v979 = vunpack.c.l.b16 %v947
        %v980 = vunpack.c.l.b16 %v948
        %v981 = vunpack.c.l.b16 %v949
        %v982 = vunpack.c.l.b16 %v950
        %v983 = vunpack.c.l.b16 %v951
        %v984 = vunpack.c.l.b16 %v952
        %v985 = vunpack.c.l.b16 %v953
        %v986 = vunpack.c.l.b16 %v954
        %v987 = vunpack.c.l.b16 %v955
        %v988 = vunpack.c.l.b16 %v956
        %v989 = vunpack.c.l.b16 %v957
        %v990 = vpack.c.b16 %v975, %v974
        %v991 = vpack.c.b16 %v977, %v976
        %v992 = vpack.c.b16 %v979, %v978
        %v993 = vpack.c.b16 %v981, %v980
        %v994 = vpack.c.b16 %v983, %v982
        %v995 = vpack.c.b16 %v985, %v984
        %v996 = vpack.c.b16 %v987, %v986
        %v997 = vpack.c.b16 %v989, %v988
        %1006 = vmatprep.subr.bf16.mxu0 0
        %1007 = vmatpush1.bf16.msra.mxu0 %v990
        %1008 = vmatprep.subr.bf16.mxu0 0
        %1009 = vmatpush1.bf16.msra.mxu0 %v991
        %1010 = vmatprep.subr.bf16.mxu0 0
        %1011 = vmatpush1.bf16.msra.mxu0 %v992
        %1012 = vmatprep.subr.bf16.mxu0 0
        %1013 = vmatpush1.bf16.msra.mxu0 %v993
        %1014 = vmatprep.subr.bf16.mxu0 0
        %1015 = vmatpush1.bf16.msra.mxu0 %v994
        %1016 = vmatprep.subr.bf16.mxu0 0
        %1017 = vmatpush1.bf16.msra.mxu0 %v995
        %1018 = vmatprep.subr.bf16.mxu0 0
        %1019 = vmatpush1.bf16.msra.mxu0 %v996
        %1020 = vmatprep.subr.bf16.mxu0 0
        %1021 = vmatpush1.bf16.msra.mxu0 %v997
        %1022 = vmatprep.subr.bf16.mxu0 0
        %1023 = vmatpush1.bf16.msra.mxu0 0
        %1024 = vmatprep.subr.bf16.mxu0 0
        %1025 = vmatpush1.bf16.msra.mxu0 0
        %1026 = vmatprep.subr.bf16.mxu0 0
        %1027 = vmatpush1.bf16.msra.mxu0 0
        %1028 = vmatprep.subr.bf16.mxu0 0
        %1029 = vmatpush1.bf16.msra.mxu0 0
        %1030 = vmatprep.subr.bf16.mxu0 0
        %1031 = vmatpush1.bf16.msra.mxu0 0
        %1032 = vmatprep.subr.bf16.mxu0 0
        %1033 = vmatpush1.bf16.msra.mxu0 0
        %1034 = vmatprep.subr.bf16.mxu0 0
        %1035 = vmatpush1.bf16.msra.mxu0 0
        %1036 = vmatprep.subr.bf16.mxu0 0
        %1037 = vmatpush1.bf16.msra.mxu0 0
        %1038 = vmatprep.mubr.bf16.mxu0 0
        %1039 = vmatmul.mubr.bf16.gmra.mrb[0].mxu0 %v937
        %v1040 = vpop.f32.mrb[0].mxu0
        %v1041 = vadd.f32 0.0, %v1040
        %v1042 = vpop.f32.mrb[0].mxu0
        %v1043 = vpop.f32.mrb[0].mxu0
        %v1044 = vadd.f32 0.0, %v1043
        %v1045 = vpop.f32.mrb[0].mxu0
        %1046 = vmatprep.mubr.bf16.mxu0 0
        %1047 = vmatmul.mubr.bf16.gmra.mrb[0].mxu0 %v938
        %v1048 = vpop.f32.mrb[0].mxu0
        %v1049 = vadd.f32 0.0, %v1048
        %v1050 = vpop.f32.mrb[0].mxu0
        %v1051 = vpop.f32.mrb[0].mxu0
        %v1052 = vadd.f32 0.0, %v1051
        %v1053 = vpop.f32.mrb[0].mxu0
        %1054 = vmatprep.mubr.bf16.mxu0 0
        %1055 = vmatmul.mubr.bf16.gmra.mrb[0].mxu0 %v939
        %v1056 = vpop.f32.mrb[0].mxu0
        %v1057 = vadd.f32 0.0, %v1056
        %v1058 = vpop.f32.mrb[0].mxu0
        %v1059 = vpop.f32.mrb[0].mxu0
        %v1060 = vadd.f32 0.0, %v1059
        %v1061 = vpop.f32.mrb[0].mxu0
        %1062 = vmatprep.mubr.bf16.mxu0 0
        %1063 = vmatmul.mubr.bf16.gmra.mrb[0].mxu0 %v940
        %v1064 = vpop.f32.mrb[0].mxu0
        %v1065 = vadd.f32 0.0, %v1064
        %v1066 = vpop.f32.mrb[0].mxu0
        %v1067 = vpop.f32.mrb[0].mxu0
        %v1068 = vadd.f32 0.0, %v1067
        %v1069 = vpop.f32.mrb[0].mxu0
        %1070 = vdwg.mxu0
        %v1071 = vadd.f32 %v874, %v1041
        %v1072 = vadd.f32 %v877, %v1044
        %v1073 = vadd.f32 %v882, %v1049
        %v1074 = vadd.f32 %v885, %v1052
        %v1075 = vadd.f32 %v890, %v1057
        %v1076 = vadd.f32 %v893, %v1060
        %v1077 = vadd.f32 %v898, %v1065
        %v1078 = vadd.f32 %v901, %v1068
        %v1079 = vpack.c.bf16 %v572, %v570
        %v1080 = vpack.c.bf16 %v576, %v574
        %v1081 = vpack.c.bf16 %v580, %v578
        %v1082 = vpack.c.bf16 %v584, %v582
        %s1083 = scalar_lea.vmem %s3, 192
        %v1084 = vld [vmem:[%s1083] sm:$0xf]
        %v1085 = vld [vmem:[%s1083 + $0x4] sm:$0xf]
        %v1086 = vld [vmem:[%s1083 + $0x8] sm:$0xf]
        %v1087 = vld [vmem:[%s1083 + $0xc] sm:$0xf]
        %v1088 = vld [vmem:[%s1083 + $0x10] sm:$0xf]
        %v1089 = vld [vmem:[%s1083 + $0x14] sm:$0xf]
        %v1090 = vld [vmem:[%s1083 + $0x18] sm:$0xf]
        %v1091 = vld [vmem:[%s1083 + $0x1c] sm:$0xf]
        %v1092 = vld [vmem:[%s1083 + $0x20] sm:$0xf]
        %v1093 = vld [vmem:[%s1083 + $0x24] sm:$0xf]
        %v1094 = vld [vmem:[%s1083 + $0x28] sm:$0xf]
        %v1095 = vld [vmem:[%s1083 + $0x2c] sm:$0xf]
        %v1096 = vld [vmem:[%s1083 + $0x30] sm:$0xf]
        %v1097 = vld [vmem:[%s1083 + $0x34] sm:$0xf]
        %v1098 = vld [vmem:[%s1083 + $0x38] sm:$0xf]
        %v1099 = vld [vmem:[%s1083 + $0x3c] sm:$0xf]
        %v1116 = vunpack.c.l.b16 %v1084
        %v1117 = vunpack.c.l.b16 %v1085
        %v1118 = vunpack.c.l.b16 %v1086
        %v1119 = vunpack.c.l.b16 %v1087
        %v1120 = vunpack.c.l.b16 %v1088
        %v1121 = vunpack.c.l.b16 %v1089
        %v1122 = vunpack.c.l.b16 %v1090
        %v1123 = vunpack.c.l.b16 %v1091
        %v1124 = vunpack.c.l.b16 %v1092
        %v1125 = vunpack.c.l.b16 %v1093
        %v1126 = vunpack.c.l.b16 %v1094
        %v1127 = vunpack.c.l.b16 %v1095
        %v1128 = vunpack.c.l.b16 %v1096
        %v1129 = vunpack.c.l.b16 %v1097
        %v1130 = vunpack.c.l.b16 %v1098
        %v1131 = vunpack.c.l.b16 %v1099
        %v1132 = vpack.c.b16 %v1117, %v1116
        %v1133 = vpack.c.b16 %v1119, %v1118
        %v1134 = vpack.c.b16 %v1121, %v1120
        %v1135 = vpack.c.b16 %v1123, %v1122
        %v1136 = vpack.c.b16 %v1125, %v1124
        %v1137 = vpack.c.b16 %v1127, %v1126
        %v1138 = vpack.c.b16 %v1129, %v1128
        %v1139 = vpack.c.b16 %v1131, %v1130
        %1148 = vmatprep.subr.bf16.mxu0 0
        %1149 = vmatpush1.bf16.msra.mxu0 %v1132
        %1150 = vmatprep.subr.bf16.mxu0 0
        %1151 = vmatpush1.bf16.msra.mxu0 %v1133
        %1152 = vmatprep.subr.bf16.mxu0 0
        %1153 = vmatpush1.bf16.msra.mxu0 %v1134
        %1154 = vmatprep.subr.bf16.mxu0 0
        %1155 = vmatpush1.bf16.msra.mxu0 %v1135
        %1156 = vmatprep.subr.bf16.mxu0 0
        %1157 = vmatpush1.bf16.msra.mxu0 %v1136
        %1158 = vmatprep.subr.bf16.mxu0 0
        %1159 = vmatpush1.bf16.msra.mxu0 %v1137
        %1160 = vmatprep.subr.bf16.mxu0 0
        %1161 = vmatpush1.bf16.msra.mxu0 %v1138
        %1162 = vmatprep.subr.bf16.mxu0 0
        %1163 = vmatpush1.bf16.msra.mxu0 %v1139
        %1164 = vmatprep.subr.bf16.mxu0 0
        %1165 = vmatpush1.bf16.msra.mxu0 0
        %1166 = vmatprep.subr.bf16.mxu0 0
        %1167 = vmatpush1.bf16.msra.mxu0 0
        %1168 = vmatprep.subr.bf16.mxu0 0
        %1169 = vmatpush1.bf16.msra.mxu0 0
        %1170 = vmatprep.subr.bf16.mxu0 0
        %1171 = vmatpush1.bf16.msra.mxu0 0
        %1172 = vmatprep.subr.bf16.mxu0 0
        %1173 = vmatpush1.bf16.msra.mxu0 0
        %1174 = vmatprep.subr.bf16.mxu0 0
        %1175 = vmatpush1.bf16.msra.mxu0 0
        %1176 = vmatprep.subr.bf16.mxu0 0
        %1177 = vmatpush1.bf16.msra.mxu0 0
        %1178 = vmatprep.subr.bf16.mxu0 0
        %1179 = vmatpush1.bf16.msra.mxu0 0
        %1180 = vmatprep.mubr.bf16.mxu0 0
        %1181 = vmatmul.mubr.bf16.gmra.mrb[0].mxu0 %v1079
        %v1182 = vpop.f32.mrb[0].mxu0
        %v1183 = vadd.f32 0.0, %v1182
        %v1184 = vpop.f32.mrb[0].mxu0
        %v1185 = vpop.f32.mrb[0].mxu0
        %v1186 = vadd.f32 0.0, %v1185
        %v1187 = vpop.f32.mrb[0].mxu0
        %1188 = vmatprep.mubr.bf16.mxu0 0
        %1189 = vmatmul.mubr.bf16.gmra.mrb[0].mxu0 %v1080
        %v1190 = vpop.f32.mrb[0].mxu0
        %v1191 = vadd.f32 0.0, %v1190
        %v1192 = vpop.f32.mrb[0].mxu0
        %v1193 = vpop.f32.mrb[0].mxu0
        %v1194 = vadd.f32 0.0, %v1193
        %v1195 = vpop.f32.mrb[0].mxu0
        %1196 = vmatprep.mubr.bf16.mxu0 0
        %1197 = vmatmul.mubr.bf16.gmra.mrb[0].mxu0 %v1081
        %v1198 = vpop.f32.mrb[0].mxu0
        %v1199 = vadd.f32 0.0, %v1198
        %v1200 = vpop.f32.mrb[0].mxu0
        %v1201 = vpop.f32.mrb[0].mxu0
        %v1202 = vadd.f32 0.0, %v1201
        %v1203 = vpop.f32.mrb[0].mxu0
        %1204 = vmatprep.mubr.bf16.mxu0 0
        %1205 = vmatmul.mubr.bf16.gmra.mrb[0].mxu0 %v1082
        %v1206 = vpop.f32.mrb[0].mxu0
        %v1207 = vadd.f32 0.0, %v1206
        %v1208 = vpop.f32.mrb[0].mxu0
        %v1209 = vpop.f32.mrb[0].mxu0
        %v1210 = vadd.f32 0.0, %v1209
        %v1211 = vpop.f32.mrb[0].mxu0
        %1212 = vdwg.mxu0
        %v1213 = vadd.f32 %v1071, %v1183
        %v1214 = vadd.f32 %v1072, %v1186
        %v1215 = vadd.f32 %v1073, %v1191
        %v1216 = vadd.f32 %v1074, %v1194
        %v1217 = vadd.f32 %v1075, %v1199
        %v1218 = vadd.f32 %v1076, %v1202
        %v1219 = vadd.f32 %v1077, %v1207
        %v1220 = vadd.f32 %v1078, %v1210
        %v1223 = vrot.slane %v584, 1
        %v1224 = vrot.slane %v585, 1
        %v1225 = vsel %vm624, %v1223, %v1224
        %v1227 = vpack.c.bf16 %v633, %v630
        %v1228 = vpack.c.bf16 %v639, %v636
        %v1229 = vpack.c.bf16 %v645, %v642
        %v1230 = vpack.c.bf16 %v1225, %v648
        %s1231 = scalar_lea.vmem %s3, 256
        %v1232 = vld [vmem:[%s1231] sm:$0xf]
        %v1233 = vld [vmem:[%s1231 + $0x4] sm:$0xf]
        %v1234 = vld [vmem:[%s1231 + $0x8] sm:$0xf]
        %v1235 = vld [vmem:[%s1231 + $0xc] sm:$0xf]
        %v1236 = vld [vmem:[%s1231 + $0x10] sm:$0xf]
        %v1237 = vld [vmem:[%s1231 + $0x14] sm:$0xf]
        %v1238 = vld [vmem:[%s1231 + $0x18] sm:$0xf]
        %v1239 = vld [vmem:[%s1231 + $0x1c] sm:$0xf]
        %v1240 = vld [vmem:[%s1231 + $0x20] sm:$0xf]
        %v1241 = vld [vmem:[%s1231 + $0x24] sm:$0xf]
        %v1242 = vld [vmem:[%s1231 + $0x28] sm:$0xf]
        %v1243 = vld [vmem:[%s1231 + $0x2c] sm:$0xf]
        %v1244 = vld [vmem:[%s1231 + $0x30] sm:$0xf]
        %v1245 = vld [vmem:[%s1231 + $0x34] sm:$0xf]
        %v1246 = vld [vmem:[%s1231 + $0x38] sm:$0xf]
        %v1247 = vld [vmem:[%s1231 + $0x3c] sm:$0xf]
        %v1264 = vunpack.c.l.b16 %v1232
        %v1265 = vunpack.c.l.b16 %v1233
        %v1266 = vunpack.c.l.b16 %v1234
        %v1267 = vunpack.c.l.b16 %v1235
        %v1268 = vunpack.c.l.b16 %v1236
        %v1269 = vunpack.c.l.b16 %v1237
        %v1270 = vunpack.c.l.b16 %v1238
        %v1271 = vunpack.c.l.b16 %v1239
        %v1272 = vunpack.c.l.b16 %v1240
        %v1273 = vunpack.c.l.b16 %v1241
        %v1274 = vunpack.c.l.b16 %v1242
        %v1275 = vunpack.c.l.b16 %v1243
        %v1276 = vunpack.c.l.b16 %v1244
        %v1277 = vunpack.c.l.b16 %v1245
        %v1278 = vunpack.c.l.b16 %v1246
        %v1279 = vunpack.c.l.b16 %v1247
        %v1280 = vpack.c.b16 %v1265, %v1264
        %v1281 = vpack.c.b16 %v1267, %v1266
        %v1282 = vpack.c.b16 %v1269, %v1268
        %v1283 = vpack.c.b16 %v1271, %v1270
        %v1284 = vpack.c.b16 %v1273, %v1272
        %v1285 = vpack.c.b16 %v1275, %v1274
        %v1286 = vpack.c.b16 %v1277, %v1276
        %v1287 = vpack.c.b16 %v1279, %v1278
        %1296 = vmatprep.subr.bf16.mxu0 0
        %1297 = vmatpush1.bf16.msra.mxu0 %v1280
        %1298 = vmatprep.subr.bf16.mxu0 0
        %1299 = vmatpush1.bf16.msra.mxu0 %v1281
        %1300 = vmatprep.subr.bf16.mxu0 0
        %1301 = vmatpush1.bf16.msra.mxu0 %v1282
        %1302 = vmatprep.subr.bf16.mxu0 0
        %1303 = vmatpush1.bf16.msra.mxu0 %v1283
        %1304 = vmatprep.subr.bf16.mxu0 0
        %1305 = vmatpush1.bf16.msra.mxu0 %v1284
        %1306 = vmatprep.subr.bf16.mxu0 0
        %1307 = vmatpush1.bf16.msra.mxu0 %v1285
        %1308 = vmatprep.subr.bf16.mxu0 0
        %1309 = vmatpush1.bf16.msra.mxu0 %v1286
        %1310 = vmatprep.subr.bf16.mxu0 0
        %1311 = vmatpush1.bf16.msra.mxu0 %v1287
        %1312 = vmatprep.subr.bf16.mxu0 0
        %1313 = vmatpush1.bf16.msra.mxu0 0
        %1314 = vmatprep.subr.bf16.mxu0 0
        %1315 = vmatpush1.bf16.msra.mxu0 0
        %1316 = vmatprep.subr.bf16.mxu0 0
        %1317 = vmatpush1.bf16.msra.mxu0 0
        %1318 = vmatprep.subr.bf16.mxu0 0
        %1319 = vmatpush1.bf16.msra.mxu0 0
        %1320 = vmatprep.subr.bf16.mxu0 0
        %1321 = vmatpush1.bf16.msra.mxu0 0
        %1322 = vmatprep.subr.bf16.mxu0 0
        %1323 = vmatpush1.bf16.msra.mxu0 0
        %1324 = vmatprep.subr.bf16.mxu0 0
        %1325 = vmatpush1.bf16.msra.mxu0 0
        %1326 = vmatprep.subr.bf16.mxu0 0
        %1327 = vmatpush1.bf16.msra.mxu0 0
        %1328 = vmatprep.mubr.bf16.mxu0 0
        %1329 = vmatmul.mubr.bf16.gmra.mrb[0].mxu0 %v1227
        %v1330 = vpop.f32.mrb[0].mxu0
        %v1331 = vadd.f32 0.0, %v1330
        %v1332 = vpop.f32.mrb[0].mxu0
        %v1333 = vpop.f32.mrb[0].mxu0
        %v1334 = vadd.f32 0.0, %v1333
        %v1335 = vpop.f32.mrb[0].mxu0
        %1336 = vmatprep.mubr.bf16.mxu0 0
        %1337 = vmatmul.mubr.bf16.gmra.mrb[0].mxu0 %v1228
        %v1338 = vpop.f32.mrb[0].mxu0
        %v1339 = vadd.f32 0.0, %v1338
        %v1340 = vpop.f32.mrb[0].mxu0
        %v1341 = vpop.f32.mrb[0].mxu0
        %v1342 = vadd.f32 0.0, %v1341
        %v1343 = vpop.f32.mrb[0].mxu0
        %1344 = vmatprep.mubr.bf16.mxu0 0
        %1345 = vmatmul.mubr.bf16.gmra.mrb[0].mxu0 %v1229
        %v1346 = vpop.f32.mrb[0].mxu0
        %v1347 = vadd.f32 0.0, %v1346
        %v1348 = vpop.f32.mrb[0].mxu0
        %v1349 = vpop.f32.mrb[0].mxu0
        %v1350 = vadd.f32 0.0, %v1349
        %v1351 = vpop.f32.mrb[0].mxu0
        %1352 = vmatprep.mubr.bf16.mxu0 0
        %1353 = vmatmul.mubr.bf16.gmra.mrb[0].mxu0 %v1230
        %v1354 = vpop.f32.mrb[0].mxu0
        %v1355 = vadd.f32 0.0, %v1354
        %v1356 = vpop.f32.mrb[0].mxu0
        %v1357 = vpop.f32.mrb[0].mxu0
        %v1358 = vadd.f32 0.0, %v1357
        %v1359 = vpop.f32.mrb[0].mxu0
        %1360 = vdwg.mxu0
        %v1361 = vadd.f32 %v1213, %v1331
        %v1362 = vadd.f32 %v1214, %v1334
        %v1363 = vadd.f32 %v1215, %v1339
        %v1364 = vadd.f32 %v1216, %v1342
        %v1365 = vadd.f32 %v1217, %v1347
        %v1366 = vadd.f32 %v1218, %v1350
        %v1367 = vadd.f32 %v1219, %v1355
        %v1368 = vadd.f32 %v1220, %v1358
        %v1369 = vrot.slane %v584, 2
        %v1370 = vrot.slane %v585, 2
        %v1371 = vsel %vm904, %v1369, %v1370
        %v1373 = vpack.c.bf16 %v913, %v910
        %v1374 = vpack.c.bf16 %v919, %v916
        %v1375 = vpack.c.bf16 %v925, %v922
        %v1376 = vpack.c.bf16 %v1371, %v928
        %s1377 = scalar_lea.vmem %s3, 320
        %v1378 = vld [vmem:[%s1377] sm:$0xf]
        %v1379 = vld [vmem:[%s1377 + $0x4] sm:$0xf]
        %v1380 = vld [vmem:[%s1377 + $0x8] sm:$0xf]
        %v1381 = vld [vmem:[%s1377 + $0xc] sm:$0xf]
        %v1382 = vld [vmem:[%s1377 + $0x10] sm:$0xf]
        %v1383 = vld [vmem:[%s1377 + $0x14] sm:$0xf]
        %v1384 = vld [vmem:[%s1377 + $0x18] sm:$0xf]
        %v1385 = vld [vmem:[%s1377 + $0x1c] sm:$0xf]
        %v1386 = vld [vmem:[%s1377 + $0x20] sm:$0xf]
        %v1387 = vld [vmem:[%s1377 + $0x24] sm:$0xf]
        %v1388 = vld [vmem:[%s1377 + $0x28] sm:$0xf]
        %v1389 = vld [vmem:[%s1377 + $0x2c] sm:$0xf]
        %v1390 = vld [vmem:[%s1377 + $0x30] sm:$0xf]
        %v1391 = vld [vmem:[%s1377 + $0x34] sm:$0xf]
        %v1392 = vld [vmem:[%s1377 + $0x38] sm:$0xf]
        %v1393 = vld [vmem:[%s1377 + $0x3c] sm:$0xf]
        %v1410 = vunpack.c.l.b16 %v1378
        %v1411 = vunpack.c.l.b16 %v1379
        %v1412 = vunpack.c.l.b16 %v1380
        %v1413 = vunpack.c.l.b16 %v1381
        %v1414 = vunpack.c.l.b16 %v1382
        %v1415 = vunpack.c.l.b16 %v1383
        %v1416 = vunpack.c.l.b16 %v1384
        %v1417 = vunpack.c.l.b16 %v1385
        %v1418 = vunpack.c.l.b16 %v1386
        %v1419 = vunpack.c.l.b16 %v1387
        %v1420 = vunpack.c.l.b16 %v1388
        %v1421 = vunpack.c.l.b16 %v1389
        %v1422 = vunpack.c.l.b16 %v1390
        %v1423 = vunpack.c.l.b16 %v1391
        %v1424 = vunpack.c.l.b16 %v1392
        %v1425 = vunpack.c.l.b16 %v1393
        %v1426 = vpack.c.b16 %v1411, %v1410
        %v1427 = vpack.c.b16 %v1413, %v1412
        %v1428 = vpack.c.b16 %v1415, %v1414
        %v1429 = vpack.c.b16 %v1417, %v1416
        %v1430 = vpack.c.b16 %v1419, %v1418
        %v1431 = vpack.c.b16 %v1421, %v1420
        %v1432 = vpack.c.b16 %v1423, %v1422
        %v1433 = vpack.c.b16 %v1425, %v1424
        %1442 = vmatprep.subr.bf16.mxu0 0
        %1443 = vmatpush1.bf16.msra.mxu0 %v1426
        %1444 = vmatprep.subr.bf16.mxu0 0
        %1445 = vmatpush1.bf16.msra.mxu0 %v1427
        %1446 = vmatprep.subr.bf16.mxu0 0
        %1447 = vmatpush1.bf16.msra.mxu0 %v1428
        %1448 = vmatprep.subr.bf16.mxu0 0
        %1449 = vmatpush1.bf16.msra.mxu0 %v1429
        %1450 = vmatprep.subr.bf16.mxu0 0
        %1451 = vmatpush1.bf16.msra.mxu0 %v1430
        %1452 = vmatprep.subr.bf16.mxu0 0
        %1453 = vmatpush1.bf16.msra.mxu0 %v1431
        %1454 = vmatprep.subr.bf16.mxu0 0
        %1455 = vmatpush1.bf16.msra.mxu0 %v1432
        %1456 = vmatprep.subr.bf16.mxu0 0
        %1457 = vmatpush1.bf16.msra.mxu0 %v1433
        %1458 = vmatprep.subr.bf16.mxu0 0
        %1459 = vmatpush1.bf16.msra.mxu0 0
        %1460 = vmatprep.subr.bf16.mxu0 0
        %1461 = vmatpush1.bf16.msra.mxu0 0
        %1462 = vmatprep.subr.bf16.mxu0 0
        %1463 = vmatpush1.bf16.msra.mxu0 0
        %1464 = vmatprep.subr.bf16.mxu0 0
        %1465 = vmatpush1.bf16.msra.mxu0 0
        %1466 = vmatprep.subr.bf16.mxu0 0
        %1467 = vmatpush1.bf16.msra.mxu0 0
        %1468 = vmatprep.subr.bf16.mxu0 0
        %1469 = vmatpush1.bf16.msra.mxu0 0
        %1470 = vmatprep.subr.bf16.mxu0 0
        %1471 = vmatpush1.bf16.msra.mxu0 0
        %1472 = vmatprep.subr.bf16.mxu0 0
        %1473 = vmatpush1.bf16.msra.mxu0 0
        %1474 = vmatprep.mubr.bf16.mxu0 0
        %1475 = vmatmul.mubr.bf16.gmra.mrb[0].mxu0 %v1373
        %v1476 = vpop.f32.mrb[0].mxu0
        %v1477 = vadd.f32 0.0, %v1476
        %v1478 = vpop.f32.mrb[0].mxu0
        %v1479 = vpop.f32.mrb[0].mxu0
        %v1480 = vadd.f32 0.0, %v1479
        %v1481 = vpop.f32.mrb[0].mxu0
        %1482 = vmatprep.mubr.bf16.mxu0 0
        %1483 = vmatmul.mubr.bf16.gmra.mrb[0].mxu0 %v1374
        %v1484 = vpop.f32.mrb[0].mxu0
        %v1485 = vadd.f32 0.0, %v1484
        %v1486 = vpop.f32.mrb[0].mxu0
        %v1487 = vpop.f32.mrb[0].mxu0
        %v1488 = vadd.f32 0.0, %v1487
        %v1489 = vpop.f32.mrb[0].mxu0
        %1490 = vmatprep.mubr.bf16.mxu0 0
        %1491 = vmatmul.mubr.bf16.gmra.mrb[0].mxu0 %v1375
        %v1492 = vpop.f32.mrb[0].mxu0
        %v1493 = vadd.f32 0.0, %v1492
        %v1494 = vpop.f32.mrb[0].mxu0
        %v1495 = vpop.f32.mrb[0].mxu0
        %v1496 = vadd.f32 0.0, %v1495
        %v1497 = vpop.f32.mrb[0].mxu0
        %1498 = vmatprep.mubr.bf16.mxu0 0
        %1499 = vmatmul.mubr.bf16.gmra.mrb[0].mxu0 %v1376
        %v1500 = vpop.f32.mrb[0].mxu0
        %v1501 = vadd.f32 0.0, %v1500
        %v1502 = vpop.f32.mrb[0].mxu0
        %v1503 = vpop.f32.mrb[0].mxu0
        %v1504 = vadd.f32 0.0, %v1503
        %v1505 = vpop.f32.mrb[0].mxu0
        %1506 = vdwg.mxu0
        %v1507 = vadd.f32 %v1361, %v1477
        %v1508 = vadd.f32 %v1362, %v1480
        %v1509 = vadd.f32 %v1363, %v1485
        %v1510 = vadd.f32 %v1364, %v1488
        %v1511 = vadd.f32 %v1365, %v1493
        %v1512 = vadd.f32 %v1366, %v1496
        %v1513 = vadd.f32 %v1367, %v1501
        %v1514 = vadd.f32 %v1368, %v1504
        %v1515 = vpack.c.bf16 %v586, %v584
        %s1516 = scalar_lea.vmem %s3, 384
        %v1517 = vld [vmem:[%s1516] sm:$0xf]
        %v1518 = vld [vmem:[%s1516 + $0x4] sm:$0xf]
        %v1519 = vld [vmem:[%s1516 + $0x8] sm:$0xf]
        %v1520 = vld [vmem:[%s1516 + $0xc] sm:$0xf]
        %v1521 = vld [vmem:[%s1516 + $0x10] sm:$0xf]
        %v1522 = vld [vmem:[%s1516 + $0x14] sm:$0xf]
        %v1523 = vld [vmem:[%s1516 + $0x18] sm:$0xf]
        %v1524 = vld [vmem:[%s1516 + $0x1c] sm:$0xf]
        %v1525 = vld [vmem:[%s1516 + $0x20] sm:$0xf]
        %v1526 = vld [vmem:[%s1516 + $0x24] sm:$0xf]
        %v1527 = vld [vmem:[%s1516 + $0x28] sm:$0xf]
        %v1528 = vld [vmem:[%s1516 + $0x2c] sm:$0xf]
        %v1529 = vld [vmem:[%s1516 + $0x30] sm:$0xf]
        %v1530 = vld [vmem:[%s1516 + $0x34] sm:$0xf]
        %v1531 = vld [vmem:[%s1516 + $0x38] sm:$0xf]
        %v1532 = vld [vmem:[%s1516 + $0x3c] sm:$0xf]
        %v1549 = vunpack.c.l.b16 %v1517
        %v1550 = vunpack.c.l.b16 %v1518
        %v1551 = vunpack.c.l.b16 %v1519
        %v1552 = vunpack.c.l.b16 %v1520
        %v1553 = vunpack.c.l.b16 %v1521
        %v1554 = vunpack.c.l.b16 %v1522
        %v1555 = vunpack.c.l.b16 %v1523
        %v1556 = vunpack.c.l.b16 %v1524
        %v1557 = vunpack.c.l.b16 %v1525
        %v1558 = vunpack.c.l.b16 %v1526
        %v1559 = vunpack.c.l.b16 %v1527
        %v1560 = vunpack.c.l.b16 %v1528
        %v1561 = vunpack.c.l.b16 %v1529
        %v1562 = vunpack.c.l.b16 %v1530
        %v1563 = vunpack.c.l.b16 %v1531
        %v1564 = vunpack.c.l.b16 %v1532
        %v1565 = vpack.c.b16 %v1550, %v1549
        %v1566 = vpack.c.b16 %v1552, %v1551
        %v1567 = vpack.c.b16 %v1554, %v1553
        %v1568 = vpack.c.b16 %v1556, %v1555
        %v1569 = vpack.c.b16 %v1558, %v1557
        %v1570 = vpack.c.b16 %v1560, %v1559
        %v1571 = vpack.c.b16 %v1562, %v1561
        %v1572 = vpack.c.b16 %v1564, %v1563
        %1581 = vmatprep.subr.bf16.mxu0 0
        %1582 = vmatpush1.bf16.msra.mxu0 %v1565
        %1583 = vmatprep.subr.bf16.mxu0 0
        %1584 = vmatpush1.bf16.msra.mxu0 %v1566
        %1585 = vmatprep.subr.bf16.mxu0 0
        %1586 = vmatpush1.bf16.msra.mxu0 %v1567
        %1587 = vmatprep.subr.bf16.mxu0 0
        %1588 = vmatpush1.bf16.msra.mxu0 %v1568
        %1589 = vmatprep.subr.bf16.mxu0 0
        %1590 = vmatpush1.bf16.msra.mxu0 %v1569
        %1591 = vmatprep.subr.bf16.mxu0 0
        %1592 = vmatpush1.bf16.msra.mxu0 %v1570
        %1593 = vmatprep.subr.bf16.mxu0 0
        %1594 = vmatpush1.bf16.msra.mxu0 %v1571
        %1595 = vmatprep.subr.bf16.mxu0 0
        %1596 = vmatpush1.bf16.msra.mxu0 %v1572
        %1597 = vmatprep.subr.bf16.mxu0 0
        %1598 = vmatpush1.bf16.msra.mxu0 0
        %1599 = vmatprep.subr.bf16.mxu0 0
        %1600 = vmatpush1.bf16.msra.mxu0 0
        %1601 = vmatprep.subr.bf16.mxu0 0
        %1602 = vmatpush1.bf16.msra.mxu0 0
        %1603 = vmatprep.subr.bf16.mxu0 0
        %1604 = vmatpush1.bf16.msra.mxu0 0
        %1605 = vmatprep.subr.bf16.mxu0 0
        %1606 = vmatpush1.bf16.msra.mxu0 0
        %1607 = vmatprep.subr.bf16.mxu0 0
        %1608 = vmatpush1.bf16.msra.mxu0 0
        %1609 = vmatprep.subr.bf16.mxu0 0
        %1610 = vmatpush1.bf16.msra.mxu0 0
        %1611 = vmatprep.subr.bf16.mxu0 0
        %1612 = vmatpush1.bf16.msra.mxu0 0
        %1613 = vmatprep.mubr.bf16.mxu0 0
        %1614 = vmatmul.mubr.bf16.gmra.mrb[0].mxu0 %v589
        %v1615 = vpop.f32.mrb[0].mxu0
        %v1616 = vadd.f32 0.0, %v1615
        %v1617 = vpop.f32.mrb[0].mxu0
        %v1618 = vpop.f32.mrb[0].mxu0
        %v1619 = vadd.f32 0.0, %v1618
        %v1620 = vpop.f32.mrb[0].mxu0
        %1621 = vmatprep.mubr.bf16.mxu0 0
        %1622 = vmatmul.mubr.bf16.gmra.mrb[0].mxu0 %v590
        %v1623 = vpop.f32.mrb[0].mxu0
        %v1624 = vadd.f32 0.0, %v1623
        %v1625 = vpop.f32.mrb[0].mxu0
        %v1626 = vpop.f32.mrb[0].mxu0
        %v1627 = vadd.f32 0.0, %v1626
        %v1628 = vpop.f32.mrb[0].mxu0
        %1629 = vmatprep.mubr.bf16.mxu0 0
        %1630 = vmatmul.mubr.bf16.gmra.mrb[0].mxu0 %v591
        %v1631 = vpop.f32.mrb[0].mxu0
        %v1632 = vadd.f32 0.0, %v1631
        %v1633 = vpop.f32.mrb[0].mxu0
        %v1634 = vpop.f32.mrb[0].mxu0
        %v1635 = vadd.f32 0.0, %v1634
        %v1636 = vpop.f32.mrb[0].mxu0
        %1637 = vmatprep.mubr.bf16.mxu0 0
        %1638 = vmatmul.mubr.bf16.gmra.mrb[0].mxu0 %v1515
        %v1639 = vpop.f32.mrb[0].mxu0
        %v1640 = vadd.f32 0.0, %v1639
        %v1641 = vpop.f32.mrb[0].mxu0
        %v1642 = vpop.f32.mrb[0].mxu0
        %v1643 = vadd.f32 0.0, %v1642
        %v1644 = vpop.f32.mrb[0].mxu0
        %1645 = vdwg.mxu0
        %v1646 = vadd.f32 %v1507, %v1616
        %v1647 = vadd.f32 %v1508, %v1619
        %v1648 = vadd.f32 %v1509, %v1624
        %v1649 = vadd.f32 %v1510, %v1627
        %v1650 = vadd.f32 %v1511, %v1632
        %v1651 = vadd.f32 %v1512, %v1635
        %v1652 = vadd.f32 %v1513, %v1640
        %v1653 = vadd.f32 %v1514, %v1643
        %v1656 = vrot.slane %v586, 1
        %v1657 = vrot.slane %v587, 1
        %v1658 = vsel %vm624, %v1656, %v1657
        %v1660 = vpack.c.bf16 %v1658, %v1225
        %s1661 = scalar_lea.vmem %s3, 448
        %v1662 = vld [vmem:[%s1661] sm:$0xf]
        %v1663 = vld [vmem:[%s1661 + $0x4] sm:$0xf]
        %v1664 = vld [vmem:[%s1661 + $0x8] sm:$0xf]
        %v1665 = vld [vmem:[%s1661 + $0xc] sm:$0xf]
        %v1666 = vld [vmem:[%s1661 + $0x10] sm:$0xf]
        %v1667 = vld [vmem:[%s1661 + $0x14] sm:$0xf]
        %v1668 = vld [vmem:[%s1661 + $0x18] sm:$0xf]
        %v1669 = vld [vmem:[%s1661 + $0x1c] sm:$0xf]
        %v1670 = vld [vmem:[%s1661 + $0x20] sm:$0xf]
        %v1671 = vld [vmem:[%s1661 + $0x24] sm:$0xf]
        %v1672 = vld [vmem:[%s1661 + $0x28] sm:$0xf]
        %v1673 = vld [vmem:[%s1661 + $0x2c] sm:$0xf]
        %v1674 = vld [vmem:[%s1661 + $0x30] sm:$0xf]
        %v1675 = vld [vmem:[%s1661 + $0x34] sm:$0xf]
        %v1676 = vld [vmem:[%s1661 + $0x38] sm:$0xf]
        %v1677 = vld [vmem:[%s1661 + $0x3c] sm:$0xf]
        %v1694 = vunpack.c.l.b16 %v1662
        %v1695 = vunpack.c.l.b16 %v1663
        %v1696 = vunpack.c.l.b16 %v1664
        %v1697 = vunpack.c.l.b16 %v1665
        %v1698 = vunpack.c.l.b16 %v1666
        %v1699 = vunpack.c.l.b16 %v1667
        %v1700 = vunpack.c.l.b16 %v1668
        %v1701 = vunpack.c.l.b16 %v1669
        %v1702 = vunpack.c.l.b16 %v1670
        %v1703 = vunpack.c.l.b16 %v1671
        %v1704 = vunpack.c.l.b16 %v1672
        %v1705 = vunpack.c.l.b16 %v1673
        %v1706 = vunpack.c.l.b16 %v1674
        %v1707 = vunpack.c.l.b16 %v1675
        %v1708 = vunpack.c.l.b16 %v1676
        %v1709 = vunpack.c.l.b16 %v1677
        %v1710 = vpack.c.b16 %v1695, %v1694
        %v1711 = vpack.c.b16 %v1697, %v1696
        %v1712 = vpack.c.b16 %v1699, %v1698
        %v1713 = vpack.c.b16 %v1701, %v1700
        %v1714 = vpack.c.b16 %v1703, %v1702
        %v1715 = vpack.c.b16 %v1705, %v1704
        %v1716 = vpack.c.b16 %v1707, %v1706
        %v1717 = vpack.c.b16 %v1709, %v1708
        %1726 = vmatprep.subr.bf16.mxu0 0
        %1727 = vmatpush1.bf16.msra.mxu0 %v1710
        %1728 = vmatprep.subr.bf16.mxu0 0
        %1729 = vmatpush1.bf16.msra.mxu0 %v1711
        %1730 = vmatprep.subr.bf16.mxu0 0
        %1731 = vmatpush1.bf16.msra.mxu0 %v1712
        %1732 = vmatprep.subr.bf16.mxu0 0
        %1733 = vmatpush1.bf16.msra.mxu0 %v1713
        %1734 = vmatprep.subr.bf16.mxu0 0
        %1735 = vmatpush1.bf16.msra.mxu0 %v1714
        %1736 = vmatprep.subr.bf16.mxu0 0
        %1737 = vmatpush1.bf16.msra.mxu0 %v1715
        %1738 = vmatprep.subr.bf16.mxu0 0
        %1739 = vmatpush1.bf16.msra.mxu0 %v1716
        %1740 = vmatprep.subr.bf16.mxu0 0
        %1741 = vmatpush1.bf16.msra.mxu0 %v1717
        %1742 = vmatprep.subr.bf16.mxu0 0
        %1743 = vmatpush1.bf16.msra.mxu0 0
        %1744 = vmatprep.subr.bf16.mxu0 0
        %1745 = vmatpush1.bf16.msra.mxu0 0
        %1746 = vmatprep.subr.bf16.mxu0 0
        %1747 = vmatpush1.bf16.msra.mxu0 0
        %1748 = vmatprep.subr.bf16.mxu0 0
        %1749 = vmatpush1.bf16.msra.mxu0 0
        %1750 = vmatprep.subr.bf16.mxu0 0
        %1751 = vmatpush1.bf16.msra.mxu0 0
        %1752 = vmatprep.subr.bf16.mxu0 0
        %1753 = vmatpush1.bf16.msra.mxu0 0
        %1754 = vmatprep.subr.bf16.mxu0 0
        %1755 = vmatpush1.bf16.msra.mxu0 0
        %1756 = vmatprep.subr.bf16.mxu0 0
        %1757 = vmatpush1.bf16.msra.mxu0 0
        %1758 = vmatprep.mubr.bf16.mxu0 0
        %1759 = vmatmul.mubr.bf16.gmra.mrb[0].mxu0 %v658
        %v1760 = vpop.f32.mrb[0].mxu0
        %v1761 = vadd.f32 0.0, %v1760
        %v1762 = vpop.f32.mrb[0].mxu0
        %v1763 = vpop.f32.mrb[0].mxu0
        %v1764 = vadd.f32 0.0, %v1763
        %v1765 = vpop.f32.mrb[0].mxu0
        %1766 = vmatprep.mubr.bf16.mxu0 0
        %1767 = vmatmul.mubr.bf16.gmra.mrb[0].mxu0 %v659
        %v1768 = vpop.f32.mrb[0].mxu0
        %v1769 = vadd.f32 0.0, %v1768
        %v1770 = vpop.f32.mrb[0].mxu0
        %v1771 = vpop.f32.mrb[0].mxu0
        %v1772 = vadd.f32 0.0, %v1771
        %v1773 = vpop.f32.mrb[0].mxu0
        %1774 = vmatprep.mubr.bf16.mxu0 0
        %1775 = vmatmul.mubr.bf16.gmra.mrb[0].mxu0 %v660
        %v1776 = vpop.f32.mrb[0].mxu0
        %v1777 = vadd.f32 0.0, %v1776
        %v1778 = vpop.f32.mrb[0].mxu0
        %v1779 = vpop.f32.mrb[0].mxu0
        %v1780 = vadd.f32 0.0, %v1779
        %v1781 = vpop.f32.mrb[0].mxu0
        %1782 = vmatprep.mubr.bf16.mxu0 0
        %1783 = vmatmul.mubr.bf16.gmra.mrb[0].mxu0 %v1660
        %v1784 = vpop.f32.mrb[0].mxu0
        %v1785 = vadd.f32 0.0, %v1784
        %v1786 = vpop.f32.mrb[0].mxu0
        %v1787 = vpop.f32.mrb[0].mxu0
        %v1788 = vadd.f32 0.0, %v1787
        %v1789 = vpop.f32.mrb[0].mxu0
        %1790 = vdwg.mxu0
        %v1791 = vadd.f32 %v1646, %v1761
        %v1792 = vadd.f32 %v1647, %v1764
        %v1793 = vadd.f32 %v1648, %v1769
        %v1794 = vadd.f32 %v1649, %v1772
        %v1795 = vadd.f32 %v1650, %v1777
        %v1796 = vadd.f32 %v1651, %v1780
        %v1797 = vadd.f32 %v1652, %v1785
        %v1798 = vadd.f32 %v1653, %v1788
        %v1799 = vrot.slane %v586, 2
        %v1800 = vrot.slane %v587, 2
        %v1801 = vsel %vm904, %v1799, %v1800
        %v1803 = vpack.c.bf16 %v1801, %v1371
        %s1804 = scalar_lea.vmem %s3, 512
        %v1805 = vld [vmem:[%s1804] sm:$0xf]
        %v1806 = vld [vmem:[%s1804 + $0x4] sm:$0xf]
        %v1807 = vld [vmem:[%s1804 + $0x8] sm:$0xf]
        %v1808 = vld [vmem:[%s1804 + $0xc] sm:$0xf]
        %v1809 = vld [vmem:[%s1804 + $0x10] sm:$0xf]
        %v1810 = vld [vmem:[%s1804 + $0x14] sm:$0xf]
        %v1811 = vld [vmem:[%s1804 + $0x18] sm:$0xf]
        %v1812 = vld [vmem:[%s1804 + $0x1c] sm:$0xf]
        %v1813 = vld [vmem:[%s1804 + $0x20] sm:$0xf]
        %v1814 = vld [vmem:[%s1804 + $0x24] sm:$0xf]
        %v1815 = vld [vmem:[%s1804 + $0x28] sm:$0xf]
        %v1816 = vld [vmem:[%s1804 + $0x2c] sm:$0xf]
        %v1817 = vld [vmem:[%s1804 + $0x30] sm:$0xf]
        %v1818 = vld [vmem:[%s1804 + $0x34] sm:$0xf]
        %v1819 = vld [vmem:[%s1804 + $0x38] sm:$0xf]
        %v1820 = vld [vmem:[%s1804 + $0x3c] sm:$0xf]
        %v1837 = vunpack.c.l.b16 %v1805
        %v1838 = vunpack.c.l.b16 %v1806
        %v1839 = vunpack.c.l.b16 %v1807
        %v1840 = vunpack.c.l.b16 %v1808
        %v1841 = vunpack.c.l.b16 %v1809
        %v1842 = vunpack.c.l.b16 %v1810
        %v1843 = vunpack.c.l.b16 %v1811
        %v1844 = vunpack.c.l.b16 %v1812
        %v1845 = vunpack.c.l.b16 %v1813
        %v1846 = vunpack.c.l.b16 %v1814
        %v1847 = vunpack.c.l.b16 %v1815
        %v1848 = vunpack.c.l.b16 %v1816
        %v1849 = vunpack.c.l.b16 %v1817
        %v1850 = vunpack.c.l.b16 %v1818
        %v1851 = vunpack.c.l.b16 %v1819
        %v1852 = vunpack.c.l.b16 %v1820
        %v1853 = vpack.c.b16 %v1838, %v1837
        %v1854 = vpack.c.b16 %v1840, %v1839
        %v1855 = vpack.c.b16 %v1842, %v1841
        %v1856 = vpack.c.b16 %v1844, %v1843
        %v1857 = vpack.c.b16 %v1846, %v1845
        %v1858 = vpack.c.b16 %v1848, %v1847
        %v1859 = vpack.c.b16 %v1850, %v1849
        %v1860 = vpack.c.b16 %v1852, %v1851
        %1869 = vmatprep.subr.bf16.mxu0 0
        %1870 = vmatpush1.bf16.msra.mxu0 %v1853
        %1871 = vmatprep.subr.bf16.mxu0 0
        %1872 = vmatpush1.bf16.msra.mxu0 %v1854
        %1873 = vmatprep.subr.bf16.mxu0 0
        %1874 = vmatpush1.bf16.msra.mxu0 %v1855
        %1875 = vmatprep.subr.bf16.mxu0 0
        %1876 = vmatpush1.bf16.msra.mxu0 %v1856
        %1877 = vmatprep.subr.bf16.mxu0 0
        %1878 = vmatpush1.bf16.msra.mxu0 %v1857
        %1879 = vmatprep.subr.bf16.mxu0 0
        %1880 = vmatpush1.bf16.msra.mxu0 %v1858
        %1881 = vmatprep.subr.bf16.mxu0 0
        %1882 = vmatpush1.bf16.msra.mxu0 %v1859
        %1883 = vmatprep.subr.bf16.mxu0 0
        %1884 = vmatpush1.bf16.msra.mxu0 %v1860
        %1885 = vmatprep.subr.bf16.mxu0 0
        %1886 = vmatpush1.bf16.msra.mxu0 0
        %1887 = vmatprep.subr.bf16.mxu0 0
        %1888 = vmatpush1.bf16.msra.mxu0 0
        %1889 = vmatprep.subr.bf16.mxu0 0
        %1890 = vmatpush1.bf16.msra.mxu0 0
        %1891 = vmatprep.subr.bf16.mxu0 0
        %1892 = vmatpush1.bf16.msra.mxu0 0
        %1893 = vmatprep.subr.bf16.mxu0 0
        %1894 = vmatpush1.bf16.msra.mxu0 0
        %1895 = vmatprep.subr.bf16.mxu0 0
        %1896 = vmatpush1.bf16.msra.mxu0 0
        %1897 = vmatprep.subr.bf16.mxu0 0
        %1898 = vmatpush1.bf16.msra.mxu0 0
        %1899 = vmatprep.subr.bf16.mxu0 0
        %1900 = vmatpush1.bf16.msra.mxu0 0
        %1901 = vmatprep.mubr.bf16.mxu0 0
        %1902 = vmatmul.mubr.bf16.gmra.mrb[0].mxu0 %v938
        %v1903 = vpop.f32.mrb[0].mxu0
        %v1904 = vadd.f32 0.0, %v1903
        %v1905 = vpop.f32.mrb[0].mxu0
        %v1906 = vpop.f32.mrb[0].mxu0
        %v1907 = vadd.f32 0.0, %v1906
        %v1908 = vpop.f32.mrb[0].mxu0
        %1909 = vmatprep.mubr.bf16.mxu0 0
        %1910 = vmatmul.mubr.bf16.gmra.mrb[0].mxu0 %v939
        %v1911 = vpop.f32.mrb[0].mxu0
        %v1912 = vadd.f32 0.0, %v1911
        %v1913 = vpop.f32.mrb[0].mxu0
        %v1914 = vpop.f32.mrb[0].mxu0
        %v1915 = vadd.f32 0.0, %v1914
        %v1916 = vpop.f32.mrb[0].mxu0
        %1917 = vmatprep.mubr.bf16.mxu0 0
        %1918 = vmatmul.mubr.bf16.gmra.mrb[0].mxu0 %v940
        %v1919 = vpop.f32.mrb[0].mxu0
        %v1920 = vadd.f32 0.0, %v1919
        %v1921 = vpop.f32.mrb[0].mxu0
        %v1922 = vpop.f32.mrb[0].mxu0
        %v1923 = vadd.f32 0.0, %v1922
        %v1924 = vpop.f32.mrb[0].mxu0
        %1925 = vmatprep.mubr.bf16.mxu0 0
        %1926 = vmatmul.mubr.bf16.gmra.mrb[0].mxu0 %v1803
        %v1927 = vpop.f32.mrb[0].mxu0
        %v1928 = vadd.f32 0.0, %v1927
        %v1929 = vpop.f32.mrb[0].mxu0
        %v1930 = vpop.f32.mrb[0].mxu0
        %v1931 = vadd.f32 0.0, %v1930
        %v1932 = vpop.f32.mrb[0].mxu0
        %1933 = vdwg.mxu0
        %v1934 = vadd.f32 %v1791, %v1904
        %v1935 = vadd.f32 %v1792, %v1907
        %v1936 = vadd.f32 %v1793, %v1912
        %v1937 = vadd.f32 %v1794, %v1915
        %v1938 = vadd.f32 %v1795, %v1920
        %v1939 = vadd.f32 %v1796, %v1923
        %v1940 = vadd.f32 %v1797, %v1928
        %v1941 = vadd.f32 %v1798, %v1931
        %v1942 = vld [vmem:[%s4] sm:$0x1]
        %v1944 = vlaneseq
        %v1945 = vshrl.u32 %v1944, 7
        %v1946 = vsub.s32 0, %v1945
        %v1947 = vrot.slane %v1942, %v1946
        %v1949 = vadd.f32 %v1934, %v1947
        %v1950 = vadd.f32 %v1935, %v1947
        %v1951 = vadd.f32 %v1936, %v1947
        %v1952 = vadd.f32 %v1937, %v1947
        %v1953 = vadd.f32 %v1938, %v1947
        %v1954 = vadd.f32 %v1939, %v1947
        %v1955 = vadd.f32 %v1940, %v1947
        %v1956 = vadd.f32 %v1941, %v1947
        %v1957 = vld [vmem:[%s353] sm:$0xff]
        %v1958 = vld [vmem:[%s353 + $0x8] sm:$0xff]
        %v1959 = vld [vmem:[%s353 + $0x10] sm:$0xff]
        %v1960 = vld [vmem:[%s353 + $0x18] sm:$0xff]
        %v1961 = vld [vmem:[%s353 + $0x20] sm:$0xff]
        %v1962 = vld [vmem:[%s353 + $0x28] sm:$0xff]
        %v1963 = vld [vmem:[%s353 + $0x30] sm:$0xff]
        %v1964 = vld [vmem:[%s353 + $0x38] sm:$0xff]
        %v1965 = vadd.f32 %v1949, %v1957
        %v1966 = vadd.f32 %v1950, %v1958
        %v1967 = vadd.f32 %v1951, %v1959
        %v1968 = vadd.f32 %v1952, %v1960
        %v1969 = vadd.f32 %v1953, %v1961
        %v1970 = vadd.f32 %v1954, %v1962
        %v1971 = vadd.f32 %v1955, %v1963
        %v1972 = vadd.f32 %v1956, %v1964
        %1973 = vst [vmem:[%s363] sm:$0xff] %v1965
        %1974 = vst [vmem:[%s363 + $0x8] sm:$0xff] %v1966
        %1975 = vst [vmem:[%s363 + $0x10] sm:$0xff] %v1967
        %1976 = vst [vmem:[%s363 + $0x18] sm:$0xff] %v1968
        %1977 = vst [vmem:[%s363 + $0x20] sm:$0xff] %v1969
        %1978 = vst [vmem:[%s363 + $0x28] sm:$0xff] %v1970
        %1979 = vst [vmem:[%s363 + $0x30] sm:$0xff] %v1971
        %1980 = vst [vmem:[%s363 + $0x38] sm:$0xff] %v1972
        %v1981 = vadd.f32 %v1965, %v1966
        %v1982 = vadd.f32 %v1981, %v1967
        %v1983 = vadd.f32 %v1982, %v1968
        %v1984 = vadd.f32 %v1983, %v1969
        %v1985 = vadd.f32 %v1984, %v1970
        %v1986 = vadd.f32 %v1985, %v1971
        %v1987 = vadd.f32 %v1986, %v1972
        %v1988 = vrot.slane %v1987, 4
        %v1989 = vadd.f32 %v1987, %v1988
        %v1990 = vrot.slane %v1989, 2
        %v1991 = vadd.f32 %v1989, %v1990
        %v1992 = vrot.slane %v1991, 1
        %v1993 = vadd.f32 %v1991, %v1992
        %v1994 = vmul.f32 %v1965, %v1965
        %v1995 = vmul.f32 %v1966, %v1966
        %v1996 = vmul.f32 %v1967, %v1967
        %v1997 = vmul.f32 %v1968, %v1968
        %v1998 = vmul.f32 %v1969, %v1969
        %v1999 = vmul.f32 %v1970, %v1970
        %v2000 = vmul.f32 %v1971, %v1971
        %v2001 = vmul.f32 %v1972, %v1972
        %v2002 = vadd.f32 %v1994, %v1995
        %v2003 = vadd.f32 %v2002, %v1996
        %v2004 = vadd.f32 %v2003, %v1997
        %v2005 = vadd.f32 %v2004, %v1998
        %v2006 = vadd.f32 %v2005, %v1999
        %v2007 = vadd.f32 %v2006, %v2000
        %v2008 = vadd.f32 %v2007, %v2001
        %v2009 = vrot.slane %v2008, 4
        %v2010 = vadd.f32 %v2008, %v2009
        %v2011 = vrot.slane %v2010, 2
        %v2012 = vadd.f32 %v2010, %v2011
        %v2013 = vrot.slane %v2012, 1
        %v2014 = vadd.f32 %v2012, %v2013
        %vm2015 = vcmask 1040384
        %v2016 = vsel %vm2015, %v1993, %v2014
        %2017 = vst [vmem:[%s335] sm:$0x3] %v2016
        %s2018 = smul.u32 8, %s27
        %p2019 = scmp.lt.s32.totalorder %s26, 1
        %s2020 = scalar_select %p2019, %s26, 1
        %p2021 = scmp.lt.s32.totalorder %s2018, 7
        %s2022 = scalar_select %p2021, %s2018, 7
        %s2023 = smul.addr %s2020, 8
        %s2024 = sadd.s32 %s2022, %s2023
        %s2025 = smul.addr %s2024, 8
        %s2026 = scalar_lea.vmem %s6, %s2025
        %s2027 = sand.u32 %s212, 1
        %s2028 = scalar_lea.sflag [#allocation3], %s2027
        %s2029 = sand.u32 %s212, 1
        %s2030 = smul.addr %s2029, 2
        %s2031 = scalar_lea.vmem [#allocation2], %s2030
        // Predicated region
        $region45: #{encoder_block_forward.11} parent=43 // pred_check
          %p2032 = pneg %p194
        $region46: #{encoder_block_forward.11} parent=43 // pred_check_branch
          %2034 = sbr.rel (%p2032) target = $region48
        $region47: #{encoder_block_forward.11} parent=43 // pred_region
          %s2035 = smul.u32 8, %s27
        $region48: #{encoder_block_forward.11} parent=43 // pred_fallthru
          _
        // Predicated region
        $region49: #{encoder_block_forward.11} parent=43 // pred_check
          %p2036 = pneg %p222
        $region50: #{encoder_block_forward.11} parent=43 // pred_check_branch
          %2038 = sbr.rel (%p2036) target = $region52
        $region51: #{encoder_block_forward.11} parent=43 // pred_region
          %s2040 = ssub.s32 32, 32
          %2041 = vsyncadd %s2028, %s2040
          %s2042 = sadd.s32 %s27, %s26
          %s2043 = smul.addr %s2042, 32
          %s2044 = scalar_lea.hbm %s7, %s2043
          %s2046 = sshll.u32 %s2031, 4
          %s2047 = int_to_ptr.vmem [resolvable:$true] %s2046
          %2049 = dma.vmem_to_hbm [thread:$0]  %s2047, 32, %s2044, %s2028
        $region52: #{encoder_block_forward.11} parent=43 // pred_fallthru
          _
      $region44: #{encoder_block_forward.11} parent=5 // pred_fallthru
        _
      %p2050 = scmp.le.s32.totalorder 2, %s17
      // Predicated region
      $region53: #{encoder_block_forward.11} parent=5 // pred_check
        %p2051 = pneg %p2050
      $region54: #{encoder_block_forward.11} parent=5 // pred_check_branch
        %2053 = sbr.rel (%p2051) target = $region56
      $region55: #{encoder_block_forward.11} parent=5 // pred_region
        %s2054 = ssub.s32 %s17, 2
        // Predicated region
        $region57: #{encoder_block_forward.11} parent=55 // pred_check
          %p2055 = pneg %p200
        $region58: #{encoder_block_forward.11} parent=55 // pred_check_branch
          %2057 = sbr.rel (%p2055) target = $region60
        $region59: #{encoder_block_forward.11} parent=55 // pred_region
          %s2058 = smul.u32 8, %s29
          %p2059 = scmp.lt.s32.totalorder %s28, 1
          %s2060 = scalar_select %p2059, %s28, 1
          %p2061 = scmp.lt.s32.totalorder %s2058, 7
          %s2062 = scalar_select %p2061, %s2058, 7
          %s2063 = smul.addr %s2060, 8
          %s2064 = sadd.s32 %s2062, %s2063
          %s2065 = smul.addr %s2064, 8
          %s2066 = scalar_lea.vmem %s6, %s2065
        $region60: #{encoder_block_forward.11} parent=55 // pred_fallthru
          _
        // Predicated region
        $region61: #{encoder_block_forward.11} parent=55 // pred_check
          %p2067 = pneg %p228
        $region62: #{encoder_block_forward.11} parent=55 // pred_check_branch
          %2069 = sbr.rel (%p2067) target = $region64
        $region63: #{encoder_block_forward.11} parent=55 // pred_region
          %s2070 = sand.u32 %s213, 1
          %s2071 = scalar_lea.sflag [#allocation3], %s2070
          %s2072 = sand.u32 %s213, 1
          %s2073 = smul.addr %s2072, 2
          %s2074 = scalar_lea.vmem [#allocation2], %s2073
          %2075 = dma.done %s2071, 32
        $region64: #{encoder_block_forward.11} parent=55 // pred_fallthru
          _
      $region56: #{encoder_block_forward.11} parent=5 // pred_fallthru
        _
    $region6: #{encoder_block_forward.11} parent=1 // loop_footer
      %s21 = sadd.s32 1, %s17
    $region7: #{encoder_block_forward.11} parent=1 // loop_footer_branch
      %16 = sbr.rel target = $region3
    $region8: #{encoder_block_forward.11} parent=1 // loop_exit
      _
    %2076 = vsyncpa [#allocation3], 1
    %s2077 = scalar_lea.sflag [#allocation3], 1
    %2078 = vsyncpa %s2077, 1

</llo_original>
